<compile_context>
chip_gen: v7x
topology: tpu7x:2x2x1
jax: 0.10.0
libtpu: 0.0.40
codegen_flags: <defaults>
</compile_context>

<pallas_src>
import jax
import jax.numpy as jnp
from jax import lax
from jax.experimental import pallas as pl
from jax.experimental.pallas import tpu as pltpu

TB = 64      # samples per grid step (multiple of 16 for bf16 tile alignment)
KPAD = 256   # conv1 contraction length (5*28 = 140) zero-padded to full MXU depth


# ---------------------------------------------------------------------------
# Fused kernel
# ---------------------------------------------------------------------------
def _mnist_fused_kernel(x_ref, t1_ref, b1_ref, me_ref, t2_ref, b2_ref,
                        wf1_ref, bf1_ref, wf2_ref, bf2_ref, o_ref):
    f32 = jnp.float32
    bf16 = jnp.bfloat16

    x = x_ref[0]                                   # (24*TB, 256) bf16; rows=(ho,n), cols=ki*28+w

    # ---- conv1 + bias + ReLU: one matmul, K folded over (ki, w) -------------
    acc1 = jnp.dot(x, t1_ref[...], preferred_element_type=f32)      # (24*TB, 256)
    y1 = jnp.maximum(acc1 + b1_ref[...], 0.0)      # cols = co*32 + wo (wo 24..31 zero pad)

    # ---- maxpool1 2x2 --------------------------------------------------------
    # H: max over adjacent TB-row blocks (TB-aligned slices).
    yh1 = jnp.concatenate(
        [jnp.maximum(y1[(2 * h) * TB:(2 * h + 1) * TB],
                     y1[(2 * h + 1) * TB:(2 * h + 2) * TB]) for h in range(12)],
        axis=0)                                    # (12*TB, 256) rows=(h2,n)
    # W: lane l <- max(lane l, lane l+1) via roll (shift 255 == -1 mod 256); only even-w
    # lanes (w = 2*w2 < 24) are kept by `me`, so rolled cross-block/pad lanes are dropped.
    q1 = jnp.maximum(yh1, pltpu.roll(yh1, 255, axis=1))
    p1 = jnp.dot(q1.astype(bf16), me_ref[...], preferred_element_type=f32)
    p1 = p1.astype(bf16)                           # (12*TB, 128): cols = w2*8 + ci (96..127 zero)

    # ---- conv2 + bias + ReLU: 5 Toeplitz-over-(w2,ci) matmuls, row slices only ----
    acc2 = jnp.zeros((8 * TB, 128), f32)
    for ki in range(5):
        acc2 = acc2 + jnp.dot(p1[ki * TB:(ki + 8) * TB], t2_ref[ki],
                              preferred_element_type=f32)
    y2 = jnp.maximum(acc2 + b2_ref[...], 0.0)      # (8*TB, 128): cols = wo2*16 + co

    # ---- maxpool2 2x2 --------------------------------------------------------
    yh2 = jnp.concatenate(
        [jnp.maximum(y2[(2 * h) * TB:(2 * h + 1) * TB],
                     y2[(2 * h + 1) * TB:(2 * h + 2) * TB]) for h in range(4)],
        axis=0)                                    # (4*TB, 128) rows=(h4,n)
    # W: lane l <- max(lane l, lane l+16) (shift 112 == -16 mod 128); odd-wo2 / wrapped
    # lanes are zeroed by wf1 (even-wo2 selection folded into fc1) -- keep them coupled.
    q2 = jnp.maximum(yh2, pltpu.roll(yh2, 112, axis=1))

    # ---- flatten (lane-aligned 128-wide blocks) -> fc1 + ReLU -> fc2 + ReLU --
    feats = jnp.concatenate([q2[h * TB:(h + 1) * TB] for h in range(4)],
                            axis=1).astype(bf16)   # (TB, 512): cols = h4*128 + wo2*16 + co
    h1 = jnp.maximum(
        jnp.dot(feats, wf1_ref[...], preferred_element_type=f32) + bf1_ref[...], 0.0)
    out = jnp.maximum(
        jnp.dot(h1.astype(bf16), wf2_ref[...], preferred_element_type=f32) + bf2_ref[...], 0.0)
    o_ref[...] = out.astype(o_ref.dtype)


# ---------------------------------------------------------------------------
# Wrapper-side operand prep (PyTorch-layout weights -> kernel matrices)
# ---------------------------------------------------------------------------
def _prep_operands(params):
    f32, bf16 = jnp.float32, jnp.bfloat16
    w1, b1 = params["w1"].astype(f32), params["b1"].astype(f32)
    w2, b2 = params["w2"].astype(f32), params["b2"].astype(f32)
    wfc1, bfc1 = params["wfc1"].astype(f32), params["bfc1"].astype(f32)
    wfc2, bfc2 = params["wfc2"].astype(f32), params["bfc2"].astype(f32)

    # conv1 Toeplitz with K folded over (ki, w):
    #   t1[ki*28 + w, co*32 + wo] = w1[co, 0, ki, w - wo]   (0 <= w-wo < 5, wo < 24)
    w_idx = jnp.arange(28)[:, None]
    wo_idx = jnp.arange(24)[None, :]
    kj = w_idx - wo_idx
    valid = (kj >= 0) & (kj < 5)
    kjc = jnp.clip(kj, 0, 4)
    blocks = []
    for ki in range(5):
        vals = w1[:, 0, ki, :][:, kjc]                      # (8 co, 28 w, 24 wo)
        vals = jnp.where(valid[None], vals, 0.0)
        vals = jnp.transpose(vals, (1, 0, 2))               # (28 w, 8 co, 24 wo)
        vals = jnp.pad(vals, ((0, 0), (0, 0), (0, 8)))      # pad wo -> 32
        blocks.append(vals.reshape(28, 256))
    t1 = jnp.concatenate(blocks, axis=0)                    # (140, 256)
    t1 = jnp.pad(t1, ((0, KPAD - 140), (0, 0))).astype(bf16)  # (256, 256)
    b1rep = jnp.pad(jnp.repeat(b1, 24).reshape(8, 24), ((0, 0), (0, 8))).reshape(1, 256)

    # pool1 even-w select + (co,w)->(w2,ci) permute (0/1, exact in bf16), padded to 128 cols
    co_r = jnp.arange(8)[:, None, None, None]
    w_r = jnp.arange(32)[None, :, None, None]
    w2_c = jnp.arange(16)[None, None, :, None]
    ci_c = jnp.arange(8)[None, None, None, :]
    me = ((co_r == ci_c) & (w_r == 2 * w2_c) & (w2_c < 12)).reshape(256, 128).astype(bf16)

    # conv2 Toeplitz-over-(w2, ci) per ki:
    #   t2[ki][w2*8 + ci, wo2*16 + co] = w2[co, ci, ki, w2 - wo2]   (0 <= w2-wo2 < 5)
    w2_r = jnp.arange(16)[:, None]
    wo2_c = jnp.arange(8)[None, :]
    kj2 = w2_r - wo2_c
    valid2 = (kj2 >= 0) & (kj2 < 5)
    kj2c = jnp.clip(kj2, 0, 4)
    t2 = []
    for ki in range(5):
        vals = w2[:, :, ki, :][:, :, kj2c]                  # (16 co, 8 ci, 16 w2, 8 wo2)
        vals = jnp.where(valid2[None, None], vals, 0.0)
        t2.append(jnp.transpose(vals, (2, 1, 3, 0)).reshape(128, 128))
    t2 = jnp.stack(t2, 0).astype(bf16)                      # (5, 128, 128)
    b2rep = jnp.tile(b2, 8).reshape(1, 128)

    # fc1: even-wo2 pool2 selection + torch (co,h4,w4) flatten order folded in; pad out -> 128
    r = jnp.arange(512)
    h4, wo2, co = r // 128, (r // 16) % 8, r % 16
    src = co * 16 + h4 * 4 + (wo2 // 2)
    rows = jnp.where(((wo2 % 2) == 0)[:, None], wfc1.T[src], 0.0)   # (512, 120)
    wf1 = jnp.zeros((512, 128), f32).at[:, :120].set(rows).astype(bf16)
    bf1 = jnp.zeros((1, 128), f32).at[0, :120].set(bfc1)

    # fc2: (10,120) -> (128,128) zero padded (padded logits stay 0 only because fc2 is ReLU'd)
    wf2 = jnp.zeros((128, 128), f32).at[:120, :10].set(wfc2.T).astype(bf16)
    bf2 = jnp.zeros((1, 128), f32).at[0, :10].set(bfc2)

    return (t1, b1rep, me, t2, b2rep, wf1, bf1, wf2, bf2)


def mnist_net_forward(x_nchw, params, *, interpret=False):
    n = x_nchw.shape[0]
    assert x_nchw.shape[1:] == (1, 28, 28)
    g = pl.cdiv(n, TB)
    npad = g * TB

    x = x_nchw[:, 0].astype(jnp.float32)
    if npad != n:
        x = jnp.pad(x, ((0, npad - n), (0, 0), (0, 0)))
    # H-im2col in the wrapper: xim[n, ho, ki*28 + w] = x[n, ho+ki, w]; zero-pad K 140 -> 256.
    xim = jnp.stack([x[:, ki:ki + 24, :] for ki in range(5)], axis=2)   # (Npad, 24, 5, 28)
    xim = xim.reshape(npad, 24, 140)
    xim = jnp.pad(xim, ((0, 0), (0, 0), (0, KPAD - 140)))
    # Tile to (G, 24*TB, 256); within a tile, row = ho*TB + n_local.
    xt = xim.reshape(g, TB, 24, KPAD).transpose(0, 2, 1, 3).reshape(g, 24 * TB, KPAD)
    xt = xt.astype(jnp.bfloat16)

    ops = _prep_operands(params)

    def const_spec(shp):
        # Constant index map => block stays VMEM-resident across grid steps (no re-DMA).
        return pl.BlockSpec(shp, lambda i, _s=shp: (0,) * len(_s))

    in_specs = [
        pl.BlockSpec((1, 24 * TB, KPAD), lambda i: (i, 0, 0)),  # im2col image tile
        const_spec((KPAD, 256)),    # t1
        const_spec((1, 256)),       # b1rep
        const_spec((256, 128)),     # me
        const_spec((5, 128, 128)),  # t2
        const_spec((1, 128)),       # b2rep
        const_spec((512, 128)),     # wf1 (pool2-select + flatten-permute folded, padded)
        const_spec((1, 128)),       # bf1
        const_spec((128, 128)),     # wf2 (padded)
        const_spec((1, 128)),       # bf2
    ]
    out = pl.pallas_call(
        _mnist_fused_kernel,
        out_shape=jax.ShapeDtypeStruct((npad, 128), jnp.float32),
        grid=(g,),
        in_specs=in_specs,
        out_specs=pl.BlockSpec((TB, 128), lambda i: (i, 0)),
        compiler_params=pltpu.CompilerParams(
            dimension_semantics=("parallel",),
            vmem_limit_bytes=32 * 1024 * 1024,
        ),
        interpret=interpret,
    )(xt, *ops)
    return out[:n, :10]


# ---------------------------------------------------------------------------
# Pure-JAX reference (PyTorch MnistNet semantics) and synthetic params
# ---------------------------------------------------------------------------
def mnist_net_reference(x, params):
    dn = ("NCHW", "OIHW", "NCHW")
    y = lax.conv_general_dilated(x, params["w1"], (1, 1), "VALID", dimension_numbers=dn)
    y = jax.nn.relu(y + params["b1"][None, :, None, None])
    y = lax.reduce_window(y, -jnp.inf, lax.max, (1, 1, 2, 2), (1, 1, 2, 2), "VALID")
    y = lax.conv_general_dilated(y, params["w2"], (1, 1), "VALID", dimension_numbers=dn)
    y = jax.nn.relu(y + params["b2"][None, :, None, None])
    y = lax.reduce_window(y, -jnp.inf, lax.max, (1, 1, 2, 2), (1, 1, 2, 2), "VALID")
    y = y.reshape(y.shape[0], -1)
    y = jax.nn.relu(y @ params["wfc1"].T + params["bfc1"])
    y = jax.nn.relu(y @ params["wfc2"].T + params["bfc2"])
    return y


def init_params(key):
    """Deterministic synthetic params, PyTorch layouts + default-like uniform init."""
    ks = jax.random.split(key, 8)

    def u(k, shape, fan_in):
        bound = 1.0 / float(fan_in) ** 0.5
        return jax.random.uniform(k, shape, jnp.float32, -bound, bound)

    return {
        "w1": u(ks[0], (8, 1, 5, 5), 25),
        "b1": u(ks[1], (8,), 25),
        "w2": u(ks[2], (16, 8, 5, 5), 200),
        "b2": u(ks[3], (16,), 200),
        "wfc1": u(ks[4], (120, 256), 256),
        "bfc1": u(ks[5], (120,), 256),
        "wfc2": u(ks[6], (10, 120), 120),
        "bfc2": u(ks[7], (10,), 120),
    }


if __name__ == "__main__":
    key = jax.random.PRNGKey(0)
    kx, kp = jax.random.split(key)
    params = init_params(kp)
    # MNIST geometry (28x28) is required by fc1 (16*4*4).  Batch = 2*TB so the
    # "parallel" batch grid axis has 2 steps (keeps both v7x TensorCores busy).
    x = jax.random.normal(kx, (2 * TB, 1, 28, 28), jnp.float32)

    out = jax.jit(mnist_net_forward)(x, params)
    out = jax.block_until_ready(out)
    assert out.shape == (2 * TB, 10)

    ref = mnist_net_reference(x, params)
    max_err = float(jnp.max(jnp.abs(out - ref)))
    assert jnp.allclose(out, ref, atol=5e-2, rtol=5e-2), max_err  # bf16 operands, f32 accum
    assert bool(jnp.all(out >= 0.0))  # final ReLU (the module ReLUs fc2's output)
    print("KERNEL_OK")
</pallas_src>

<mosaic_0001>
module attributes {stable_mosaic.version = 11 : i64} {
  func.func @_mnist_fused_kernel(%arg0: i32, %arg1: memref<1x1536x256xbf16, #tpu.memory_space<vmem>>, %arg2: memref<256x256xbf16, #tpu.memory_space<vmem>>, %arg3: memref<1x256xf32, #tpu.memory_space<vmem>>, %arg4: memref<256x128xbf16, #tpu.memory_space<vmem>>, %arg5: memref<5x128x128xbf16, #tpu.memory_space<vmem>>, %arg6: memref<1x128xf32, #tpu.memory_space<vmem>>, %arg7: memref<512x128xbf16, #tpu.memory_space<vmem>>, %arg8: memref<1x128xf32, #tpu.memory_space<vmem>>, %arg9: memref<128x128xbf16, #tpu.memory_space<vmem>>, %arg10: memref<1x128xf32, #tpu.memory_space<vmem>>, %arg11: memref<64x128xf32, #tpu.memory_space<vmem>>) attributes {dimension_semantics = [#tpu.dimension_semantics<parallel>], iteration_bounds = array<i64: 2>, scalar_prefetch = 0 : i64, scratch_operands = 0 : i64, tpu.core_type = #tpu.core_type<tc>, window_params = [{transform_indices = @transform_0, window_bounds = array<i64: 1, 1536, 256>}, {pipeline_mode = #tpu.pipeline_mode<synchronous>, transform_indices = @transform_1, window_bounds = array<i64: 256, 256>}, {pipeline_mode = #tpu.pipeline_mode<synchronous>, transform_indices = @transform_2, window_bounds = array<i64: 1, 256>}, {pipeline_mode = #tpu.pipeline_mode<synchronous>, transform_indices = @transform_3, window_bounds = array<i64: 256, 128>}, {pipeline_mode = #tpu.pipeline_mode<synchronous>, transform_indices = @transform_4, window_bounds = array<i64: 5, 128, 128>}, {pipeline_mode = #tpu.pipeline_mode<synchronous>, transform_indices = @transform_5, window_bounds = array<i64: 1, 128>}, {pipeline_mode = #tpu.pipeline_mode<synchronous>, transform_indices = @transform_6, window_bounds = array<i64: 512, 128>}, {pipeline_mode = #tpu.pipeline_mode<synchronous>, transform_indices = @transform_7, window_bounds = array<i64: 1, 128>}, {pipeline_mode = #tpu.pipeline_mode<synchronous>, transform_indices = @transform_8, window_bounds = array<i64: 128, 128>}, {pipeline_mode = #tpu.pipeline_mode<synchronous>, transform_indices = @transform_9, window_bounds = array<i64: 1, 128>}, {transform_indices = @transform_10, window_bounds = array<i64: 64, 128>}]} {
    %c0 = arith.constant 0 : index
    %c0_0 = arith.constant 0 : index
    %c0_1 = arith.constant 0 : index
    %0 = vector.load %arg1[%c0, %c0_0, %c0_1] : memref<1x1536x256xbf16, #tpu.memory_space<vmem>>, vector<1x1536x256xbf16>
    %1 = vector.shape_cast %0 : vector<1x1536x256xbf16> to vector<1536x256xbf16>
    %c0_2 = arith.constant 0 : index
    %c0_3 = arith.constant 0 : index
    %2 = vector.load %arg2[%c0_2, %c0_3] : memref<256x256xbf16, #tpu.memory_space<vmem>>, vector<256x256xbf16>
    %cst = arith.constant dense<0.000000e+00> : vector<1536x256xf32>
    %3 = tpu.matmul %1, %2, %cst {dimension_numbers = #tpu.dot_dimension_numbers<[1], [0], [0], [1], [0, 0, 1, 1], [], []>} : vector<1536x256xbf16>, vector<256x256xbf16>, vector<1536x256xf32> -> vector<1536x256xf32>
    %c0_4 = arith.constant 0 : index
    %c0_5 = arith.constant 0 : index
    %4 = vector.load %arg3[%c0_4, %c0_5] : memref<1x256xf32, #tpu.memory_space<vmem>>, vector<1x256xf32>
    %5 = vector.broadcast %4 : vector<1x256xf32> to vector<1536x256xf32>
    %6 = arith.addf %3, %5 : vector<1536x256xf32>
    %cst_6 = arith.constant 0.000000e+00 : f32
    %7 = vector.broadcast %cst_6 : f32 to vector<1536x256xf32>
    %8 = arith.maximumf %6, %7 : vector<1536x256xf32>
    %9 = vector.extract_strided_slice %8 {offsets = [0, 0], sizes = [64, 256], strides = [1, 1]} : vector<1536x256xf32> to vector<64x256xf32>
    %10 = vector.extract_strided_slice %8 {offsets = [64, 0], sizes = [64, 256], strides = [1, 1]} : vector<1536x256xf32> to vector<64x256xf32>
    %11 = arith.maximumf %9, %10 : vector<64x256xf32>
    %12 = vector.extract_strided_slice %8 {offsets = [128, 0], sizes = [64, 256], strides = [1, 1]} : vector<1536x256xf32> to vector<64x256xf32>
    %13 = vector.extract_strided_slice %8 {offsets = [192, 0], sizes = [64, 256], strides = [1, 1]} : vector<1536x256xf32> to vector<64x256xf32>
    %14 = arith.maximumf %12, %13 : vector<64x256xf32>
    %15 = vector.extract_strided_slice %8 {offsets = [256, 0], sizes = [64, 256], strides = [1, 1]} : vector<1536x256xf32> to vector<64x256xf32>
    %16 = vector.extract_strided_slice %8 {offsets = [320, 0], sizes = [64, 256], strides = [1, 1]} : vector<1536x256xf32> to vector<64x256xf32>
    %17 = arith.maximumf %15, %16 : vector<64x256xf32>
    %18 = vector.extract_strided_slice %8 {offsets = [384, 0], sizes = [64, 256], strides = [1, 1]} : vector<1536x256xf32> to vector<64x256xf32>
    %19 = vector.extract_strided_slice %8 {offsets = [448, 0], sizes = [64, 256], strides = [1, 1]} : vector<1536x256xf32> to vector<64x256xf32>
    %20 = arith.maximumf %18, %19 : vector<64x256xf32>
    %21 = vector.extract_strided_slice %8 {offsets = [512, 0], sizes = [64, 256], strides = [1, 1]} : vector<1536x256xf32> to vector<64x256xf32>
    %22 = vector.extract_strided_slice %8 {offsets = [576, 0], sizes = [64, 256], strides = [1, 1]} : vector<1536x256xf32> to vector<64x256xf32>
    %23 = arith.maximumf %21, %22 : vector<64x256xf32>
    %24 = vector.extract_strided_slice %8 {offsets = [640, 0], sizes = [64, 256], strides = [1, 1]} : vector<1536x256xf32> to vector<64x256xf32>
    %25 = vector.extract_strided_slice %8 {offsets = [704, 0], sizes = [64, 256], strides = [1, 1]} : vector<1536x256xf32> to vector<64x256xf32>
    %26 = arith.maximumf %24, %25 : vector<64x256xf32>
    %27 = vector.extract_strided_slice %8 {offsets = [768, 0], sizes = [64, 256], strides = [1, 1]} : vector<1536x256xf32> to vector<64x256xf32>
    %28 = vector.extract_strided_slice %8 {offsets = [832, 0], sizes = [64, 256], strides = [1, 1]} : vector<1536x256xf32> to vector<64x256xf32>
    %29 = arith.maximumf %27, %28 : vector<64x256xf32>
    %30 = vector.extract_strided_slice %8 {offsets = [896, 0], sizes = [64, 256], strides = [1, 1]} : vector<1536x256xf32> to vector<64x256xf32>
    %31 = vector.extract_strided_slice %8 {offsets = [960, 0], sizes = [64, 256], strides = [1, 1]} : vector<1536x256xf32> to vector<64x256xf32>
    %32 = arith.maximumf %30, %31 : vector<64x256xf32>
    %33 = vector.extract_strided_slice %8 {offsets = [1024, 0], sizes = [64, 256], strides = [1, 1]} : vector<1536x256xf32> to vector<64x256xf32>
    %34 = vector.extract_strided_slice %8 {offsets = [1088, 0], sizes = [64, 256], strides = [1, 1]} : vector<1536x256xf32> to vector<64x256xf32>
    %35 = arith.maximumf %33, %34 : vector<64x256xf32>
    %36 = vector.extract_strided_slice %8 {offsets = [1152, 0], sizes = [64, 256], strides = [1, 1]} : vector<1536x256xf32> to vector<64x256xf32>
    %37 = vector.extract_strided_slice %8 {offsets = [1216, 0], sizes = [64, 256], strides = [1, 1]} : vector<1536x256xf32> to vector<64x256xf32>
    %38 = arith.maximumf %36, %37 : vector<64x256xf32>
    %39 = vector.extract_strided_slice %8 {offsets = [1280, 0], sizes = [64, 256], strides = [1, 1]} : vector<1536x256xf32> to vector<64x256xf32>
    %40 = vector.extract_strided_slice %8 {offsets = [1344, 0], sizes = [64, 256], strides = [1, 1]} : vector<1536x256xf32> to vector<64x256xf32>
    %41 = arith.maximumf %39, %40 : vector<64x256xf32>
    %42 = vector.extract_strided_slice %8 {offsets = [1408, 0], sizes = [64, 256], strides = [1, 1]} : vector<1536x256xf32> to vector<64x256xf32>
    %43 = vector.extract_strided_slice %8 {offsets = [1472, 0], sizes = [64, 256], strides = [1, 1]} : vector<1536x256xf32> to vector<64x256xf32>
    %44 = arith.maximumf %42, %43 : vector<64x256xf32>
    %45 = tpu.concatenate %11, %14, %17, %20, %23, %26, %29, %32, %35, %38, %41, %44 in 0 : vector<64x256xf32>, vector<64x256xf32>, vector<64x256xf32>, vector<64x256xf32>, vector<64x256xf32>, vector<64x256xf32>, vector<64x256xf32>, vector<64x256xf32>, vector<64x256xf32>, vector<64x256xf32>, vector<64x256xf32>, vector<64x256xf32> -> vector<768x256xf32>
    %c255_i32 = arith.constant 255 : i32
    %46 = tpu.dynamic_rotate %45 by %c255_i32 dim 1 : vector<768x256xf32>, i32 -> vector<768x256xf32>
    %47 = arith.maximumf %45, %46 : vector<768x256xf32>
    %48 = arith.truncf %47 : vector<768x256xf32> to vector<768x256xbf16>
    %c0_7 = arith.constant 0 : index
    %c0_8 = arith.constant 0 : index
    %49 = vector.load %arg4[%c0_7, %c0_8] : memref<256x128xbf16, #tpu.memory_space<vmem>>, vector<256x128xbf16>
    %cst_9 = arith.constant dense<0.000000e+00> : vector<768x128xf32>
    %50 = tpu.matmul %48, %49, %cst_9 {dimension_numbers = #tpu.dot_dimension_numbers<[1], [0], [0], [1], [0, 0, 1, 1], [], []>} : vector<768x256xbf16>, vector<256x128xbf16>, vector<768x128xf32> -> vector<768x128xf32>
    %51 = arith.truncf %50 : vector<768x128xf32> to vector<768x128xbf16>
    %cst_10 = arith.constant 0.000000e+00 : f32
    %52 = vector.broadcast %cst_10 : f32 to vector<512x128xf32>
    %53 = vector.extract_strided_slice %51 {offsets = [0, 0], sizes = [512, 128], strides = [1, 1]} : vector<768x128xbf16> to vector<512x128xbf16>
    %c0_11 = arith.constant 0 : index
    %c0_12 = arith.constant 0 : index
    %c0_13 = arith.constant 0 : index
    %54 = vector.load %arg5[%c0_11, %c0_12, %c0_13] : memref<5x128x128xbf16, #tpu.memory_space<vmem>>, vector<1x128x128xbf16>
    %55 = vector.shape_cast %54 : vector<1x128x128xbf16> to vector<128x128xbf16>
    %cst_14 = arith.constant dense<0.000000e+00> : vector<512x128xf32>
    %56 = tpu.matmul %53, %55, %cst_14 {dimension_numbers = #tpu.dot_dimension_numbers<[1], [0], [0], [1], [0, 0, 1, 1], [], []>} : vector<512x128xbf16>, vector<128x128xbf16>, vector<512x128xf32> -> vector<512x128xf32>
    %57 = arith.addf %52, %56 : vector<512x128xf32>
    %58 = vector.extract_strided_slice %51 {offsets = [64, 0], sizes = [512, 128], strides = [1, 1]} : vector<768x128xbf16> to vector<512x128xbf16>
    %c1 = arith.constant 1 : index
    %c0_15 = arith.constant 0 : index
    %c0_16 = arith.constant 0 : index
    %59 = vector.load %arg5[%c1, %c0_15, %c0_16] : memref<5x128x128xbf16, #tpu.memory_space<vmem>>, vector<1x128x128xbf16>
    %60 = vector.shape_cast %59 : vector<1x128x128xbf16> to vector<128x128xbf16>
    %cst_17 = arith.constant dense<0.000000e+00> : vector<512x128xf32>
    %61 = tpu.matmul %58, %60, %cst_17 {dimension_numbers = #tpu.dot_dimension_numbers<[1], [0], [0], [1], [0, 0, 1, 1], [], []>} : vector<512x128xbf16>, vector<128x128xbf16>, vector<512x128xf32> -> vector<512x128xf32>
    %62 = arith.addf %57, %61 : vector<512x128xf32>
    %63 = vector.extract_strided_slice %51 {offsets = [128, 0], sizes = [512, 128], strides = [1, 1]} : vector<768x128xbf16> to vector<512x128xbf16>
    %c2 = arith.constant 2 : index
    %c0_18 = arith.constant 0 : index
    %c0_19 = arith.constant 0 : index
    %64 = vector.load %arg5[%c2, %c0_18, %c0_19] : memref<5x128x128xbf16, #tpu.memory_space<vmem>>, vector<1x128x128xbf16>
    %65 = vector.shape_cast %64 : vector<1x128x128xbf16> to vector<128x128xbf16>
    %cst_20 = arith.constant dense<0.000000e+00> : vector<512x128xf32>
    %66 = tpu.matmul %63, %65, %cst_20 {dimension_numbers = #tpu.dot_dimension_numbers<[1], [0], [0], [1], [0, 0, 1, 1], [], []>} : vector<512x128xbf16>, vector<128x128xbf16>, vector<512x128xf32> -> vector<512x128xf32>
    %67 = arith.addf %62, %66 : vector<512x128xf32>
    %68 = vector.extract_strided_slice %51 {offsets = [192, 0], sizes = [512, 128], strides = [1, 1]} : vector<768x128xbf16> to vector<512x128xbf16>
    %c3 = arith.constant 3 : index
    %c0_21 = arith.constant 0 : index
    %c0_22 = arith.constant 0 : index
    %69 = vector.load %arg5[%c3, %c0_21, %c0_22] : memref<5x128x128xbf16, #tpu.memory_space<vmem>>, vector<1x128x128xbf16>
    %70 = vector.shape_cast %69 : vector<1x128x128xbf16> to vector<128x128xbf16>
    %cst_23 = arith.constant dense<0.000000e+00> : vector<512x128xf32>
    %71 = tpu.matmul %68, %70, %cst_23 {dimension_numbers = #tpu.dot_dimension_numbers<[1], [0], [0], [1], [0, 0, 1, 1], [], []>} : vector<512x128xbf16>, vector<128x128xbf16>, vector<512x128xf32> -> vector<512x128xf32>
    %72 = arith.addf %67, %71 : vector<512x128xf32>
    %73 = vector.extract_strided_slice %51 {offsets = [256, 0], sizes = [512, 128], strides = [1, 1]} : vector<768x128xbf16> to vector<512x128xbf16>
    %c4 = arith.constant 4 : index
    %c0_24 = arith.constant 0 : index
    %c0_25 = arith.constant 0 : index
    %74 = vector.load %arg5[%c4, %c0_24, %c0_25] : memref<5x128x128xbf16, #tpu.memory_space<vmem>>, vector<1x128x128xbf16>
    %75 = vector.shape_cast %74 : vector<1x128x128xbf16> to vector<128x128xbf16>
    %cst_26 = arith.constant dense<0.000000e+00> : vector<512x128xf32>
    %76 = tpu.matmul %73, %75, %cst_26 {dimension_numbers = #tpu.dot_dimension_numbers<[1], [0], [0], [1], [0, 0, 1, 1], [], []>} : vector<512x128xbf16>, vector<128x128xbf16>, vector<512x128xf32> -> vector<512x128xf32>
    %77 = arith.addf %72, %76 : vector<512x128xf32>
    %c0_27 = arith.constant 0 : index
    %c0_28 = arith.constant 0 : index
    %78 = vector.load %arg6[%c0_27, %c0_28] : memref<1x128xf32, #tpu.memory_space<vmem>>, vector<1x128xf32>
    %79 = vector.broadcast %78 : vector<1x128xf32> to vector<512x128xf32>
    %80 = arith.addf %77, %79 : vector<512x128xf32>
    %cst_29 = arith.constant 0.000000e+00 : f32
    %81 = vector.broadcast %cst_29 : f32 to vector<512x128xf32>
    %82 = arith.maximumf %80, %81 : vector<512x128xf32>
    %83 = vector.extract_strided_slice %82 {offsets = [0, 0], sizes = [64, 128], strides = [1, 1]} : vector<512x128xf32> to vector<64x128xf32>
    %84 = vector.extract_strided_slice %82 {offsets = [64, 0], sizes = [64, 128], strides = [1, 1]} : vector<512x128xf32> to vector<64x128xf32>
    %85 = arith.maximumf %83, %84 : vector<64x128xf32>
    %86 = vector.extract_strided_slice %82 {offsets = [128, 0], sizes = [64, 128], strides = [1, 1]} : vector<512x128xf32> to vector<64x128xf32>
    %87 = vector.extract_strided_slice %82 {offsets = [192, 0], sizes = [64, 128], strides = [1, 1]} : vector<512x128xf32> to vector<64x128xf32>
    %88 = arith.maximumf %86, %87 : vector<64x128xf32>
    %89 = vector.extract_strided_slice %82 {offsets = [256, 0], sizes = [64, 128], strides = [1, 1]} : vector<512x128xf32> to vector<64x128xf32>
    %90 = vector.extract_strided_slice %82 {offsets = [320, 0], sizes = [64, 128], strides = [1, 1]} : vector<512x128xf32> to vector<64x128xf32>
    %91 = arith.maximumf %89, %90 : vector<64x128xf32>
    %92 = vector.extract_strided_slice %82 {offsets = [384, 0], sizes = [64, 128], strides = [1, 1]} : vector<512x128xf32> to vector<64x128xf32>
    %93 = vector.extract_strided_slice %82 {offsets = [448, 0], sizes = [64, 128], strides = [1, 1]} : vector<512x128xf32> to vector<64x128xf32>
    %94 = arith.maximumf %92, %93 : vector<64x128xf32>
    %95 = tpu.concatenate %85, %88, %91, %94 in 0 : vector<64x128xf32>, vector<64x128xf32>, vector<64x128xf32>, vector<64x128xf32> -> vector<256x128xf32>
    %c112_i32 = arith.constant 112 : i32
    %96 = tpu.dynamic_rotate %95 by %c112_i32 dim 1 : vector<256x128xf32>, i32 -> vector<256x128xf32>
    %97 = arith.maximumf %95, %96 : vector<256x128xf32>
    %98 = vector.extract_strided_slice %97 {offsets = [0, 0], sizes = [64, 128], strides = [1, 1]} : vector<256x128xf32> to vector<64x128xf32>
    %99 = vector.extract_strided_slice %97 {offsets = [64, 0], sizes = [64, 128], strides = [1, 1]} : vector<256x128xf32> to vector<64x128xf32>
    %100 = vector.extract_strided_slice %97 {offsets = [128, 0], sizes = [64, 128], strides = [1, 1]} : vector<256x128xf32> to vector<64x128xf32>
    %101 = vector.extract_strided_slice %97 {offsets = [192, 0], sizes = [64, 128], strides = [1, 1]} : vector<256x128xf32> to vector<64x128xf32>
    %102 = tpu.concatenate %98, %99, %100, %101 in 1 : vector<64x128xf32>, vector<64x128xf32>, vector<64x128xf32>, vector<64x128xf32> -> vector<64x512xf32>
    %103 = arith.truncf %102 : vector<64x512xf32> to vector<64x512xbf16>
    %c0_30 = arith.constant 0 : index
    %c0_31 = arith.constant 0 : index
    %104 = vector.load %arg7[%c0_30, %c0_31] : memref<512x128xbf16, #tpu.memory_space<vmem>>, vector<512x128xbf16>
    %cst_32 = arith.constant dense<0.000000e+00> : vector<64x128xf32>
    %105 = tpu.matmul %103, %104, %cst_32 {dimension_numbers = #tpu.dot_dimension_numbers<[1], [0], [0], [1], [0, 0, 1, 1], [], []>} : vector<64x512xbf16>, vector<512x128xbf16>, vector<64x128xf32> -> vector<64x128xf32>
    %c0_33 = arith.constant 0 : index
    %c0_34 = arith.constant 0 : index
    %106 = vector.load %arg8[%c0_33, %c0_34] : memref<1x128xf32, #tpu.memory_space<vmem>>, vector<1x128xf32>
    %107 = vector.broadcast %106 : vector<1x128xf32> to vector<64x128xf32>
    %108 = arith.addf %105, %107 : vector<64x128xf32>
    %cst_35 = arith.constant 0.000000e+00 : f32
    %109 = vector.broadcast %cst_35 : f32 to vector<64x128xf32>
    %110 = arith.maximumf %108, %109 : vector<64x128xf32>
    %111 = arith.truncf %110 : vector<64x128xf32> to vector<64x128xbf16>
    %c0_36 = arith.constant 0 : index
    %c0_37 = arith.constant 0 : index
    %112 = vector.load %arg9[%c0_36, %c0_37] : memref<128x128xbf16, #tpu.memory_space<vmem>>, vector<128x128xbf16>
    %cst_38 = arith.constant dense<0.000000e+00> : vector<64x128xf32>
    %113 = tpu.matmul %111, %112, %cst_38 {dimension_numbers = #tpu.dot_dimension_numbers<[1], [0], [0], [1], [0, 0, 1, 1], [], []>} : vector<64x128xbf16>, vector<128x128xbf16>, vector<64x128xf32> -> vector<64x128xf32>
    %c0_39 = arith.constant 0 : index
    %c0_40 = arith.constant 0 : index
    %114 = vector.load %arg10[%c0_39, %c0_40] : memref<1x128xf32, #tpu.memory_space<vmem>>, vector<1x128xf32>
    %115 = vector.broadcast %114 : vector<1x128xf32> to vector<64x128xf32>
    %116 = arith.addf %113, %115 : vector<64x128xf32>
    %cst_41 = arith.constant 0.000000e+00 : f32
    %117 = vector.broadcast %cst_41 : f32 to vector<64x128xf32>
    %118 = arith.maximumf %116, %117 : vector<64x128xf32>
    %c0_42 = arith.constant 0 : index
    %c0_43 = arith.constant 0 : index
    %119 = vector.load %arg11[%c0_42, %c0_43] : memref<64x128xf32, #tpu.memory_space<vmem>>, vector<64x128xf32>
    tpu.vector_store %arg11[%c0_42, %c0_43], %118 {strides = array<i32>} : memref<64x128xf32, #tpu.memory_space<vmem>>, vector<64x128xf32>,
    return
  }
  func.func @transform_0(%arg0: i32) -> (i32, i32, i32) {
    %c0_i32 = arith.constant 0 : i32
    %c0_i32_0 = arith.constant 0 : i32
    %c0_i32_1 = arith.constant 0 : i32
    return %arg0, %c0_i32, %c0_i32_0 : i32, i32, i32
  }
  func.func @transform_1(%arg0: i32) -> (i32, i32) {
    %c0_i32 = arith.constant 0 : i32
    %c0_i32_0 = arith.constant 0 : i32
    %c0_i32_1 = arith.constant 0 : i32
    return %c0_i32, %c0_i32_0 : i32, i32
  }
  func.func @transform_2(%arg0: i32) -> (i32, i32) {
    %c0_i32 = arith.constant 0 : i32
    %c0_i32_0 = arith.constant 0 : i32
    %c0_i32_1 = arith.constant 0 : i32
    return %c0_i32, %c0_i32_0 : i32, i32
  }
  func.func @transform_3(%arg0: i32) -> (i32, i32) {
    %c0_i32 = arith.constant 0 : i32
    %c0_i32_0 = arith.constant 0 : i32
    %c0_i32_1 = arith.constant 0 : i32
    return %c0_i32, %c0_i32_0 : i32, i32
  }
  func.func @transform_4(%arg0: i32) -> (i32, i32, i32) {
    %c0_i32 = arith.constant 0 : i32
    %c0_i32_0 = arith.constant 0 : i32
    %c0_i32_1 = arith.constant 0 : i32
    %c0_i32_2 = arith.constant 0 : i32
    return %c0_i32, %c0_i32_0, %c0_i32_1 : i32, i32, i32
  }
  func.func @transform_5(%arg0: i32) -> (i32, i32) {
    %c0_i32 = arith.constant 0 : i32
    %c0_i32_0 = arith.constant 0 : i32
    %c0_i32_1 = arith.constant 0 : i32
    return %c0_i32, %c0_i32_0 : i32, i32
  }
  func.func @transform_6(%arg0: i32) -> (i32, i32) {
    %c0_i32 = arith.constant 0 : i32
    %c0_i32_0 = arith.constant 0 : i32
    %c0_i32_1 = arith.constant 0 : i32
    return %c0_i32, %c0_i32_0 : i32, i32
  }
  func.func @transform_7(%arg0: i32) -> (i32, i32) {
    %c0_i32 = arith.constant 0 : i32
    %c0_i32_0 = arith.constant 0 : i32
    %c0_i32_1 = arith.constant 0 : i32
    return %c0_i32, %c0_i32_0 : i32, i32
  }
  func.func @transform_8(%arg0: i32) -> (i32, i32) {
    %c0_i32 = arith.constant 0 : i32
    %c0_i32_0 = arith.constant 0 : i32
    %c0_i32_1 = arith.constant 0 : i32
    return %c0_i32, %c0_i32_0 : i32, i32
  }
  func.func @transform_9(%arg0: i32) -> (i32, i32) {
    %c0_i32 = arith.constant 0 : i32
    %c0_i32_0 = arith.constant 0 : i32
    %c0_i32_1 = arith.constant 0 : i32
    return %c0_i32, %c0_i32_0 : i32, i32
  }
  func.func @transform_10(%arg0: i32) -> (i32, i32) {
    %c0_i32 = arith.constant 0 : i32
    %c0_i32_0 = arith.constant 0 : i32
    return %arg0, %c0_i32 : i32, i32
  }
}

</mosaic_0001>

<llo_original>
// kernel: tile.8
$region0: #{tile.8}
  #allocation0 [shape = 's32[1]{0}', space=sflag, size = 0x4, scoped, tag = 'scoped memory for tile.8']
  %s0 = inlined_call_operand.vmem [shape: f32[16], index: 0, kind: input, shape index: {}]
  %s1 = inlined_call_operand.vmem [shape: f32[8,16], index: 1, kind: output, shape index: {}]
  // Predicated region
  $region2: #{tile.8} parent=0 // pred_check
    _
  $region3: #{tile.8} parent=0 // pred_check_branch
    %3 = sbr.rel (0) target = $region5
  $region4: #{tile.8} parent=0 // pred_region
    _
  $region5: #{tile.8} parent=0 // pred_fallthru
    _
  %v4 = vld [vmem:[%s0] ss:$0 sm:$0xff]
  %5 = vst [vmem:[%s1] sm:$0xff] %v4

// kernel: tile.9
$region0: #{tile.9}
  %s0 = inlined_call_operand.vmem [shape: f32[8,16], index: 0, kind: input, shape index: {}]
  %s1 = inlined_call_operand.vmem [shape: f32[1,128], index: 1, kind: output, shape index: {}]
  $region1: #{tile.9} parent=0
    #allocation0 [shape = 'u8[4096]{0}', space=vmem, size = 0x1000, scoped, tag = 'scoped mem for output reshape']
    %v2 = vld [vmem:[%s0] sm:$0x1]
    %vm3 = vcmask 130048
    %4 = vst.msk [vmem:[#allocation0] sm:$0x1] %vm3, %v2
    %s5 = scalar_lea.vmem %s0, 7
    %v6 = vld [vmem:[%s5] sm:$0x1]
    %7 = vrot.lane.b32.xlu0 %v6, 112
    %v8 = vpop.permute.xlu0 %7
    %vm9 = vcmask 1048448
    %10 = vst.msk [vmem:[#allocation0] sm:$0x1] %vm9, %v8
    %s11 = scalar_lea.vmem %s0, 6
    %v12 = vld [vmem:[%s11] sm:$0x1]
    %13 = vrot.lane.b32.xlu0 %v12, 96
    %v14 = vpop.permute.xlu0 %13
    %vm15 = vcmask 917248
    %16 = vst.msk [vmem:[#allocation0] sm:$0x1] %vm15, %v14
    %s17 = scalar_lea.vmem %s0, 5
    %v18 = vld [vmem:[%s17] sm:$0x1]
    %19 = vrot.lane.b32.xlu0 %v18, 80
    %v20 = vpop.permute.xlu0 %19
    %vm21 = vcmask 786048
    %22 = vst.msk [vmem:[#allocation0] sm:$0x1] %vm21, %v20
    %s23 = scalar_lea.vmem %s0, 4
    %v24 = vld [vmem:[%s23] sm:$0x1]
    %25 = vrot.lane.b32.xlu0 %v24, 64
    %v26 = vpop.permute.xlu0 %25
    %vm27 = vcmask 654848
    %28 = vst.msk [vmem:[#allocation0] sm:$0x1] %vm27, %v26
    %s29 = scalar_lea.vmem %s0, 3
    %v30 = vld [vmem:[%s29] sm:$0x1]
    %31 = vrot.lane.b32.xlu0 %v30, 48
    %v32 = vpop.permute.xlu0 %31
    %vm33 = vcmask 523648
    %34 = vst.msk [vmem:[#allocation0] sm:$0x1] %vm33, %v32
    %s35 = scalar_lea.vmem %s0, 2
    %v36 = vld [vmem:[%s35] sm:$0x1]
    %37 = vrot.lane.b32.xlu0 %v36, 32
    %v38 = vpop.permute.xlu0 %37
    %vm39 = vcmask 392448
    %40 = vst.msk [vmem:[#allocation0] sm:$0x1] %vm39, %v38
    %s41 = scalar_lea.vmem %s0, 1
    %v42 = vld [vmem:[%s41] sm:$0x1]
    %43 = vrot.lane.b32.xlu0 %v42, 16
    %v44 = vpop.permute.xlu0 %43
    %vm45 = vcmask 261248
    %46 = vst.msk [vmem:[#allocation0] sm:$0x1] %vm45, %v44
    %s48 = sshllo.u32 0, 1
    %v50 = vld [vmem:[#allocation0] sm:%s48]
    %s51 = sshllo.u32 0, 1
    %52 = vst [vmem:[%s1] sm:%s51] %v50

// kernel: mnist_net_forward.1
$region0: #{mnist_net_forward.1}
  #allocation0 [shape = 'u32[]', space=smem, size = 0x4, offset = 0x4, fixed_abs, tag = 'smem constant byte address 0x4 - core index']
  #allocation1 [shape = 'u32[144,128]{1,0:T(1,128)}', space=vmem, size = 0x12000, scoped, tag = 'internal scratch']
  %s0 = inlined_call_operand.vmem [shape: bf16[2,1536,256], index: 0, kind: input, shape index: {}]
  %s1 = inlined_call_operand.vmem [shape: bf16[256,256], index: 1, kind: input, shape index: {}]
  %s2 = inlined_call_operand.vmem [shape: f32[1,256], index: 2, kind: input, shape index: {}]
  %s3 = inlined_call_operand.vmem [shape: bf16[256,128], index: 3, kind: input, shape index: {}]
  %s4 = inlined_call_operand.vmem [shape: bf16[5,128,128], index: 4, kind: input, shape index: {}]
  %s5 = inlined_call_operand.vmem [shape: f32[1,128], index: 5, kind: input, shape index: {}]
  %s6 = inlined_call_operand.vmem [shape: bf16[512,128], index: 6, kind: input, shape index: {}]
  %s7 = inlined_call_operand.vmem [shape: f32[1,128], index: 7, kind: input, shape index: {}]
  %s8 = inlined_call_operand.vmem [shape: bf16[128,128], index: 8, kind: input, shape index: {}]
  %s9 = inlined_call_operand.vmem [shape: f32[1,128], index: 9, kind: input, shape index: {}]
  %s10 = inlined_call_operand.vmem [shape: f32[128,128], index: 10, kind: output, shape index: {}]
  %s11 = sld [smem:[#allocation0]]
  $region73: #{mnist_net_forward.1} parent=0
    _
  %s13 = ssub.s32 1, %s11
  %s14 = scalar_select 0, %s13, %s11
  loop: start=0, step=1, limit=4
  $region2: #{mnist_net_forward.1} parent=0 // loop_pre_header
    _
  $region3: #{mnist_net_forward.1} parent=0 // loop_header
    %s16 = sphi 0, %s20
    %p17 = scmp.ge.s32.totalorder %s16, 4
    %s26 = sphi 0, %s28
    %s29 = sphi 0, %s26
    %s30 = sphi 0, %s29
    %s46 = sphi 0, %s30
    %s50 = sphi 0, %s50
    %s52 = sphi 0, %s50
    %s53 = sphi 0, %s52
    %s67 = sphi 0, %s53
    %s71 = sphi 0, %s71
    %s73 = sphi 0, %s71
    %s74 = sphi 0, %s73
    %s88 = sphi 0, %s74
    %s92 = sphi 0, %s92
    %s94 = sphi 0, %s92
    %s95 = sphi 0, %s94
    %s109 = sphi 0, %s95
    %s113 = sphi 0, %s113
    %s115 = sphi 0, %s113
    %s116 = sphi 0, %s115
    %s130 = sphi 0, %s116
    %s134 = sphi 0, %s134
    %s136 = sphi 0, %s134
    %s137 = sphi 0, %s136
    %s151 = sphi 0, %s137
    %s155 = sphi 0, %s155
    %s157 = sphi 0, %s155
    %s158 = sphi 0, %s157
    %s172 = sphi 0, %s158
    %s176 = sphi 0, %s176
    %s178 = sphi 0, %s176
    %s179 = sphi 0, %s178
    %s193 = sphi 0, %s179
    %s197 = sphi 0, %s197
    %s199 = sphi 0, %s197
    %s200 = sphi 0, %s199
    %s214 = sphi 0, %s200
    %s218 = sphi 0, %s218
    %s220 = sphi 0, %s218
    %s221 = sphi 0, %s220
    %s235 = sphi 0, %s221
    %s241 = sphi 0, %s243
    %s244 = sphi 0, %s241
    %s245 = sphi 0, %s244
    %s261 = sphi 0, %s245
  $region4: #{mnist_net_forward.1} parent=0 // loop_header_branch
    %19 = sbr.rel (%p17) target = $region8
  $region5: #{mnist_net_forward.1} parent=0 // loop_body
    %s21 = ssub.s32 %s16, 1
    %s22 = ssub.s32 %s16, 2
    %s23 = sadd.s32 %s16, 1
    %s24 = ssub.s32 %s16, %s23
    %p25 = scmp.eq.s32.totalorder %s24, 0
    %s27 = sadd.s32 %s26, 1
    %s28 = scalar_select %p25, %s26, %s27
    %p31 = pneg %p25
    %p32 = scmp.eq.s32.totalorder %s16, 1
    %p33 = por %p31, %p32
    %p34 = scmp.ne.s32.totalorder %s26, %s29
    %p35 = scmp.eq.s32.totalorder %s16, 0
    %p36 = por %p34, %p35
    %p37 = scmp.ne.s32.totalorder %s26, %s29
    %p38 = scmp.eq.s32.totalorder %s21, 1
    %p39 = por %p37, %p38
    %p40 = scmp.ne.s32.totalorder %s29, %s30
    %p41 = scmp.eq.s32.totalorder %s21, 0
    %p42 = por %p40, %p41
    %p43 = scmp.ne.s32.totalorder %s29, %s30
    %p44 = scmp.eq.s32.totalorder %s22, 1
    %p45 = por %p43, %p44
    %p47 = scmp.ne.s32.totalorder %s30, %s46
    %p48 = scmp.eq.s32.totalorder %s22, 0
    %p49 = por %p47, %p48
    %s51 = sadd.s32 %s50, 1
    %p54 = scmp.eq.s32.totalorder %s16, 1
    %p55 = scmp.ne.s32.totalorder %s50, %s52
    %p56 = scmp.eq.s32.totalorder %s16, 0
    %p57 = por %p55, %p56
    %p58 = scmp.ne.s32.totalorder %s50, %s52
    %p59 = scmp.eq.s32.totalorder %s21, 1
    %p60 = por %p58, %p59
    %p61 = scmp.ne.s32.totalorder %s52, %s53
    %p62 = scmp.eq.s32.totalorder %s21, 0
    %p63 = por %p61, %p62
    %p64 = scmp.ne.s32.totalorder %s52, %s53
    %p65 = scmp.eq.s32.totalorder %s22, 1
    %p66 = por %p64, %p65
    %p68 = scmp.ne.s32.totalorder %s53, %s67
    %p69 = scmp.eq.s32.totalorder %s22, 0
    %p70 = por %p68, %p69
    %s72 = sadd.s32 %s71, 1
    %p75 = scmp.eq.s32.totalorder %s16, 1
    %p76 = scmp.ne.s32.totalorder %s71, %s73
    %p77 = scmp.eq.s32.totalorder %s16, 0
    %p78 = por %p76, %p77
    %p79 = scmp.ne.s32.totalorder %s71, %s73
    %p80 = scmp.eq.s32.totalorder %s21, 1
    %p81 = por %p79, %p80
    %p82 = scmp.ne.s32.totalorder %s73, %s74
    %p83 = scmp.eq.s32.totalorder %s21, 0
    %p84 = por %p82, %p83
    %p85 = scmp.ne.s32.totalorder %s73, %s74
    %p86 = scmp.eq.s32.totalorder %s22, 1
    %p87 = por %p85, %p86
    %p89 = scmp.ne.s32.totalorder %s74, %s88
    %p90 = scmp.eq.s32.totalorder %s22, 0
    %p91 = por %p89, %p90
    %s93 = sadd.s32 %s92, 1
    %p96 = scmp.eq.s32.totalorder %s16, 1
    %p97 = scmp.ne.s32.totalorder %s92, %s94
    %p98 = scmp.eq.s32.totalorder %s16, 0
    %p99 = por %p97, %p98
    %p100 = scmp.ne.s32.totalorder %s92, %s94
    %p101 = scmp.eq.s32.totalorder %s21, 1
    %p102 = por %p100, %p101
    %p103 = scmp.ne.s32.totalorder %s94, %s95
    %p104 = scmp.eq.s32.totalorder %s21, 0
    %p105 = por %p103, %p104
    %p106 = scmp.ne.s32.totalorder %s94, %s95
    %p107 = scmp.eq.s32.totalorder %s22, 1
    %p108 = por %p106, %p107
    %p110 = scmp.ne.s32.totalorder %s95, %s109
    %p111 = scmp.eq.s32.totalorder %s22, 0
    %p112 = por %p110, %p111
    %s114 = sadd.s32 %s113, 1
    %p117 = scmp.eq.s32.totalorder %s16, 1
    %p118 = scmp.ne.s32.totalorder %s113, %s115
    %p119 = scmp.eq.s32.totalorder %s16, 0
    %p120 = por %p118, %p119
    %p121 = scmp.ne.s32.totalorder %s113, %s115
    %p122 = scmp.eq.s32.totalorder %s21, 1
    %p123 = por %p121, %p122
    %p124 = scmp.ne.s32.totalorder %s115, %s116
    %p125 = scmp.eq.s32.totalorder %s21, 0
    %p126 = por %p124, %p125
    %p127 = scmp.ne.s32.totalorder %s115, %s116
    %p128 = scmp.eq.s32.totalorder %s22, 1
    %p129 = por %p127, %p128
    %p131 = scmp.ne.s32.totalorder %s116, %s130
    %p132 = scmp.eq.s32.totalorder %s22, 0
    %p133 = por %p131, %p132
    %s135 = sadd.s32 %s134, 1
    %p138 = scmp.eq.s32.totalorder %s16, 1
    %p139 = scmp.ne.s32.totalorder %s134, %s136
    %p140 = scmp.eq.s32.totalorder %s16, 0
    %p141 = por %p139, %p140
    %p142 = scmp.ne.s32.totalorder %s134, %s136
    %p143 = scmp.eq.s32.totalorder %s21, 1
    %p144 = por %p142, %p143
    %p145 = scmp.ne.s32.totalorder %s136, %s137
    %p146 = scmp.eq.s32.totalorder %s21, 0
    %p147 = por %p145, %p146
    %p148 = scmp.ne.s32.totalorder %s136, %s137
    %p149 = scmp.eq.s32.totalorder %s22, 1
    %p150 = por %p148, %p149
    %p152 = scmp.ne.s32.totalorder %s137, %s151
    %p153 = scmp.eq.s32.totalorder %s22, 0
    %p154 = por %p152, %p153
    %s156 = sadd.s32 %s155, 1
    %p159 = scmp.eq.s32.totalorder %s16, 1
    %p160 = scmp.ne.s32.totalorder %s155, %s157
    %p161 = scmp.eq.s32.totalorder %s16, 0
    %p162 = por %p160, %p161
    %p163 = scmp.ne.s32.totalorder %s155, %s157
    %p164 = scmp.eq.s32.totalorder %s21, 1
    %p165 = por %p163, %p164
    %p166 = scmp.ne.s32.totalorder %s157, %s158
    %p167 = scmp.eq.s32.totalorder %s21, 0
    %p168 = por %p166, %p167
    %p169 = scmp.ne.s32.totalorder %s157, %s158
    %p170 = scmp.eq.s32.totalorder %s22, 1
    %p171 = por %p169, %p170
    %p173 = scmp.ne.s32.totalorder %s158, %s172
    %p174 = scmp.eq.s32.totalorder %s22, 0
    %p175 = por %p173, %p174
    %s177 = sadd.s32 %s176, 1
    %p180 = scmp.eq.s32.totalorder %s16, 1
    %p181 = scmp.ne.s32.totalorder %s176, %s178
    %p182 = scmp.eq.s32.totalorder %s16, 0
    %p183 = por %p181, %p182
    %p184 = scmp.ne.s32.totalorder %s176, %s178
    %p185 = scmp.eq.s32.totalorder %s21, 1
    %p186 = por %p184, %p185
    %p187 = scmp.ne.s32.totalorder %s178, %s179
    %p188 = scmp.eq.s32.totalorder %s21, 0
    %p189 = por %p187, %p188
    %p190 = scmp.ne.s32.totalorder %s178, %s179
    %p191 = scmp.eq.s32.totalorder %s22, 1
    %p192 = por %p190, %p191
    %p194 = scmp.ne.s32.totalorder %s179, %s193
    %p195 = scmp.eq.s32.totalorder %s22, 0
    %p196 = por %p194, %p195
    %s198 = sadd.s32 %s197, 1
    %p201 = scmp.eq.s32.totalorder %s16, 1
    %p202 = scmp.ne.s32.totalorder %s197, %s199
    %p203 = scmp.eq.s32.totalorder %s16, 0
    %p204 = por %p202, %p203
    %p205 = scmp.ne.s32.totalorder %s197, %s199
    %p206 = scmp.eq.s32.totalorder %s21, 1
    %p207 = por %p205, %p206
    %p208 = scmp.ne.s32.totalorder %s199, %s200
    %p209 = scmp.eq.s32.totalorder %s21, 0
    %p210 = por %p208, %p209
    %p211 = scmp.ne.s32.totalorder %s199, %s200
    %p212 = scmp.eq.s32.totalorder %s22, 1
    %p213 = por %p211, %p212
    %p215 = scmp.ne.s32.totalorder %s200, %s214
    %p216 = scmp.eq.s32.totalorder %s22, 0
    %p217 = por %p215, %p216
    %s219 = sadd.s32 %s218, 1
    %p222 = scmp.eq.s32.totalorder %s16, 1
    %p223 = scmp.ne.s32.totalorder %s218, %s220
    %p224 = scmp.eq.s32.totalorder %s16, 0
    %p225 = por %p223, %p224
    %p226 = scmp.ne.s32.totalorder %s218, %s220
    %p227 = scmp.eq.s32.totalorder %s21, 1
    %p228 = por %p226, %p227
    %p229 = scmp.ne.s32.totalorder %s220, %s221
    %p230 = scmp.eq.s32.totalorder %s21, 0
    %p231 = por %p229, %p230
    %p232 = scmp.ne.s32.totalorder %s220, %s221
    %p233 = scmp.eq.s32.totalorder %s22, 1
    %p234 = por %p232, %p233
    %p236 = scmp.ne.s32.totalorder %s221, %s235
    %p237 = scmp.eq.s32.totalorder %s22, 0
    %p238 = por %p236, %p237
    %s239 = ssub.s32 %s16, %s23
    %p240 = scmp.eq.s32.totalorder %s239, 0
    %s242 = sadd.s32 %s241, 1
    %s243 = scalar_select %p240, %s241, %s242
    %p246 = pneg %p240
    %p247 = scmp.eq.s32.totalorder %s16, 1
    %p248 = por %p246, %p247
    %p249 = scmp.ne.s32.totalorder %s241, %s244
    %p250 = scmp.eq.s32.totalorder %s16, 0
    %p251 = por %p249, %p250
    %p252 = scmp.ne.s32.totalorder %s241, %s244
    %p253 = scmp.eq.s32.totalorder %s21, 1
    %p254 = por %p252, %p253
    %p255 = scmp.ne.s32.totalorder %s244, %s245
    %p256 = scmp.eq.s32.totalorder %s21, 0
    %p257 = por %p255, %p256
    %p258 = scmp.ne.s32.totalorder %s244, %s245
    %p259 = scmp.eq.s32.totalorder %s22, 1
    %p260 = por %p258, %p259
    %p262 = scmp.ne.s32.totalorder %s245, %s261
    %p263 = scmp.eq.s32.totalorder %s22, 0
    %p264 = por %p262, %p263
    %p265 = scmp.le.s32.totalorder 1, %s16
    %p266 = scmp.lt.s32.totalorder %s16, 3
    %p267 = pnand %p265, %p266
    %p268 = pneg %p267
    // Predicated region
    $region9: #{mnist_net_forward.1} parent=5 // pred_check
      _
    $region10: #{mnist_net_forward.1} parent=5 // pred_check_branch
      %270 = sbr.rel (%p267) target = $region12
    $region11: #{mnist_net_forward.1} parent=5 // pred_region
      %s271 = ssub.s32 %s16, 1
      // Predicated region
      $region13: #{mnist_net_forward.1} parent=11 // pred_check
        %p272 = pneg %p63
      $region14: #{mnist_net_forward.1} parent=11 // pred_check_branch
        %274 = sbr.rel (%p272) target = $region16
      $region15: #{mnist_net_forward.1} parent=11 // pred_region
        _
      $region16: #{mnist_net_forward.1} parent=11 // pred_fallthru
        _
      // Predicated region
      $region17: #{mnist_net_forward.1} parent=11 // pred_check
        %p275 = pneg %p84
      $region18: #{mnist_net_forward.1} parent=11 // pred_check_branch
        %277 = sbr.rel (%p275) target = $region20
      $region19: #{mnist_net_forward.1} parent=11 // pred_region
        _
      $region20: #{mnist_net_forward.1} parent=11 // pred_fallthru
        _
      // Predicated region
      $region21: #{mnist_net_forward.1} parent=11 // pred_check
        %p278 = pneg %p105
      $region22: #{mnist_net_forward.1} parent=11 // pred_check_branch
        %280 = sbr.rel (%p278) target = $region24
      $region23: #{mnist_net_forward.1} parent=11 // pred_region
        _
      $region24: #{mnist_net_forward.1} parent=11 // pred_fallthru
        _
      // Predicated region
      $region25: #{mnist_net_forward.1} parent=11 // pred_check
        %p281 = pneg %p126
      $region26: #{mnist_net_forward.1} parent=11 // pred_check_branch
        %283 = sbr.rel (%p281) target = $region28
      $region27: #{mnist_net_forward.1} parent=11 // pred_region
        _
      $region28: #{mnist_net_forward.1} parent=11 // pred_fallthru
        _
      // Predicated region
      $region29: #{mnist_net_forward.1} parent=11 // pred_check
        %p284 = pneg %p147
      $region30: #{mnist_net_forward.1} parent=11 // pred_check_branch
        %286 = sbr.rel (%p284) target = $region32
      $region31: #{mnist_net_forward.1} parent=11 // pred_region
        _
      $region32: #{mnist_net_forward.1} parent=11 // pred_fallthru
        _
      // Predicated region
      $region33: #{mnist_net_forward.1} parent=11 // pred_check
        %p287 = pneg %p168
      $region34: #{mnist_net_forward.1} parent=11 // pred_check_branch
        %289 = sbr.rel (%p287) target = $region36
      $region35: #{mnist_net_forward.1} parent=11 // pred_region
        _
      $region36: #{mnist_net_forward.1} parent=11 // pred_fallthru
        _
      // Predicated region
      $region37: #{mnist_net_forward.1} parent=11 // pred_check
        %p290 = pneg %p189
      $region38: #{mnist_net_forward.1} parent=11 // pred_check_branch
        %292 = sbr.rel (%p290) target = $region40
      $region39: #{mnist_net_forward.1} parent=11 // pred_region
        _
      $region40: #{mnist_net_forward.1} parent=11 // pred_fallthru
        _
      // Predicated region
      $region41: #{mnist_net_forward.1} parent=11 // pred_check
        %p293 = pneg %p210
      $region42: #{mnist_net_forward.1} parent=11 // pred_check_branch
        %295 = sbr.rel (%p293) target = $region44
      $region43: #{mnist_net_forward.1} parent=11 // pred_region
        _
      $region44: #{mnist_net_forward.1} parent=11 // pred_fallthru
        _
      // Predicated region
      $region45: #{mnist_net_forward.1} parent=11 // pred_check
        %p296 = pneg %p231
      $region46: #{mnist_net_forward.1} parent=11 // pred_check_branch
        %298 = sbr.rel (%p296) target = $region48
      $region47: #{mnist_net_forward.1} parent=11 // pred_region
        _
      $region48: #{mnist_net_forward.1} parent=11 // pred_fallthru
        _
    $region12: #{mnist_net_forward.1} parent=5 // pred_fallthru
      _
    %p299 = scmp.lt.s32.totalorder %s16, 2
    // Predicated region
    $region49: #{mnist_net_forward.1} parent=5 // pred_check
      %p300 = pneg %p299
    $region50: #{mnist_net_forward.1} parent=5 // pred_check_branch
      %302 = sbr.rel (%p300) target = $region52
    $region51: #{mnist_net_forward.1} parent=5 // pred_region
      // Predicated region
      $region53: #{mnist_net_forward.1} parent=51 // pred_check
        %p303 = pneg %p36
      $region54: #{mnist_net_forward.1} parent=51 // pred_check_branch
        %305 = sbr.rel (%p303) target = $region56
      $region55: #{mnist_net_forward.1} parent=51 // pred_region
        %p306 = scmp.lt.s32.totalorder %s16, 1
        %s307 = scalar_select %p306, %s16, 1
        %s308 = smul.addr %s307, 384
        %s309 = smul.addr %s308, 4
        %s310 = scalar_lea.vmem %s0, %s309
      $region56: #{mnist_net_forward.1} parent=51 // pred_fallthru
        _
    $region52: #{mnist_net_forward.1} parent=5 // pred_fallthru
      _
    %p311 = scmp.le.s32.totalorder 1, %s16
    %p312 = scmp.lt.s32.totalorder %s16, 3
    %p313 = pnand %p311, %p312
    %p314 = pneg %p313
    // Predicated region
    $region57: #{mnist_net_forward.1} parent=5 // pred_check
      _
    $region58: #{mnist_net_forward.1} parent=5 // pred_check_branch
      %316 = sbr.rel (%p313) target = $region60
    $region59: #{mnist_net_forward.1} parent=5 // pred_region
      %s317 = ssub.s32 %s16, 1
      %p318 = scmp.lt.s32.totalorder %s21, 1
      %s319 = scalar_select %p318, %s21, 1
      %s320 = smul.addr %s319, 384
      %s321 = smul.addr %s320, 4
      %s322 = scalar_lea.vmem %s0, %s321
      %p323 = pneg %p42
      %p324 = pneg %p39
      %p325 = pneg %p63
      %p326 = pneg %p60
      %p327 = pneg %p84
      %p328 = pneg %p81
      %p329 = pneg %p105
      %p330 = pneg %p102
      %p331 = pneg %p126
      %p332 = pneg %p123
      %p333 = pneg %p147
      %p334 = pneg %p144
      %p335 = pneg %p168
      %p336 = pneg %p165
      %p337 = pneg %p189
      %p338 = pneg %p186
      %p339 = pneg %p210
      %p340 = pneg %p207
      %p341 = pneg %p231
      %p342 = pneg %p228
      %p343 = pneg %p257
      %p344 = pneg %p254
      %s345 = smul.u32 8, %s21
      %p346 = scmp.lt.s32.totalorder %s345, 15
      %s347 = scalar_select %p346, %s345, 15
      %s348 = smul.addr %s347, 8
      %s349 = scalar_lea.vmem %s10, %s348
      %p350 = scmp.lt.s32.totalorder %s21, 1
      %s351 = scalar_select %p350, %s21, 1
      %s352 = smul.addr %s351, 384
      %s353 = smul.addr %s352, 4
      %s354 = scalar_lea.vmem %s0, %s353
      %s355 = smul.u32 8, %s21
      %p356 = scmp.lt.s32.totalorder %s355, 15
      %s357 = scalar_select %p356, %s355, 15
      %s358 = smul.addr %s357, 8
      %s359 = scalar_lea.vmem %s10, %s358
      %s360 = smul.u32 8, %s21
      %v362 = vld [vmem:[%s354] sm:$0xff]
      %v363 = vld [vmem:[%s354 + $0x8] sm:$0xff]
      %v364 = vld [vmem:[%s354 + $0x10] sm:$0xff]
      %v365 = vld [vmem:[%s354 + $0x18] sm:$0xff]
      %v366 = vld [vmem:[%s354 + $0x20] sm:$0xff]
      %v367 = vld [vmem:[%s354 + $0x28] sm:$0xff]
      %v368 = vld [vmem:[%s354 + $0x30] sm:$0xff]
      %v369 = vld [vmem:[%s354 + $0x38] sm:$0xff]
      %v370 = vld [vmem:[%s354 + $0x40] sm:$0xff]
      %v371 = vld [vmem:[%s354 + $0x48] sm:$0xff]
      %v372 = vld [vmem:[%s354 + $0x50] sm:$0xff]
      %v373 = vld [vmem:[%s354 + $0x58] sm:$0xff]
      %v374 = vld [vmem:[%s354 + $0x60] sm:$0xff]
      %v375 = vld [vmem:[%s354 + $0x68] sm:$0xff]
      %v376 = vld [vmem:[%s354 + $0x70] sm:$0xff]
      %v377 = vld [vmem:[%s354 + $0x78] sm:$0xff]
      %v378 = vld [vmem:[%s354 + $0x80] sm:$0xff]
      %v379 = vld [vmem:[%s354 + $0x88] sm:$0xff]
      %v380 = vld [vmem:[%s354 + $0x90] sm:$0xff]
      %v381 = vld [vmem:[%s354 + $0x98] sm:$0xff]
      %v382 = vld [vmem:[%s354 + $0xa0] sm:$0xff]
      %v383 = vld [vmem:[%s354 + $0xa8] sm:$0xff]
      %v384 = vld [vmem:[%s354 + $0xb0] sm:$0xff]
      %v385 = vld [vmem:[%s354 + $0xb8] sm:$0xff]
      %v386 = vld [vmem:[%s354 + $0xc0] sm:$0xff]
      %v387 = vld [vmem:[%s354 + $0xc8] sm:$0xff]
      %v388 = vld [vmem:[%s354 + $0xd0] sm:$0xff]
      %v389 = vld [vmem:[%s354 + $0xd8] sm:$0xff]
      %v390 = vld [vmem:[%s354 + $0xe0] sm:$0xff]
      %v391 = vld [vmem:[%s354 + $0xe8] sm:$0xff]
      %v392 = vld [vmem:[%s354 + $0xf0] sm:$0xff]
      %v393 = vld [vmem:[%s354 + $0xf8] sm:$0xff]
      %v394 = vld [vmem:[%s354 + $0x100] sm:$0xff]
      %v395 = vld [vmem:[%s354 + $0x108] sm:$0xff]
      %v396 = vld [vmem:[%s354 + $0x110] sm:$0xff]
      %v397 = vld [vmem:[%s354 + $0x118] sm:$0xff]
      %v398 = vld [vmem:[%s354 + $0x120] sm:$0xff]
      %v399 = vld [vmem:[%s354 + $0x128] sm:$0xff]
      %v400 = vld [vmem:[%s354 + $0x130] sm:$0xff]
      %v401 = vld [vmem:[%s354 + $0x138] sm:$0xff]
      %v402 = vld [vmem:[%s354 + $0x140] sm:$0xff]
      %v403 = vld [vmem:[%s354 + $0x148] sm:$0xff]
      %v404 = vld [vmem:[%s354 + $0x150] sm:$0xff]
      %v405 = vld [vmem:[%s354 + $0x158] sm:$0xff]
      %v406 = vld [vmem:[%s354 + $0x160] sm:$0xff]
      %v407 = vld [vmem:[%s354 + $0x168] sm:$0xff]
      %v408 = vld [vmem:[%s354 + $0x170] sm:$0xff]
      %v409 = vld [vmem:[%s354 + $0x178] sm:$0xff]
      %v410 = vld [vmem:[%s354 + $0x180] sm:$0xff]
      %v411 = vld [vmem:[%s354 + $0x188] sm:$0xff]
      %v412 = vld [vmem:[%s354 + $0x190] sm:$0xff]
      %v413 = vld [vmem:[%s354 + $0x198] sm:$0xff]
      %v414 = vld [vmem:[%s354 + $0x1a0] sm:$0xff]
      %v415 = vld [vmem:[%s354 + $0x1a8] sm:$0xff]
      %v416 = vld [vmem:[%s354 + $0x1b0] sm:$0xff]
      %v417 = vld [vmem:[%s354 + $0x1b8] sm:$0xff]
      %v418 = vld [vmem:[%s354 + $0x1c0] sm:$0xff]
      %v419 = vld [vmem:[%s354 + $0x1c8] sm:$0xff]
      %v420 = vld [vmem:[%s354 + $0x1d0] sm:$0xff]
      %v421 = vld [vmem:[%s354 + $0x1d8] sm:$0xff]
      %v422 = vld [vmem:[%s354 + $0x1e0] sm:$0xff]
      %v423 = vld [vmem:[%s354 + $0x1e8] sm:$0xff]
      %v424 = vld [vmem:[%s354 + $0x1f0] sm:$0xff]
      %v425 = vld [vmem:[%s354 + $0x1f8] sm:$0xff]
      %v426 = vld [vmem:[%s354 + $0x200] sm:$0xff]
      %v427 = vld [vmem:[%s354 + $0x208] sm:$0xff]
      %v428 = vld [vmem:[%s354 + $0x210] sm:$0xff]
      %v429 = vld [vmem:[%s354 + $0x218] sm:$0xff]
      %v430 = vld [vmem:[%s354 + $0x220] sm:$0xff]
      %v431 = vld [vmem:[%s354 + $0x228] sm:$0xff]
      %v432 = vld [vmem:[%s354 + $0x230] sm:$0xff]
      %v433 = vld [vmem:[%s354 + $0x238] sm:$0xff]
      %v434 = vld [vmem:[%s354 + $0x240] sm:$0xff]
      %v435 = vld [vmem:[%s354 + $0x248] sm:$0xff]
      %v436 = vld [vmem:[%s354 + $0x250] sm:$0xff]
      %v437 = vld [vmem:[%s354 + $0x258] sm:$0xff]
      %v438 = vld [vmem:[%s354 + $0x260] sm:$0xff]
      %v439 = vld [vmem:[%s354 + $0x268] sm:$0xff]
      %v440 = vld [vmem:[%s354 + $0x270] sm:$0xff]
      %v441 = vld [vmem:[%s354 + $0x278] sm:$0xff]
      %v442 = vld [vmem:[%s354 + $0x280] sm:$0xff]
      %v443 = vld [vmem:[%s354 + $0x288] sm:$0xff]
      %v444 = vld [vmem:[%s354 + $0x290] sm:$0xff]
      %v445 = vld [vmem:[%s354 + $0x298] sm:$0xff]
      %v446 = vld [vmem:[%s354 + $0x2a0] sm:$0xff]
      %v447 = vld [vmem:[%s354 + $0x2a8] sm:$0xff]
      %v448 = vld [vmem:[%s354 + $0x2b0] sm:$0xff]
      %v449 = vld [vmem:[%s354 + $0x2b8] sm:$0xff]
      %v450 = vld [vmem:[%s354 + $0x2c0] sm:$0xff]
      %v451 = vld [vmem:[%s354 + $0x2c8] sm:$0xff]
      %v452 = vld [vmem:[%s354 + $0x2d0] sm:$0xff]
      %v453 = vld [vmem:[%s354 + $0x2d8] sm:$0xff]
      %v454 = vld [vmem:[%s354 + $0x2e0] sm:$0xff]
      %v455 = vld [vmem:[%s354 + $0x2e8] sm:$0xff]
      %v456 = vld [vmem:[%s354 + $0x2f0] sm:$0xff]
      %v457 = vld [vmem:[%s354 + $0x2f8] sm:$0xff]
      %v458 = vld [vmem:[%s354 + $0x300] sm:$0xff]
      %v459 = vld [vmem:[%s354 + $0x308] sm:$0xff]
      %v460 = vld [vmem:[%s354 + $0x310] sm:$0xff]
      %v461 = vld [vmem:[%s354 + $0x318] sm:$0xff]
      %v462 = vld [vmem:[%s354 + $0x320] sm:$0xff]
      %v463 = vld [vmem:[%s354 + $0x328] sm:$0xff]
      %v464 = vld [vmem:[%s354 + $0x330] sm:$0xff]
      %v465 = vld [vmem:[%s354 + $0x338] sm:$0xff]
      %v466 = vld [vmem:[%s354 + $0x340] sm:$0xff]
      %v467 = vld [vmem:[%s354 + $0x348] sm:$0xff]
      %v468 = vld [vmem:[%s354 + $0x350] sm:$0xff]
      %v469 = vld [vmem:[%s354 + $0x358] sm:$0xff]
      %v470 = vld [vmem:[%s354 + $0x360] sm:$0xff]
      %v471 = vld [vmem:[%s354 + $0x368] sm:$0xff]
      %v472 = vld [vmem:[%s354 + $0x370] sm:$0xff]
      %v473 = vld [vmem:[%s354 + $0x378] sm:$0xff]
      %v474 = vld [vmem:[%s354 + $0x380] sm:$0xff]
      %v475 = vld [vmem:[%s354 + $0x388] sm:$0xff]
      %v476 = vld [vmem:[%s354 + $0x390] sm:$0xff]
      %v477 = vld [vmem:[%s354 + $0x398] sm:$0xff]
      %v478 = vld [vmem:[%s354 + $0x3a0] sm:$0xff]
      %v479 = vld [vmem:[%s354 + $0x3a8] sm:$0xff]
      %v480 = vld [vmem:[%s354 + $0x3b0] sm:$0xff]
      %v481 = vld [vmem:[%s354 + $0x3b8] sm:$0xff]
      %v482 = vld [vmem:[%s354 + $0x3c0] sm:$0xff]
      %v483 = vld [vmem:[%s354 + $0x3c8] sm:$0xff]
      %v484 = vld [vmem:[%s354 + $0x3d0] sm:$0xff]
      %v485 = vld [vmem:[%s354 + $0x3d8] sm:$0xff]
      %v486 = vld [vmem:[%s354 + $0x3e0] sm:$0xff]
      %v487 = vld [vmem:[%s354 + $0x3e8] sm:$0xff]
      %v488 = vld [vmem:[%s354 + $0x3f0] sm:$0xff]
      %v489 = vld [vmem:[%s354 + $0x3f8] sm:$0xff]
      %v490 = vld [vmem:[%s354 + $0x400] sm:$0xff]
      %v491 = vld [vmem:[%s354 + $0x408] sm:$0xff]
      %v492 = vld [vmem:[%s354 + $0x410] sm:$0xff]
      %v493 = vld [vmem:[%s354 + $0x418] sm:$0xff]
      %v494 = vld [vmem:[%s354 + $0x420] sm:$0xff]
      %v495 = vld [vmem:[%s354 + $0x428] sm:$0xff]
      %v496 = vld [vmem:[%s354 + $0x430] sm:$0xff]
      %v497 = vld [vmem:[%s354 + $0x438] sm:$0xff]
      %v498 = vld [vmem:[%s354 + $0x440] sm:$0xff]
      %v499 = vld [vmem:[%s354 + $0x448] sm:$0xff]
      %v500 = vld [vmem:[%s354 + $0x450] sm:$0xff]
      %v501 = vld [vmem:[%s354 + $0x458] sm:$0xff]
      %v502 = vld [vmem:[%s354 + $0x460] sm:$0xff]
      %v503 = vld [vmem:[%s354 + $0x468] sm:$0xff]
      %v504 = vld [vmem:[%s354 + $0x470] sm:$0xff]
      %v505 = vld [vmem:[%s354 + $0x478] sm:$0xff]
      %v506 = vld [vmem:[%s354 + $0x480] sm:$0xff]
      %v507 = vld [vmem:[%s354 + $0x488] sm:$0xff]
      %v508 = vld [vmem:[%s354 + $0x490] sm:$0xff]
      %v509 = vld [vmem:[%s354 + $0x498] sm:$0xff]
      %v510 = vld [vmem:[%s354 + $0x4a0] sm:$0xff]
      %v511 = vld [vmem:[%s354 + $0x4a8] sm:$0xff]
      %v512 = vld [vmem:[%s354 + $0x4b0] sm:$0xff]
      %v513 = vld [vmem:[%s354 + $0x4b8] sm:$0xff]
      %v514 = vld [vmem:[%s354 + $0x4c0] sm:$0xff]
      %v515 = vld [vmem:[%s354 + $0x4c8] sm:$0xff]
      %v516 = vld [vmem:[%s354 + $0x4d0] sm:$0xff]
      %v517 = vld [vmem:[%s354 + $0x4d8] sm:$0xff]
      %v518 = vld [vmem:[%s354 + $0x4e0] sm:$0xff]
      %v519 = vld [vmem:[%s354 + $0x4e8] sm:$0xff]
      %v520 = vld [vmem:[%s354 + $0x4f0] sm:$0xff]
      %v521 = vld [vmem:[%s354 + $0x4f8] sm:$0xff]
      %v522 = vld [vmem:[%s354 + $0x500] sm:$0xff]
      %v523 = vld [vmem:[%s354 + $0x508] sm:$0xff]
      %v524 = vld [vmem:[%s354 + $0x510] sm:$0xff]
      %v525 = vld [vmem:[%s354 + $0x518] sm:$0xff]
      %v526 = vld [vmem:[%s354 + $0x520] sm:$0xff]
      %v527 = vld [vmem:[%s354 + $0x528] sm:$0xff]
      %v528 = vld [vmem:[%s354 + $0x530] sm:$0xff]
      %v529 = vld [vmem:[%s354 + $0x538] sm:$0xff]
      %v530 = vld [vmem:[%s354 + $0x540] sm:$0xff]
      %v531 = vld [vmem:[%s354 + $0x548] sm:$0xff]
      %v532 = vld [vmem:[%s354 + $0x550] sm:$0xff]
      %v533 = vld [vmem:[%s354 + $0x558] sm:$0xff]
      %v534 = vld [vmem:[%s354 + $0x560] sm:$0xff]
      %v535 = vld [vmem:[%s354 + $0x568] sm:$0xff]
      %v536 = vld [vmem:[%s354 + $0x570] sm:$0xff]
      %v537 = vld [vmem:[%s354 + $0x578] sm:$0xff]
      %v538 = vld [vmem:[%s354 + $0x580] sm:$0xff]
      %v539 = vld [vmem:[%s354 + $0x588] sm:$0xff]
      %v540 = vld [vmem:[%s354 + $0x590] sm:$0xff]
      %v541 = vld [vmem:[%s354 + $0x598] sm:$0xff]
      %v542 = vld [vmem:[%s354 + $0x5a0] sm:$0xff]
      %v543 = vld [vmem:[%s354 + $0x5a8] sm:$0xff]
      %v544 = vld [vmem:[%s354 + $0x5b0] sm:$0xff]
      %v545 = vld [vmem:[%s354 + $0x5b8] sm:$0xff]
      %v546 = vld [vmem:[%s354 + $0x5c0] sm:$0xff]
      %v547 = vld [vmem:[%s354 + $0x5c8] sm:$0xff]
      %v548 = vld [vmem:[%s354 + $0x5d0] sm:$0xff]
      %v549 = vld [vmem:[%s354 + $0x5d8] sm:$0xff]
      %v550 = vld [vmem:[%s354 + $0x5e0] sm:$0xff]
      %v551 = vld [vmem:[%s354 + $0x5e8] sm:$0xff]
      %v552 = vld [vmem:[%s354 + $0x5f0] sm:$0xff]
      %v553 = vld [vmem:[%s354 + $0x5f8] sm:$0xff]
      %v554 = vld [vmem:[%s1] sm:$0xff]
      %v555 = vld [vmem:[%s1 + $0x8] sm:$0xff]
      %v556 = vld [vmem:[%s1 + $0x10] sm:$0xff]
      %v557 = vld [vmem:[%s1 + $0x18] sm:$0xff]
      %v558 = vld [vmem:[%s1 + $0x20] sm:$0xff]
      %v559 = vld [vmem:[%s1 + $0x28] sm:$0xff]
      %v560 = vld [vmem:[%s1 + $0x30] sm:$0xff]
      %v561 = vld [vmem:[%s1 + $0x38] sm:$0xff]
      %v562 = vld [vmem:[%s1 + $0x40] sm:$0xff]
      %v563 = vld [vmem:[%s1 + $0x48] sm:$0xff]
      %v564 = vld [vmem:[%s1 + $0x50] sm:$0xff]
      %v565 = vld [vmem:[%s1 + $0x58] sm:$0xff]
      %v566 = vld [vmem:[%s1 + $0x60] sm:$0xff]
      %v567 = vld [vmem:[%s1 + $0x68] sm:$0xff]
      %v568 = vld [vmem:[%s1 + $0x70] sm:$0xff]
      %v569 = vld [vmem:[%s1 + $0x78] sm:$0xff]
      %v570 = vld [vmem:[%s1 + $0x80] sm:$0xff]
      %v571 = vld [vmem:[%s1 + $0x88] sm:$0xff]
      %v572 = vld [vmem:[%s1 + $0x90] sm:$0xff]
      %v573 = vld [vmem:[%s1 + $0x98] sm:$0xff]
      %v574 = vld [vmem:[%s1 + $0xa0] sm:$0xff]
      %v575 = vld [vmem:[%s1 + $0xa8] sm:$0xff]
      %v576 = vld [vmem:[%s1 + $0xb0] sm:$0xff]
      %v577 = vld [vmem:[%s1 + $0xb8] sm:$0xff]
      %v578 = vld [vmem:[%s1 + $0xc0] sm:$0xff]
      %v579 = vld [vmem:[%s1 + $0xc8] sm:$0xff]
      %v580 = vld [vmem:[%s1 + $0xd0] sm:$0xff]
      %v581 = vld [vmem:[%s1 + $0xd8] sm:$0xff]
      %v582 = vld [vmem:[%s1 + $0xe0] sm:$0xff]
      %v583 = vld [vmem:[%s1 + $0xe8] sm:$0xff]
      %v584 = vld [vmem:[%s1 + $0xf0] sm:$0xff]
      %v585 = vld [vmem:[%s1 + $0xf8] sm:$0xff]
      %v586 = vld [vmem:[%s2] sm:$0x3]
      %v588 = vlaneseq
      %v589 = vshrl.u32 %v588, 7
      %v590 = vsub.s32 0, %v589
      %v591 = vrot.slane %v586, %v590
      %v592 = vlaneseq
      %v593 = vshrl.u32 %v592, 7
      %v594 = vsub.s32 1, %v593
      %v595 = vrot.slane %v586, %v594
      %v790 = vunpack.c.l.b16 %v362
      %v791 = vunpack.c.h.b16 %v362
      %v792 = vunpack.c.l.b16 %v363
      %v793 = vunpack.c.h.b16 %v363
      %v794 = vunpack.c.l.b16 %v364
      %v795 = vunpack.c.h.b16 %v364
      %v796 = vunpack.c.l.b16 %v365
      %v797 = vunpack.c.h.b16 %v365
      %v798 = vunpack.c.l.b16 %v366
      %v799 = vunpack.c.h.b16 %v366
      %v800 = vunpack.c.l.b16 %v367
      %v801 = vunpack.c.h.b16 %v367
      %v802 = vunpack.c.l.b16 %v368
      %v803 = vunpack.c.h.b16 %v368
      %v804 = vunpack.c.l.b16 %v369
      %v805 = vunpack.c.h.b16 %v369
      %v806 = vunpack.c.l.b16 %v370
      %v807 = vunpack.c.h.b16 %v370
      %v808 = vunpack.c.l.b16 %v371
      %v809 = vunpack.c.h.b16 %v371
      %v810 = vunpack.c.l.b16 %v372
      %v811 = vunpack.c.h.b16 %v372
      %v812 = vunpack.c.l.b16 %v373
      %v813 = vunpack.c.h.b16 %v373
      %v814 = vunpack.c.l.b16 %v374
      %v815 = vunpack.c.h.b16 %v374
      %v816 = vunpack.c.l.b16 %v375
      %v817 = vunpack.c.h.b16 %v375
      %v818 = vunpack.c.l.b16 %v376
      %v819 = vunpack.c.h.b16 %v376
      %v820 = vunpack.c.l.b16 %v377
      %v821 = vunpack.c.h.b16 %v377
      %v822 = vunpack.c.l.b16 %v378
      %v823 = vunpack.c.h.b16 %v378
      %v824 = vunpack.c.l.b16 %v379
      %v825 = vunpack.c.h.b16 %v379
      %v826 = vunpack.c.l.b16 %v380
      %v827 = vunpack.c.h.b16 %v380
      %v828 = vunpack.c.l.b16 %v381
      %v829 = vunpack.c.h.b16 %v381
      %v830 = vunpack.c.l.b16 %v382
      %v831 = vunpack.c.h.b16 %v382
      %v832 = vunpack.c.l.b16 %v383
      %v833 = vunpack.c.h.b16 %v383
      %v834 = vunpack.c.l.b16 %v384
      %v835 = vunpack.c.h.b16 %v384
      %v836 = vunpack.c.l.b16 %v385
      %v837 = vunpack.c.h.b16 %v385
      %v838 = vunpack.c.l.b16 %v386
      %v839 = vunpack.c.h.b16 %v386
      %v840 = vunpack.c.l.b16 %v387
      %v841 = vunpack.c.h.b16 %v387
      %v842 = vunpack.c.l.b16 %v388
      %v843 = vunpack.c.h.b16 %v388
      %v844 = vunpack.c.l.b16 %v389
      %v845 = vunpack.c.h.b16 %v389
      %v846 = vunpack.c.l.b16 %v390
      %v847 = vunpack.c.h.b16 %v390
      %v848 = vunpack.c.l.b16 %v391
      %v849 = vunpack.c.h.b16 %v391
      %v850 = vunpack.c.l.b16 %v392
      %v851 = vunpack.c.h.b16 %v392
      %v852 = vunpack.c.l.b16 %v393
      %v853 = vunpack.c.h.b16 %v393
      %v854 = vunpack.c.l.b16 %v394
      %v855 = vunpack.c.h.b16 %v394
      %v856 = vunpack.c.l.b16 %v395
      %v857 = vunpack.c.h.b16 %v395
      %v858 = vunpack.c.l.b16 %v396
      %v859 = vunpack.c.h.b16 %v396
      %v860 = vunpack.c.l.b16 %v397
      %v861 = vunpack.c.h.b16 %v397
      %v862 = vunpack.c.l.b16 %v398
      %v863 = vunpack.c.h.b16 %v398
      %v864 = vunpack.c.l.b16 %v399
      %v865 = vunpack.c.h.b16 %v399
      %v866 = vunpack.c.l.b16 %v400
      %v867 = vunpack.c.h.b16 %v400
      %v868 = vunpack.c.l.b16 %v401
      %v869 = vunpack.c.h.b16 %v401
      %v870 = vunpack.c.l.b16 %v402
      %v871 = vunpack.c.h.b16 %v402
      %v872 = vunpack.c.l.b16 %v403
      %v873 = vunpack.c.h.b16 %v403
      %v874 = vunpack.c.l.b16 %v404
      %v875 = vunpack.c.h.b16 %v404
      %v876 = vunpack.c.l.b16 %v405
      %v877 = vunpack.c.h.b16 %v405
      %v878 = vunpack.c.l.b16 %v406
      %v879 = vunpack.c.h.b16 %v406
      %v880 = vunpack.c.l.b16 %v407
      %v881 = vunpack.c.h.b16 %v407
      %v882 = vunpack.c.l.b16 %v408
      %v883 = vunpack.c.h.b16 %v408
      %v884 = vunpack.c.l.b16 %v409
      %v885 = vunpack.c.h.b16 %v409
      %v886 = vunpack.c.l.b16 %v410
      %v887 = vunpack.c.h.b16 %v410
      %v888 = vunpack.c.l.b16 %v411
      %v889 = vunpack.c.h.b16 %v411
      %v890 = vunpack.c.l.b16 %v412
      %v891 = vunpack.c.h.b16 %v412
      %v892 = vunpack.c.l.b16 %v413
      %v893 = vunpack.c.h.b16 %v413
      %v894 = vunpack.c.l.b16 %v414
      %v895 = vunpack.c.h.b16 %v414
      %v896 = vunpack.c.l.b16 %v415
      %v897 = vunpack.c.h.b16 %v415
      %v898 = vunpack.c.l.b16 %v416
      %v899 = vunpack.c.h.b16 %v416
      %v900 = vunpack.c.l.b16 %v417
      %v901 = vunpack.c.h.b16 %v417
      %v902 = vunpack.c.l.b16 %v418
      %v903 = vunpack.c.h.b16 %v418
      %v904 = vunpack.c.l.b16 %v419
      %v905 = vunpack.c.h.b16 %v419
      %v906 = vunpack.c.l.b16 %v420
      %v907 = vunpack.c.h.b16 %v420
      %v908 = vunpack.c.l.b16 %v421
      %v909 = vunpack.c.h.b16 %v421
      %v910 = vunpack.c.l.b16 %v422
      %v911 = vunpack.c.h.b16 %v422
      %v912 = vunpack.c.l.b16 %v423
      %v913 = vunpack.c.h.b16 %v423
      %v914 = vunpack.c.l.b16 %v424
      %v915 = vunpack.c.h.b16 %v424
      %v916 = vunpack.c.l.b16 %v425
      %v917 = vunpack.c.h.b16 %v425
      %v918 = vunpack.c.l.b16 %v426
      %v919 = vunpack.c.h.b16 %v426
      %v920 = vunpack.c.l.b16 %v427
      %v921 = vunpack.c.h.b16 %v427
      %v922 = vunpack.c.l.b16 %v428
      %v923 = vunpack.c.h.b16 %v428
      %v924 = vunpack.c.l.b16 %v429
      %v925 = vunpack.c.h.b16 %v429
      %v926 = vunpack.c.l.b16 %v430
      %v927 = vunpack.c.h.b16 %v430
      %v928 = vunpack.c.l.b16 %v431
      %v929 = vunpack.c.h.b16 %v431
      %v930 = vunpack.c.l.b16 %v432
      %v931 = vunpack.c.h.b16 %v432
      %v932 = vunpack.c.l.b16 %v433
      %v933 = vunpack.c.h.b16 %v433
      %v934 = vunpack.c.l.b16 %v434
      %v935 = vunpack.c.h.b16 %v434
      %v936 = vunpack.c.l.b16 %v435
      %v937 = vunpack.c.h.b16 %v435
      %v938 = vunpack.c.l.b16 %v436
      %v939 = vunpack.c.h.b16 %v436
      %v940 = vunpack.c.l.b16 %v437
      %v941 = vunpack.c.h.b16 %v437
      %v942 = vunpack.c.l.b16 %v438
      %v943 = vunpack.c.h.b16 %v438
      %v944 = vunpack.c.l.b16 %v439
      %v945 = vunpack.c.h.b16 %v439
      %v946 = vunpack.c.l.b16 %v440
      %v947 = vunpack.c.h.b16 %v440
      %v948 = vunpack.c.l.b16 %v441
      %v949 = vunpack.c.h.b16 %v441
      %v950 = vunpack.c.l.b16 %v442
      %v951 = vunpack.c.h.b16 %v442
      %v952 = vunpack.c.l.b16 %v443
      %v953 = vunpack.c.h.b16 %v443
      %v954 = vunpack.c.l.b16 %v444
      %v955 = vunpack.c.h.b16 %v444
      %v956 = vunpack.c.l.b16 %v445
      %v957 = vunpack.c.h.b16 %v445
      %v958 = vunpack.c.l.b16 %v446
      %v959 = vunpack.c.h.b16 %v446
      %v960 = vunpack.c.l.b16 %v447
      %v961 = vunpack.c.h.b16 %v447
      %v962 = vunpack.c.l.b16 %v448
      %v963 = vunpack.c.h.b16 %v448
      %v964 = vunpack.c.l.b16 %v449
      %v965 = vunpack.c.h.b16 %v449
      %v966 = vunpack.c.l.b16 %v450
      %v967 = vunpack.c.h.b16 %v450
      %v968 = vunpack.c.l.b16 %v451
      %v969 = vunpack.c.h.b16 %v451
      %v970 = vunpack.c.l.b16 %v452
      %v971 = vunpack.c.h.b16 %v452
      %v972 = vunpack.c.l.b16 %v453
      %v973 = vunpack.c.h.b16 %v453
      %v974 = vunpack.c.l.b16 %v454
      %v975 = vunpack.c.h.b16 %v454
      %v976 = vunpack.c.l.b16 %v455
      %v977 = vunpack.c.h.b16 %v455
      %v978 = vunpack.c.l.b16 %v456
      %v979 = vunpack.c.h.b16 %v456
      %v980 = vunpack.c.l.b16 %v457
      %v981 = vunpack.c.h.b16 %v457
      %v982 = vunpack.c.l.b16 %v458
      %v983 = vunpack.c.h.b16 %v458
      %v984 = vunpack.c.l.b16 %v459
      %v985 = vunpack.c.h.b16 %v459
      %v986 = vunpack.c.l.b16 %v460
      %v987 = vunpack.c.h.b16 %v460
      %v988 = vunpack.c.l.b16 %v461
      %v989 = vunpack.c.h.b16 %v461
      %v990 = vunpack.c.l.b16 %v462
      %v991 = vunpack.c.h.b16 %v462
      %v992 = vunpack.c.l.b16 %v463
      %v993 = vunpack.c.h.b16 %v463
      %v994 = vunpack.c.l.b16 %v464
      %v995 = vunpack.c.h.b16 %v464
      %v996 = vunpack.c.l.b16 %v465
      %v997 = vunpack.c.h.b16 %v465
      %v998 = vunpack.c.l.b16 %v466
      %v999 = vunpack.c.h.b16 %v466
      %v1000 = vunpack.c.l.b16 %v467
      %v1001 = vunpack.c.h.b16 %v467
      %v1002 = vunpack.c.l.b16 %v468
      %v1003 = vunpack.c.h.b16 %v468
      %v1004 = vunpack.c.l.b16 %v469
      %v1005 = vunpack.c.h.b16 %v469
      %v1006 = vunpack.c.l.b16 %v470
      %v1007 = vunpack.c.h.b16 %v470
      %v1008 = vunpack.c.l.b16 %v471
      %v1009 = vunpack.c.h.b16 %v471
      %v1010 = vunpack.c.l.b16 %v472
      %v1011 = vunpack.c.h.b16 %v472
      %v1012 = vunpack.c.l.b16 %v473
      %v1013 = vunpack.c.h.b16 %v473
      %v1014 = vunpack.c.l.b16 %v474
      %v1015 = vunpack.c.h.b16 %v474
      %v1016 = vunpack.c.l.b16 %v475
      %v1017 = vunpack.c.h.b16 %v475
      %v1018 = vunpack.c.l.b16 %v476
      %v1019 = vunpack.c.h.b16 %v476
      %v1020 = vunpack.c.l.b16 %v477
      %v1021 = vunpack.c.h.b16 %v477
      %v1022 = vunpack.c.l.b16 %v478
      %v1023 = vunpack.c.h.b16 %v478
      %v1024 = vunpack.c.l.b16 %v479
      %v1025 = vunpack.c.h.b16 %v479
      %v1026 = vunpack.c.l.b16 %v480
      %v1027 = vunpack.c.h.b16 %v480
      %v1028 = vunpack.c.l.b16 %v481
      %v1029 = vunpack.c.h.b16 %v481
      %v1030 = vunpack.c.l.b16 %v482
      %v1031 = vunpack.c.h.b16 %v482
      %v1032 = vunpack.c.l.b16 %v483
      %v1033 = vunpack.c.h.b16 %v483
      %v1034 = vunpack.c.l.b16 %v484
      %v1035 = vunpack.c.h.b16 %v484
      %v1036 = vunpack.c.l.b16 %v485
      %v1037 = vunpack.c.h.b16 %v485
      %v1038 = vunpack.c.l.b16 %v486
      %v1039 = vunpack.c.h.b16 %v486
      %v1040 = vunpack.c.l.b16 %v487
      %v1041 = vunpack.c.h.b16 %v487
      %v1042 = vunpack.c.l.b16 %v488
      %v1043 = vunpack.c.h.b16 %v488
      %v1044 = vunpack.c.l.b16 %v489
      %v1045 = vunpack.c.h.b16 %v489
      %v1046 = vunpack.c.l.b16 %v490
      %v1047 = vunpack.c.h.b16 %v490
      %v1048 = vunpack.c.l.b16 %v491
      %v1049 = vunpack.c.h.b16 %v491
      %v1050 = vunpack.c.l.b16 %v492
      %v1051 = vunpack.c.h.b16 %v492
      %v1052 = vunpack.c.l.b16 %v493
      %v1053 = vunpack.c.h.b16 %v493
      %v1054 = vunpack.c.l.b16 %v494
      %v1055 = vunpack.c.h.b16 %v494
      %v1056 = vunpack.c.l.b16 %v495
      %v1057 = vunpack.c.h.b16 %v495
      %v1058 = vunpack.c.l.b16 %v496
      %v1059 = vunpack.c.h.b16 %v496
      %v1060 = vunpack.c.l.b16 %v497
      %v1061 = vunpack.c.h.b16 %v497
      %v1062 = vunpack.c.l.b16 %v498
      %v1063 = vunpack.c.h.b16 %v498
      %v1064 = vunpack.c.l.b16 %v499
      %v1065 = vunpack.c.h.b16 %v499
      %v1066 = vunpack.c.l.b16 %v500
      %v1067 = vunpack.c.h.b16 %v500
      %v1068 = vunpack.c.l.b16 %v501
      %v1069 = vunpack.c.h.b16 %v501
      %v1070 = vunpack.c.l.b16 %v502
      %v1071 = vunpack.c.h.b16 %v502
      %v1072 = vunpack.c.l.b16 %v503
      %v1073 = vunpack.c.h.b16 %v503
      %v1074 = vunpack.c.l.b16 %v504
      %v1075 = vunpack.c.h.b16 %v504
      %v1076 = vunpack.c.l.b16 %v505
      %v1077 = vunpack.c.h.b16 %v505
      %v1078 = vunpack.c.l.b16 %v506
      %v1079 = vunpack.c.h.b16 %v506
      %v1080 = vunpack.c.l.b16 %v507
      %v1081 = vunpack.c.h.b16 %v507
      %v1082 = vunpack.c.l.b16 %v508
      %v1083 = vunpack.c.h.b16 %v508
      %v1084 = vunpack.c.l.b16 %v509
      %v1085 = vunpack.c.h.b16 %v509
      %v1086 = vunpack.c.l.b16 %v510
      %v1087 = vunpack.c.h.b16 %v510
      %v1088 = vunpack.c.l.b16 %v511
      %v1089 = vunpack.c.h.b16 %v511
      %v1090 = vunpack.c.l.b16 %v512
      %v1091 = vunpack.c.h.b16 %v512
      %v1092 = vunpack.c.l.b16 %v513
      %v1093 = vunpack.c.h.b16 %v513
      %v1094 = vunpack.c.l.b16 %v514
      %v1095 = vunpack.c.h.b16 %v514
      %v1096 = vunpack.c.l.b16 %v515
      %v1097 = vunpack.c.h.b16 %v515
      %v1098 = vunpack.c.l.b16 %v516
      %v1099 = vunpack.c.h.b16 %v516
      %v1100 = vunpack.c.l.b16 %v517
      %v1101 = vunpack.c.h.b16 %v517
      %v1102 = vunpack.c.l.b16 %v518
      %v1103 = vunpack.c.h.b16 %v518
      %v1104 = vunpack.c.l.b16 %v519
      %v1105 = vunpack.c.h.b16 %v519
      %v1106 = vunpack.c.l.b16 %v520
      %v1107 = vunpack.c.h.b16 %v520
      %v1108 = vunpack.c.l.b16 %v521
      %v1109 = vunpack.c.h.b16 %v521
      %v1110 = vunpack.c.l.b16 %v522
      %v1111 = vunpack.c.h.b16 %v522
      %v1112 = vunpack.c.l.b16 %v523
      %v1113 = vunpack.c.h.b16 %v523
      %v1114 = vunpack.c.l.b16 %v524
      %v1115 = vunpack.c.h.b16 %v524
      %v1116 = vunpack.c.l.b16 %v525
      %v1117 = vunpack.c.h.b16 %v525
      %v1118 = vunpack.c.l.b16 %v526
      %v1119 = vunpack.c.h.b16 %v526
      %v1120 = vunpack.c.l.b16 %v527
      %v1121 = vunpack.c.h.b16 %v527
      %v1122 = vunpack.c.l.b16 %v528
      %v1123 = vunpack.c.h.b16 %v528
      %v1124 = vunpack.c.l.b16 %v529
      %v1125 = vunpack.c.h.b16 %v529
      %v1126 = vunpack.c.l.b16 %v530
      %v1127 = vunpack.c.h.b16 %v530
      %v1128 = vunpack.c.l.b16 %v531
      %v1129 = vunpack.c.h.b16 %v531
      %v1130 = vunpack.c.l.b16 %v532
      %v1131 = vunpack.c.h.b16 %v532
      %v1132 = vunpack.c.l.b16 %v533
      %v1133 = vunpack.c.h.b16 %v533
      %v1134 = vunpack.c.l.b16 %v534
      %v1135 = vunpack.c.h.b16 %v534
      %v1136 = vunpack.c.l.b16 %v535
      %v1137 = vunpack.c.h.b16 %v535
      %v1138 = vunpack.c.l.b16 %v536
      %v1139 = vunpack.c.h.b16 %v536
      %v1140 = vunpack.c.l.b16 %v537
      %v1141 = vunpack.c.h.b16 %v537
      %v1142 = vunpack.c.l.b16 %v538
      %v1143 = vunpack.c.h.b16 %v538
      %v1144 = vunpack.c.l.b16 %v539
      %v1145 = vunpack.c.h.b16 %v539
      %v1146 = vunpack.c.l.b16 %v540
      %v1147 = vunpack.c.h.b16 %v540
      %v1148 = vunpack.c.l.b16 %v541
      %v1149 = vunpack.c.h.b16 %v541
      %v1150 = vunpack.c.l.b16 %v542
      %v1151 = vunpack.c.h.b16 %v542
      %v1152 = vunpack.c.l.b16 %v543
      %v1153 = vunpack.c.h.b16 %v543
      %v1154 = vunpack.c.l.b16 %v544
      %v1155 = vunpack.c.h.b16 %v544
      %v1156 = vunpack.c.l.b16 %v545
      %v1157 = vunpack.c.h.b16 %v545
      %v1158 = vunpack.c.l.b16 %v546
      %v1159 = vunpack.c.h.b16 %v546
      %v1160 = vunpack.c.l.b16 %v547
      %v1161 = vunpack.c.h.b16 %v547
      %v1162 = vunpack.c.l.b16 %v548
      %v1163 = vunpack.c.h.b16 %v548
      %v1164 = vunpack.c.l.b16 %v549
      %v1165 = vunpack.c.h.b16 %v549
      %v1166 = vunpack.c.l.b16 %v550
      %v1167 = vunpack.c.h.b16 %v550
      %v1168 = vunpack.c.l.b16 %v551
      %v1169 = vunpack.c.h.b16 %v551
      %v1170 = vunpack.c.l.b16 %v552
      %v1171 = vunpack.c.h.b16 %v552
      %v1172 = vunpack.c.l.b16 %v553
      %v1173 = vunpack.c.h.b16 %v553
      %v1174 = vpack.c.b16 %v792, %v790
      %v1175 = vpack.c.b16 %v793, %v791
      %v1176 = vpack.c.b16 %v796, %v794
      %v1177 = vpack.c.b16 %v797, %v795
      %v1178 = vpack.c.b16 %v800, %v798
      %v1179 = vpack.c.b16 %v801, %v799
      %v1180 = vpack.c.b16 %v804, %v802
      %v1181 = vpack.c.b16 %v805, %v803
      %v1182 = vpack.c.b16 %v808, %v806
      %v1183 = vpack.c.b16 %v809, %v807
      %v1184 = vpack.c.b16 %v812, %v810
      %v1185 = vpack.c.b16 %v813, %v811
      %v1186 = vpack.c.b16 %v816, %v814
      %v1187 = vpack.c.b16 %v817, %v815
      %v1188 = vpack.c.b16 %v820, %v818
      %v1189 = vpack.c.b16 %v821, %v819
      %v1190 = vpack.c.b16 %v824, %v822
      %v1191 = vpack.c.b16 %v825, %v823
      %v1192 = vpack.c.b16 %v828, %v826
      %v1193 = vpack.c.b16 %v829, %v827
      %v1194 = vpack.c.b16 %v832, %v830
      %v1195 = vpack.c.b16 %v833, %v831
      %v1196 = vpack.c.b16 %v836, %v834
      %v1197 = vpack.c.b16 %v837, %v835
      %v1198 = vpack.c.b16 %v840, %v838
      %v1199 = vpack.c.b16 %v841, %v839
      %v1200 = vpack.c.b16 %v844, %v842
      %v1201 = vpack.c.b16 %v845, %v843
      %v1202 = vpack.c.b16 %v848, %v846
      %v1203 = vpack.c.b16 %v849, %v847
      %v1204 = vpack.c.b16 %v852, %v850
      %v1205 = vpack.c.b16 %v853, %v851
      %v1206 = vpack.c.b16 %v856, %v854
      %v1207 = vpack.c.b16 %v857, %v855
      %v1208 = vpack.c.b16 %v860, %v858
      %v1209 = vpack.c.b16 %v861, %v859
      %v1210 = vpack.c.b16 %v864, %v862
      %v1211 = vpack.c.b16 %v865, %v863
      %v1212 = vpack.c.b16 %v868, %v866
      %v1213 = vpack.c.b16 %v869, %v867
      %v1214 = vpack.c.b16 %v872, %v870
      %v1215 = vpack.c.b16 %v873, %v871
      %v1216 = vpack.c.b16 %v876, %v874
      %v1217 = vpack.c.b16 %v877, %v875
      %v1218 = vpack.c.b16 %v880, %v878
      %v1219 = vpack.c.b16 %v881, %v879
      %v1220 = vpack.c.b16 %v884, %v882
      %v1221 = vpack.c.b16 %v885, %v883
      %v1222 = vpack.c.b16 %v888, %v886
      %v1223 = vpack.c.b16 %v889, %v887
      %v1224 = vpack.c.b16 %v892, %v890
      %v1225 = vpack.c.b16 %v893, %v891
      %v1226 = vpack.c.b16 %v896, %v894
      %v1227 = vpack.c.b16 %v897, %v895
      %v1228 = vpack.c.b16 %v900, %v898
      %v1229 = vpack.c.b16 %v901, %v899
      %v1230 = vpack.c.b16 %v904, %v902
      %v1231 = vpack.c.b16 %v905, %v903
      %v1232 = vpack.c.b16 %v908, %v906
      %v1233 = vpack.c.b16 %v909, %v907
      %v1234 = vpack.c.b16 %v912, %v910
      %v1235 = vpack.c.b16 %v913, %v911
      %v1236 = vpack.c.b16 %v916, %v914
      %v1237 = vpack.c.b16 %v917, %v915
      %v1238 = vpack.c.b16 %v920, %v918
      %v1239 = vpack.c.b16 %v921, %v919
      %v1240 = vpack.c.b16 %v924, %v922
      %v1241 = vpack.c.b16 %v925, %v923
      %v1242 = vpack.c.b16 %v928, %v926
      %v1243 = vpack.c.b16 %v929, %v927
      %v1244 = vpack.c.b16 %v932, %v930
      %v1245 = vpack.c.b16 %v933, %v931
      %v1246 = vpack.c.b16 %v936, %v934
      %v1247 = vpack.c.b16 %v937, %v935
      %v1248 = vpack.c.b16 %v940, %v938
      %v1249 = vpack.c.b16 %v941, %v939
      %v1250 = vpack.c.b16 %v944, %v942
      %v1251 = vpack.c.b16 %v945, %v943
      %v1252 = vpack.c.b16 %v948, %v946
      %v1253 = vpack.c.b16 %v949, %v947
      %v1254 = vpack.c.b16 %v952, %v950
      %v1255 = vpack.c.b16 %v953, %v951
      %v1256 = vpack.c.b16 %v956, %v954
      %v1257 = vpack.c.b16 %v957, %v955
      %v1258 = vpack.c.b16 %v960, %v958
      %v1259 = vpack.c.b16 %v961, %v959
      %v1260 = vpack.c.b16 %v964, %v962
      %v1261 = vpack.c.b16 %v965, %v963
      %v1262 = vpack.c.b16 %v968, %v966
      %v1263 = vpack.c.b16 %v969, %v967
      %v1264 = vpack.c.b16 %v972, %v970
      %v1265 = vpack.c.b16 %v973, %v971
      %v1266 = vpack.c.b16 %v976, %v974
      %v1267 = vpack.c.b16 %v977, %v975
      %v1268 = vpack.c.b16 %v980, %v978
      %v1269 = vpack.c.b16 %v981, %v979
      %v1270 = vpack.c.b16 %v984, %v982
      %v1271 = vpack.c.b16 %v985, %v983
      %v1272 = vpack.c.b16 %v988, %v986
      %v1273 = vpack.c.b16 %v989, %v987
      %v1274 = vpack.c.b16 %v992, %v990
      %v1275 = vpack.c.b16 %v993, %v991
      %v1276 = vpack.c.b16 %v996, %v994
      %v1277 = vpack.c.b16 %v997, %v995
      %v1278 = vpack.c.b16 %v1000, %v998
      %v1279 = vpack.c.b16 %v1001, %v999
      %v1280 = vpack.c.b16 %v1004, %v1002
      %v1281 = vpack.c.b16 %v1005, %v1003
      %v1282 = vpack.c.b16 %v1008, %v1006
      %v1283 = vpack.c.b16 %v1009, %v1007
      %v1284 = vpack.c.b16 %v1012, %v1010
      %v1285 = vpack.c.b16 %v1013, %v1011
      %v1286 = vpack.c.b16 %v1016, %v1014
      %v1287 = vpack.c.b16 %v1017, %v1015
      %v1288 = vpack.c.b16 %v1020, %v1018
      %v1289 = vpack.c.b16 %v1021, %v1019
      %v1290 = vpack.c.b16 %v1024, %v1022
      %v1291 = vpack.c.b16 %v1025, %v1023
      %v1292 = vpack.c.b16 %v1028, %v1026
      %v1293 = vpack.c.b16 %v1029, %v1027
      %v1294 = vpack.c.b16 %v1032, %v1030
      %v1295 = vpack.c.b16 %v1033, %v1031
      %v1296 = vpack.c.b16 %v1036, %v1034
      %v1297 = vpack.c.b16 %v1037, %v1035
      %v1298 = vpack.c.b16 %v1040, %v1038
      %v1299 = vpack.c.b16 %v1041, %v1039
      %v1300 = vpack.c.b16 %v1044, %v1042
      %v1301 = vpack.c.b16 %v1045, %v1043
      %v1302 = vpack.c.b16 %v1048, %v1046
      %v1303 = vpack.c.b16 %v1049, %v1047
      %v1304 = vpack.c.b16 %v1052, %v1050
      %v1305 = vpack.c.b16 %v1053, %v1051
      %v1306 = vpack.c.b16 %v1056, %v1054
      %v1307 = vpack.c.b16 %v1057, %v1055
      %v1308 = vpack.c.b16 %v1060, %v1058
      %v1309 = vpack.c.b16 %v1061, %v1059
      %v1310 = vpack.c.b16 %v1064, %v1062
      %v1311 = vpack.c.b16 %v1065, %v1063
      %v1312 = vpack.c.b16 %v1068, %v1066
      %v1313 = vpack.c.b16 %v1069, %v1067
      %v1314 = vpack.c.b16 %v1072, %v1070
      %v1315 = vpack.c.b16 %v1073, %v1071
      %v1316 = vpack.c.b16 %v1076, %v1074
      %v1317 = vpack.c.b16 %v1077, %v1075
      %v1318 = vpack.c.b16 %v1080, %v1078
      %v1319 = vpack.c.b16 %v1081, %v1079
      %v1320 = vpack.c.b16 %v1084, %v1082
      %v1321 = vpack.c.b16 %v1085, %v1083
      %v1322 = vpack.c.b16 %v1088, %v1086
      %v1323 = vpack.c.b16 %v1089, %v1087
      %v1324 = vpack.c.b16 %v1092, %v1090
      %v1325 = vpack.c.b16 %v1093, %v1091
      %v1326 = vpack.c.b16 %v1096, %v1094
      %v1327 = vpack.c.b16 %v1097, %v1095
      %v1328 = vpack.c.b16 %v1100, %v1098
      %v1329 = vpack.c.b16 %v1101, %v1099
      %v1330 = vpack.c.b16 %v1104, %v1102
      %v1331 = vpack.c.b16 %v1105, %v1103
      %v1332 = vpack.c.b16 %v1108, %v1106
      %v1333 = vpack.c.b16 %v1109, %v1107
      %v1334 = vpack.c.b16 %v1112, %v1110
      %v1335 = vpack.c.b16 %v1113, %v1111
      %v1336 = vpack.c.b16 %v1116, %v1114
      %v1337 = vpack.c.b16 %v1117, %v1115
      %v1338 = vpack.c.b16 %v1120, %v1118
      %v1339 = vpack.c.b16 %v1121, %v1119
      %v1340 = vpack.c.b16 %v1124, %v1122
      %v1341 = vpack.c.b16 %v1125, %v1123
      %v1342 = vpack.c.b16 %v1128, %v1126
      %v1343 = vpack.c.b16 %v1129, %v1127
      %v1344 = vpack.c.b16 %v1132, %v1130
      %v1345 = vpack.c.b16 %v1133, %v1131
      %v1346 = vpack.c.b16 %v1136, %v1134
      %v1347 = vpack.c.b16 %v1137, %v1135
      %v1348 = vpack.c.b16 %v1140, %v1138
      %v1349 = vpack.c.b16 %v1141, %v1139
      %v1350 = vpack.c.b16 %v1144, %v1142
      %v1351 = vpack.c.b16 %v1145, %v1143
      %v1352 = vpack.c.b16 %v1148, %v1146
      %v1353 = vpack.c.b16 %v1149, %v1147
      %v1354 = vpack.c.b16 %v1152, %v1150
      %v1355 = vpack.c.b16 %v1153, %v1151
      %v1356 = vpack.c.b16 %v1156, %v1154
      %v1357 = vpack.c.b16 %v1157, %v1155
      %v1358 = vpack.c.b16 %v1160, %v1158
      %v1359 = vpack.c.b16 %v1161, %v1159
      %v1360 = vpack.c.b16 %v1164, %v1162
      %v1361 = vpack.c.b16 %v1165, %v1163
      %v1362 = vpack.c.b16 %v1168, %v1166
      %v1363 = vpack.c.b16 %v1169, %v1167
      %v1364 = vpack.c.b16 %v1172, %v1170
      %v1365 = vpack.c.b16 %v1173, %v1171
      %v1590 = vunpack.c.l.b16 %v554
      %v1591 = vunpack.c.h.b16 %v554
      %v1592 = vunpack.c.l.b16 %v555
      %v1593 = vunpack.c.h.b16 %v555
      %v1594 = vunpack.c.l.b16 %v556
      %v1595 = vunpack.c.h.b16 %v556
      %v1596 = vunpack.c.l.b16 %v557
      %v1597 = vunpack.c.h.b16 %v557
      %v1598 = vunpack.c.l.b16 %v558
      %v1599 = vunpack.c.h.b16 %v558
      %v1600 = vunpack.c.l.b16 %v559
      %v1601 = vunpack.c.h.b16 %v559
      %v1602 = vunpack.c.l.b16 %v560
      %v1603 = vunpack.c.h.b16 %v560
      %v1604 = vunpack.c.l.b16 %v561
      %v1605 = vunpack.c.h.b16 %v561
      %v1606 = vunpack.c.l.b16 %v562
      %v1607 = vunpack.c.h.b16 %v562
      %v1608 = vunpack.c.l.b16 %v563
      %v1609 = vunpack.c.h.b16 %v563
      %v1610 = vunpack.c.l.b16 %v564
      %v1611 = vunpack.c.h.b16 %v564
      %v1612 = vunpack.c.l.b16 %v565
      %v1613 = vunpack.c.h.b16 %v565
      %v1614 = vunpack.c.l.b16 %v566
      %v1615 = vunpack.c.h.b16 %v566
      %v1616 = vunpack.c.l.b16 %v567
      %v1617 = vunpack.c.h.b16 %v567
      %v1618 = vunpack.c.l.b16 %v568
      %v1619 = vunpack.c.h.b16 %v568
      %v1620 = vunpack.c.l.b16 %v569
      %v1621 = vunpack.c.h.b16 %v569
      %v1622 = vunpack.c.l.b16 %v570
      %v1623 = vunpack.c.h.b16 %v570
      %v1624 = vunpack.c.l.b16 %v571
      %v1625 = vunpack.c.h.b16 %v571
      %v1626 = vunpack.c.l.b16 %v572
      %v1627 = vunpack.c.h.b16 %v572
      %v1628 = vunpack.c.l.b16 %v573
      %v1629 = vunpack.c.h.b16 %v573
      %v1630 = vunpack.c.l.b16 %v574
      %v1631 = vunpack.c.h.b16 %v574
      %v1632 = vunpack.c.l.b16 %v575
      %v1633 = vunpack.c.h.b16 %v575
      %v1634 = vunpack.c.l.b16 %v576
      %v1635 = vunpack.c.h.b16 %v576
      %v1636 = vunpack.c.l.b16 %v577
      %v1637 = vunpack.c.h.b16 %v577
      %v1638 = vunpack.c.l.b16 %v578
      %v1639 = vunpack.c.h.b16 %v578
      %v1640 = vunpack.c.l.b16 %v579
      %v1641 = vunpack.c.h.b16 %v579
      %v1642 = vunpack.c.l.b16 %v580
      %v1643 = vunpack.c.h.b16 %v580
      %v1644 = vunpack.c.l.b16 %v581
      %v1645 = vunpack.c.h.b16 %v581
      %v1646 = vunpack.c.l.b16 %v582
      %v1647 = vunpack.c.h.b16 %v582
      %v1648 = vunpack.c.l.b16 %v583
      %v1649 = vunpack.c.h.b16 %v583
      %v1650 = vunpack.c.l.b16 %v584
      %v1651 = vunpack.c.h.b16 %v584
      %v1652 = vunpack.c.l.b16 %v585
      %v1653 = vunpack.c.h.b16 %v585
      %v1654 = vpack.c.b16 %v1592, %v1590
      %v1655 = vpack.c.b16 %v1593, %v1591
      %v1656 = vpack.c.b16 %v1596, %v1594
      %v1657 = vpack.c.b16 %v1597, %v1595
      %v1658 = vpack.c.b16 %v1600, %v1598
      %v1659 = vpack.c.b16 %v1601, %v1599
      %v1660 = vpack.c.b16 %v1604, %v1602
      %v1661 = vpack.c.b16 %v1605, %v1603
      %v1662 = vpack.c.b16 %v1608, %v1606
      %v1663 = vpack.c.b16 %v1609, %v1607
      %v1664 = vpack.c.b16 %v1612, %v1610
      %v1665 = vpack.c.b16 %v1613, %v1611
      %v1666 = vpack.c.b16 %v1616, %v1614
      %v1667 = vpack.c.b16 %v1617, %v1615
      %v1668 = vpack.c.b16 %v1620, %v1618
      %v1669 = vpack.c.b16 %v1621, %v1619
      %v1670 = vpack.c.b16 %v1624, %v1622
      %v1671 = vpack.c.b16 %v1625, %v1623
      %v1672 = vpack.c.b16 %v1628, %v1626
      %v1673 = vpack.c.b16 %v1629, %v1627
      %v1674 = vpack.c.b16 %v1632, %v1630
      %v1675 = vpack.c.b16 %v1633, %v1631
      %v1676 = vpack.c.b16 %v1636, %v1634
      %v1677 = vpack.c.b16 %v1637, %v1635
      %v1678 = vpack.c.b16 %v1640, %v1638
      %v1679 = vpack.c.b16 %v1641, %v1639
      %v1680 = vpack.c.b16 %v1644, %v1642
      %v1681 = vpack.c.b16 %v1645, %v1643
      %v1682 = vpack.c.b16 %v1648, %v1646
      %v1683 = vpack.c.b16 %v1649, %v1647
      %v1684 = vpack.c.b16 %v1652, %v1650
      %v1685 = vpack.c.b16 %v1653, %v1651
      %1718 = vmatprep.subr.bf16.mxu0 %v1655
      %1719 = vmatpush1.bf16.msra.mxu0 %v1654
      %1720 = vmatprep.subr.bf16.mxu0 %v1657
      %1721 = vmatpush1.bf16.msra.mxu0 %v1656
      %1722 = vmatprep.subr.bf16.mxu0 %v1659
      %1723 = vmatpush1.bf16.msra.mxu0 %v1658
      %1724 = vmatprep.subr.bf16.mxu0 %v1661
      %1725 = vmatpush1.bf16.msra.mxu0 %v1660
      %1726 = vmatprep.subr.bf16.mxu0 %v1663
      %1727 = vmatpush1.bf16.msra.mxu0 %v1662
      %1728 = vmatprep.subr.bf16.mxu0 %v1665
      %1729 = vmatpush1.bf16.msra.mxu0 %v1664
      %1730 = vmatprep.subr.bf16.mxu0 %v1667
      %1731 = vmatpush1.bf16.msra.mxu0 %v1666
      %1732 = vmatprep.subr.bf16.mxu0 %v1669
      %1733 = vmatpush1.bf16.msra.mxu0 %v1668
      %1734 = vmatprep.subr.bf16.mxu0 %v1671
      %1735 = vmatpush1.bf16.msra.mxu0 %v1670
      %1736 = vmatprep.subr.bf16.mxu0 %v1673
      %1737 = vmatpush1.bf16.msra.mxu0 %v1672
      %1738 = vmatprep.subr.bf16.mxu0 %v1675
      %1739 = vmatpush1.bf16.msra.mxu0 %v1674
      %1740 = vmatprep.subr.bf16.mxu0 %v1677
      %1741 = vmatpush1.bf16.msra.mxu0 %v1676
      %1742 = vmatprep.subr.bf16.mxu0 %v1679
      %1743 = vmatpush1.bf16.msra.mxu0 %v1678
      %1744 = vmatprep.subr.bf16.mxu0 %v1681
      %1745 = vmatpush1.bf16.msra.mxu0 %v1680
      %1746 = vmatprep.subr.bf16.mxu0 %v1683
      %1747 = vmatpush1.bf16.msra.mxu0 %v1682
      %1748 = vmatprep.subr.bf16.mxu0 %v1685
      %1749 = vmatpush1.bf16.msra.mxu0 %v1684
      %1750 = vmatprep.mubr.bf16.mxu0 %v1175
      %1751 = vmatmul.mubr.bf16.gmra.mrb[0].mxu0 %v1174
      %v1752 = vpop.f32.mrb[0].mxu0
      %v1753 = vadd.f32 %v591, %v1752
      %v1754 = vpop.f32.mrb[0].mxu0
      %v1755 = vadd.f32 %v595, %v1754
      %v1756 = vpop.f32.mrb[0].mxu0
      %v1757 = vadd.f32 %v591, %v1756
      %v1758 = vpop.f32.mrb[0].mxu0
      %v1759 = vadd.f32 %v595, %v1758
      %1760 = vmatprep.mubr.bf16.mxu0 %v1177
      %1761 = vmatmul.mubr.bf16.gmra.mrb[0].mxu0 %v1176
      %v1762 = vpop.f32.mrb[0].mxu0
      %v1763 = vadd.f32 %v591, %v1762
      %v1764 = vpop.f32.mrb[0].mxu0
      %v1765 = vadd.f32 %v595, %v1764
      %v1766 = vpop.f32.mrb[0].mxu0
      %v1767 = vadd.f32 %v591, %v1766
      %v1768 = vpop.f32.mrb[0].mxu0
      %v1769 = vadd.f32 %v595, %v1768
      %1770 = vmatprep.mubr.bf16.mxu0 %v1179
      %1771 = vmatmul.mubr.bf16.gmra.mrb[0].mxu0 %v1178
      %v1772 = vpop.f32.mrb[0].mxu0
      %v1773 = vadd.f32 %v591, %v1772
      %v1774 = vpop.f32.mrb[0].mxu0
      %v1775 = vadd.f32 %v595, %v1774
      %v1776 = vpop.f32.mrb[0].mxu0
      %v1777 = vadd.f32 %v591, %v1776
      %v1778 = vpop.f32.mrb[0].mxu0
      %v1779 = vadd.f32 %v595, %v1778
      %1780 = vmatprep.mubr.bf16.mxu0 %v1181
      %1781 = vmatmul.mubr.bf16.gmra.mrb[0].mxu0 %v1180
      %v1782 = vpop.f32.mrb[0].mxu0
      %v1783 = vadd.f32 %v591, %v1782
      %v1784 = vpop.f32.mrb[0].mxu0
      %v1785 = vadd.f32 %v595, %v1784
      %v1786 = vpop.f32.mrb[0].mxu0
      %v1787 = vadd.f32 %v591, %v1786
      %v1788 = vpop.f32.mrb[0].mxu0
      %v1789 = vadd.f32 %v595, %v1788
      %1790 = vmatprep.mubr.bf16.mxu0 %v1183
      %1791 = vmatmul.mubr.bf16.gmra.mrb[0].mxu0 %v1182
      %v1792 = vpop.f32.mrb[0].mxu0
      %v1793 = vadd.f32 %v591, %v1792
      %v1794 = vpop.f32.mrb[0].mxu0
      %v1795 = vadd.f32 %v595, %v1794
      %v1796 = vpop.f32.mrb[0].mxu0
      %v1797 = vadd.f32 %v591, %v1796
      %v1798 = vpop.f32.mrb[0].mxu0
      %v1799 = vadd.f32 %v595, %v1798
      %1800 = vmatprep.mubr.bf16.mxu0 %v1185
      %1801 = vmatmul.mubr.bf16.gmra.mrb[0].mxu0 %v1184
      %v1802 = vpop.f32.mrb[0].mxu0
      %v1803 = vadd.f32 %v591, %v1802
      %v1804 = vpop.f32.mrb[0].mxu0
      %v1805 = vadd.f32 %v595, %v1804
      %v1806 = vpop.f32.mrb[0].mxu0
      %v1807 = vadd.f32 %v591, %v1806
      %v1808 = vpop.f32.mrb[0].mxu0
      %v1809 = vadd.f32 %v595, %v1808
      %1810 = vmatprep.mubr.bf16.mxu0 %v1187
      %1811 = vmatmul.mubr.bf16.gmra.mrb[0].mxu0 %v1186
      %v1812 = vpop.f32.mrb[0].mxu0
      %v1813 = vadd.f32 %v591, %v1812
      %v1814 = vpop.f32.mrb[0].mxu0
      %v1815 = vadd.f32 %v595, %v1814
      %v1816 = vpop.f32.mrb[0].mxu0
      %v1817 = vadd.f32 %v591, %v1816
      %v1818 = vpop.f32.mrb[0].mxu0
      %v1819 = vadd.f32 %v595, %v1818
      %1820 = vmatprep.mubr.bf16.mxu0 %v1189
      %1821 = vmatmul.mubr.bf16.gmra.mrb[0].mxu0 %v1188
      %v1822 = vpop.f32.mrb[0].mxu0
      %v1823 = vadd.f32 %v591, %v1822
      %v1824 = vpop.f32.mrb[0].mxu0
      %v1825 = vadd.f32 %v595, %v1824
      %v1826 = vpop.f32.mrb[0].mxu0
      %v1827 = vadd.f32 %v591, %v1826
      %v1828 = vpop.f32.mrb[0].mxu0
      %v1829 = vadd.f32 %v595, %v1828
      %1830 = vmatprep.mubr.bf16.mxu0 %v1191
      %1831 = vmatmul.mubr.bf16.gmra.mrb[0].mxu0 %v1190
      %v1832 = vpop.f32.mrb[0].mxu0
      %v1833 = vadd.f32 %v591, %v1832
      %v1834 = vpop.f32.mrb[0].mxu0
      %v1835 = vadd.f32 %v595, %v1834
      %v1836 = vpop.f32.mrb[0].mxu0
      %v1837 = vadd.f32 %v591, %v1836
      %v1838 = vpop.f32.mrb[0].mxu0
      %v1839 = vadd.f32 %v595, %v1838
      %1840 = vmatprep.mubr.bf16.mxu0 %v1193
      %1841 = vmatmul.mubr.bf16.gmra.mrb[0].mxu0 %v1192
      %v1842 = vpop.f32.mrb[0].mxu0
      %v1843 = vadd.f32 %v591, %v1842
      %v1844 = vpop.f32.mrb[0].mxu0
      %v1845 = vadd.f32 %v595, %v1844
      %v1846 = vpop.f32.mrb[0].mxu0
      %v1847 = vadd.f32 %v591, %v1846
      %v1848 = vpop.f32.mrb[0].mxu0
      %v1849 = vadd.f32 %v595, %v1848
      %1850 = vmatprep.mubr.bf16.mxu0 %v1195
      %1851 = vmatmul.mubr.bf16.gmra.mrb[0].mxu0 %v1194
      %v1852 = vpop.f32.mrb[0].mxu0
      %v1853 = vadd.f32 %v591, %v1852
      %v1854 = vpop.f32.mrb[0].mxu0
      %v1855 = vadd.f32 %v595, %v1854
      %v1856 = vpop.f32.mrb[0].mxu0
      %v1857 = vadd.f32 %v591, %v1856
      %v1858 = vpop.f32.mrb[0].mxu0
      %v1859 = vadd.f32 %v595, %v1858
      %1860 = vmatprep.mubr.bf16.mxu0 %v1197
      %1861 = vmatmul.mubr.bf16.gmra.mrb[0].mxu0 %v1196
      %v1862 = vpop.f32.mrb[0].mxu0
      %v1863 = vadd.f32 %v591, %v1862
      %v1864 = vpop.f32.mrb[0].mxu0
      %v1865 = vadd.f32 %v595, %v1864
      %v1866 = vpop.f32.mrb[0].mxu0
      %v1867 = vadd.f32 %v591, %v1866
      %v1868 = vpop.f32.mrb[0].mxu0
      %v1869 = vadd.f32 %v595, %v1868
      %1870 = vmatprep.mubr.bf16.mxu0 %v1199
      %1871 = vmatmul.mubr.bf16.gmra.mrb[0].mxu0 %v1198
      %v1872 = vpop.f32.mrb[0].mxu0
      %v1873 = vadd.f32 %v591, %v1872
      %v1874 = vpop.f32.mrb[0].mxu0
      %v1875 = vadd.f32 %v595, %v1874
      %v1876 = vpop.f32.mrb[0].mxu0
      %v1877 = vadd.f32 %v591, %v1876
      %v1878 = vpop.f32.mrb[0].mxu0
      %v1879 = vadd.f32 %v595, %v1878
      %1880 = vmatprep.mubr.bf16.mxu0 %v1201
      %1881 = vmatmul.mubr.bf16.gmra.mrb[0].mxu0 %v1200
      %v1882 = vpop.f32.mrb[0].mxu0
      %v1883 = vadd.f32 %v591, %v1882
      %v1884 = vpop.f32.mrb[0].mxu0
      %v1885 = vadd.f32 %v595, %v1884
      %v1886 = vpop.f32.mrb[0].mxu0
      %v1887 = vadd.f32 %v591, %v1886
      %v1888 = vpop.f32.mrb[0].mxu0
      %v1889 = vadd.f32 %v595, %v1888
      %1890 = vmatprep.mubr.bf16.mxu0 %v1203
      %1891 = vmatmul.mubr.bf16.gmra.mrb[0].mxu0 %v1202
      %v1892 = vpop.f32.mrb[0].mxu0
      %v1893 = vadd.f32 %v591, %v1892
      %v1894 = vpop.f32.mrb[0].mxu0
      %v1895 = vadd.f32 %v595, %v1894
      %v1896 = vpop.f32.mrb[0].mxu0
      %v1897 = vadd.f32 %v591, %v1896
      %v1898 = vpop.f32.mrb[0].mxu0
      %v1899 = vadd.f32 %v595, %v1898
      %1900 = vmatprep.mubr.bf16.mxu0 %v1205
      %1901 = vmatmul.mubr.bf16.gmra.mrb[0].mxu0 %v1204
      %v1902 = vpop.f32.mrb[0].mxu0
      %v1903 = vadd.f32 %v591, %v1902
      %v1904 = vpop.f32.mrb[0].mxu0
      %v1905 = vadd.f32 %v595, %v1904
      %v1906 = vpop.f32.mrb[0].mxu0
      %v1907 = vadd.f32 %v591, %v1906
      %v1908 = vpop.f32.mrb[0].mxu0
      %v1909 = vadd.f32 %v595, %v1908
      %1910 = vmatprep.mubr.bf16.mxu0 %v1207
      %1911 = vmatmul.mubr.bf16.gmra.mrb[0].mxu0 %v1206
      %v1912 = vpop.f32.mrb[0].mxu0
      %v1913 = vadd.f32 %v591, %v1912
      %v1914 = vpop.f32.mrb[0].mxu0
      %v1915 = vadd.f32 %v595, %v1914
      %v1916 = vpop.f32.mrb[0].mxu0
      %v1917 = vadd.f32 %v591, %v1916
      %v1918 = vpop.f32.mrb[0].mxu0
      %v1919 = vadd.f32 %v595, %v1918
      %1920 = vmatprep.mubr.bf16.mxu0 %v1209
      %1921 = vmatmul.mubr.bf16.gmra.mrb[0].mxu0 %v1208
      %v1922 = vpop.f32.mrb[0].mxu0
      %v1923 = vadd.f32 %v591, %v1922
      %v1924 = vpop.f32.mrb[0].mxu0
      %v1925 = vadd.f32 %v595, %v1924
      %v1926 = vpop.f32.mrb[0].mxu0
      %v1927 = vadd.f32 %v591, %v1926
      %v1928 = vpop.f32.mrb[0].mxu0
      %v1929 = vadd.f32 %v595, %v1928
      %1930 = vmatprep.mubr.bf16.mxu0 %v1211
      %1931 = vmatmul.mubr.bf16.gmra.mrb[0].mxu0 %v1210
      %v1932 = vpop.f32.mrb[0].mxu0
      %v1933 = vadd.f32 %v591, %v1932
      %v1934 = vpop.f32.mrb[0].mxu0
      %v1935 = vadd.f32 %v595, %v1934
      %v1936 = vpop.f32.mrb[0].mxu0
      %v1937 = vadd.f32 %v591, %v1936
      %v1938 = vpop.f32.mrb[0].mxu0
      %v1939 = vadd.f32 %v595, %v1938
      %1940 = vmatprep.mubr.bf16.mxu0 %v1213
      %1941 = vmatmul.mubr.bf16.gmra.mrb[0].mxu0 %v1212
      %v1942 = vpop.f32.mrb[0].mxu0
      %v1943 = vadd.f32 %v591, %v1942
      %v1944 = vpop.f32.mrb[0].mxu0
      %v1945 = vadd.f32 %v595, %v1944
      %v1946 = vpop.f32.mrb[0].mxu0
      %v1947 = vadd.f32 %v591, %v1946
      %v1948 = vpop.f32.mrb[0].mxu0
      %v1949 = vadd.f32 %v595, %v1948
      %1950 = vmatprep.mubr.bf16.mxu0 %v1215
      %1951 = vmatmul.mubr.bf16.gmra.mrb[0].mxu0 %v1214
      %v1952 = vpop.f32.mrb[0].mxu0
      %v1953 = vadd.f32 %v591, %v1952
      %v1954 = vpop.f32.mrb[0].mxu0
      %v1955 = vadd.f32 %v595, %v1954
      %v1956 = vpop.f32.mrb[0].mxu0
      %v1957 = vadd.f32 %v591, %v1956
      %v1958 = vpop.f32.mrb[0].mxu0
      %v1959 = vadd.f32 %v595, %v1958
      %1960 = vmatprep.mubr.bf16.mxu0 %v1217
      %1961 = vmatmul.mubr.bf16.gmra.mrb[0].mxu0 %v1216
      %v1962 = vpop.f32.mrb[0].mxu0
      %v1963 = vadd.f32 %v591, %v1962
      %v1964 = vpop.f32.mrb[0].mxu0
      %v1965 = vadd.f32 %v595, %v1964
      %v1966 = vpop.f32.mrb[0].mxu0
      %v1967 = vadd.f32 %v591, %v1966
      %v1968 = vpop.f32.mrb[0].mxu0
      %v1969 = vadd.f32 %v595, %v1968
      %1970 = vmatprep.mubr.bf16.mxu0 %v1219
      %1971 = vmatmul.mubr.bf16.gmra.mrb[0].mxu0 %v1218
      %v1972 = vpop.f32.mrb[0].mxu0
      %v1973 = vadd.f32 %v591, %v1972
      %v1974 = vpop.f32.mrb[0].mxu0
      %v1975 = vadd.f32 %v595, %v1974
      %v1976 = vpop.f32.mrb[0].mxu0
      %v1977 = vadd.f32 %v591, %v1976
      %v1978 = vpop.f32.mrb[0].mxu0
      %v1979 = vadd.f32 %v595, %v1978
      %1980 = vmatprep.mubr.bf16.mxu0 %v1221
      %1981 = vmatmul.mubr.bf16.gmra.mrb[0].mxu0 %v1220
      %v1982 = vpop.f32.mrb[0].mxu0
      %v1983 = vadd.f32 %v591, %v1982
      %v1984 = vpop.f32.mrb[0].mxu0
      %v1985 = vadd.f32 %v595, %v1984
      %v1986 = vpop.f32.mrb[0].mxu0
      %v1987 = vadd.f32 %v591, %v1986
      %v1988 = vpop.f32.mrb[0].mxu0
      %v1989 = vadd.f32 %v595, %v1988
      %1990 = vmatprep.mubr.bf16.mxu0 %v1223
      %1991 = vmatmul.mubr.bf16.gmra.mrb[0].mxu0 %v1222
      %v1992 = vpop.f32.mrb[0].mxu0
      %v1993 = vadd.f32 %v591, %v1992
      %v1994 = vpop.f32.mrb[0].mxu0
      %v1995 = vadd.f32 %v595, %v1994
      %v1996 = vpop.f32.mrb[0].mxu0
      %v1997 = vadd.f32 %v591, %v1996
      %v1998 = vpop.f32.mrb[0].mxu0
      %v1999 = vadd.f32 %v595, %v1998
      %2000 = vmatprep.mubr.bf16.mxu0 %v1225
      %2001 = vmatmul.mubr.bf16.gmra.mrb[0].mxu0 %v1224
      %v2002 = vpop.f32.mrb[0].mxu0
      %v2003 = vadd.f32 %v591, %v2002
      %v2004 = vpop.f32.mrb[0].mxu0
      %v2005 = vadd.f32 %v595, %v2004
      %v2006 = vpop.f32.mrb[0].mxu0
      %v2007 = vadd.f32 %v591, %v2006
      %v2008 = vpop.f32.mrb[0].mxu0
      %v2009 = vadd.f32 %v595, %v2008
      %2010 = vmatprep.mubr.bf16.mxu0 %v1227
      %2011 = vmatmul.mubr.bf16.gmra.mrb[0].mxu0 %v1226
      %v2012 = vpop.f32.mrb[0].mxu0
      %v2013 = vadd.f32 %v591, %v2012
      %v2014 = vpop.f32.mrb[0].mxu0
      %v2015 = vadd.f32 %v595, %v2014
      %v2016 = vpop.f32.mrb[0].mxu0
      %v2017 = vadd.f32 %v591, %v2016
      %v2018 = vpop.f32.mrb[0].mxu0
      %v2019 = vadd.f32 %v595, %v2018
      %2020 = vmatprep.mubr.bf16.mxu0 %v1229
      %2021 = vmatmul.mubr.bf16.gmra.mrb[0].mxu0 %v1228
      %v2022 = vpop.f32.mrb[0].mxu0
      %v2023 = vadd.f32 %v591, %v2022
      %v2024 = vpop.f32.mrb[0].mxu0
      %v2025 = vadd.f32 %v595, %v2024
      %v2026 = vpop.f32.mrb[0].mxu0
      %v2027 = vadd.f32 %v591, %v2026
      %v2028 = vpop.f32.mrb[0].mxu0
      %v2029 = vadd.f32 %v595, %v2028
      %2030 = vmatprep.mubr.bf16.mxu0 %v1231
      %2031 = vmatmul.mubr.bf16.gmra.mrb[0].mxu0 %v1230
      %v2032 = vpop.f32.mrb[0].mxu0
      %v2033 = vadd.f32 %v591, %v2032
      %v2034 = vpop.f32.mrb[0].mxu0
      %v2035 = vadd.f32 %v595, %v2034
      %v2036 = vpop.f32.mrb[0].mxu0
      %v2037 = vadd.f32 %v591, %v2036
      %v2038 = vpop.f32.mrb[0].mxu0
      %v2039 = vadd.f32 %v595, %v2038
      %2040 = vmatprep.mubr.bf16.mxu0 %v1233
      %2041 = vmatmul.mubr.bf16.gmra.mrb[0].mxu0 %v1232
      %v2042 = vpop.f32.mrb[0].mxu0
      %v2043 = vadd.f32 %v591, %v2042
      %v2044 = vpop.f32.mrb[0].mxu0
      %v2045 = vadd.f32 %v595, %v2044
      %v2046 = vpop.f32.mrb[0].mxu0
      %v2047 = vadd.f32 %v591, %v2046
      %v2048 = vpop.f32.mrb[0].mxu0
      %v2049 = vadd.f32 %v595, %v2048
      %2050 = vmatprep.mubr.bf16.mxu0 %v1235
      %2051 = vmatmul.mubr.bf16.gmra.mrb[0].mxu0 %v1234
      %v2052 = vpop.f32.mrb[0].mxu0
      %v2053 = vadd.f32 %v591, %v2052
      %v2054 = vpop.f32.mrb[0].mxu0
      %v2055 = vadd.f32 %v595, %v2054
      %v2056 = vpop.f32.mrb[0].mxu0
      %v2057 = vadd.f32 %v591, %v2056
      %v2058 = vpop.f32.mrb[0].mxu0
      %v2059 = vadd.f32 %v595, %v2058
      %2060 = vmatprep.mubr.bf16.mxu0 %v1237
      %2061 = vmatmul.mubr.bf16.gmra.mrb[0].mxu0 %v1236
      %v2062 = vpop.f32.mrb[0].mxu0
      %v2063 = vadd.f32 %v591, %v2062
      %v2064 = vpop.f32.mrb[0].mxu0
      %v2065 = vadd.f32 %v595, %v2064
      %v2066 = vpop.f32.mrb[0].mxu0
      %v2067 = vadd.f32 %v591, %v2066
      %v2068 = vpop.f32.mrb[0].mxu0
      %v2069 = vadd.f32 %v595, %v2068
      %2070 = vmatprep.mubr.bf16.mxu0 %v1239
      %2071 = vmatmul.mubr.bf16.gmra.mrb[0].mxu0 %v1238
      %v2072 = vpop.f32.mrb[0].mxu0
      %v2073 = vadd.f32 %v591, %v2072
      %v2074 = vpop.f32.mrb[0].mxu0
      %v2075 = vadd.f32 %v595, %v2074
      %v2076 = vpop.f32.mrb[0].mxu0
      %v2077 = vadd.f32 %v591, %v2076
      %v2078 = vpop.f32.mrb[0].mxu0
      %v2079 = vadd.f32 %v595, %v2078
      %2080 = vmatprep.mubr.bf16.mxu0 %v1241
      %2081 = vmatmul.mubr.bf16.gmra.mrb[0].mxu0 %v1240
      %v2082 = vpop.f32.mrb[0].mxu0
      %v2083 = vadd.f32 %v591, %v2082
      %v2084 = vpop.f32.mrb[0].mxu0
      %v2085 = vadd.f32 %v595, %v2084
      %v2086 = vpop.f32.mrb[0].mxu0
      %v2087 = vadd.f32 %v591, %v2086
      %v2088 = vpop.f32.mrb[0].mxu0
      %v2089 = vadd.f32 %v595, %v2088
      %2090 = vmatprep.mubr.bf16.mxu0 %v1243
      %2091 = vmatmul.mubr.bf16.gmra.mrb[0].mxu0 %v1242
      %v2092 = vpop.f32.mrb[0].mxu0
      %v2093 = vadd.f32 %v591, %v2092
      %v2094 = vpop.f32.mrb[0].mxu0
      %v2095 = vadd.f32 %v595, %v2094
      %v2096 = vpop.f32.mrb[0].mxu0
      %v2097 = vadd.f32 %v591, %v2096
      %v2098 = vpop.f32.mrb[0].mxu0
      %v2099 = vadd.f32 %v595, %v2098
      %2100 = vmatprep.mubr.bf16.mxu0 %v1245
      %2101 = vmatmul.mubr.bf16.gmra.mrb[0].mxu0 %v1244
      %v2102 = vpop.f32.mrb[0].mxu0
      %v2103 = vadd.f32 %v591, %v2102
      %v2104 = vpop.f32.mrb[0].mxu0
      %v2105 = vadd.f32 %v595, %v2104
      %v2106 = vpop.f32.mrb[0].mxu0
      %v2107 = vadd.f32 %v591, %v2106
      %v2108 = vpop.f32.mrb[0].mxu0
      %v2109 = vadd.f32 %v595, %v2108
      %2110 = vmatprep.mubr.bf16.mxu0 %v1247
      %2111 = vmatmul.mubr.bf16.gmra.mrb[0].mxu0 %v1246
      %v2112 = vpop.f32.mrb[0].mxu0
      %v2113 = vadd.f32 %v591, %v2112
      %v2114 = vpop.f32.mrb[0].mxu0
      %v2115 = vadd.f32 %v595, %v2114
      %v2116 = vpop.f32.mrb[0].mxu0
      %v2117 = vadd.f32 %v591, %v2116
      %v2118 = vpop.f32.mrb[0].mxu0
      %v2119 = vadd.f32 %v595, %v2118
      %2120 = vmatprep.mubr.bf16.mxu0 %v1249
      %2121 = vmatmul.mubr.bf16.gmra.mrb[0].mxu0 %v1248
      %v2122 = vpop.f32.mrb[0].mxu0
      %v2123 = vadd.f32 %v591, %v2122
      %v2124 = vpop.f32.mrb[0].mxu0
      %v2125 = vadd.f32 %v595, %v2124
      %v2126 = vpop.f32.mrb[0].mxu0
      %v2127 = vadd.f32 %v591, %v2126
      %v2128 = vpop.f32.mrb[0].mxu0
      %v2129 = vadd.f32 %v595, %v2128
      %2130 = vmatprep.mubr.bf16.mxu0 %v1251
      %2131 = vmatmul.mubr.bf16.gmra.mrb[0].mxu0 %v1250
      %v2132 = vpop.f32.mrb[0].mxu0
      %v2133 = vadd.f32 %v591, %v2132
      %v2134 = vpop.f32.mrb[0].mxu0
      %v2135 = vadd.f32 %v595, %v2134
      %v2136 = vpop.f32.mrb[0].mxu0
      %v2137 = vadd.f32 %v591, %v2136
      %v2138 = vpop.f32.mrb[0].mxu0
      %v2139 = vadd.f32 %v595, %v2138
      %2140 = vmatprep.mubr.bf16.mxu0 %v1253
      %2141 = vmatmul.mubr.bf16.gmra.mrb[0].mxu0 %v1252
      %v2142 = vpop.f32.mrb[0].mxu0
      %v2143 = vadd.f32 %v591, %v2142
      %v2144 = vpop.f32.mrb[0].mxu0
      %v2145 = vadd.f32 %v595, %v2144
      %v2146 = vpop.f32.mrb[0].mxu0
      %v2147 = vadd.f32 %v591, %v2146
      %v2148 = vpop.f32.mrb[0].mxu0
      %v2149 = vadd.f32 %v595, %v2148
      %2150 = vmatprep.mubr.bf16.mxu0 %v1255
      %2151 = vmatmul.mubr.bf16.gmra.mrb[0].mxu0 %v1254
      %v2152 = vpop.f32.mrb[0].mxu0
      %v2153 = vadd.f32 %v591, %v2152
      %v2154 = vpop.f32.mrb[0].mxu0
      %v2155 = vadd.f32 %v595, %v2154
      %v2156 = vpop.f32.mrb[0].mxu0
      %v2157 = vadd.f32 %v591, %v2156
      %v2158 = vpop.f32.mrb[0].mxu0
      %v2159 = vadd.f32 %v595, %v2158
      %2160 = vmatprep.mubr.bf16.mxu0 %v1257
      %2161 = vmatmul.mubr.bf16.gmra.mrb[0].mxu0 %v1256
      %v2162 = vpop.f32.mrb[0].mxu0
      %v2163 = vadd.f32 %v591, %v2162
      %v2164 = vpop.f32.mrb[0].mxu0
      %v2165 = vadd.f32 %v595, %v2164
      %v2166 = vpop.f32.mrb[0].mxu0
      %v2167 = vadd.f32 %v591, %v2166
      %v2168 = vpop.f32.mrb[0].mxu0
      %v2169 = vadd.f32 %v595, %v2168
      %2170 = vmatprep.mubr.bf16.mxu0 %v1259
      %2171 = vmatmul.mubr.bf16.gmra.mrb[0].mxu0 %v1258
      %v2172 = vpop.f32.mrb[0].mxu0
      %v2173 = vadd.f32 %v591, %v2172
      %v2174 = vpop.f32.mrb[0].mxu0
      %v2175 = vadd.f32 %v595, %v2174
      %v2176 = vpop.f32.mrb[0].mxu0
      %v2177 = vadd.f32 %v591, %v2176
      %v2178 = vpop.f32.mrb[0].mxu0
      %v2179 = vadd.f32 %v595, %v2178
      %2180 = vmatprep.mubr.bf16.mxu0 %v1261
      %2181 = vmatmul.mubr.bf16.gmra.mrb[0].mxu0 %v1260
      %v2182 = vpop.f32.mrb[0].mxu0
      %v2183 = vadd.f32 %v591, %v2182
      %v2184 = vpop.f32.mrb[0].mxu0
      %v2185 = vadd.f32 %v595, %v2184
      %v2186 = vpop.f32.mrb[0].mxu0
      %v2187 = vadd.f32 %v591, %v2186
      %v2188 = vpop.f32.mrb[0].mxu0
      %v2189 = vadd.f32 %v595, %v2188
      %2190 = vmatprep.mubr.bf16.mxu0 %v1263
      %2191 = vmatmul.mubr.bf16.gmra.mrb[0].mxu0 %v1262
      %v2192 = vpop.f32.mrb[0].mxu0
      %v2193 = vadd.f32 %v591, %v2192
      %v2194 = vpop.f32.mrb[0].mxu0
      %v2195 = vadd.f32 %v595, %v2194
      %v2196 = vpop.f32.mrb[0].mxu0
      %v2197 = vadd.f32 %v591, %v2196
      %v2198 = vpop.f32.mrb[0].mxu0
      %v2199 = vadd.f32 %v595, %v2198
      %2200 = vmatprep.mubr.bf16.mxu0 %v1265
      %2201 = vmatmul.mubr.bf16.gmra.mrb[0].mxu0 %v1264
      %v2202 = vpop.f32.mrb[0].mxu0
      %v2203 = vadd.f32 %v591, %v2202
      %v2204 = vpop.f32.mrb[0].mxu0
      %v2205 = vadd.f32 %v595, %v2204
      %v2206 = vpop.f32.mrb[0].mxu0
      %v2207 = vadd.f32 %v591, %v2206
      %v2208 = vpop.f32.mrb[0].mxu0
      %v2209 = vadd.f32 %v595, %v2208
      %2210 = vmatprep.mubr.bf16.mxu0 %v1267
      %2211 = vmatmul.mubr.bf16.gmra.mrb[0].mxu0 %v1266
      %v2212 = vpop.f32.mrb[0].mxu0
      %v2213 = vadd.f32 %v591, %v2212
      %v2214 = vpop.f32.mrb[0].mxu0
      %v2215 = vadd.f32 %v595, %v2214
      %v2216 = vpop.f32.mrb[0].mxu0
      %v2217 = vadd.f32 %v591, %v2216
      %v2218 = vpop.f32.mrb[0].mxu0
      %v2219 = vadd.f32 %v595, %v2218
      %2220 = vmatprep.mubr.bf16.mxu0 %v1269
      %2221 = vmatmul.mubr.bf16.gmra.mrb[0].mxu0 %v1268
      %v2222 = vpop.f32.mrb[0].mxu0
      %v2223 = vadd.f32 %v591, %v2222
      %v2224 = vpop.f32.mrb[0].mxu0
      %v2225 = vadd.f32 %v595, %v2224
      %v2226 = vpop.f32.mrb[0].mxu0
      %v2227 = vadd.f32 %v591, %v2226
      %v2228 = vpop.f32.mrb[0].mxu0
      %v2229 = vadd.f32 %v595, %v2228
      %2230 = vmatprep.mubr.bf16.mxu0 %v1271
      %2231 = vmatmul.mubr.bf16.gmra.mrb[0].mxu0 %v1270
      %v2232 = vpop.f32.mrb[0].mxu0
      %v2233 = vadd.f32 %v591, %v2232
      %v2234 = vpop.f32.mrb[0].mxu0
      %v2235 = vadd.f32 %v595, %v2234
      %v2236 = vpop.f32.mrb[0].mxu0
      %v2237 = vadd.f32 %v591, %v2236
      %v2238 = vpop.f32.mrb[0].mxu0
      %v2239 = vadd.f32 %v595, %v2238
      %2240 = vmatprep.mubr.bf16.mxu0 %v1273
      %2241 = vmatmul.mubr.bf16.gmra.mrb[0].mxu0 %v1272
      %v2242 = vpop.f32.mrb[0].mxu0
      %v2243 = vadd.f32 %v591, %v2242
      %v2244 = vpop.f32.mrb[0].mxu0
      %v2245 = vadd.f32 %v595, %v2244
      %v2246 = vpop.f32.mrb[0].mxu0
      %v2247 = vadd.f32 %v591, %v2246
      %v2248 = vpop.f32.mrb[0].mxu0
      %v2249 = vadd.f32 %v595, %v2248
      %2250 = vmatprep.mubr.bf16.mxu0 %v1275
      %2251 = vmatmul.mubr.bf16.gmra.mrb[0].mxu0 %v1274
      %v2252 = vpop.f32.mrb[0].mxu0
      %v2253 = vadd.f32 %v591, %v2252
      %v2254 = vpop.f32.mrb[0].mxu0
      %v2255 = vadd.f32 %v595, %v2254
      %v2256 = vpop.f32.mrb[0].mxu0
      %v2257 = vadd.f32 %v591, %v2256
      %v2258 = vpop.f32.mrb[0].mxu0
      %v2259 = vadd.f32 %v595, %v2258
      %2260 = vmatprep.mubr.bf16.mxu0 %v1277
      %2261 = vmatmul.mubr.bf16.gmra.mrb[0].mxu0 %v1276
      %v2262 = vpop.f32.mrb[0].mxu0
      %v2263 = vadd.f32 %v591, %v2262
      %v2264 = vpop.f32.mrb[0].mxu0
      %v2265 = vadd.f32 %v595, %v2264
      %v2266 = vpop.f32.mrb[0].mxu0
      %v2267 = vadd.f32 %v591, %v2266
      %v2268 = vpop.f32.mrb[0].mxu0
      %v2269 = vadd.f32 %v595, %v2268
      %2270 = vmatprep.mubr.bf16.mxu0 %v1279
      %2271 = vmatmul.mubr.bf16.gmra.mrb[0].mxu0 %v1278
      %v2272 = vpop.f32.mrb[0].mxu0
      %v2273 = vadd.f32 %v591, %v2272
      %v2274 = vpop.f32.mrb[0].mxu0
      %v2275 = vadd.f32 %v595, %v2274
      %v2276 = vpop.f32.mrb[0].mxu0
      %v2277 = vadd.f32 %v591, %v2276
      %v2278 = vpop.f32.mrb[0].mxu0
      %v2279 = vadd.f32 %v595, %v2278
      %2280 = vmatprep.mubr.bf16.mxu0 %v1281
      %2281 = vmatmul.mubr.bf16.gmra.mrb[0].mxu0 %v1280
      %v2282 = vpop.f32.mrb[0].mxu0
      %v2283 = vadd.f32 %v591, %v2282
      %v2284 = vpop.f32.mrb[0].mxu0
      %v2285 = vadd.f32 %v595, %v2284
      %v2286 = vpop.f32.mrb[0].mxu0
      %v2287 = vadd.f32 %v591, %v2286
      %v2288 = vpop.f32.mrb[0].mxu0
      %v2289 = vadd.f32 %v595, %v2288
      %2290 = vmatprep.mubr.bf16.mxu0 %v1283
      %2291 = vmatmul.mubr.bf16.gmra.mrb[0].mxu0 %v1282
      %v2292 = vpop.f32.mrb[0].mxu0
      %v2293 = vadd.f32 %v591, %v2292
      %v2294 = vpop.f32.mrb[0].mxu0
      %v2295 = vadd.f32 %v595, %v2294
      %v2296 = vpop.f32.mrb[0].mxu0
      %v2297 = vadd.f32 %v591, %v2296
      %v2298 = vpop.f32.mrb[0].mxu0
      %v2299 = vadd.f32 %v595, %v2298
      %2300 = vmatprep.mubr.bf16.mxu0 %v1285
      %2301 = vmatmul.mubr.bf16.gmra.mrb[0].mxu0 %v1284
      %v2302 = vpop.f32.mrb[0].mxu0
      %v2303 = vadd.f32 %v591, %v2302
      %v2304 = vpop.f32.mrb[0].mxu0
      %v2305 = vadd.f32 %v595, %v2304
      %v2306 = vpop.f32.mrb[0].mxu0
      %v2307 = vadd.f32 %v591, %v2306
      %v2308 = vpop.f32.mrb[0].mxu0
      %v2309 = vadd.f32 %v595, %v2308
      %2310 = vmatprep.mubr.bf16.mxu0 %v1287
      %2311 = vmatmul.mubr.bf16.gmra.mrb[0].mxu0 %v1286
      %v2312 = vpop.f32.mrb[0].mxu0
      %v2313 = vadd.f32 %v591, %v2312
      %v2314 = vpop.f32.mrb[0].mxu0
      %v2315 = vadd.f32 %v595, %v2314
      %v2316 = vpop.f32.mrb[0].mxu0
      %v2317 = vadd.f32 %v591, %v2316
      %v2318 = vpop.f32.mrb[0].mxu0
      %v2319 = vadd.f32 %v595, %v2318
      %2320 = vmatprep.mubr.bf16.mxu0 %v1289
      %2321 = vmatmul.mubr.bf16.gmra.mrb[0].mxu0 %v1288
      %v2322 = vpop.f32.mrb[0].mxu0
      %v2323 = vadd.f32 %v591, %v2322
      %v2324 = vpop.f32.mrb[0].mxu0
      %v2325 = vadd.f32 %v595, %v2324
      %v2326 = vpop.f32.mrb[0].mxu0
      %v2327 = vadd.f32 %v591, %v2326
      %v2328 = vpop.f32.mrb[0].mxu0
      %v2329 = vadd.f32 %v595, %v2328
      %2330 = vmatprep.mubr.bf16.mxu0 %v1291
      %2331 = vmatmul.mubr.bf16.gmra.mrb[0].mxu0 %v1290
      %v2332 = vpop.f32.mrb[0].mxu0
      %v2333 = vadd.f32 %v591, %v2332
      %v2334 = vpop.f32.mrb[0].mxu0
      %v2335 = vadd.f32 %v595, %v2334
      %v2336 = vpop.f32.mrb[0].mxu0
      %v2337 = vadd.f32 %v591, %v2336
      %v2338 = vpop.f32.mrb[0].mxu0
      %v2339 = vadd.f32 %v595, %v2338
      %2340 = vmatprep.mubr.bf16.mxu0 %v1293
      %2341 = vmatmul.mubr.bf16.gmra.mrb[0].mxu0 %v1292
      %v2342 = vpop.f32.mrb[0].mxu0
      %v2343 = vadd.f32 %v591, %v2342
      %v2344 = vpop.f32.mrb[0].mxu0
      %v2345 = vadd.f32 %v595, %v2344
      %v2346 = vpop.f32.mrb[0].mxu0
      %v2347 = vadd.f32 %v591, %v2346
      %v2348 = vpop.f32.mrb[0].mxu0
      %v2349 = vadd.f32 %v595, %v2348
      %2350 = vmatprep.mubr.bf16.mxu0 %v1295
      %2351 = vmatmul.mubr.bf16.gmra.mrb[0].mxu0 %v1294
      %v2352 = vpop.f32.mrb[0].mxu0
      %v2353 = vadd.f32 %v591, %v2352
      %v2354 = vpop.f32.mrb[0].mxu0
      %v2355 = vadd.f32 %v595, %v2354
      %v2356 = vpop.f32.mrb[0].mxu0
      %v2357 = vadd.f32 %v591, %v2356
      %v2358 = vpop.f32.mrb[0].mxu0
      %v2359 = vadd.f32 %v595, %v2358
      %2360 = vmatprep.mubr.bf16.mxu0 %v1297
      %2361 = vmatmul.mubr.bf16.gmra.mrb[0].mxu0 %v1296
      %v2362 = vpop.f32.mrb[0].mxu0
      %v2363 = vadd.f32 %v591, %v2362
      %v2364 = vpop.f32.mrb[0].mxu0
      %v2365 = vadd.f32 %v595, %v2364
      %v2366 = vpop.f32.mrb[0].mxu0
      %v2367 = vadd.f32 %v591, %v2366
      %v2368 = vpop.f32.mrb[0].mxu0
      %v2369 = vadd.f32 %v595, %v2368
      %2370 = vmatprep.mubr.bf16.mxu0 %v1299
      %2371 = vmatmul.mubr.bf16.gmra.mrb[0].mxu0 %v1298
      %v2372 = vpop.f32.mrb[0].mxu0
      %v2373 = vadd.f32 %v591, %v2372
      %v2374 = vpop.f32.mrb[0].mxu0
      %v2375 = vadd.f32 %v595, %v2374
      %v2376 = vpop.f32.mrb[0].mxu0
      %v2377 = vadd.f32 %v591, %v2376
      %v2378 = vpop.f32.mrb[0].mxu0
      %v2379 = vadd.f32 %v595, %v2378
      %2380 = vmatprep.mubr.bf16.mxu0 %v1301
      %2381 = vmatmul.mubr.bf16.gmra.mrb[0].mxu0 %v1300
      %v2382 = vpop.f32.mrb[0].mxu0
      %v2383 = vadd.f32 %v591, %v2382
      %v2384 = vpop.f32.mrb[0].mxu0
      %v2385 = vadd.f32 %v595, %v2384
      %v2386 = vpop.f32.mrb[0].mxu0
      %v2387 = vadd.f32 %v591, %v2386
      %v2388 = vpop.f32.mrb[0].mxu0
      %v2389 = vadd.f32 %v595, %v2388
      %2390 = vmatprep.mubr.bf16.mxu0 %v1303
      %2391 = vmatmul.mubr.bf16.gmra.mrb[0].mxu0 %v1302
      %v2392 = vpop.f32.mrb[0].mxu0
      %v2393 = vadd.f32 %v591, %v2392
      %v2394 = vpop.f32.mrb[0].mxu0
      %v2395 = vadd.f32 %v595, %v2394
      %v2396 = vpop.f32.mrb[0].mxu0
      %v2397 = vadd.f32 %v591, %v2396
      %v2398 = vpop.f32.mrb[0].mxu0
      %v2399 = vadd.f32 %v595, %v2398
      %2400 = vmatprep.mubr.bf16.mxu0 %v1305
      %2401 = vmatmul.mubr.bf16.gmra.mrb[0].mxu0 %v1304
      %v2402 = vpop.f32.mrb[0].mxu0
      %v2403 = vadd.f32 %v591, %v2402
      %v2404 = vpop.f32.mrb[0].mxu0
      %v2405 = vadd.f32 %v595, %v2404
      %v2406 = vpop.f32.mrb[0].mxu0
      %v2407 = vadd.f32 %v591, %v2406
      %v2408 = vpop.f32.mrb[0].mxu0
      %v2409 = vadd.f32 %v595, %v2408
      %2410 = vmatprep.mubr.bf16.mxu0 %v1307
      %2411 = vmatmul.mubr.bf16.gmra.mrb[0].mxu0 %v1306
      %v2412 = vpop.f32.mrb[0].mxu0
      %v2413 = vadd.f32 %v591, %v2412
      %v2414 = vpop.f32.mrb[0].mxu0
      %v2415 = vadd.f32 %v595, %v2414
      %v2416 = vpop.f32.mrb[0].mxu0
      %v2417 = vadd.f32 %v591, %v2416
      %v2418 = vpop.f32.mrb[0].mxu0
      %v2419 = vadd.f32 %v595, %v2418
      %2420 = vmatprep.mubr.bf16.mxu0 %v1309
      %2421 = vmatmul.mubr.bf16.gmra.mrb[0].mxu0 %v1308
      %v2422 = vpop.f32.mrb[0].mxu0
      %v2423 = vadd.f32 %v591, %v2422
      %v2424 = vpop.f32.mrb[0].mxu0
      %v2425 = vadd.f32 %v595, %v2424
      %v2426 = vpop.f32.mrb[0].mxu0
      %v2427 = vadd.f32 %v591, %v2426
      %v2428 = vpop.f32.mrb[0].mxu0
      %v2429 = vadd.f32 %v595, %v2428
      %2430 = vmatprep.mubr.bf16.mxu0 %v1311
      %2431 = vmatmul.mubr.bf16.gmra.mrb[0].mxu0 %v1310
      %v2432 = vpop.f32.mrb[0].mxu0
      %v2433 = vadd.f32 %v591, %v2432
      %v2434 = vpop.f32.mrb[0].mxu0
      %v2435 = vadd.f32 %v595, %v2434
      %v2436 = vpop.f32.mrb[0].mxu0
      %v2437 = vadd.f32 %v591, %v2436
      %v2438 = vpop.f32.mrb[0].mxu0
      %v2439 = vadd.f32 %v595, %v2438
      %2440 = vmatprep.mubr.bf16.mxu0 %v1313
      %2441 = vmatmul.mubr.bf16.gmra.mrb[0].mxu0 %v1312
      %v2442 = vpop.f32.mrb[0].mxu0
      %v2443 = vadd.f32 %v591, %v2442
      %v2444 = vpop.f32.mrb[0].mxu0
      %v2445 = vadd.f32 %v595, %v2444
      %v2446 = vpop.f32.mrb[0].mxu0
      %v2447 = vadd.f32 %v591, %v2446
      %v2448 = vpop.f32.mrb[0].mxu0
      %v2449 = vadd.f32 %v595, %v2448
      %2450 = vmatprep.mubr.bf16.mxu0 %v1315
      %2451 = vmatmul.mubr.bf16.gmra.mrb[0].mxu0 %v1314
      %v2452 = vpop.f32.mrb[0].mxu0
      %v2453 = vadd.f32 %v591, %v2452
      %v2454 = vpop.f32.mrb[0].mxu0
      %v2455 = vadd.f32 %v595, %v2454
      %v2456 = vpop.f32.mrb[0].mxu0
      %v2457 = vadd.f32 %v591, %v2456
      %v2458 = vpop.f32.mrb[0].mxu0
      %v2459 = vadd.f32 %v595, %v2458
      %2460 = vmatprep.mubr.bf16.mxu0 %v1317
      %2461 = vmatmul.mubr.bf16.gmra.mrb[0].mxu0 %v1316
      %v2462 = vpop.f32.mrb[0].mxu0
      %v2463 = vadd.f32 %v591, %v2462
      %v2464 = vpop.f32.mrb[0].mxu0
      %v2465 = vadd.f32 %v595, %v2464
      %v2466 = vpop.f32.mrb[0].mxu0
      %v2467 = vadd.f32 %v591, %v2466
      %v2468 = vpop.f32.mrb[0].mxu0
      %v2469 = vadd.f32 %v595, %v2468
      %2470 = vmatprep.mubr.bf16.mxu0 %v1319
      %2471 = vmatmul.mubr.bf16.gmra.mrb[0].mxu0 %v1318
      %v2472 = vpop.f32.mrb[0].mxu0
      %v2473 = vadd.f32 %v591, %v2472
      %v2474 = vpop.f32.mrb[0].mxu0
      %v2475 = vadd.f32 %v595, %v2474
      %v2476 = vpop.f32.mrb[0].mxu0
      %v2477 = vadd.f32 %v591, %v2476
      %v2478 = vpop.f32.mrb[0].mxu0
      %v2479 = vadd.f32 %v595, %v2478
      %2480 = vmatprep.mubr.bf16.mxu0 %v1321
      %2481 = vmatmul.mubr.bf16.gmra.mrb[0].mxu0 %v1320
      %v2482 = vpop.f32.mrb[0].mxu0
      %v2483 = vadd.f32 %v591, %v2482
      %v2484 = vpop.f32.mrb[0].mxu0
      %v2485 = vadd.f32 %v595, %v2484
      %v2486 = vpop.f32.mrb[0].mxu0
      %v2487 = vadd.f32 %v591, %v2486
      %v2488 = vpop.f32.mrb[0].mxu0
      %v2489 = vadd.f32 %v595, %v2488
      %2490 = vmatprep.mubr.bf16.mxu0 %v1323
      %2491 = vmatmul.mubr.bf16.gmra.mrb[0].mxu0 %v1322
      %v2492 = vpop.f32.mrb[0].mxu0
      %v2493 = vadd.f32 %v591, %v2492
      %v2494 = vpop.f32.mrb[0].mxu0
      %v2495 = vadd.f32 %v595, %v2494
      %v2496 = vpop.f32.mrb[0].mxu0
      %v2497 = vadd.f32 %v591, %v2496
      %v2498 = vpop.f32.mrb[0].mxu0
      %v2499 = vadd.f32 %v595, %v2498
      %2500 = vmatprep.mubr.bf16.mxu0 %v1325
      %2501 = vmatmul.mubr.bf16.gmra.mrb[0].mxu0 %v1324
      %v2502 = vpop.f32.mrb[0].mxu0
      %v2503 = vadd.f32 %v591, %v2502
      %v2504 = vpop.f32.mrb[0].mxu0
      %v2505 = vadd.f32 %v595, %v2504
      %v2506 = vpop.f32.mrb[0].mxu0
      %v2507 = vadd.f32 %v591, %v2506
      %v2508 = vpop.f32.mrb[0].mxu0
      %v2509 = vadd.f32 %v595, %v2508
      %2510 = vmatprep.mubr.bf16.mxu0 %v1327
      %2511 = vmatmul.mubr.bf16.gmra.mrb[0].mxu0 %v1326
      %v2512 = vpop.f32.mrb[0].mxu0
      %v2513 = vadd.f32 %v591, %v2512
      %v2514 = vpop.f32.mrb[0].mxu0
      %v2515 = vadd.f32 %v595, %v2514
      %v2516 = vpop.f32.mrb[0].mxu0
      %v2517 = vadd.f32 %v591, %v2516
      %v2518 = vpop.f32.mrb[0].mxu0
      %v2519 = vadd.f32 %v595, %v2518
      %2520 = vmatprep.mubr.bf16.mxu0 %v1329
      %2521 = vmatmul.mubr.bf16.gmra.mrb[0].mxu0 %v1328
      %v2522 = vpop.f32.mrb[0].mxu0
      %v2523 = vadd.f32 %v591, %v2522
      %v2524 = vpop.f32.mrb[0].mxu0
      %v2525 = vadd.f32 %v595, %v2524
      %v2526 = vpop.f32.mrb[0].mxu0
      %v2527 = vadd.f32 %v591, %v2526
      %v2528 = vpop.f32.mrb[0].mxu0
      %v2529 = vadd.f32 %v595, %v2528
      %2530 = vmatprep.mubr.bf16.mxu0 %v1331
      %2531 = vmatmul.mubr.bf16.gmra.mrb[0].mxu0 %v1330
      %v2532 = vpop.f32.mrb[0].mxu0
      %v2533 = vadd.f32 %v591, %v2532
      %v2534 = vpop.f32.mrb[0].mxu0
      %v2535 = vadd.f32 %v595, %v2534
      %v2536 = vpop.f32.mrb[0].mxu0
      %v2537 = vadd.f32 %v591, %v2536
      %v2538 = vpop.f32.mrb[0].mxu0
      %v2539 = vadd.f32 %v595, %v2538
      %2540 = vmatprep.mubr.bf16.mxu0 %v1333
      %2541 = vmatmul.mubr.bf16.gmra.mrb[0].mxu0 %v1332
      %v2542 = vpop.f32.mrb[0].mxu0
      %v2543 = vadd.f32 %v591, %v2542
      %v2544 = vpop.f32.mrb[0].mxu0
      %v2545 = vadd.f32 %v595, %v2544
      %v2546 = vpop.f32.mrb[0].mxu0
      %v2547 = vadd.f32 %v591, %v2546
      %v2548 = vpop.f32.mrb[0].mxu0
      %v2549 = vadd.f32 %v595, %v2548
      %2550 = vmatprep.mubr.bf16.mxu0 %v1335
      %2551 = vmatmul.mubr.bf16.gmra.mrb[0].mxu0 %v1334
      %v2552 = vpop.f32.mrb[0].mxu0
      %v2553 = vadd.f32 %v591, %v2552
      %v2554 = vpop.f32.mrb[0].mxu0
      %v2555 = vadd.f32 %v595, %v2554
      %v2556 = vpop.f32.mrb[0].mxu0
      %v2557 = vadd.f32 %v591, %v2556
      %v2558 = vpop.f32.mrb[0].mxu0
      %v2559 = vadd.f32 %v595, %v2558
      %2560 = vmatprep.mubr.bf16.mxu0 %v1337
      %2561 = vmatmul.mubr.bf16.gmra.mrb[0].mxu0 %v1336
      %v2562 = vpop.f32.mrb[0].mxu0
      %v2563 = vadd.f32 %v591, %v2562
      %v2564 = vpop.f32.mrb[0].mxu0
      %v2565 = vadd.f32 %v595, %v2564
      %v2566 = vpop.f32.mrb[0].mxu0
      %v2567 = vadd.f32 %v591, %v2566
      %v2568 = vpop.f32.mrb[0].mxu0
      %v2569 = vadd.f32 %v595, %v2568
      %2570 = vmatprep.mubr.bf16.mxu0 %v1339
      %2571 = vmatmul.mubr.bf16.gmra.mrb[0].mxu0 %v1338
      %v2572 = vpop.f32.mrb[0].mxu0
      %v2573 = vadd.f32 %v591, %v2572
      %v2574 = vpop.f32.mrb[0].mxu0
      %v2575 = vadd.f32 %v595, %v2574
      %v2576 = vpop.f32.mrb[0].mxu0
      %v2577 = vadd.f32 %v591, %v2576
      %v2578 = vpop.f32.mrb[0].mxu0
      %v2579 = vadd.f32 %v595, %v2578
      %2580 = vmatprep.mubr.bf16.mxu0 %v1341
      %2581 = vmatmul.mubr.bf16.gmra.mrb[0].mxu0 %v1340
      %v2582 = vpop.f32.mrb[0].mxu0
      %v2583 = vadd.f32 %v591, %v2582
      %v2584 = vpop.f32.mrb[0].mxu0
      %v2585 = vadd.f32 %v595, %v2584
      %v2586 = vpop.f32.mrb[0].mxu0
      %v2587 = vadd.f32 %v591, %v2586
      %v2588 = vpop.f32.mrb[0].mxu0
      %v2589 = vadd.f32 %v595, %v2588
      %2590 = vmatprep.mubr.bf16.mxu0 %v1343
      %2591 = vmatmul.mubr.bf16.gmra.mrb[0].mxu0 %v1342
      %v2592 = vpop.f32.mrb[0].mxu0
      %v2593 = vadd.f32 %v591, %v2592
      %v2594 = vpop.f32.mrb[0].mxu0
      %v2595 = vadd.f32 %v595, %v2594
      %v2596 = vpop.f32.mrb[0].mxu0
      %v2597 = vadd.f32 %v591, %v2596
      %v2598 = vpop.f32.mrb[0].mxu0
      %v2599 = vadd.f32 %v595, %v2598
      %2600 = vmatprep.mubr.bf16.mxu0 %v1345
      %2601 = vmatmul.mubr.bf16.gmra.mrb[0].mxu0 %v1344
      %v2602 = vpop.f32.mrb[0].mxu0
      %v2603 = vadd.f32 %v591, %v2602
      %v2604 = vpop.f32.mrb[0].mxu0
      %v2605 = vadd.f32 %v595, %v2604
      %v2606 = vpop.f32.mrb[0].mxu0
      %v2607 = vadd.f32 %v591, %v2606
      %v2608 = vpop.f32.mrb[0].mxu0
      %v2609 = vadd.f32 %v595, %v2608
      %2610 = vmatprep.mubr.bf16.mxu0 %v1347
      %2611 = vmatmul.mubr.bf16.gmra.mrb[0].mxu0 %v1346
      %v2612 = vpop.f32.mrb[0].mxu0
      %v2613 = vadd.f32 %v591, %v2612
      %v2614 = vpop.f32.mrb[0].mxu0
      %v2615 = vadd.f32 %v595, %v2614
      %v2616 = vpop.f32.mrb[0].mxu0
      %v2617 = vadd.f32 %v591, %v2616
      %v2618 = vpop.f32.mrb[0].mxu0
      %v2619 = vadd.f32 %v595, %v2618
      %2620 = vmatprep.mubr.bf16.mxu0 %v1349
      %2621 = vmatmul.mubr.bf16.gmra.mrb[0].mxu0 %v1348
      %v2622 = vpop.f32.mrb[0].mxu0
      %v2623 = vadd.f32 %v591, %v2622
      %v2624 = vpop.f32.mrb[0].mxu0
      %v2625 = vadd.f32 %v595, %v2624
      %v2626 = vpop.f32.mrb[0].mxu0
      %v2627 = vadd.f32 %v591, %v2626
      %v2628 = vpop.f32.mrb[0].mxu0
      %v2629 = vadd.f32 %v595, %v2628
      %2630 = vmatprep.mubr.bf16.mxu0 %v1351
      %2631 = vmatmul.mubr.bf16.gmra.mrb[0].mxu0 %v1350
      %v2632 = vpop.f32.mrb[0].mxu0
      %v2633 = vadd.f32 %v591, %v2632
      %v2634 = vpop.f32.mrb[0].mxu0
      %v2635 = vadd.f32 %v595, %v2634
      %v2636 = vpop.f32.mrb[0].mxu0
      %v2637 = vadd.f32 %v591, %v2636
      %v2638 = vpop.f32.mrb[0].mxu0
      %v2639 = vadd.f32 %v595, %v2638
      %2640 = vmatprep.mubr.bf16.mxu0 %v1353
      %2641 = vmatmul.mubr.bf16.gmra.mrb[0].mxu0 %v1352
      %v2642 = vpop.f32.mrb[0].mxu0
      %v2643 = vadd.f32 %v591, %v2642
      %v2644 = vpop.f32.mrb[0].mxu0
      %v2645 = vadd.f32 %v595, %v2644
      %v2646 = vpop.f32.mrb[0].mxu0
      %v2647 = vadd.f32 %v591, %v2646
      %v2648 = vpop.f32.mrb[0].mxu0
      %v2649 = vadd.f32 %v595, %v2648
      %2650 = vmatprep.mubr.bf16.mxu0 %v1355
      %2651 = vmatmul.mubr.bf16.gmra.mrb[0].mxu0 %v1354
      %v2652 = vpop.f32.mrb[0].mxu0
      %v2653 = vadd.f32 %v591, %v2652
      %v2654 = vpop.f32.mrb[0].mxu0
      %v2655 = vadd.f32 %v595, %v2654
      %v2656 = vpop.f32.mrb[0].mxu0
      %v2657 = vadd.f32 %v591, %v2656
      %v2658 = vpop.f32.mrb[0].mxu0
      %v2659 = vadd.f32 %v595, %v2658
      %2660 = vmatprep.mubr.bf16.mxu0 %v1357
      %2661 = vmatmul.mubr.bf16.gmra.mrb[0].mxu0 %v1356
      %v2662 = vpop.f32.mrb[0].mxu0
      %v2663 = vadd.f32 %v591, %v2662
      %v2664 = vpop.f32.mrb[0].mxu0
      %v2665 = vadd.f32 %v595, %v2664
      %v2666 = vpop.f32.mrb[0].mxu0
      %v2667 = vadd.f32 %v591, %v2666
      %v2668 = vpop.f32.mrb[0].mxu0
      %v2669 = vadd.f32 %v595, %v2668
      %2670 = vmatprep.mubr.bf16.mxu0 %v1359
      %2671 = vmatmul.mubr.bf16.gmra.mrb[0].mxu0 %v1358
      %v2672 = vpop.f32.mrb[0].mxu0
      %v2673 = vadd.f32 %v591, %v2672
      %v2674 = vpop.f32.mrb[0].mxu0
      %v2675 = vadd.f32 %v595, %v2674
      %v2676 = vpop.f32.mrb[0].mxu0
      %v2677 = vadd.f32 %v591, %v2676
      %v2678 = vpop.f32.mrb[0].mxu0
      %v2679 = vadd.f32 %v595, %v2678
      %2680 = vmatprep.mubr.bf16.mxu0 %v1361
      %2681 = vmatmul.mubr.bf16.gmra.mrb[0].mxu0 %v1360
      %v2682 = vpop.f32.mrb[0].mxu0
      %v2683 = vadd.f32 %v591, %v2682
      %v2684 = vpop.f32.mrb[0].mxu0
      %v2685 = vadd.f32 %v595, %v2684
      %v2686 = vpop.f32.mrb[0].mxu0
      %v2687 = vadd.f32 %v591, %v2686
      %v2688 = vpop.f32.mrb[0].mxu0
      %v2689 = vadd.f32 %v595, %v2688
      %2690 = vmatprep.mubr.bf16.mxu0 %v1363
      %2691 = vmatmul.mubr.bf16.gmra.mrb[0].mxu0 %v1362
      %v2692 = vpop.f32.mrb[0].mxu0
      %v2693 = vadd.f32 %v591, %v2692
      %v2694 = vpop.f32.mrb[0].mxu0
      %v2695 = vadd.f32 %v595, %v2694
      %v2696 = vpop.f32.mrb[0].mxu0
      %v2697 = vadd.f32 %v591, %v2696
      %v2698 = vpop.f32.mrb[0].mxu0
      %v2699 = vadd.f32 %v595, %v2698
      %2700 = vmatprep.mubr.bf16.mxu0 %v1365
      %2701 = vmatmul.mubr.bf16.gmra.mrb[0].mxu0 %v1364
      %v2702 = vpop.f32.mrb[0].mxu0
      %v2703 = vadd.f32 %v591, %v2702
      %v2704 = vpop.f32.mrb[0].mxu0
      %v2705 = vadd.f32 %v595, %v2704
      %v2706 = vpop.f32.mrb[0].mxu0
      %v2707 = vadd.f32 %v591, %v2706
      %v2708 = vpop.f32.mrb[0].mxu0
      %v2709 = vadd.f32 %v595, %v2708
      %2710 = vdwg.mxu0
      %v2711 = vmax.f32 %v1753, 0.0
      %v2712 = vmax.f32 %v1755, 0.0
      %v2713 = vmax.f32 %v1757, 0.0
      %v2714 = vmax.f32 %v1759, 0.0
      %v2715 = vmax.f32 %v1763, 0.0
      %v2716 = vmax.f32 %v1765, 0.0
      %v2717 = vmax.f32 %v1767, 0.0
      %v2718 = vmax.f32 %v1769, 0.0
      %v2719 = vmax.f32 %v1773, 0.0
      %v2720 = vmax.f32 %v1775, 0.0
      %v2721 = vmax.f32 %v1777, 0.0
      %v2722 = vmax.f32 %v1779, 0.0
      %v2723 = vmax.f32 %v1783, 0.0
      %v2724 = vmax.f32 %v1785, 0.0
      %v2725 = vmax.f32 %v1787, 0.0
      %v2726 = vmax.f32 %v1789, 0.0
      %v2727 = vmax.f32 %v1793, 0.0
      %v2728 = vmax.f32 %v1795, 0.0
      %v2729 = vmax.f32 %v1797, 0.0
      %v2730 = vmax.f32 %v1799, 0.0
      %v2731 = vmax.f32 %v1803, 0.0
      %v2732 = vmax.f32 %v1805, 0.0
      %v2733 = vmax.f32 %v1807, 0.0
      %v2734 = vmax.f32 %v1809, 0.0
      %v2735 = vmax.f32 %v1813, 0.0
      %v2736 = vmax.f32 %v1815, 0.0
      %v2737 = vmax.f32 %v1817, 0.0
      %v2738 = vmax.f32 %v1819, 0.0
      %v2739 = vmax.f32 %v1823, 0.0
      %v2740 = vmax.f32 %v1825, 0.0
      %v2741 = vmax.f32 %v1827, 0.0
      %v2742 = vmax.f32 %v1829, 0.0
      %v2743 = vmax.f32 %v1833, 0.0
      %v2744 = vmax.f32 %v1835, 0.0
      %v2745 = vmax.f32 %v1837, 0.0
      %v2746 = vmax.f32 %v1839, 0.0
      %v2747 = vmax.f32 %v1843, 0.0
      %v2748 = vmax.f32 %v1845, 0.0
      %v2749 = vmax.f32 %v1847, 0.0
      %v2750 = vmax.f32 %v1849, 0.0
      %v2751 = vmax.f32 %v1853, 0.0
      %v2752 = vmax.f32 %v1855, 0.0
      %v2753 = vmax.f32 %v1857, 0.0
      %v2754 = vmax.f32 %v1859, 0.0
      %v2755 = vmax.f32 %v1863, 0.0
      %v2756 = vmax.f32 %v1865, 0.0
      %v2757 = vmax.f32 %v1867, 0.0
      %v2758 = vmax.f32 %v1869, 0.0
      %v2759 = vmax.f32 %v1873, 0.0
      %v2760 = vmax.f32 %v1875, 0.0
      %v2761 = vmax.f32 %v1877, 0.0
      %v2762 = vmax.f32 %v1879, 0.0
      %v2763 = vmax.f32 %v1883, 0.0
      %v2764 = vmax.f32 %v1885, 0.0
      %v2765 = vmax.f32 %v1887, 0.0
      %v2766 = vmax.f32 %v1889, 0.0
      %v2767 = vmax.f32 %v1893, 0.0
      %v2768 = vmax.f32 %v1895, 0.0
      %v2769 = vmax.f32 %v1897, 0.0
      %v2770 = vmax.f32 %v1899, 0.0
      %v2771 = vmax.f32 %v1903, 0.0
      %v2772 = vmax.f32 %v1905, 0.0
      %v2773 = vmax.f32 %v1907, 0.0
      %v2774 = vmax.f32 %v1909, 0.0
      %v2775 = vmax.f32 %v1913, 0.0
      %v2776 = vmax.f32 %v1915, 0.0
      %v2777 = vmax.f32 %v1917, 0.0
      %v2778 = vmax.f32 %v1919, 0.0
      %v2779 = vmax.f32 %v1923, 0.0
      %v2780 = vmax.f32 %v1925, 0.0
      %v2781 = vmax.f32 %v1927, 0.0
      %v2782 = vmax.f32 %v1929, 0.0
      %v2783 = vmax.f32 %v1933, 0.0
      %v2784 = vmax.f32 %v1935, 0.0
      %v2785 = vmax.f32 %v1937, 0.0
      %v2786 = vmax.f32 %v1939, 0.0
      %v2787 = vmax.f32 %v1943, 0.0
      %v2788 = vmax.f32 %v1945, 0.0
      %v2789 = vmax.f32 %v1947, 0.0
      %v2790 = vmax.f32 %v1949, 0.0
      %v2791 = vmax.f32 %v1953, 0.0
      %v2792 = vmax.f32 %v1955, 0.0
      %v2793 = vmax.f32 %v1957, 0.0
      %v2794 = vmax.f32 %v1959, 0.0
      %v2795 = vmax.f32 %v1963, 0.0
      %v2796 = vmax.f32 %v1965, 0.0
      %v2797 = vmax.f32 %v1967, 0.0
      %v2798 = vmax.f32 %v1969, 0.0
      %v2799 = vmax.f32 %v1973, 0.0
      %v2800 = vmax.f32 %v1975, 0.0
      %v2801 = vmax.f32 %v1977, 0.0
      %v2802 = vmax.f32 %v1979, 0.0
      %v2803 = vmax.f32 %v1983, 0.0
      %v2804 = vmax.f32 %v1985, 0.0
      %v2805 = vmax.f32 %v1987, 0.0
      %v2806 = vmax.f32 %v1989, 0.0
      %v2807 = vmax.f32 %v1993, 0.0
      %v2808 = vmax.f32 %v1995, 0.0
      %v2809 = vmax.f32 %v1997, 0.0
      %v2810 = vmax.f32 %v1999, 0.0
      %v2811 = vmax.f32 %v2003, 0.0
      %v2812 = vmax.f32 %v2005, 0.0
      %v2813 = vmax.f32 %v2007, 0.0
      %v2814 = vmax.f32 %v2009, 0.0
      %v2815 = vmax.f32 %v2013, 0.0
      %v2816 = vmax.f32 %v2015, 0.0
      %v2817 = vmax.f32 %v2017, 0.0
      %v2818 = vmax.f32 %v2019, 0.0
      %v2819 = vmax.f32 %v2023, 0.0
      %v2820 = vmax.f32 %v2025, 0.0
      %v2821 = vmax.f32 %v2027, 0.0
      %v2822 = vmax.f32 %v2029, 0.0
      %v2823 = vmax.f32 %v2033, 0.0
      %v2824 = vmax.f32 %v2035, 0.0
      %v2825 = vmax.f32 %v2037, 0.0
      %v2826 = vmax.f32 %v2039, 0.0
      %v2827 = vmax.f32 %v2043, 0.0
      %v2828 = vmax.f32 %v2045, 0.0
      %v2829 = vmax.f32 %v2047, 0.0
      %v2830 = vmax.f32 %v2049, 0.0
      %v2831 = vmax.f32 %v2053, 0.0
      %v2832 = vmax.f32 %v2055, 0.0
      %v2833 = vmax.f32 %v2057, 0.0
      %v2834 = vmax.f32 %v2059, 0.0
      %v2835 = vmax.f32 %v2063, 0.0
      %v2836 = vmax.f32 %v2065, 0.0
      %v2837 = vmax.f32 %v2067, 0.0
      %v2838 = vmax.f32 %v2069, 0.0
      %v2839 = vmax.f32 %v2073, 0.0
      %v2840 = vmax.f32 %v2075, 0.0
      %v2841 = vmax.f32 %v2077, 0.0
      %v2842 = vmax.f32 %v2079, 0.0
      %v2843 = vmax.f32 %v2083, 0.0
      %v2844 = vmax.f32 %v2085, 0.0
      %v2845 = vmax.f32 %v2087, 0.0
      %v2846 = vmax.f32 %v2089, 0.0
      %v2847 = vmax.f32 %v2093, 0.0
      %v2848 = vmax.f32 %v2095, 0.0
      %v2849 = vmax.f32 %v2097, 0.0
      %v2850 = vmax.f32 %v2099, 0.0
      %v2851 = vmax.f32 %v2103, 0.0
      %v2852 = vmax.f32 %v2105, 0.0
      %v2853 = vmax.f32 %v2107, 0.0
      %v2854 = vmax.f32 %v2109, 0.0
      %v2855 = vmax.f32 %v2113, 0.0
      %v2856 = vmax.f32 %v2115, 0.0
      %v2857 = vmax.f32 %v2117, 0.0
      %v2858 = vmax.f32 %v2119, 0.0
      %v2859 = vmax.f32 %v2123, 0.0
      %v2860 = vmax.f32 %v2125, 0.0
      %v2861 = vmax.f32 %v2127, 0.0
      %v2862 = vmax.f32 %v2129, 0.0
      %v2863 = vmax.f32 %v2133, 0.0
      %v2864 = vmax.f32 %v2135, 0.0
      %v2865 = vmax.f32 %v2137, 0.0
      %v2866 = vmax.f32 %v2139, 0.0
      %v2867 = vmax.f32 %v2143, 0.0
      %v2868 = vmax.f32 %v2145, 0.0
      %v2869 = vmax.f32 %v2147, 0.0
      %v2870 = vmax.f32 %v2149, 0.0
      %v2871 = vmax.f32 %v2153, 0.0
      %v2872 = vmax.f32 %v2155, 0.0
      %v2873 = vmax.f32 %v2157, 0.0
      %v2874 = vmax.f32 %v2159, 0.0
      %v2875 = vmax.f32 %v2163, 0.0
      %v2876 = vmax.f32 %v2165, 0.0
      %v2877 = vmax.f32 %v2167, 0.0
      %v2878 = vmax.f32 %v2169, 0.0
      %v2879 = vmax.f32 %v2173, 0.0
      %v2880 = vmax.f32 %v2175, 0.0
      %v2881 = vmax.f32 %v2177, 0.0
      %v2882 = vmax.f32 %v2179, 0.0
      %v2883 = vmax.f32 %v2183, 0.0
      %v2884 = vmax.f32 %v2185, 0.0
      %v2885 = vmax.f32 %v2187, 0.0
      %v2886 = vmax.f32 %v2189, 0.0
      %v2887 = vmax.f32 %v2193, 0.0
      %v2888 = vmax.f32 %v2195, 0.0
      %v2889 = vmax.f32 %v2197, 0.0
      %v2890 = vmax.f32 %v2199, 0.0
      %v2891 = vmax.f32 %v2203, 0.0
      %v2892 = vmax.f32 %v2205, 0.0
      %v2893 = vmax.f32 %v2207, 0.0
      %v2894 = vmax.f32 %v2209, 0.0
      %v2895 = vmax.f32 %v2213, 0.0
      %v2896 = vmax.f32 %v2215, 0.0
      %v2897 = vmax.f32 %v2217, 0.0
      %v2898 = vmax.f32 %v2219, 0.0
      %v2899 = vmax.f32 %v2223, 0.0
      %v2900 = vmax.f32 %v2225, 0.0
      %v2901 = vmax.f32 %v2227, 0.0
      %v2902 = vmax.f32 %v2229, 0.0
      %v2903 = vmax.f32 %v2233, 0.0
      %v2904 = vmax.f32 %v2235, 0.0
      %v2905 = vmax.f32 %v2237, 0.0
      %v2906 = vmax.f32 %v2239, 0.0
      %v2907 = vmax.f32 %v2243, 0.0
      %v2908 = vmax.f32 %v2245, 0.0
      %v2909 = vmax.f32 %v2247, 0.0
      %v2910 = vmax.f32 %v2249, 0.0
      %v2911 = vmax.f32 %v2253, 0.0
      %v2912 = vmax.f32 %v2255, 0.0
      %v2913 = vmax.f32 %v2257, 0.0
      %v2914 = vmax.f32 %v2259, 0.0
      %v2915 = vmax.f32 %v2263, 0.0
      %v2916 = vmax.f32 %v2265, 0.0
      %v2917 = vmax.f32 %v2267, 0.0
      %v2918 = vmax.f32 %v2269, 0.0
      %v2919 = vmax.f32 %v2273, 0.0
      %v2920 = vmax.f32 %v2275, 0.0
      %v2921 = vmax.f32 %v2277, 0.0
      %v2922 = vmax.f32 %v2279, 0.0
      %v2923 = vmax.f32 %v2283, 0.0
      %v2924 = vmax.f32 %v2285, 0.0
      %v2925 = vmax.f32 %v2287, 0.0
      %v2926 = vmax.f32 %v2289, 0.0
      %v2927 = vmax.f32 %v2293, 0.0
      %v2928 = vmax.f32 %v2295, 0.0
      %v2929 = vmax.f32 %v2297, 0.0
      %v2930 = vmax.f32 %v2299, 0.0
      %v2931 = vmax.f32 %v2303, 0.0
      %v2932 = vmax.f32 %v2305, 0.0
      %v2933 = vmax.f32 %v2307, 0.0
      %v2934 = vmax.f32 %v2309, 0.0
      %v2935 = vmax.f32 %v2313, 0.0
      %v2936 = vmax.f32 %v2315, 0.0
      %v2937 = vmax.f32 %v2317, 0.0
      %v2938 = vmax.f32 %v2319, 0.0
      %v2939 = vmax.f32 %v2323, 0.0
      %v2940 = vmax.f32 %v2325, 0.0
      %v2941 = vmax.f32 %v2327, 0.0
      %v2942 = vmax.f32 %v2329, 0.0
      %v2943 = vmax.f32 %v2333, 0.0
      %v2944 = vmax.f32 %v2335, 0.0
      %v2945 = vmax.f32 %v2337, 0.0
      %v2946 = vmax.f32 %v2339, 0.0
      %v2947 = vmax.f32 %v2343, 0.0
      %v2948 = vmax.f32 %v2345, 0.0
      %v2949 = vmax.f32 %v2347, 0.0
      %v2950 = vmax.f32 %v2349, 0.0
      %v2951 = vmax.f32 %v2353, 0.0
      %v2952 = vmax.f32 %v2355, 0.0
      %v2953 = vmax.f32 %v2357, 0.0
      %v2954 = vmax.f32 %v2359, 0.0
      %v2955 = vmax.f32 %v2363, 0.0
      %v2956 = vmax.f32 %v2365, 0.0
      %v2957 = vmax.f32 %v2367, 0.0
      %v2958 = vmax.f32 %v2369, 0.0
      %v2959 = vmax.f32 %v2373, 0.0
      %v2960 = vmax.f32 %v2375, 0.0
      %v2961 = vmax.f32 %v2377, 0.0
      %v2962 = vmax.f32 %v2379, 0.0
      %v2963 = vmax.f32 %v2383, 0.0
      %v2964 = vmax.f32 %v2385, 0.0
      %v2965 = vmax.f32 %v2387, 0.0
      %v2966 = vmax.f32 %v2389, 0.0
      %v2967 = vmax.f32 %v2393, 0.0
      %v2968 = vmax.f32 %v2395, 0.0
      %v2969 = vmax.f32 %v2397, 0.0
      %v2970 = vmax.f32 %v2399, 0.0
      %v2971 = vmax.f32 %v2403, 0.0
      %v2972 = vmax.f32 %v2405, 0.0
      %v2973 = vmax.f32 %v2407, 0.0
      %v2974 = vmax.f32 %v2409, 0.0
      %v2975 = vmax.f32 %v2413, 0.0
      %v2976 = vmax.f32 %v2415, 0.0
      %v2977 = vmax.f32 %v2417, 0.0
      %v2978 = vmax.f32 %v2419, 0.0
      %v2979 = vmax.f32 %v2423, 0.0
      %v2980 = vmax.f32 %v2425, 0.0
      %v2981 = vmax.f32 %v2427, 0.0
      %v2982 = vmax.f32 %v2429, 0.0
      %v2983 = vmax.f32 %v2433, 0.0
      %v2984 = vmax.f32 %v2435, 0.0
      %v2985 = vmax.f32 %v2437, 0.0
      %v2986 = vmax.f32 %v2439, 0.0
      %v2987 = vmax.f32 %v2443, 0.0
      %v2988 = vmax.f32 %v2445, 0.0
      %v2989 = vmax.f32 %v2447, 0.0
      %v2990 = vmax.f32 %v2449, 0.0
      %v2991 = vmax.f32 %v2453, 0.0
      %v2992 = vmax.f32 %v2455, 0.0
      %v2993 = vmax.f32 %v2457, 0.0
      %v2994 = vmax.f32 %v2459, 0.0
      %v2995 = vmax.f32 %v2463, 0.0
      %v2996 = vmax.f32 %v2465, 0.0
      %v2997 = vmax.f32 %v2467, 0.0
      %v2998 = vmax.f32 %v2469, 0.0
      %v2999 = vmax.f32 %v2473, 0.0
      %v3000 = vmax.f32 %v2475, 0.0
      %v3001 = vmax.f32 %v2477, 0.0
      %v3002 = vmax.f32 %v2479, 0.0
      %v3003 = vmax.f32 %v2483, 0.0
      %v3004 = vmax.f32 %v2485, 0.0
      %v3005 = vmax.f32 %v2487, 0.0
      %v3006 = vmax.f32 %v2489, 0.0
      %v3007 = vmax.f32 %v2493, 0.0
      %v3008 = vmax.f32 %v2495, 0.0
      %v3009 = vmax.f32 %v2497, 0.0
      %v3010 = vmax.f32 %v2499, 0.0
      %v3011 = vmax.f32 %v2503, 0.0
      %v3012 = vmax.f32 %v2505, 0.0
      %v3013 = vmax.f32 %v2507, 0.0
      %v3014 = vmax.f32 %v2509, 0.0
      %v3015 = vmax.f32 %v2513, 0.0
      %v3016 = vmax.f32 %v2515, 0.0
      %v3017 = vmax.f32 %v2517, 0.0
      %v3018 = vmax.f32 %v2519, 0.0
      %v3019 = vmax.f32 %v2523, 0.0
      %v3020 = vmax.f32 %v2525, 0.0
      %v3021 = vmax.f32 %v2527, 0.0
      %v3022 = vmax.f32 %v2529, 0.0
      %v3023 = vmax.f32 %v2533, 0.0
      %v3024 = vmax.f32 %v2535, 0.0
      %v3025 = vmax.f32 %v2537, 0.0
      %v3026 = vmax.f32 %v2539, 0.0
      %v3027 = vmax.f32 %v2543, 0.0
      %v3028 = vmax.f32 %v2545, 0.0
      %v3029 = vmax.f32 %v2547, 0.0
      %v3030 = vmax.f32 %v2549, 0.0
      %v3031 = vmax.f32 %v2553, 0.0
      %v3032 = vmax.f32 %v2555, 0.0
      %v3033 = vmax.f32 %v2557, 0.0
      %v3034 = vmax.f32 %v2559, 0.0
      %v3035 = vmax.f32 %v2563, 0.0
      %v3036 = vmax.f32 %v2565, 0.0
      %v3037 = vmax.f32 %v2567, 0.0
      %v3038 = vmax.f32 %v2569, 0.0
      %v3039 = vmax.f32 %v2573, 0.0
      %v3040 = vmax.f32 %v2575, 0.0
      %v3041 = vmax.f32 %v2577, 0.0
      %v3042 = vmax.f32 %v2579, 0.0
      %v3043 = vmax.f32 %v2583, 0.0
      %v3044 = vmax.f32 %v2585, 0.0
      %v3045 = vmax.f32 %v2587, 0.0
      %v3046 = vmax.f32 %v2589, 0.0
      %v3047 = vmax.f32 %v2593, 0.0
      %v3048 = vmax.f32 %v2595, 0.0
      %v3049 = vmax.f32 %v2597, 0.0
      %v3050 = vmax.f32 %v2599, 0.0
      %v3051 = vmax.f32 %v2603, 0.0
      %v3052 = vmax.f32 %v2605, 0.0
      %v3053 = vmax.f32 %v2607, 0.0
      %v3054 = vmax.f32 %v2609, 0.0
      %v3055 = vmax.f32 %v2613, 0.0
      %v3056 = vmax.f32 %v2615, 0.0
      %v3057 = vmax.f32 %v2617, 0.0
      %v3058 = vmax.f32 %v2619, 0.0
      %v3059 = vmax.f32 %v2623, 0.0
      %v3060 = vmax.f32 %v2625, 0.0
      %v3061 = vmax.f32 %v2627, 0.0
      %v3062 = vmax.f32 %v2629, 0.0
      %v3063 = vmax.f32 %v2633, 0.0
      %v3064 = vmax.f32 %v2635, 0.0
      %v3065 = vmax.f32 %v2637, 0.0
      %v3066 = vmax.f32 %v2639, 0.0
      %v3067 = vmax.f32 %v2643, 0.0
      %v3068 = vmax.f32 %v2645, 0.0
      %v3069 = vmax.f32 %v2647, 0.0
      %v3070 = vmax.f32 %v2649, 0.0
      %v3071 = vmax.f32 %v2653, 0.0
      %v3072 = vmax.f32 %v2655, 0.0
      %v3073 = vmax.f32 %v2657, 0.0
      %v3074 = vmax.f32 %v2659, 0.0
      %v3075 = vmax.f32 %v2663, 0.0
      %v3076 = vmax.f32 %v2665, 0.0
      %v3077 = vmax.f32 %v2667, 0.0
      %v3078 = vmax.f32 %v2669, 0.0
      %v3079 = vmax.f32 %v2673, 0.0
      %v3080 = vmax.f32 %v2675, 0.0
      %v3081 = vmax.f32 %v2677, 0.0
      %v3082 = vmax.f32 %v2679, 0.0
      %v3083 = vmax.f32 %v2683, 0.0
      %v3084 = vmax.f32 %v2685, 0.0
      %v3085 = vmax.f32 %v2687, 0.0
      %v3086 = vmax.f32 %v2689, 0.0
      %v3087 = vmax.f32 %v2693, 0.0
      %v3088 = vmax.f32 %v2695, 0.0
      %v3089 = vmax.f32 %v2697, 0.0
      %v3090 = vmax.f32 %v2699, 0.0
      %v3091 = vmax.f32 %v2703, 0.0
      %v3092 = vmax.f32 %v2705, 0.0
      %v3093 = vmax.f32 %v2707, 0.0
      %v3094 = vmax.f32 %v2709, 0.0
      %v3095 = vmax.f32 %v2711, %v2727
      %v3096 = vmax.f32 %v2712, %v2728
      %v3097 = vmax.f32 %v2713, %v2729
      %v3098 = vmax.f32 %v2714, %v2730
      %v3099 = vmax.f32 %v2715, %v2731
      %v3100 = vmax.f32 %v2716, %v2732
      %v3101 = vmax.f32 %v2717, %v2733
      %v3102 = vmax.f32 %v2718, %v2734
      %v3103 = vmax.f32 %v2719, %v2735
      %v3104 = vmax.f32 %v2720, %v2736
      %v3105 = vmax.f32 %v2721, %v2737
      %v3106 = vmax.f32 %v2722, %v2738
      %v3107 = vmax.f32 %v2723, %v2739
      %v3108 = vmax.f32 %v2724, %v2740
      %v3109 = vmax.f32 %v2725, %v2741
      %v3110 = vmax.f32 %v2726, %v2742
      %v3111 = vmax.f32 %v2743, %v2759
      %v3112 = vmax.f32 %v2744, %v2760
      %v3113 = vmax.f32 %v2745, %v2761
      %v3114 = vmax.f32 %v2746, %v2762
      %v3115 = vmax.f32 %v2747, %v2763
      %v3116 = vmax.f32 %v2748, %v2764
      %v3117 = vmax.f32 %v2749, %v2765
      %v3118 = vmax.f32 %v2750, %v2766
      %v3119 = vmax.f32 %v2751, %v2767
      %v3120 = vmax.f32 %v2752, %v2768
      %v3121 = vmax.f32 %v2753, %v2769
      %v3122 = vmax.f32 %v2754, %v2770
      %v3123 = vmax.f32 %v2755, %v2771
      %v3124 = vmax.f32 %v2756, %v2772
      %v3125 = vmax.f32 %v2757, %v2773
      %v3126 = vmax.f32 %v2758, %v2774
      %v3127 = vmax.f32 %v2775, %v2791
      %v3128 = vmax.f32 %v2776, %v2792
      %v3129 = vmax.f32 %v2777, %v2793
      %v3130 = vmax.f32 %v2778, %v2794
      %v3131 = vmax.f32 %v2779, %v2795
      %v3132 = vmax.f32 %v2780, %v2796
      %v3133 = vmax.f32 %v2781, %v2797
      %v3134 = vmax.f32 %v2782, %v2798
      %v3135 = vmax.f32 %v2783, %v2799
      %v3136 = vmax.f32 %v2784, %v2800
      %v3137 = vmax.f32 %v2785, %v2801
      %v3138 = vmax.f32 %v2786, %v2802
      %v3139 = vmax.f32 %v2787, %v2803
      %v3140 = vmax.f32 %v2788, %v2804
      %v3141 = vmax.f32 %v2789, %v2805
      %v3142 = vmax.f32 %v2790, %v2806
      %v3143 = vmax.f32 %v2807, %v2823
      %v3144 = vmax.f32 %v2808, %v2824
      %v3145 = vmax.f32 %v2809, %v2825
      %v3146 = vmax.f32 %v2810, %v2826
      %v3147 = vmax.f32 %v2811, %v2827
      %v3148 = vmax.f32 %v2812, %v2828
      %v3149 = vmax.f32 %v2813, %v2829
      %v3150 = vmax.f32 %v2814, %v2830
      %v3151 = vmax.f32 %v2815, %v2831
      %v3152 = vmax.f32 %v2816, %v2832
      %v3153 = vmax.f32 %v2817, %v2833
      %v3154 = vmax.f32 %v2818, %v2834
      %v3155 = vmax.f32 %v2819, %v2835
      %v3156 = vmax.f32 %v2820, %v2836
      %v3157 = vmax.f32 %v2821, %v2837
      %v3158 = vmax.f32 %v2822, %v2838
      %v3159 = vmax.f32 %v2839, %v2855
      %v3160 = vmax.f32 %v2840, %v2856
      %v3161 = vmax.f32 %v2841, %v2857
      %v3162 = vmax.f32 %v2842, %v2858
      %v3163 = vmax.f32 %v2843, %v2859
      %v3164 = vmax.f32 %v2844, %v2860
      %v3165 = vmax.f32 %v2845, %v2861
      %v3166 = vmax.f32 %v2846, %v2862
      %v3167 = vmax.f32 %v2847, %v2863
      %v3168 = vmax.f32 %v2848, %v2864
      %v3169 = vmax.f32 %v2849, %v2865
      %v3170 = vmax.f32 %v2850, %v2866
      %v3171 = vmax.f32 %v2851, %v2867
      %v3172 = vmax.f32 %v2852, %v2868
      %v3173 = vmax.f32 %v2853, %v2869
      %v3174 = vmax.f32 %v2854, %v2870
      %v3175 = vmax.f32 %v2871, %v2887
      %v3176 = vmax.f32 %v2872, %v2888
      %v3177 = vmax.f32 %v2873, %v2889
      %v3178 = vmax.f32 %v2874, %v2890
      %v3179 = vmax.f32 %v2875, %v2891
      %v3180 = vmax.f32 %v2876, %v2892
      %v3181 = vmax.f32 %v2877, %v2893
      %v3182 = vmax.f32 %v2878, %v2894
      %v3183 = vmax.f32 %v2879, %v2895
      %v3184 = vmax.f32 %v2880, %v2896
      %v3185 = vmax.f32 %v2881, %v2897
      %v3186 = vmax.f32 %v2882, %v2898
      %v3187 = vmax.f32 %v2883, %v2899
      %v3188 = vmax.f32 %v2884, %v2900
      %v3189 = vmax.f32 %v2885, %v2901
      %v3190 = vmax.f32 %v2886, %v2902
      %v3191 = vmax.f32 %v2903, %v2919
      %v3192 = vmax.f32 %v2904, %v2920
      %v3193 = vmax.f32 %v2905, %v2921
      %v3194 = vmax.f32 %v2906, %v2922
      %v3195 = vmax.f32 %v2907, %v2923
      %v3196 = vmax.f32 %v2908, %v2924
      %v3197 = vmax.f32 %v2909, %v2925
      %v3198 = vmax.f32 %v2910, %v2926
      %v3199 = vmax.f32 %v2911, %v2927
      %v3200 = vmax.f32 %v2912, %v2928
      %v3201 = vmax.f32 %v2913, %v2929
      %v3202 = vmax.f32 %v2914, %v2930
      %v3203 = vmax.f32 %v2915, %v2931
      %v3204 = vmax.f32 %v2916, %v2932
      %v3205 = vmax.f32 %v2917, %v2933
      %v3206 = vmax.f32 %v2918, %v2934
      %v3207 = vmax.f32 %v2935, %v2951
      %v3208 = vmax.f32 %v2936, %v2952
      %v3209 = vmax.f32 %v2937, %v2953
      %v3210 = vmax.f32 %v2938, %v2954
      %v3211 = vmax.f32 %v2939, %v2955
      %v3212 = vmax.f32 %v2940, %v2956
      %v3213 = vmax.f32 %v2941, %v2957
      %v3214 = vmax.f32 %v2942, %v2958
      %v3215 = vmax.f32 %v2943, %v2959
      %v3216 = vmax.f32 %v2944, %v2960
      %v3217 = vmax.f32 %v2945, %v2961
      %v3218 = vmax.f32 %v2946, %v2962
      %v3219 = vmax.f32 %v2947, %v2963
      %v3220 = vmax.f32 %v2948, %v2964
      %v3221 = vmax.f32 %v2949, %v2965
      %v3222 = vmax.f32 %v2950, %v2966
      %v3223 = vmax.f32 %v2967, %v2983
      %v3224 = vmax.f32 %v2968, %v2984
      %v3225 = vmax.f32 %v2969, %v2985
      %v3226 = vmax.f32 %v2970, %v2986
      %v3227 = vmax.f32 %v2971, %v2987
      %v3228 = vmax.f32 %v2972, %v2988
      %v3229 = vmax.f32 %v2973, %v2989
      %v3230 = vmax.f32 %v2974, %v2990
      %v3231 = vmax.f32 %v2975, %v2991
      %v3232 = vmax.f32 %v2976, %v2992
      %v3233 = vmax.f32 %v2977, %v2993
      %v3234 = vmax.f32 %v2978, %v2994
      %v3235 = vmax.f32 %v2979, %v2995
      %v3236 = vmax.f32 %v2980, %v2996
      %v3237 = vmax.f32 %v2981, %v2997
      %v3238 = vmax.f32 %v2982, %v2998
      %v3239 = vmax.f32 %v2999, %v3015
      %v3240 = vmax.f32 %v3000, %v3016
      %v3241 = vmax.f32 %v3001, %v3017
      %v3242 = vmax.f32 %v3002, %v3018
      %v3243 = vmax.f32 %v3003, %v3019
      %v3244 = vmax.f32 %v3004, %v3020
      %v3245 = vmax.f32 %v3005, %v3021
      %v3246 = vmax.f32 %v3006, %v3022
      %v3247 = vmax.f32 %v3007, %v3023
      %v3248 = vmax.f32 %v3008, %v3024
      %v3249 = vmax.f32 %v3009, %v3025
      %v3250 = vmax.f32 %v3010, %v3026
      %v3251 = vmax.f32 %v3011, %v3027
      %v3252 = vmax.f32 %v3012, %v3028
      %v3253 = vmax.f32 %v3013, %v3029
      %v3254 = vmax.f32 %v3014, %v3030
      %v3255 = vmax.f32 %v3031, %v3047
      %v3256 = vmax.f32 %v3032, %v3048
      %v3257 = vmax.f32 %v3033, %v3049
      %v3258 = vmax.f32 %v3034, %v3050
      %v3259 = vmax.f32 %v3035, %v3051
      %v3260 = vmax.f32 %v3036, %v3052
      %v3261 = vmax.f32 %v3037, %v3053
      %v3262 = vmax.f32 %v3038, %v3054
      %v3263 = vmax.f32 %v3039, %v3055
      %v3264 = vmax.f32 %v3040, %v3056
      %v3265 = vmax.f32 %v3041, %v3057
      %v3266 = vmax.f32 %v3042, %v3058
      %v3267 = vmax.f32 %v3043, %v3059
      %v3268 = vmax.f32 %v3044, %v3060
      %v3269 = vmax.f32 %v3045, %v3061
      %v3270 = vmax.f32 %v3046, %v3062
      %v3271 = vmax.f32 %v3063, %v3079
      %v3272 = vmax.f32 %v3064, %v3080
      %v3273 = vmax.f32 %v3065, %v3081
      %v3274 = vmax.f32 %v3066, %v3082
      %v3275 = vmax.f32 %v3067, %v3083
      %v3276 = vmax.f32 %v3068, %v3084
      %v3277 = vmax.f32 %v3069, %v3085
      %v3278 = vmax.f32 %v3070, %v3086
      %v3279 = vmax.f32 %v3071, %v3087
      %v3280 = vmax.f32 %v3072, %v3088
      %v3281 = vmax.f32 %v3073, %v3089
      %v3282 = vmax.f32 %v3074, %v3090
      %v3283 = vmax.f32 %v3075, %v3091
      %v3284 = vmax.f32 %v3076, %v3092
      %v3285 = vmax.f32 %v3077, %v3093
      %v3286 = vmax.f32 %v3078, %v3094
      %3287 = vrot.lane.b32.xlu0 %v3095, 127
      %v3288 = vpop.permute.xlu0 %3287
      %3289 = vrot.lane.b32.xlu0 %v3097, 127
      %v3290 = vpop.permute.xlu0 %3289
      %3291 = vrot.lane.b32.xlu0 %v3099, 127
      %v3292 = vpop.permute.xlu0 %3291
      %3293 = vrot.lane.b32.xlu0 %v3101, 127
      %v3294 = vpop.permute.xlu0 %3293
      %3295 = vrot.lane.b32.xlu0 %v3103, 127
      %v3296 = vpop.permute.xlu0 %3295
      %3297 = vrot.lane.b32.xlu0 %v3105, 127
      %v3298 = vpop.permute.xlu0 %3297
      %3299 = vrot.lane.b32.xlu0 %v3107, 127
      %v3300 = vpop.permute.xlu0 %3299
      %3301 = vrot.lane.b32.xlu0 %v3109, 127
      %v3302 = vpop.permute.xlu0 %3301
      %3303 = vrot.lane.b32.xlu0 %v3111, 127
      %v3304 = vpop.permute.xlu0 %3303
      %3305 = vrot.lane.b32.xlu0 %v3113, 127
      %v3306 = vpop.permute.xlu0 %3305
      %3307 = vrot.lane.b32.xlu0 %v3115, 127
      %v3308 = vpop.permute.xlu0 %3307
      %3309 = vrot.lane.b32.xlu0 %v3117, 127
      %v3310 = vpop.permute.xlu0 %3309
      %3311 = vrot.lane.b32.xlu0 %v3119, 127
      %v3312 = vpop.permute.xlu0 %3311
      %3313 = vrot.lane.b32.xlu0 %v3121, 127
      %v3314 = vpop.permute.xlu0 %3313
      %3315 = vrot.lane.b32.xlu0 %v3123, 127
      %v3316 = vpop.permute.xlu0 %3315
      %3317 = vrot.lane.b32.xlu0 %v3125, 127
      %v3318 = vpop.permute.xlu0 %3317
      %3319 = vrot.lane.b32.xlu0 %v3127, 127
      %v3320 = vpop.permute.xlu0 %3319
      %3321 = vrot.lane.b32.xlu0 %v3129, 127
      %v3322 = vpop.permute.xlu0 %3321
      %3323 = vrot.lane.b32.xlu0 %v3131, 127
      %v3324 = vpop.permute.xlu0 %3323
      %3325 = vrot.lane.b32.xlu0 %v3133, 127
      %v3326 = vpop.permute.xlu0 %3325
      %3327 = vrot.lane.b32.xlu0 %v3135, 127
      %v3328 = vpop.permute.xlu0 %3327
      %3329 = vrot.lane.b32.xlu0 %v3137, 127
      %v3330 = vpop.permute.xlu0 %3329
      %3331 = vrot.lane.b32.xlu0 %v3139, 127
      %v3332 = vpop.permute.xlu0 %3331
      %3333 = vrot.lane.b32.xlu0 %v3141, 127
      %v3334 = vpop.permute.xlu0 %3333
      %3335 = vrot.lane.b32.xlu0 %v3143, 127
      %v3336 = vpop.permute.xlu0 %3335
      %3337 = vrot.lane.b32.xlu0 %v3145, 127
      %v3338 = vpop.permute.xlu0 %3337
      %3339 = vrot.lane.b32.xlu0 %v3147, 127
      %v3340 = vpop.permute.xlu0 %3339
      %3341 = vrot.lane.b32.xlu0 %v3149, 127
      %v3342 = vpop.permute.xlu0 %3341
      %3343 = vrot.lane.b32.xlu0 %v3151, 127
      %v3344 = vpop.permute.xlu0 %3343
      %3345 = vrot.lane.b32.xlu0 %v3153, 127
      %v3346 = vpop.permute.xlu0 %3345
      %3347 = vrot.lane.b32.xlu0 %v3155, 127
      %v3348 = vpop.permute.xlu0 %3347
      %3349 = vrot.lane.b32.xlu0 %v3157, 127
      %v3350 = vpop.permute.xlu0 %3349
      %3351 = vrot.lane.b32.xlu0 %v3159, 127
      %v3352 = vpop.permute.xlu0 %3351
      %3353 = vrot.lane.b32.xlu0 %v3161, 127
      %v3354 = vpop.permute.xlu0 %3353
      %3355 = vrot.lane.b32.xlu0 %v3163, 127
      %v3356 = vpop.permute.xlu0 %3355
      %3357 = vrot.lane.b32.xlu0 %v3165, 127
      %v3358 = vpop.permute.xlu0 %3357
      %3359 = vrot.lane.b32.xlu0 %v3167, 127
      %v3360 = vpop.permute.xlu0 %3359
      %3361 = vrot.lane.b32.xlu0 %v3169, 127
      %v3362 = vpop.permute.xlu0 %3361
      %3363 = vrot.lane.b32.xlu0 %v3171, 127
      %v3364 = vpop.permute.xlu0 %3363
      %3365 = vrot.lane.b32.xlu0 %v3173, 127
      %v3366 = vpop.permute.xlu0 %3365
      %3367 = vrot.lane.b32.xlu0 %v3175, 127
      %v3368 = vpop.permute.xlu0 %3367
      %3369 = vrot.lane.b32.xlu0 %v3177, 127
      %v3370 = vpop.permute.xlu0 %3369
      %3371 = vrot.lane.b32.xlu0 %v3179, 127
      %v3372 = vpop.permute.xlu0 %3371
      %3373 = vrot.lane.b32.xlu0 %v3181, 127
      %v3374 = vpop.permute.xlu0 %3373
      %3375 = vrot.lane.b32.xlu0 %v3183, 127
      %v3376 = vpop.permute.xlu0 %3375
      %3377 = vrot.lane.b32.xlu0 %v3185, 127
      %v3378 = vpop.permute.xlu0 %3377
      %3379 = vrot.lane.b32.xlu0 %v3187, 127
      %v3380 = vpop.permute.xlu0 %3379
      %3381 = vrot.lane.b32.xlu0 %v3189, 127
      %v3382 = vpop.permute.xlu0 %3381
      %3383 = vrot.lane.b32.xlu0 %v3191, 127
      %v3384 = vpop.permute.xlu0 %3383
      %3385 = vrot.lane.b32.xlu0 %v3193, 127
      %v3386 = vpop.permute.xlu0 %3385
      %3387 = vrot.lane.b32.xlu0 %v3195, 127
      %v3388 = vpop.permute.xlu0 %3387
      %3389 = vrot.lane.b32.xlu0 %v3197, 127
      %v3390 = vpop.permute.xlu0 %3389
      %3391 = vrot.lane.b32.xlu0 %v3199, 127
      %v3392 = vpop.permute.xlu0 %3391
      %3393 = vrot.lane.b32.xlu0 %v3201, 127
      %v3394 = vpop.permute.xlu0 %3393
      %3395 = vrot.lane.b32.xlu0 %v3203, 127
      %v3396 = vpop.permute.xlu0 %3395
      %3397 = vrot.lane.b32.xlu0 %v3205, 127
      %v3398 = vpop.permute.xlu0 %3397
      %3399 = vrot.lane.b32.xlu0 %v3207, 127
      %v3400 = vpop.permute.xlu0 %3399
      %3401 = vrot.lane.b32.xlu0 %v3209, 127
      %v3402 = vpop.permute.xlu0 %3401
      %3403 = vrot.lane.b32.xlu0 %v3211, 127
      %v3404 = vpop.permute.xlu0 %3403
      %3405 = vrot.lane.b32.xlu0 %v3213, 127
      %v3406 = vpop.permute.xlu0 %3405
      %3407 = vrot.lane.b32.xlu0 %v3215, 127
      %v3408 = vpop.permute.xlu0 %3407
      %3409 = vrot.lane.b32.xlu0 %v3217, 127
      %v3410 = vpop.permute.xlu0 %3409
      %3411 = vrot.lane.b32.xlu0 %v3219, 127
      %v3412 = vpop.permute.xlu0 %3411
      %3413 = vrot.lane.b32.xlu0 %v3221, 127
      %v3414 = vpop.permute.xlu0 %3413
      %3415 = vrot.lane.b32.xlu0 %v3223, 127
      %v3416 = vpop.permute.xlu0 %3415
      %3417 = vrot.lane.b32.xlu0 %v3225, 127
      %v3418 = vpop.permute.xlu0 %3417
      %3419 = vrot.lane.b32.xlu0 %v3227, 127
      %v3420 = vpop.permute.xlu0 %3419
      %3421 = vrot.lane.b32.xlu0 %v3229, 127
      %v3422 = vpop.permute.xlu0 %3421
      %3423 = vrot.lane.b32.xlu0 %v3231, 127
      %v3424 = vpop.permute.xlu0 %3423
      %3425 = vrot.lane.b32.xlu0 %v3233, 127
      %v3426 = vpop.permute.xlu0 %3425
      %3427 = vrot.lane.b32.xlu0 %v3235, 127
      %v3428 = vpop.permute.xlu0 %3427
      %3429 = vrot.lane.b32.xlu0 %v3237, 127
      %v3430 = vpop.permute.xlu0 %3429
      %3431 = vrot.lane.b32.xlu0 %v3239, 127
      %v3432 = vpop.permute.xlu0 %3431
      %3433 = vrot.lane.b32.xlu0 %v3241, 127
      %v3434 = vpop.permute.xlu0 %3433
      %3435 = vrot.lane.b32.xlu0 %v3243, 127
      %v3436 = vpop.permute.xlu0 %3435
      %3437 = vrot.lane.b32.xlu0 %v3245, 127
      %v3438 = vpop.permute.xlu0 %3437
      %3439 = vrot.lane.b32.xlu0 %v3247, 127
      %v3440 = vpop.permute.xlu0 %3439
      %3441 = vrot.lane.b32.xlu0 %v3249, 127
      %v3442 = vpop.permute.xlu0 %3441
      %3443 = vrot.lane.b32.xlu0 %v3251, 127
      %v3444 = vpop.permute.xlu0 %3443
      %3445 = vrot.lane.b32.xlu0 %v3253, 127
      %v3446 = vpop.permute.xlu0 %3445
      %3447 = vrot.lane.b32.xlu0 %v3255, 127
      %v3448 = vpop.permute.xlu0 %3447
      %3449 = vrot.lane.b32.xlu0 %v3257, 127
      %v3450 = vpop.permute.xlu0 %3449
      %3451 = vrot.lane.b32.xlu0 %v3259, 127
      %v3452 = vpop.permute.xlu0 %3451
      %3453 = vrot.lane.b32.xlu0 %v3261, 127
      %v3454 = vpop.permute.xlu0 %3453
      %3455 = vrot.lane.b32.xlu0 %v3263, 127
      %v3456 = vpop.permute.xlu0 %3455
      %3457 = vrot.lane.b32.xlu0 %v3265, 127
      %v3458 = vpop.permute.xlu0 %3457
      %3459 = vrot.lane.b32.xlu0 %v3267, 127
      %v3460 = vpop.permute.xlu0 %3459
      %3461 = vrot.lane.b32.xlu0 %v3269, 127
      %v3462 = vpop.permute.xlu0 %3461
      %3463 = vrot.lane.b32.xlu0 %v3271, 127
      %v3464 = vpop.permute.xlu0 %3463
      %3465 = vrot.lane.b32.xlu0 %v3273, 127
      %v3466 = vpop.permute.xlu0 %3465
      %3467 = vrot.lane.b32.xlu0 %v3275, 127
      %v3468 = vpop.permute.xlu0 %3467
      %3469 = vrot.lane.b32.xlu0 %v3277, 127
      %v3470 = vpop.permute.xlu0 %3469
      %3471 = vrot.lane.b32.xlu0 %v3279, 127
      %v3472 = vpop.permute.xlu0 %3471
      %3473 = vrot.lane.b32.xlu0 %v3281, 127
      %v3474 = vpop.permute.xlu0 %3473
      %3475 = vrot.lane.b32.xlu0 %v3283, 127
      %v3476 = vpop.permute.xlu0 %3475
      %3477 = vrot.lane.b32.xlu0 %v3285, 127
      %v3478 = vpop.permute.xlu0 %3477
      %3479 = vrot.lane.b32.xlu0 %v3096, 127
      %v3480 = vpop.permute.xlu0 %3479
      %3481 = vrot.lane.b32.xlu0 %v3098, 127
      %v3482 = vpop.permute.xlu0 %3481
      %3483 = vrot.lane.b32.xlu0 %v3100, 127
      %v3484 = vpop.permute.xlu0 %3483
      %3485 = vrot.lane.b32.xlu0 %v3102, 127
      %v3486 = vpop.permute.xlu0 %3485
      %3487 = vrot.lane.b32.xlu0 %v3104, 127
      %v3488 = vpop.permute.xlu0 %3487
      %3489 = vrot.lane.b32.xlu0 %v3106, 127
      %v3490 = vpop.permute.xlu0 %3489
      %3491 = vrot.lane.b32.xlu0 %v3108, 127
      %v3492 = vpop.permute.xlu0 %3491
      %3493 = vrot.lane.b32.xlu0 %v3110, 127
      %v3494 = vpop.permute.xlu0 %3493
      %3495 = vrot.lane.b32.xlu0 %v3112, 127
      %v3496 = vpop.permute.xlu0 %3495
      %3497 = vrot.lane.b32.xlu0 %v3114, 127
      %v3498 = vpop.permute.xlu0 %3497
      %3499 = vrot.lane.b32.xlu0 %v3116, 127
      %v3500 = vpop.permute.xlu0 %3499
      %3501 = vrot.lane.b32.xlu0 %v3118, 127
      %v3502 = vpop.permute.xlu0 %3501
      %3503 = vrot.lane.b32.xlu0 %v3120, 127
      %v3504 = vpop.permute.xlu0 %3503
      %3505 = vrot.lane.b32.xlu0 %v3122, 127
      %v3506 = vpop.permute.xlu0 %3505
      %3507 = vrot.lane.b32.xlu0 %v3124, 127
      %v3508 = vpop.permute.xlu0 %3507
      %3509 = vrot.lane.b32.xlu0 %v3126, 127
      %v3510 = vpop.permute.xlu0 %3509
      %3511 = vrot.lane.b32.xlu0 %v3128, 127
      %v3512 = vpop.permute.xlu0 %3511
      %3513 = vrot.lane.b32.xlu0 %v3130, 127
      %v3514 = vpop.permute.xlu0 %3513
      %3515 = vrot.lane.b32.xlu0 %v3132, 127
      %v3516 = vpop.permute.xlu0 %3515
      %3517 = vrot.lane.b32.xlu0 %v3134, 127
      %v3518 = vpop.permute.xlu0 %3517
      %3519 = vrot.lane.b32.xlu0 %v3136, 127
      %v3520 = vpop.permute.xlu0 %3519
      %3521 = vrot.lane.b32.xlu0 %v3138, 127
      %v3522 = vpop.permute.xlu0 %3521
      %3523 = vrot.lane.b32.xlu0 %v3140, 127
      %v3524 = vpop.permute.xlu0 %3523
      %3525 = vrot.lane.b32.xlu0 %v3142, 127
      %v3526 = vpop.permute.xlu0 %3525
      %3527 = vrot.lane.b32.xlu0 %v3144, 127
      %v3528 = vpop.permute.xlu0 %3527
      %3529 = vrot.lane.b32.xlu0 %v3146, 127
      %v3530 = vpop.permute.xlu0 %3529
      %3531 = vrot.lane.b32.xlu0 %v3148, 127
      %v3532 = vpop.permute.xlu0 %3531
      %3533 = vrot.lane.b32.xlu0 %v3150, 127
      %v3534 = vpop.permute.xlu0 %3533
      %3535 = vrot.lane.b32.xlu0 %v3152, 127
      %v3536 = vpop.permute.xlu0 %3535
      %3537 = vrot.lane.b32.xlu0 %v3154, 127
      %v3538 = vpop.permute.xlu0 %3537
      %3539 = vrot.lane.b32.xlu0 %v3156, 127
      %v3540 = vpop.permute.xlu0 %3539
      %3541 = vrot.lane.b32.xlu0 %v3158, 127
      %v3542 = vpop.permute.xlu0 %3541
      %3543 = vrot.lane.b32.xlu0 %v3160, 127
      %v3544 = vpop.permute.xlu0 %3543
      %3545 = vrot.lane.b32.xlu0 %v3162, 127
      %v3546 = vpop.permute.xlu0 %3545
      %3547 = vrot.lane.b32.xlu0 %v3164, 127
      %v3548 = vpop.permute.xlu0 %3547
      %3549 = vrot.lane.b32.xlu0 %v3166, 127
      %v3550 = vpop.permute.xlu0 %3549
      %3551 = vrot.lane.b32.xlu0 %v3168, 127
      %v3552 = vpop.permute.xlu0 %3551
      %3553 = vrot.lane.b32.xlu0 %v3170, 127
      %v3554 = vpop.permute.xlu0 %3553
      %3555 = vrot.lane.b32.xlu0 %v3172, 127
      %v3556 = vpop.permute.xlu0 %3555
      %3557 = vrot.lane.b32.xlu0 %v3174, 127
      %v3558 = vpop.permute.xlu0 %3557
      %3559 = vrot.lane.b32.xlu0 %v3176, 127
      %v3560 = vpop.permute.xlu0 %3559
      %3561 = vrot.lane.b32.xlu0 %v3178, 127
      %v3562 = vpop.permute.xlu0 %3561
      %3563 = vrot.lane.b32.xlu0 %v3180, 127
      %v3564 = vpop.permute.xlu0 %3563
      %3565 = vrot.lane.b32.xlu0 %v3182, 127
      %v3566 = vpop.permute.xlu0 %3565
      %3567 = vrot.lane.b32.xlu0 %v3184, 127
      %v3568 = vpop.permute.xlu0 %3567
      %3569 = vrot.lane.b32.xlu0 %v3186, 127
      %v3570 = vpop.permute.xlu0 %3569
      %3571 = vrot.lane.b32.xlu0 %v3188, 127
      %v3572 = vpop.permute.xlu0 %3571
      %3573 = vrot.lane.b32.xlu0 %v3190, 127
      %v3574 = vpop.permute.xlu0 %3573
      %3575 = vrot.lane.b32.xlu0 %v3192, 127
      %v3576 = vpop.permute.xlu0 %3575
      %3577 = vrot.lane.b32.xlu0 %v3194, 127
      %v3578 = vpop.permute.xlu0 %3577
      %3579 = vrot.lane.b32.xlu0 %v3196, 127
      %v3580 = vpop.permute.xlu0 %3579
      %3581 = vrot.lane.b32.xlu0 %v3198, 127
      %v3582 = vpop.permute.xlu0 %3581
      %3583 = vrot.lane.b32.xlu0 %v3200, 127
      %v3584 = vpop.permute.xlu0 %3583
      %3585 = vrot.lane.b32.xlu0 %v3202, 127
      %v3586 = vpop.permute.xlu0 %3585
      %3587 = vrot.lane.b32.xlu0 %v3204, 127
      %v3588 = vpop.permute.xlu0 %3587
      %3589 = vrot.lane.b32.xlu0 %v3206, 127
      %v3590 = vpop.permute.xlu0 %3589
      %3591 = vrot.lane.b32.xlu0 %v3208, 127
      %v3592 = vpop.permute.xlu0 %3591
      %3593 = vrot.lane.b32.xlu0 %v3210, 127
      %v3594 = vpop.permute.xlu0 %3593
      %3595 = vrot.lane.b32.xlu0 %v3212, 127
      %v3596 = vpop.permute.xlu0 %3595
      %3597 = vrot.lane.b32.xlu0 %v3214, 127
      %v3598 = vpop.permute.xlu0 %3597
      %3599 = vrot.lane.b32.xlu0 %v3216, 127
      %v3600 = vpop.permute.xlu0 %3599
      %3601 = vrot.lane.b32.xlu0 %v3218, 127
      %v3602 = vpop.permute.xlu0 %3601
      %3603 = vrot.lane.b32.xlu0 %v3220, 127
      %v3604 = vpop.permute.xlu0 %3603
      %3605 = vrot.lane.b32.xlu0 %v3222, 127
      %v3606 = vpop.permute.xlu0 %3605
      %3607 = vrot.lane.b32.xlu0 %v3224, 127
      %v3608 = vpop.permute.xlu0 %3607
      %3609 = vrot.lane.b32.xlu0 %v3226, 127
      %v3610 = vpop.permute.xlu0 %3609
      %3611 = vrot.lane.b32.xlu0 %v3228, 127
      %v3612 = vpop.permute.xlu0 %3611
      %3613 = vrot.lane.b32.xlu0 %v3230, 127
      %v3614 = vpop.permute.xlu0 %3613
      %3615 = vrot.lane.b32.xlu0 %v3232, 127
      %v3616 = vpop.permute.xlu0 %3615
      %3617 = vrot.lane.b32.xlu0 %v3234, 127
      %v3618 = vpop.permute.xlu0 %3617
      %3619 = vrot.lane.b32.xlu0 %v3236, 127
      %v3620 = vpop.permute.xlu0 %3619
      %3621 = vrot.lane.b32.xlu0 %v3238, 127
      %v3622 = vpop.permute.xlu0 %3621
      %3623 = vrot.lane.b32.xlu0 %v3240, 127
      %v3624 = vpop.permute.xlu0 %3623
      %3625 = vrot.lane.b32.xlu0 %v3242, 127
      %v3626 = vpop.permute.xlu0 %3625
      %3627 = vrot.lane.b32.xlu0 %v3244, 127
      %v3628 = vpop.permute.xlu0 %3627
      %3629 = vrot.lane.b32.xlu0 %v3246, 127
      %v3630 = vpop.permute.xlu0 %3629
      %3631 = vrot.lane.b32.xlu0 %v3248, 127
      %v3632 = vpop.permute.xlu0 %3631
      %3633 = vrot.lane.b32.xlu0 %v3250, 127
      %v3634 = vpop.permute.xlu0 %3633
      %3635 = vrot.lane.b32.xlu0 %v3252, 127
      %v3636 = vpop.permute.xlu0 %3635
      %3637 = vrot.lane.b32.xlu0 %v3254, 127
      %v3638 = vpop.permute.xlu0 %3637
      %3639 = vrot.lane.b32.xlu0 %v3256, 127
      %v3640 = vpop.permute.xlu0 %3639
      %3641 = vrot.lane.b32.xlu0 %v3258, 127
      %v3642 = vpop.permute.xlu0 %3641
      %3643 = vrot.lane.b32.xlu0 %v3260, 127
      %v3644 = vpop.permute.xlu0 %3643
      %3645 = vrot.lane.b32.xlu0 %v3262, 127
      %v3646 = vpop.permute.xlu0 %3645
      %3647 = vrot.lane.b32.xlu0 %v3264, 127
      %v3648 = vpop.permute.xlu0 %3647
      %3649 = vrot.lane.b32.xlu0 %v3266, 127
      %v3650 = vpop.permute.xlu0 %3649
      %3651 = vrot.lane.b32.xlu0 %v3268, 127
      %v3652 = vpop.permute.xlu0 %3651
      %3653 = vrot.lane.b32.xlu0 %v3270, 127
      %v3654 = vpop.permute.xlu0 %3653
      %3655 = vrot.lane.b32.xlu0 %v3272, 127
      %v3656 = vpop.permute.xlu0 %3655
      %3657 = vrot.lane.b32.xlu0 %v3274, 127
      %v3658 = vpop.permute.xlu0 %3657
      %3659 = vrot.lane.b32.xlu0 %v3276, 127
      %v3660 = vpop.permute.xlu0 %3659
      %3661 = vrot.lane.b32.xlu0 %v3278, 127
      %v3662 = vpop.permute.xlu0 %3661
      %3663 = vrot.lane.b32.xlu0 %v3280, 127
      %v3664 = vpop.permute.xlu0 %3663
      %3665 = vrot.lane.b32.xlu0 %v3282, 127
      %v3666 = vpop.permute.xlu0 %3665
      %3667 = vrot.lane.b32.xlu0 %v3284, 127
      %v3668 = vpop.permute.xlu0 %3667
      %3669 = vrot.lane.b32.xlu0 %v3286, 127
      %v3670 = vpop.permute.xlu0 %3669
      %v3671 = vlaneseq
      %v3672 = vand.u32 %v3671, 127
      %vm3673 = vcmp.lt.s32.totalorder %v3672, 127
      %v3674 = vsel %vm3673, %v3288, %v3480
      %v3675 = vsel %vm3673, %v3290, %v3482
      %v3676 = vsel %vm3673, %v3292, %v3484
      %v3677 = vsel %vm3673, %v3294, %v3486
      %v3678 = vsel %vm3673, %v3296, %v3488
      %v3679 = vsel %vm3673, %v3298, %v3490
      %v3680 = vsel %vm3673, %v3300, %v3492
      %v3681 = vsel %vm3673, %v3302, %v3494
      %v3682 = vsel %vm3673, %v3304, %v3496
      %v3683 = vsel %vm3673, %v3306, %v3498
      %v3684 = vsel %vm3673, %v3308, %v3500
      %v3685 = vsel %vm3673, %v3310, %v3502
      %v3686 = vsel %vm3673, %v3312, %v3504
      %v3687 = vsel %vm3673, %v3314, %v3506
      %v3688 = vsel %vm3673, %v3316, %v3508
      %v3689 = vsel %vm3673, %v3318, %v3510
      %v3690 = vsel %vm3673, %v3320, %v3512
      %v3691 = vsel %vm3673, %v3322, %v3514
      %v3692 = vsel %vm3673, %v3324, %v3516
      %v3693 = vsel %vm3673, %v3326, %v3518
      %v3694 = vsel %vm3673, %v3328, %v3520
      %v3695 = vsel %vm3673, %v3330, %v3522
      %v3696 = vsel %vm3673, %v3332, %v3524
      %v3697 = vsel %vm3673, %v3334, %v3526
      %v3698 = vsel %vm3673, %v3336, %v3528
      %v3699 = vsel %vm3673, %v3338, %v3530
      %v3700 = vsel %vm3673, %v3340, %v3532
      %v3701 = vsel %vm3673, %v3342, %v3534
      %v3702 = vsel %vm3673, %v3344, %v3536
      %v3703 = vsel %vm3673, %v3346, %v3538
      %v3704 = vsel %vm3673, %v3348, %v3540
      %v3705 = vsel %vm3673, %v3350, %v3542
      %v3706 = vsel %vm3673, %v3352, %v3544
      %v3707 = vsel %vm3673, %v3354, %v3546
      %v3708 = vsel %vm3673, %v3356, %v3548
      %v3709 = vsel %vm3673, %v3358, %v3550
      %v3710 = vsel %vm3673, %v3360, %v3552
      %v3711 = vsel %vm3673, %v3362, %v3554
      %v3712 = vsel %vm3673, %v3364, %v3556
      %v3713 = vsel %vm3673, %v3366, %v3558
      %v3714 = vsel %vm3673, %v3368, %v3560
      %v3715 = vsel %vm3673, %v3370, %v3562
      %v3716 = vsel %vm3673, %v3372, %v3564
      %v3717 = vsel %vm3673, %v3374, %v3566
      %v3718 = vsel %vm3673, %v3376, %v3568
      %v3719 = vsel %vm3673, %v3378, %v3570
      %v3720 = vsel %vm3673, %v3380, %v3572
      %v3721 = vsel %vm3673, %v3382, %v3574
      %v3722 = vsel %vm3673, %v3384, %v3576
      %v3723 = vsel %vm3673, %v3386, %v3578
      %v3724 = vsel %vm3673, %v3388, %v3580
      %v3725 = vsel %vm3673, %v3390, %v3582
      %v3726 = vsel %vm3673, %v3392, %v3584
      %v3727 = vsel %vm3673, %v3394, %v3586
      %v3728 = vsel %vm3673, %v3396, %v3588
      %v3729 = vsel %vm3673, %v3398, %v3590
      %v3730 = vsel %vm3673, %v3400, %v3592
      %v3731 = vsel %vm3673, %v3402, %v3594
      %v3732 = vsel %vm3673, %v3404, %v3596
      %v3733 = vsel %vm3673, %v3406, %v3598
      %v3734 = vsel %vm3673, %v3408, %v3600
      %v3735 = vsel %vm3673, %v3410, %v3602
      %v3736 = vsel %vm3673, %v3412, %v3604
      %v3737 = vsel %vm3673, %v3414, %v3606
      %v3738 = vsel %vm3673, %v3416, %v3608
      %v3739 = vsel %vm3673, %v3418, %v3610
      %v3740 = vsel %vm3673, %v3420, %v3612
      %v3741 = vsel %vm3673, %v3422, %v3614
      %v3742 = vsel %vm3673, %v3424, %v3616
      %v3743 = vsel %vm3673, %v3426, %v3618
      %v3744 = vsel %vm3673, %v3428, %v3620
      %v3745 = vsel %vm3673, %v3430, %v3622
      %v3746 = vsel %vm3673, %v3432, %v3624
      %v3747 = vsel %vm3673, %v3434, %v3626
      %v3748 = vsel %vm3673, %v3436, %v3628
      %v3749 = vsel %vm3673, %v3438, %v3630
      %v3750 = vsel %vm3673, %v3440, %v3632
      %v3751 = vsel %vm3673, %v3442, %v3634
      %v3752 = vsel %vm3673, %v3444, %v3636
      %v3753 = vsel %vm3673, %v3446, %v3638
      %v3754 = vsel %vm3673, %v3448, %v3640
      %v3755 = vsel %vm3673, %v3450, %v3642
      %v3756 = vsel %vm3673, %v3452, %v3644
      %v3757 = vsel %vm3673, %v3454, %v3646
      %v3758 = vsel %vm3673, %v3456, %v3648
      %v3759 = vsel %vm3673, %v3458, %v3650
      %v3760 = vsel %vm3673, %v3460, %v3652
      %v3761 = vsel %vm3673, %v3462, %v3654
      %v3762 = vsel %vm3673, %v3464, %v3656
      %v3763 = vsel %vm3673, %v3466, %v3658
      %v3764 = vsel %vm3673, %v3468, %v3660
      %v3765 = vsel %vm3673, %v3470, %v3662
      %v3766 = vsel %vm3673, %v3472, %v3664
      %v3767 = vsel %vm3673, %v3474, %v3666
      %v3768 = vsel %vm3673, %v3476, %v3668
      %v3769 = vsel %vm3673, %v3478, %v3670
      %v3770 = vsel %vm3673, %v3480, %v3288
      %v3771 = vsel %vm3673, %v3482, %v3290
      %v3772 = vsel %vm3673, %v3484, %v3292
      %v3773 = vsel %vm3673, %v3486, %v3294
      %v3774 = vsel %vm3673, %v3488, %v3296
      %v3775 = vsel %vm3673, %v3490, %v3298
      %v3776 = vsel %vm3673, %v3492, %v3300
      %v3777 = vsel %vm3673, %v3494, %v3302
      %v3778 = vsel %vm3673, %v3496, %v3304
      %v3779 = vsel %vm3673, %v3498, %v3306
      %v3780 = vsel %vm3673, %v3500, %v3308
      %v3781 = vsel %vm3673, %v3502, %v3310
      %v3782 = vsel %vm3673, %v3504, %v3312
      %v3783 = vsel %vm3673, %v3506, %v3314
      %v3784 = vsel %vm3673, %v3508, %v3316
      %v3785 = vsel %vm3673, %v3510, %v3318
      %v3786 = vsel %vm3673, %v3512, %v3320
      %v3787 = vsel %vm3673, %v3514, %v3322
      %v3788 = vsel %vm3673, %v3516, %v3324
      %v3789 = vsel %vm3673, %v3518, %v3326
      %v3790 = vsel %vm3673, %v3520, %v3328
      %v3791 = vsel %vm3673, %v3522, %v3330
      %v3792 = vsel %vm3673, %v3524, %v3332
      %v3793 = vsel %vm3673, %v3526, %v3334
      %v3794 = vsel %vm3673, %v3528, %v3336
      %v3795 = vsel %vm3673, %v3530, %v3338
      %v3796 = vsel %vm3673, %v3532, %v3340
      %v3797 = vsel %vm3673, %v3534, %v3342
      %v3798 = vsel %vm3673, %v3536, %v3344
      %v3799 = vsel %vm3673, %v3538, %v3346
      %v3800 = vsel %vm3673, %v3540, %v3348
      %v3801 = vsel %vm3673, %v3542, %v3350
      %v3802 = vsel %vm3673, %v3544, %v3352
      %v3803 = vsel %vm3673, %v3546, %v3354
      %v3804 = vsel %vm3673, %v3548, %v3356
      %v3805 = vsel %vm3673, %v3550, %v3358
      %v3806 = vsel %vm3673, %v3552, %v3360
      %v3807 = vsel %vm3673, %v3554, %v3362
      %v3808 = vsel %vm3673, %v3556, %v3364
      %v3809 = vsel %vm3673, %v3558, %v3366
      %v3810 = vsel %vm3673, %v3560, %v3368
      %v3811 = vsel %vm3673, %v3562, %v3370
      %v3812 = vsel %vm3673, %v3564, %v3372
      %v3813 = vsel %vm3673, %v3566, %v3374
      %v3814 = vsel %vm3673, %v3568, %v3376
      %v3815 = vsel %vm3673, %v3570, %v3378
      %v3816 = vsel %vm3673, %v3572, %v3380
      %v3817 = vsel %vm3673, %v3574, %v3382
      %v3818 = vsel %vm3673, %v3576, %v3384
      %v3819 = vsel %vm3673, %v3578, %v3386
      %v3820 = vsel %vm3673, %v3580, %v3388
      %v3821 = vsel %vm3673, %v3582, %v3390
      %v3822 = vsel %vm3673, %v3584, %v3392
      %v3823 = vsel %vm3673, %v3586, %v3394
      %v3824 = vsel %vm3673, %v3588, %v3396
      %v3825 = vsel %vm3673, %v3590, %v3398
      %v3826 = vsel %vm3673, %v3592, %v3400
      %v3827 = vsel %vm3673, %v3594, %v3402
      %v3828 = vsel %vm3673, %v3596, %v3404
      %v3829 = vsel %vm3673, %v3598, %v3406
      %v3830 = vsel %vm3673, %v3600, %v3408
      %v3831 = vsel %vm3673, %v3602, %v3410
      %v3832 = vsel %vm3673, %v3604, %v3412
      %v3833 = vsel %vm3673, %v3606, %v3414
      %v3834 = vsel %vm3673, %v3608, %v3416
      %v3835 = vsel %vm3673, %v3610, %v3418
      %v3836 = vsel %vm3673, %v3612, %v3420
      %v3837 = vsel %vm3673, %v3614, %v3422
      %v3838 = vsel %vm3673, %v3616, %v3424
      %v3839 = vsel %vm3673, %v3618, %v3426
      %v3840 = vsel %vm3673, %v3620, %v3428
      %v3841 = vsel %vm3673, %v3622, %v3430
      %v3842 = vsel %vm3673, %v3624, %v3432
      %v3843 = vsel %vm3673, %v3626, %v3434
      %v3844 = vsel %vm3673, %v3628, %v3436
      %v3845 = vsel %vm3673, %v3630, %v3438
      %v3846 = vsel %vm3673, %v3632, %v3440
      %v3847 = vsel %vm3673, %v3634, %v3442
      %v3848 = vsel %vm3673, %v3636, %v3444
      %v3849 = vsel %vm3673, %v3638, %v3446
      %v3850 = vsel %vm3673, %v3640, %v3448
      %v3851 = vsel %vm3673, %v3642, %v3450
      %v3852 = vsel %vm3673, %v3644, %v3452
      %v3853 = vsel %vm3673, %v3646, %v3454
      %v3854 = vsel %vm3673, %v3648, %v3456
      %v3855 = vsel %vm3673, %v3650, %v3458
      %v3856 = vsel %vm3673, %v3652, %v3460
      %v3857 = vsel %vm3673, %v3654, %v3462
      %v3858 = vsel %vm3673, %v3656, %v3464
      %v3859 = vsel %vm3673, %v3658, %v3466
      %v3860 = vsel %vm3673, %v3660, %v3468
      %v3861 = vsel %vm3673, %v3662, %v3470
      %v3862 = vsel %vm3673, %v3664, %v3472
      %v3863 = vsel %vm3673, %v3666, %v3474
      %v3864 = vsel %vm3673, %v3668, %v3476
      %v3865 = vsel %vm3673, %v3670, %v3478
      %v3866 = vmax.f32 %v3095, %v3674
      %v3867 = vmax.f32 %v3096, %v3770
      %v3868 = vmax.f32 %v3097, %v3675
      %v3869 = vmax.f32 %v3098, %v3771
      %v3870 = vmax.f32 %v3099, %v3676
      %v3871 = vmax.f32 %v3100, %v3772
      %v3872 = vmax.f32 %v3101, %v3677
      %v3873 = vmax.f32 %v3102, %v3773
      %v3874 = vmax.f32 %v3103, %v3678
      %v3875 = vmax.f32 %v3104, %v3774
      %v3876 = vmax.f32 %v3105, %v3679
      %v3877 = vmax.f32 %v3106, %v3775
      %v3878 = vmax.f32 %v3107, %v3680
      %v3879 = vmax.f32 %v3108, %v3776
      %v3880 = vmax.f32 %v3109, %v3681
      %v3881 = vmax.f32 %v3110, %v3777
      %v3882 = vmax.f32 %v3111, %v3682
      %v3883 = vmax.f32 %v3112, %v3778
      %v3884 = vmax.f32 %v3113, %v3683
      %v3885 = vmax.f32 %v3114, %v3779
      %v3886 = vmax.f32 %v3115, %v3684
      %v3887 = vmax.f32 %v3116, %v3780
      %v3888 = vmax.f32 %v3117, %v3685
      %v3889 = vmax.f32 %v3118, %v3781
      %v3890 = vmax.f32 %v3119, %v3686
      %v3891 = vmax.f32 %v3120, %v3782
      %v3892 = vmax.f32 %v3121, %v3687
      %v3893 = vmax.f32 %v3122, %v3783
      %v3894 = vmax.f32 %v3123, %v3688
      %v3895 = vmax.f32 %v3124, %v3784
      %v3896 = vmax.f32 %v3125, %v3689
      %v3897 = vmax.f32 %v3126, %v3785
      %v3898 = vmax.f32 %v3127, %v3690
      %v3899 = vmax.f32 %v3128, %v3786
      %v3900 = vmax.f32 %v3129, %v3691
      %v3901 = vmax.f32 %v3130, %v3787
      %v3902 = vmax.f32 %v3131, %v3692
      %v3903 = vmax.f32 %v3132, %v3788
      %v3904 = vmax.f32 %v3133, %v3693
      %v3905 = vmax.f32 %v3134, %v3789
      %v3906 = vmax.f32 %v3135, %v3694
      %v3907 = vmax.f32 %v3136, %v3790
      %v3908 = vmax.f32 %v3137, %v3695
      %v3909 = vmax.f32 %v3138, %v3791
      %v3910 = vmax.f32 %v3139, %v3696
      %v3911 = vmax.f32 %v3140, %v3792
      %v3912 = vmax.f32 %v3141, %v3697
      %v3913 = vmax.f32 %v3142, %v3793
      %v3914 = vmax.f32 %v3143, %v3698
      %v3915 = vmax.f32 %v3144, %v3794
      %v3916 = vmax.f32 %v3145, %v3699
      %v3917 = vmax.f32 %v3146, %v3795
      %v3918 = vmax.f32 %v3147, %v3700
      %v3919 = vmax.f32 %v3148, %v3796
      %v3920 = vmax.f32 %v3149, %v3701
      %v3921 = vmax.f32 %v3150, %v3797
      %v3922 = vmax.f32 %v3151, %v3702
      %v3923 = vmax.f32 %v3152, %v3798
      %v3924 = vmax.f32 %v3153, %v3703
      %v3925 = vmax.f32 %v3154, %v3799
      %v3926 = vmax.f32 %v3155, %v3704
      %v3927 = vmax.f32 %v3156, %v3800
      %v3928 = vmax.f32 %v3157, %v3705
      %v3929 = vmax.f32 %v3158, %v3801
      %v3930 = vmax.f32 %v3159, %v3706
      %v3931 = vmax.f32 %v3160, %v3802
      %v3932 = vmax.f32 %v3161, %v3707
      %v3933 = vmax.f32 %v3162, %v3803
      %v3934 = vmax.f32 %v3163, %v3708
      %v3935 = vmax.f32 %v3164, %v3804
      %v3936 = vmax.f32 %v3165, %v3709
      %v3937 = vmax.f32 %v3166, %v3805
      %v3938 = vmax.f32 %v3167, %v3710
      %v3939 = vmax.f32 %v3168, %v3806
      %v3940 = vmax.f32 %v3169, %v3711
      %v3941 = vmax.f32 %v3170, %v3807
      %v3942 = vmax.f32 %v3171, %v3712
      %v3943 = vmax.f32 %v3172, %v3808
      %v3944 = vmax.f32 %v3173, %v3713
      %v3945 = vmax.f32 %v3174, %v3809
      %v3946 = vmax.f32 %v3175, %v3714
      %v3947 = vmax.f32 %v3176, %v3810
      %v3948 = vmax.f32 %v3177, %v3715
      %v3949 = vmax.f32 %v3178, %v3811
      %v3950 = vmax.f32 %v3179, %v3716
      %v3951 = vmax.f32 %v3180, %v3812
      %v3952 = vmax.f32 %v3181, %v3717
      %v3953 = vmax.f32 %v3182, %v3813
      %v3954 = vmax.f32 %v3183, %v3718
      %v3955 = vmax.f32 %v3184, %v3814
      %v3956 = vmax.f32 %v3185, %v3719
      %v3957 = vmax.f32 %v3186, %v3815
      %v3958 = vmax.f32 %v3187, %v3720
      %v3959 = vmax.f32 %v3188, %v3816
      %v3960 = vmax.f32 %v3189, %v3721
      %v3961 = vmax.f32 %v3190, %v3817
      %v3962 = vmax.f32 %v3191, %v3722
      %v3963 = vmax.f32 %v3192, %v3818
      %v3964 = vmax.f32 %v3193, %v3723
      %v3965 = vmax.f32 %v3194, %v3819
      %v3966 = vmax.f32 %v3195, %v3724
      %v3967 = vmax.f32 %v3196, %v3820
      %v3968 = vmax.f32 %v3197, %v3725
      %v3969 = vmax.f32 %v3198, %v3821
      %v3970 = vmax.f32 %v3199, %v3726
      %v3971 = vmax.f32 %v3200, %v3822
      %v3972 = vmax.f32 %v3201, %v3727
      %v3973 = vmax.f32 %v3202, %v3823
      %v3974 = vmax.f32 %v3203, %v3728
      %v3975 = vmax.f32 %v3204, %v3824
      %v3976 = vmax.f32 %v3205, %v3729
      %v3977 = vmax.f32 %v3206, %v3825
      %v3978 = vmax.f32 %v3207, %v3730
      %v3979 = vmax.f32 %v3208, %v3826
      %v3980 = vmax.f32 %v3209, %v3731
      %v3981 = vmax.f32 %v3210, %v3827
      %v3982 = vmax.f32 %v3211, %v3732
      %v3983 = vmax.f32 %v3212, %v3828
      %v3984 = vmax.f32 %v3213, %v3733
      %v3985 = vmax.f32 %v3214, %v3829
      %v3986 = vmax.f32 %v3215, %v3734
      %v3987 = vmax.f32 %v3216, %v3830
      %v3988 = vmax.f32 %v3217, %v3735
      %v3989 = vmax.f32 %v3218, %v3831
      %v3990 = vmax.f32 %v3219, %v3736
      %v3991 = vmax.f32 %v3220, %v3832
      %v3992 = vmax.f32 %v3221, %v3737
      %v3993 = vmax.f32 %v3222, %v3833
      %v3994 = vmax.f32 %v3223, %v3738
      %v3995 = vmax.f32 %v3224, %v3834
      %v3996 = vmax.f32 %v3225, %v3739
      %v3997 = vmax.f32 %v3226, %v3835
      %v3998 = vmax.f32 %v3227, %v3740
      %v3999 = vmax.f32 %v3228, %v3836
      %v4000 = vmax.f32 %v3229, %v3741
      %v4001 = vmax.f32 %v3230, %v3837
      %v4002 = vmax.f32 %v3231, %v3742
      %v4003 = vmax.f32 %v3232, %v3838
      %v4004 = vmax.f32 %v3233, %v3743
      %v4005 = vmax.f32 %v3234, %v3839
      %v4006 = vmax.f32 %v3235, %v3744
      %v4007 = vmax.f32 %v3236, %v3840
      %v4008 = vmax.f32 %v3237, %v3745
      %v4009 = vmax.f32 %v3238, %v3841
      %v4010 = vmax.f32 %v3239, %v3746
      %v4011 = vmax.f32 %v3240, %v3842
      %v4012 = vmax.f32 %v3241, %v3747
      %v4013 = vmax.f32 %v3242, %v3843
      %v4014 = vmax.f32 %v3243, %v3748
      %v4015 = vmax.f32 %v3244, %v3844
      %v4016 = vmax.f32 %v3245, %v3749
      %v4017 = vmax.f32 %v3246, %v3845
      %v4018 = vmax.f32 %v3247, %v3750
      %v4019 = vmax.f32 %v3248, %v3846
      %v4020 = vmax.f32 %v3249, %v3751
      %v4021 = vmax.f32 %v3250, %v3847
      %v4022 = vmax.f32 %v3251, %v3752
      %v4023 = vmax.f32 %v3252, %v3848
      %v4024 = vmax.f32 %v3253, %v3753
      %v4025 = vmax.f32 %v3254, %v3849
      %v4026 = vmax.f32 %v3255, %v3754
      %v4027 = vmax.f32 %v3256, %v3850
      %v4028 = vmax.f32 %v3257, %v3755
      %v4029 = vmax.f32 %v3258, %v3851
      %v4030 = vmax.f32 %v3259, %v3756
      %v4031 = vmax.f32 %v3260, %v3852
      %v4032 = vmax.f32 %v3261, %v3757
      %v4033 = vmax.f32 %v3262, %v3853
      %v4034 = vmax.f32 %v3263, %v3758
      %v4035 = vmax.f32 %v3264, %v3854
      %v4036 = vmax.f32 %v3265, %v3759
      %v4037 = vmax.f32 %v3266, %v3855
      %v4038 = vmax.f32 %v3267, %v3760
      %v4039 = vmax.f32 %v3268, %v3856
      %v4040 = vmax.f32 %v3269, %v3761
      %v4041 = vmax.f32 %v3270, %v3857
      %v4042 = vmax.f32 %v3271, %v3762
      %v4043 = vmax.f32 %v3272, %v3858
      %v4044 = vmax.f32 %v3273, %v3763
      %v4045 = vmax.f32 %v3274, %v3859
      %v4046 = vmax.f32 %v3275, %v3764
      %v4047 = vmax.f32 %v3276, %v3860
      %v4048 = vmax.f32 %v3277, %v3765
      %v4049 = vmax.f32 %v3278, %v3861
      %v4050 = vmax.f32 %v3279, %v3766
      %v4051 = vmax.f32 %v3280, %v3862
      %v4052 = vmax.f32 %v3281, %v3767
      %v4053 = vmax.f32 %v3282, %v3863
      %v4054 = vmax.f32 %v3283, %v3768
      %v4055 = vmax.f32 %v3284, %v3864
      %v4056 = vmax.f32 %v3285, %v3769
      %v4057 = vmax.f32 %v3286, %v3865
      %v4058 = vpack.c.bf16 %v3868, %v3866
      %v4059 = vpack.c.bf16 %v3869, %v3867
      %v4060 = vpack.c.bf16 %v3872, %v3870
      %v4061 = vpack.c.bf16 %v3873, %v3871
      %v4062 = vpack.c.bf16 %v3876, %v3874
      %v4063 = vpack.c.bf16 %v3877, %v3875
      %v4064 = vpack.c.bf16 %v3880, %v3878
      %v4065 = vpack.c.bf16 %v3881, %v3879
      %v4066 = vpack.c.bf16 %v3884, %v3882
      %v4067 = vpack.c.bf16 %v3885, %v3883
      %v4068 = vpack.c.bf16 %v3888, %v3886
      %v4069 = vpack.c.bf16 %v3889, %v3887
      %v4070 = vpack.c.bf16 %v3892, %v3890
      %v4071 = vpack.c.bf16 %v3893, %v3891
      %v4072 = vpack.c.bf16 %v3896, %v3894
      %v4073 = vpack.c.bf16 %v3897, %v3895
      %v4074 = vpack.c.bf16 %v3900, %v3898
      %v4075 = vpack.c.bf16 %v3901, %v3899
      %v4076 = vpack.c.bf16 %v3904, %v3902
      %v4077 = vpack.c.bf16 %v3905, %v3903
      %v4078 = vpack.c.bf16 %v3908, %v3906
      %v4079 = vpack.c.bf16 %v3909, %v3907
      %v4080 = vpack.c.bf16 %v3912, %v3910
      %v4081 = vpack.c.bf16 %v3913, %v3911
      %v4082 = vpack.c.bf16 %v3916, %v3914
      %v4083 = vpack.c.bf16 %v3917, %v3915
      %v4084 = vpack.c.bf16 %v3920, %v3918
      %v4085 = vpack.c.bf16 %v3921, %v3919
      %v4086 = vpack.c.bf16 %v3924, %v3922
      %v4087 = vpack.c.bf16 %v3925, %v3923
      %v4088 = vpack.c.bf16 %v3928, %v3926
      %v4089 = vpack.c.bf16 %v3929, %v3927
      %v4090 = vpack.c.bf16 %v3932, %v3930
      %v4091 = vpack.c.bf16 %v3933, %v3931
      %v4092 = vpack.c.bf16 %v3936, %v3934
      %v4093 = vpack.c.bf16 %v3937, %v3935
      %v4094 = vpack.c.bf16 %v3940, %v3938
      %v4095 = vpack.c.bf16 %v3941, %v3939
      %v4096 = vpack.c.bf16 %v3944, %v3942
      %v4097 = vpack.c.bf16 %v3945, %v3943
      %v4098 = vpack.c.bf16 %v3948, %v3946
      %v4099 = vpack.c.bf16 %v3949, %v3947
      %v4100 = vpack.c.bf16 %v3952, %v3950
      %v4101 = vpack.c.bf16 %v3953, %v3951
      %v4102 = vpack.c.bf16 %v3956, %v3954
      %v4103 = vpack.c.bf16 %v3957, %v3955
      %v4104 = vpack.c.bf16 %v3960, %v3958
      %v4105 = vpack.c.bf16 %v3961, %v3959
      %v4106 = vpack.c.bf16 %v3964, %v3962
      %v4107 = vpack.c.bf16 %v3965, %v3963
      %v4108 = vpack.c.bf16 %v3968, %v3966
      %v4109 = vpack.c.bf16 %v3969, %v3967
      %v4110 = vpack.c.bf16 %v3972, %v3970
      %v4111 = vpack.c.bf16 %v3973, %v3971
      %v4112 = vpack.c.bf16 %v3976, %v3974
      %v4113 = vpack.c.bf16 %v3977, %v3975
      %v4114 = vpack.c.bf16 %v3980, %v3978
      %v4115 = vpack.c.bf16 %v3981, %v3979
      %v4116 = vpack.c.bf16 %v3984, %v3982
      %v4117 = vpack.c.bf16 %v3985, %v3983
      %v4118 = vpack.c.bf16 %v3988, %v3986
      %v4119 = vpack.c.bf16 %v3989, %v3987
      %v4120 = vpack.c.bf16 %v3992, %v3990
      %v4121 = vpack.c.bf16 %v3993, %v3991
      %v4122 = vpack.c.bf16 %v3996, %v3994
      %v4123 = vpack.c.bf16 %v3997, %v3995
      %v4124 = vpack.c.bf16 %v4000, %v3998
      %v4125 = vpack.c.bf16 %v4001, %v3999
      %v4126 = vpack.c.bf16 %v4004, %v4002
      %v4127 = vpack.c.bf16 %v4005, %v4003
      %v4128 = vpack.c.bf16 %v4008, %v4006
      %v4129 = vpack.c.bf16 %v4009, %v4007
      %v4130 = vpack.c.bf16 %v4012, %v4010
      %v4131 = vpack.c.bf16 %v4013, %v4011
      %v4132 = vpack.c.bf16 %v4016, %v4014
      %v4133 = vpack.c.bf16 %v4017, %v4015
      %v4134 = vpack.c.bf16 %v4020, %v4018
      %v4135 = vpack.c.bf16 %v4021, %v4019
      %v4136 = vpack.c.bf16 %v4024, %v4022
      %v4137 = vpack.c.bf16 %v4025, %v4023
      %v4138 = vpack.c.bf16 %v4028, %v4026
      %v4139 = vpack.c.bf16 %v4029, %v4027
      %v4140 = vpack.c.bf16 %v4032, %v4030
      %v4141 = vpack.c.bf16 %v4033, %v4031
      %v4142 = vpack.c.bf16 %v4036, %v4034
      %v4143 = vpack.c.bf16 %v4037, %v4035
      %v4144 = vpack.c.bf16 %v4040, %v4038
      %v4145 = vpack.c.bf16 %v4041, %v4039
      %v4146 = vpack.c.bf16 %v4044, %v4042
      %v4147 = vpack.c.bf16 %v4045, %v4043
      %v4148 = vpack.c.bf16 %v4048, %v4046
      %v4149 = vpack.c.bf16 %v4049, %v4047
      %v4150 = vpack.c.bf16 %v4052, %v4050
      %v4151 = vpack.c.bf16 %v4053, %v4051
      %v4152 = vpack.c.bf16 %v4056, %v4054
      %v4153 = vpack.c.bf16 %v4057, %v4055
      %v4154 = vld [vmem:[%s3] sm:$0xf]
      %v4155 = vld [vmem:[%s3 + $0x4] sm:$0xf]
      %v4156 = vld [vmem:[%s3 + $0x8] sm:$0xf]
      %v4157 = vld [vmem:[%s3 + $0xc] sm:$0xf]
      %v4158 = vld [vmem:[%s3 + $0x10] sm:$0xf]
      %v4159 = vld [vmem:[%s3 + $0x14] sm:$0xf]
      %v4160 = vld [vmem:[%s3 + $0x18] sm:$0xf]
      %v4161 = vld [vmem:[%s3 + $0x1c] sm:$0xf]
      %v4162 = vld [vmem:[%s3 + $0x20] sm:$0xf]
      %v4163 = vld [vmem:[%s3 + $0x24] sm:$0xf]
      %v4164 = vld [vmem:[%s3 + $0x28] sm:$0xf]
      %v4165 = vld [vmem:[%s3 + $0x2c] sm:$0xf]
      %v4166 = vld [vmem:[%s3 + $0x30] sm:$0xf]
      %v4167 = vld [vmem:[%s3 + $0x34] sm:$0xf]
      %v4168 = vld [vmem:[%s3 + $0x38] sm:$0xf]
      %v4169 = vld [vmem:[%s3 + $0x3c] sm:$0xf]
      %v4170 = vld [vmem:[%s3 + $0x40] sm:$0xf]
      %v4171 = vld [vmem:[%s3 + $0x44] sm:$0xf]
      %v4172 = vld [vmem:[%s3 + $0x48] sm:$0xf]
      %v4173 = vld [vmem:[%s3 + $0x4c] sm:$0xf]
      %v4174 = vld [vmem:[%s3 + $0x50] sm:$0xf]
      %v4175 = vld [vmem:[%s3 + $0x54] sm:$0xf]
      %v4176 = vld [vmem:[%s3 + $0x58] sm:$0xf]
      %v4177 = vld [vmem:[%s3 + $0x5c] sm:$0xf]
      %v4178 = vld [vmem:[%s3 + $0x60] sm:$0xf]
      %v4179 = vld [vmem:[%s3 + $0x64] sm:$0xf]
      %v4180 = vld [vmem:[%s3 + $0x68] sm:$0xf]
      %v4181 = vld [vmem:[%s3 + $0x6c] sm:$0xf]
      %v4182 = vld [vmem:[%s3 + $0x70] sm:$0xf]
      %v4183 = vld [vmem:[%s3 + $0x74] sm:$0xf]
      %v4184 = vld [vmem:[%s3 + $0x78] sm:$0xf]
      %v4185 = vld [vmem:[%s3 + $0x7c] sm:$0xf]
      %v4218 = vunpack.c.l.b16 %v4154
      %v4219 = vunpack.c.l.b16 %v4155
      %v4220 = vunpack.c.l.b16 %v4156
      %v4221 = vunpack.c.l.b16 %v4157
      %v4222 = vunpack.c.l.b16 %v4158
      %v4223 = vunpack.c.l.b16 %v4159
      %v4224 = vunpack.c.l.b16 %v4160
      %v4225 = vunpack.c.l.b16 %v4161
      %v4226 = vunpack.c.l.b16 %v4162
      %v4227 = vunpack.c.l.b16 %v4163
      %v4228 = vunpack.c.l.b16 %v4164
      %v4229 = vunpack.c.l.b16 %v4165
      %v4230 = vunpack.c.l.b16 %v4166
      %v4231 = vunpack.c.l.b16 %v4167
      %v4232 = vunpack.c.l.b16 %v4168
      %v4233 = vunpack.c.l.b16 %v4169
      %v4234 = vunpack.c.l.b16 %v4170
      %v4235 = vunpack.c.l.b16 %v4171
      %v4236 = vunpack.c.l.b16 %v4172
      %v4237 = vunpack.c.l.b16 %v4173
      %v4238 = vunpack.c.l.b16 %v4174
      %v4239 = vunpack.c.l.b16 %v4175
      %v4240 = vunpack.c.l.b16 %v4176
      %v4241 = vunpack.c.l.b16 %v4177
      %v4242 = vunpack.c.l.b16 %v4178
      %v4243 = vunpack.c.l.b16 %v4179
      %v4244 = vunpack.c.l.b16 %v4180
      %v4245 = vunpack.c.l.b16 %v4181
      %v4246 = vunpack.c.l.b16 %v4182
      %v4247 = vunpack.c.l.b16 %v4183
      %v4248 = vunpack.c.l.b16 %v4184
      %v4249 = vunpack.c.l.b16 %v4185
      %v4250 = vpack.c.b16 %v4219, %v4218
      %v4251 = vpack.c.b16 %v4221, %v4220
      %v4252 = vpack.c.b16 %v4223, %v4222
      %v4253 = vpack.c.b16 %v4225, %v4224
      %v4254 = vpack.c.b16 %v4227, %v4226
      %v4255 = vpack.c.b16 %v4229, %v4228
      %v4256 = vpack.c.b16 %v4231, %v4230
      %v4257 = vpack.c.b16 %v4233, %v4232
      %v4258 = vpack.c.b16 %v4235, %v4234
      %v4259 = vpack.c.b16 %v4237, %v4236
      %v4260 = vpack.c.b16 %v4239, %v4238
      %v4261 = vpack.c.b16 %v4241, %v4240
      %v4262 = vpack.c.b16 %v4243, %v4242
      %v4263 = vpack.c.b16 %v4245, %v4244
      %v4264 = vpack.c.b16 %v4247, %v4246
      %v4265 = vpack.c.b16 %v4249, %v4248
      %4282 = vmatprep.subr.bf16.mxu0 0
      %4283 = vmatpush1.bf16.msra.mxu0 %v4250
      %4284 = vmatprep.subr.bf16.mxu0 0
      %4285 = vmatpush1.bf16.msra.mxu0 %v4251
      %4286 = vmatprep.subr.bf16.mxu0 0
      %4287 = vmatpush1.bf16.msra.mxu0 %v4252
      %4288 = vmatprep.subr.bf16.mxu0 0
      %4289 = vmatpush1.bf16.msra.mxu0 %v4253
      %4290 = vmatprep.subr.bf16.mxu0 0
      %4291 = vmatpush1.bf16.msra.mxu0 %v4254
      %4292 = vmatprep.subr.bf16.mxu0 0
      %4293 = vmatpush1.bf16.msra.mxu0 %v4255
      %4294 = vmatprep.subr.bf16.mxu0 0
      %4295 = vmatpush1.bf16.msra.mxu0 %v4256
      %4296 = vmatprep.subr.bf16.mxu0 0
      %4297 = vmatpush1.bf16.msra.mxu0 %v4257
      %4298 = vmatprep.subr.bf16.mxu0 0
      %4299 = vmatpush1.bf16.msra.mxu0 %v4258
      %4300 = vmatprep.subr.bf16.mxu0 0
      %4301 = vmatpush1.bf16.msra.mxu0 %v4259
      %4302 = vmatprep.subr.bf16.mxu0 0
      %4303 = vmatpush1.bf16.msra.mxu0 %v4260
      %4304 = vmatprep.subr.bf16.mxu0 0
      %4305 = vmatpush1.bf16.msra.mxu0 %v4261
      %4306 = vmatprep.subr.bf16.mxu0 0
      %4307 = vmatpush1.bf16.msra.mxu0 %v4262
      %4308 = vmatprep.subr.bf16.mxu0 0
      %4309 = vmatpush1.bf16.msra.mxu0 %v4263
      %4310 = vmatprep.subr.bf16.mxu0 0
      %4311 = vmatpush1.bf16.msra.mxu0 %v4264
      %4312 = vmatprep.subr.bf16.mxu0 0
      %4313 = vmatpush1.bf16.msra.mxu0 %v4265
      %4314 = vmatprep.mubr.bf16.mxu0 %v4059
      %4315 = vmatmul.mubr.bf16.gmra.mrb[0].mxu0 %v4058
      %v4316 = vpop.f32.mrb[0].mxu0
      %v4317 = vadd.f32 0.0, %v4316
      %v4318 = vpop.f32.mrb[0].mxu0
      %v4319 = vpop.f32.mrb[0].mxu0
      %v4320 = vadd.f32 0.0, %v4319
      %v4321 = vpop.f32.mrb[0].mxu0
      %4322 = vmatprep.mubr.bf16.mxu0 %v4061
      %4323 = vmatmul.mubr.bf16.gmra.mrb[0].mxu0 %v4060
      %v4324 = vpop.f32.mrb[0].mxu0
      %v4325 = vadd.f32 0.0, %v4324
      %v4326 = vpop.f32.mrb[0].mxu0
      %v4327 = vpop.f32.mrb[0].mxu0
      %v4328 = vadd.f32 0.0, %v4327
      %v4329 = vpop.f32.mrb[0].mxu0
      %4330 = vmatprep.mubr.bf16.mxu0 %v4063
      %4331 = vmatmul.mubr.bf16.gmra.mrb[0].mxu0 %v4062
      %v4332 = vpop.f32.mrb[0].mxu0
      %v4333 = vadd.f32 0.0, %v4332
      %v4334 = vpop.f32.mrb[0].mxu0
      %v4335 = vpop.f32.mrb[0].mxu0
      %v4336 = vadd.f32 0.0, %v4335
      %v4337 = vpop.f32.mrb[0].mxu0
      %4338 = vmatprep.mubr.bf16.mxu0 %v4065
      %4339 = vmatmul.mubr.bf16.gmra.mrb[0].mxu0 %v4064
      %v4340 = vpop.f32.mrb[0].mxu0
      %v4341 = vadd.f32 0.0, %v4340
      %v4342 = vpop.f32.mrb[0].mxu0
      %v4343 = vpop.f32.mrb[0].mxu0
      %v4344 = vadd.f32 0.0, %v4343
      %v4345 = vpop.f32.mrb[0].mxu0
      %4346 = vmatprep.mubr.bf16.mxu0 %v4067
      %4347 = vmatmul.mubr.bf16.gmra.mrb[0].mxu0 %v4066
      %v4348 = vpop.f32.mrb[0].mxu0
      %v4349 = vadd.f32 0.0, %v4348
      %v4350 = vpop.f32.mrb[0].mxu0
      %v4351 = vpop.f32.mrb[0].mxu0
      %v4352 = vadd.f32 0.0, %v4351
      %v4353 = vpop.f32.mrb[0].mxu0
      %4354 = vmatprep.mubr.bf16.mxu0 %v4069
      %4355 = vmatmul.mubr.bf16.gmra.mrb[0].mxu0 %v4068
      %v4356 = vpop.f32.mrb[0].mxu0
      %v4357 = vadd.f32 0.0, %v4356
      %v4358 = vpop.f32.mrb[0].mxu0
      %v4359 = vpop.f32.mrb[0].mxu0
      %v4360 = vadd.f32 0.0, %v4359
      %v4361 = vpop.f32.mrb[0].mxu0
      %4362 = vmatprep.mubr.bf16.mxu0 %v4071
      %4363 = vmatmul.mubr.bf16.gmra.mrb[0].mxu0 %v4070
      %v4364 = vpop.f32.mrb[0].mxu0
      %v4365 = vadd.f32 0.0, %v4364
      %v4366 = vpop.f32.mrb[0].mxu0
      %v4367 = vpop.f32.mrb[0].mxu0
      %v4368 = vadd.f32 0.0, %v4367
      %v4369 = vpop.f32.mrb[0].mxu0
      %4370 = vmatprep.mubr.bf16.mxu0 %v4073
      %4371 = vmatmul.mubr.bf16.gmra.mrb[0].mxu0 %v4072
      %v4372 = vpop.f32.mrb[0].mxu0
      %v4373 = vadd.f32 0.0, %v4372
      %v4374 = vpop.f32.mrb[0].mxu0
      %v4375 = vpop.f32.mrb[0].mxu0
      %v4376 = vadd.f32 0.0, %v4375
      %v4377 = vpop.f32.mrb[0].mxu0
      %4378 = vmatprep.mubr.bf16.mxu0 %v4075
      %4379 = vmatmul.mubr.bf16.gmra.mrb[0].mxu0 %v4074
      %v4380 = vpop.f32.mrb[0].mxu0
      %v4381 = vadd.f32 0.0, %v4380
      %v4382 = vpop.f32.mrb[0].mxu0
      %v4383 = vpop.f32.mrb[0].mxu0
      %v4384 = vadd.f32 0.0, %v4383
      %v4385 = vpop.f32.mrb[0].mxu0
      %4386 = vmatprep.mubr.bf16.mxu0 %v4077
      %4387 = vmatmul.mubr.bf16.gmra.mrb[0].mxu0 %v4076
      %v4388 = vpop.f32.mrb[0].mxu0
      %v4389 = vadd.f32 0.0, %v4388
      %v4390 = vpop.f32.mrb[0].mxu0
      %v4391 = vpop.f32.mrb[0].mxu0
      %v4392 = vadd.f32 0.0, %v4391
      %v4393 = vpop.f32.mrb[0].mxu0
      %4394 = vmatprep.mubr.bf16.mxu0 %v4079
      %4395 = vmatmul.mubr.bf16.gmra.mrb[0].mxu0 %v4078
      %v4396 = vpop.f32.mrb[0].mxu0
      %v4397 = vadd.f32 0.0, %v4396
      %v4398 = vpop.f32.mrb[0].mxu0
      %v4399 = vpop.f32.mrb[0].mxu0
      %v4400 = vadd.f32 0.0, %v4399
      %v4401 = vpop.f32.mrb[0].mxu0
      %4402 = vmatprep.mubr.bf16.mxu0 %v4081
      %4403 = vmatmul.mubr.bf16.gmra.mrb[0].mxu0 %v4080
      %v4404 = vpop.f32.mrb[0].mxu0
      %v4405 = vadd.f32 0.0, %v4404
      %v4406 = vpop.f32.mrb[0].mxu0
      %v4407 = vpop.f32.mrb[0].mxu0
      %v4408 = vadd.f32 0.0, %v4407
      %v4409 = vpop.f32.mrb[0].mxu0
      %4410 = vmatprep.mubr.bf16.mxu0 %v4083
      %4411 = vmatmul.mubr.bf16.gmra.mrb[0].mxu0 %v4082
      %v4412 = vpop.f32.mrb[0].mxu0
      %v4413 = vadd.f32 0.0, %v4412
      %v4414 = vpop.f32.mrb[0].mxu0
      %v4415 = vpop.f32.mrb[0].mxu0
      %v4416 = vadd.f32 0.0, %v4415
      %v4417 = vpop.f32.mrb[0].mxu0
      %4418 = vmatprep.mubr.bf16.mxu0 %v4085
      %4419 = vmatmul.mubr.bf16.gmra.mrb[0].mxu0 %v4084
      %v4420 = vpop.f32.mrb[0].mxu0
      %v4421 = vadd.f32 0.0, %v4420
      %v4422 = vpop.f32.mrb[0].mxu0
      %v4423 = vpop.f32.mrb[0].mxu0
      %v4424 = vadd.f32 0.0, %v4423
      %v4425 = vpop.f32.mrb[0].mxu0
      %4426 = vmatprep.mubr.bf16.mxu0 %v4087
      %4427 = vmatmul.mubr.bf16.gmra.mrb[0].mxu0 %v4086
      %v4428 = vpop.f32.mrb[0].mxu0
      %v4429 = vadd.f32 0.0, %v4428
      %v4430 = vpop.f32.mrb[0].mxu0
      %v4431 = vpop.f32.mrb[0].mxu0
      %v4432 = vadd.f32 0.0, %v4431
      %v4433 = vpop.f32.mrb[0].mxu0
      %4434 = vmatprep.mubr.bf16.mxu0 %v4089
      %4435 = vmatmul.mubr.bf16.gmra.mrb[0].mxu0 %v4088
      %v4436 = vpop.f32.mrb[0].mxu0
      %v4437 = vadd.f32 0.0, %v4436
      %v4438 = vpop.f32.mrb[0].mxu0
      %v4439 = vpop.f32.mrb[0].mxu0
      %v4440 = vadd.f32 0.0, %v4439
      %v4441 = vpop.f32.mrb[0].mxu0
      %4442 = vmatprep.mubr.bf16.mxu0 %v4091
      %4443 = vmatmul.mubr.bf16.gmra.mrb[0].mxu0 %v4090
      %v4444 = vpop.f32.mrb[0].mxu0
      %v4445 = vadd.f32 0.0, %v4444
      %v4446 = vpop.f32.mrb[0].mxu0
      %v4447 = vpop.f32.mrb[0].mxu0
      %v4448 = vadd.f32 0.0, %v4447
      %v4449 = vpop.f32.mrb[0].mxu0
      %4450 = vmatprep.mubr.bf16.mxu0 %v4093
      %4451 = vmatmul.mubr.bf16.gmra.mrb[0].mxu0 %v4092
      %v4452 = vpop.f32.mrb[0].mxu0
      %v4453 = vadd.f32 0.0, %v4452
      %v4454 = vpop.f32.mrb[0].mxu0
      %v4455 = vpop.f32.mrb[0].mxu0
      %v4456 = vadd.f32 0.0, %v4455
      %v4457 = vpop.f32.mrb[0].mxu0
      %4458 = vmatprep.mubr.bf16.mxu0 %v4095
      %4459 = vmatmul.mubr.bf16.gmra.mrb[0].mxu0 %v4094
      %v4460 = vpop.f32.mrb[0].mxu0
      %v4461 = vadd.f32 0.0, %v4460
      %v4462 = vpop.f32.mrb[0].mxu0
      %v4463 = vpop.f32.mrb[0].mxu0
      %v4464 = vadd.f32 0.0, %v4463
      %v4465 = vpop.f32.mrb[0].mxu0
      %4466 = vmatprep.mubr.bf16.mxu0 %v4097
      %4467 = vmatmul.mubr.bf16.gmra.mrb[0].mxu0 %v4096
      %v4468 = vpop.f32.mrb[0].mxu0
      %v4469 = vadd.f32 0.0, %v4468
      %v4470 = vpop.f32.mrb[0].mxu0
      %v4471 = vpop.f32.mrb[0].mxu0
      %v4472 = vadd.f32 0.0, %v4471
      %v4473 = vpop.f32.mrb[0].mxu0
      %4474 = vmatprep.mubr.bf16.mxu0 %v4099
      %4475 = vmatmul.mubr.bf16.gmra.mrb[0].mxu0 %v4098
      %v4476 = vpop.f32.mrb[0].mxu0
      %v4477 = vadd.f32 0.0, %v4476
      %v4478 = vpop.f32.mrb[0].mxu0
      %v4479 = vpop.f32.mrb[0].mxu0
      %v4480 = vadd.f32 0.0, %v4479
      %v4481 = vpop.f32.mrb[0].mxu0
      %4482 = vmatprep.mubr.bf16.mxu0 %v4101
      %4483 = vmatmul.mubr.bf16.gmra.mrb[0].mxu0 %v4100
      %v4484 = vpop.f32.mrb[0].mxu0
      %v4485 = vadd.f32 0.0, %v4484
      %v4486 = vpop.f32.mrb[0].mxu0
      %v4487 = vpop.f32.mrb[0].mxu0
      %v4488 = vadd.f32 0.0, %v4487
      %v4489 = vpop.f32.mrb[0].mxu0
      %4490 = vmatprep.mubr.bf16.mxu0 %v4103
      %4491 = vmatmul.mubr.bf16.gmra.mrb[0].mxu0 %v4102
      %v4492 = vpop.f32.mrb[0].mxu0
      %v4493 = vadd.f32 0.0, %v4492
      %v4494 = vpop.f32.mrb[0].mxu0
      %v4495 = vpop.f32.mrb[0].mxu0
      %v4496 = vadd.f32 0.0, %v4495
      %v4497 = vpop.f32.mrb[0].mxu0
      %4498 = vmatprep.mubr.bf16.mxu0 %v4105
      %4499 = vmatmul.mubr.bf16.gmra.mrb[0].mxu0 %v4104
      %v4500 = vpop.f32.mrb[0].mxu0
      %v4501 = vadd.f32 0.0, %v4500
      %v4502 = vpop.f32.mrb[0].mxu0
      %v4503 = vpop.f32.mrb[0].mxu0
      %v4504 = vadd.f32 0.0, %v4503
      %v4505 = vpop.f32.mrb[0].mxu0
      %4506 = vmatprep.mubr.bf16.mxu0 %v4107
      %4507 = vmatmul.mubr.bf16.gmra.mrb[0].mxu0 %v4106
      %v4508 = vpop.f32.mrb[0].mxu0
      %v4509 = vadd.f32 0.0, %v4508
      %v4510 = vpop.f32.mrb[0].mxu0
      %v4511 = vpop.f32.mrb[0].mxu0
      %v4512 = vadd.f32 0.0, %v4511
      %v4513 = vpop.f32.mrb[0].mxu0
      %4514 = vmatprep.mubr.bf16.mxu0 %v4109
      %4515 = vmatmul.mubr.bf16.gmra.mrb[0].mxu0 %v4108
      %v4516 = vpop.f32.mrb[0].mxu0
      %v4517 = vadd.f32 0.0, %v4516
      %v4518 = vpop.f32.mrb[0].mxu0
      %v4519 = vpop.f32.mrb[0].mxu0
      %v4520 = vadd.f32 0.0, %v4519
      %v4521 = vpop.f32.mrb[0].mxu0
      %4522 = vmatprep.mubr.bf16.mxu0 %v4111
      %4523 = vmatmul.mubr.bf16.gmra.mrb[0].mxu0 %v4110
      %v4524 = vpop.f32.mrb[0].mxu0
      %v4525 = vadd.f32 0.0, %v4524
      %v4526 = vpop.f32.mrb[0].mxu0
      %v4527 = vpop.f32.mrb[0].mxu0
      %v4528 = vadd.f32 0.0, %v4527
      %v4529 = vpop.f32.mrb[0].mxu0
      %4530 = vmatprep.mubr.bf16.mxu0 %v4113
      %4531 = vmatmul.mubr.bf16.gmra.mrb[0].mxu0 %v4112
      %v4532 = vpop.f32.mrb[0].mxu0
      %v4533 = vadd.f32 0.0, %v4532
      %v4534 = vpop.f32.mrb[0].mxu0
      %v4535 = vpop.f32.mrb[0].mxu0
      %v4536 = vadd.f32 0.0, %v4535
      %v4537 = vpop.f32.mrb[0].mxu0
      %4538 = vmatprep.mubr.bf16.mxu0 %v4115
      %4539 = vmatmul.mubr.bf16.gmra.mrb[0].mxu0 %v4114
      %v4540 = vpop.f32.mrb[0].mxu0
      %v4541 = vadd.f32 0.0, %v4540
      %v4542 = vpop.f32.mrb[0].mxu0
      %v4543 = vpop.f32.mrb[0].mxu0
      %v4544 = vadd.f32 0.0, %v4543
      %v4545 = vpop.f32.mrb[0].mxu0
      %4546 = vmatprep.mubr.bf16.mxu0 %v4117
      %4547 = vmatmul.mubr.bf16.gmra.mrb[0].mxu0 %v4116
      %v4548 = vpop.f32.mrb[0].mxu0
      %v4549 = vadd.f32 0.0, %v4548
      %v4550 = vpop.f32.mrb[0].mxu0
      %v4551 = vpop.f32.mrb[0].mxu0
      %v4552 = vadd.f32 0.0, %v4551
      %v4553 = vpop.f32.mrb[0].mxu0
      %4554 = vmatprep.mubr.bf16.mxu0 %v4119
      %4555 = vmatmul.mubr.bf16.gmra.mrb[0].mxu0 %v4118
      %v4556 = vpop.f32.mrb[0].mxu0
      %v4557 = vadd.f32 0.0, %v4556
      %v4558 = vpop.f32.mrb[0].mxu0
      %v4559 = vpop.f32.mrb[0].mxu0
      %v4560 = vadd.f32 0.0, %v4559
      %v4561 = vpop.f32.mrb[0].mxu0
      %4562 = vmatprep.mubr.bf16.mxu0 %v4121
      %4563 = vmatmul.mubr.bf16.gmra.mrb[0].mxu0 %v4120
      %v4564 = vpop.f32.mrb[0].mxu0
      %v4565 = vadd.f32 0.0, %v4564
      %v4566 = vpop.f32.mrb[0].mxu0
      %v4567 = vpop.f32.mrb[0].mxu0
      %v4568 = vadd.f32 0.0, %v4567
      %v4569 = vpop.f32.mrb[0].mxu0
      %4570 = vmatprep.mubr.bf16.mxu0 %v4123
      %4571 = vmatmul.mubr.bf16.gmra.mrb[0].mxu0 %v4122
      %v4572 = vpop.f32.mrb[0].mxu0
      %v4573 = vadd.f32 0.0, %v4572
      %v4574 = vpop.f32.mrb[0].mxu0
      %v4575 = vpop.f32.mrb[0].mxu0
      %v4576 = vadd.f32 0.0, %v4575
      %v4577 = vpop.f32.mrb[0].mxu0
      %4578 = vmatprep.mubr.bf16.mxu0 %v4125
      %4579 = vmatmul.mubr.bf16.gmra.mrb[0].mxu0 %v4124
      %v4580 = vpop.f32.mrb[0].mxu0
      %v4581 = vadd.f32 0.0, %v4580
      %v4582 = vpop.f32.mrb[0].mxu0
      %v4583 = vpop.f32.mrb[0].mxu0
      %v4584 = vadd.f32 0.0, %v4583
      %v4585 = vpop.f32.mrb[0].mxu0
      %4586 = vmatprep.mubr.bf16.mxu0 %v4127
      %4587 = vmatmul.mubr.bf16.gmra.mrb[0].mxu0 %v4126
      %v4588 = vpop.f32.mrb[0].mxu0
      %v4589 = vadd.f32 0.0, %v4588
      %v4590 = vpop.f32.mrb[0].mxu0
      %v4591 = vpop.f32.mrb[0].mxu0
      %v4592 = vadd.f32 0.0, %v4591
      %v4593 = vpop.f32.mrb[0].mxu0
      %4594 = vmatprep.mubr.bf16.mxu0 %v4129
      %4595 = vmatmul.mubr.bf16.gmra.mrb[0].mxu0 %v4128
      %v4596 = vpop.f32.mrb[0].mxu0
      %v4597 = vadd.f32 0.0, %v4596
      %v4598 = vpop.f32.mrb[0].mxu0
      %v4599 = vpop.f32.mrb[0].mxu0
      %v4600 = vadd.f32 0.0, %v4599
      %v4601 = vpop.f32.mrb[0].mxu0
      %4602 = vmatprep.mubr.bf16.mxu0 %v4131
      %4603 = vmatmul.mubr.bf16.gmra.mrb[0].mxu0 %v4130
      %v4604 = vpop.f32.mrb[0].mxu0
      %v4605 = vadd.f32 0.0, %v4604
      %v4606 = vpop.f32.mrb[0].mxu0
      %v4607 = vpop.f32.mrb[0].mxu0
      %v4608 = vadd.f32 0.0, %v4607
      %v4609 = vpop.f32.mrb[0].mxu0
      %4610 = vmatprep.mubr.bf16.mxu0 %v4133
      %4611 = vmatmul.mubr.bf16.gmra.mrb[0].mxu0 %v4132
      %v4612 = vpop.f32.mrb[0].mxu0
      %v4613 = vadd.f32 0.0, %v4612
      %v4614 = vpop.f32.mrb[0].mxu0
      %v4615 = vpop.f32.mrb[0].mxu0
      %v4616 = vadd.f32 0.0, %v4615
      %v4617 = vpop.f32.mrb[0].mxu0
      %4618 = vmatprep.mubr.bf16.mxu0 %v4135
      %4619 = vmatmul.mubr.bf16.gmra.mrb[0].mxu0 %v4134
      %v4620 = vpop.f32.mrb[0].mxu0
      %v4621 = vadd.f32 0.0, %v4620
      %v4622 = vpop.f32.mrb[0].mxu0
      %v4623 = vpop.f32.mrb[0].mxu0
      %v4624 = vadd.f32 0.0, %v4623
      %v4625 = vpop.f32.mrb[0].mxu0
      %4626 = vmatprep.mubr.bf16.mxu0 %v4137
      %4627 = vmatmul.mubr.bf16.gmra.mrb[0].mxu0 %v4136
      %v4628 = vpop.f32.mrb[0].mxu0
      %v4629 = vadd.f32 0.0, %v4628
      %v4630 = vpop.f32.mrb[0].mxu0
      %v4631 = vpop.f32.mrb[0].mxu0
      %v4632 = vadd.f32 0.0, %v4631
      %v4633 = vpop.f32.mrb[0].mxu0
      %4634 = vmatprep.mubr.bf16.mxu0 %v4139
      %4635 = vmatmul.mubr.bf16.gmra.mrb[0].mxu0 %v4138
      %v4636 = vpop.f32.mrb[0].mxu0
      %v4637 = vadd.f32 0.0, %v4636
      %v4638 = vpop.f32.mrb[0].mxu0
      %v4639 = vpop.f32.mrb[0].mxu0
      %v4640 = vadd.f32 0.0, %v4639
      %v4641 = vpop.f32.mrb[0].mxu0
      %4642 = vmatprep.mubr.bf16.mxu0 %v4141
      %4643 = vmatmul.mubr.bf16.gmra.mrb[0].mxu0 %v4140
      %v4644 = vpop.f32.mrb[0].mxu0
      %v4645 = vadd.f32 0.0, %v4644
      %v4646 = vpop.f32.mrb[0].mxu0
      %v4647 = vpop.f32.mrb[0].mxu0
      %v4648 = vadd.f32 0.0, %v4647
      %v4649 = vpop.f32.mrb[0].mxu0
      %4650 = vmatprep.mubr.bf16.mxu0 %v4143
      %4651 = vmatmul.mubr.bf16.gmra.mrb[0].mxu0 %v4142
      %v4652 = vpop.f32.mrb[0].mxu0
      %v4653 = vadd.f32 0.0, %v4652
      %v4654 = vpop.f32.mrb[0].mxu0
      %v4655 = vpop.f32.mrb[0].mxu0
      %v4656 = vadd.f32 0.0, %v4655
      %v4657 = vpop.f32.mrb[0].mxu0
      %4658 = vmatprep.mubr.bf16.mxu0 %v4145
      %4659 = vmatmul.mubr.bf16.gmra.mrb[0].mxu0 %v4144
      %v4660 = vpop.f32.mrb[0].mxu0
      %v4661 = vadd.f32 0.0, %v4660
      %v4662 = vpop.f32.mrb[0].mxu0
      %v4663 = vpop.f32.mrb[0].mxu0
      %v4664 = vadd.f32 0.0, %v4663
      %v4665 = vpop.f32.mrb[0].mxu0
      %4666 = vmatprep.mubr.bf16.mxu0 %v4147
      %4667 = vmatmul.mubr.bf16.gmra.mrb[0].mxu0 %v4146
      %v4668 = vpop.f32.mrb[0].mxu0
      %v4669 = vadd.f32 0.0, %v4668
      %v4670 = vpop.f32.mrb[0].mxu0
      %v4671 = vpop.f32.mrb[0].mxu0
      %v4672 = vadd.f32 0.0, %v4671
      %v4673 = vpop.f32.mrb[0].mxu0
      %4674 = vmatprep.mubr.bf16.mxu0 %v4149
      %4675 = vmatmul.mubr.bf16.gmra.mrb[0].mxu0 %v4148
      %v4676 = vpop.f32.mrb[0].mxu0
      %v4677 = vadd.f32 0.0, %v4676
      %v4678 = vpop.f32.mrb[0].mxu0
      %v4679 = vpop.f32.mrb[0].mxu0
      %v4680 = vadd.f32 0.0, %v4679
      %v4681 = vpop.f32.mrb[0].mxu0
      %4682 = vmatprep.mubr.bf16.mxu0 %v4151
      %4683 = vmatmul.mubr.bf16.gmra.mrb[0].mxu0 %v4150
      %v4684 = vpop.f32.mrb[0].mxu0
      %v4685 = vadd.f32 0.0, %v4684
      %v4686 = vpop.f32.mrb[0].mxu0
      %v4687 = vpop.f32.mrb[0].mxu0
      %v4688 = vadd.f32 0.0, %v4687
      %v4689 = vpop.f32.mrb[0].mxu0
      %4690 = vmatprep.mubr.bf16.mxu0 %v4153
      %4691 = vmatmul.mubr.bf16.gmra.mrb[0].mxu0 %v4152
      %v4692 = vpop.f32.mrb[0].mxu0
      %v4693 = vadd.f32 0.0, %v4692
      %v4694 = vpop.f32.mrb[0].mxu0
      %v4695 = vpop.f32.mrb[0].mxu0
      %v4696 = vadd.f32 0.0, %v4695
      %v4697 = vpop.f32.mrb[0].mxu0
      %4698 = vdwg.mxu0
      %v4699 = vpack.c.bf16 %v4320, %v4317
      %v4700 = vpack.c.bf16 %v4328, %v4325
      %v4701 = vpack.c.bf16 %v4336, %v4333
      %v4702 = vpack.c.bf16 %v4344, %v4341
      %v4703 = vpack.c.bf16 %v4352, %v4349
      %v4704 = vpack.c.bf16 %v4360, %v4357
      %v4705 = vpack.c.bf16 %v4368, %v4365
      %v4706 = vpack.c.bf16 %v4376, %v4373
      %v4707 = vpack.c.bf16 %v4384, %v4381
      %v4708 = vpack.c.bf16 %v4392, %v4389
      %v4709 = vpack.c.bf16 %v4400, %v4397
      %v4710 = vpack.c.bf16 %v4408, %v4405
      %v4711 = vpack.c.bf16 %v4416, %v4413
      %v4712 = vpack.c.bf16 %v4424, %v4421
      %v4713 = vpack.c.bf16 %v4432, %v4429
      %v4714 = vpack.c.bf16 %v4440, %v4437
      %v4715 = vpack.c.bf16 %v4448, %v4445
      %v4716 = vpack.c.bf16 %v4456, %v4453
      %v4717 = vpack.c.bf16 %v4464, %v4461
      %v4718 = vpack.c.bf16 %v4472, %v4469
      %v4719 = vpack.c.bf16 %v4480, %v4477
      %v4720 = vpack.c.bf16 %v4488, %v4485
      %v4721 = vpack.c.bf16 %v4496, %v4493
      %v4722 = vpack.c.bf16 %v4504, %v4501
      %v4723 = vpack.c.bf16 %v4512, %v4509
      %v4724 = vpack.c.bf16 %v4520, %v4517
      %v4725 = vpack.c.bf16 %v4528, %v4525
      %v4726 = vpack.c.bf16 %v4536, %v4533
      %v4727 = vpack.c.bf16 %v4544, %v4541
      %v4728 = vpack.c.bf16 %v4552, %v4549
      %v4729 = vpack.c.bf16 %v4560, %v4557
      %v4730 = vpack.c.bf16 %v4568, %v4565
      %v4731 = vpack.c.bf16 %v4576, %v4573
      %v4732 = vpack.c.bf16 %v4584, %v4581
      %v4733 = vpack.c.bf16 %v4592, %v4589
      %v4734 = vpack.c.bf16 %v4600, %v4597
      %v4735 = vpack.c.bf16 %v4608, %v4605
      %v4736 = vpack.c.bf16 %v4616, %v4613
      %v4737 = vpack.c.bf16 %v4624, %v4621
      %v4738 = vpack.c.bf16 %v4632, %v4629
      %v4739 = vpack.c.bf16 %v4640, %v4637
      %v4740 = vpack.c.bf16 %v4648, %v4645
      %v4741 = vpack.c.bf16 %v4656, %v4653
      %v4742 = vpack.c.bf16 %v4664, %v4661
      %v4743 = vpack.c.bf16 %v4672, %v4669
      %v4744 = vpack.c.bf16 %v4680, %v4677
      %v4745 = vpack.c.bf16 %v4688, %v4685
      %v4746 = vpack.c.bf16 %v4696, %v4693
      %v4747 = vld [vmem:[%s4] sm:$0xf]
      %v4748 = vld [vmem:[%s4 + $0x4] sm:$0xf]
      %v4749 = vld [vmem:[%s4 + $0x8] sm:$0xf]
      %v4750 = vld [vmem:[%s4 + $0xc] sm:$0xf]
      %v4751 = vld [vmem:[%s4 + $0x10] sm:$0xf]
      %v4752 = vld [vmem:[%s4 + $0x14] sm:$0xf]
      %v4753 = vld [vmem:[%s4 + $0x18] sm:$0xf]
      %v4754 = vld [vmem:[%s4 + $0x1c] sm:$0xf]
      %v4755 = vld [vmem:[%s4 + $0x20] sm:$0xf]
      %v4756 = vld [vmem:[%s4 + $0x24] sm:$0xf]
      %v4757 = vld [vmem:[%s4 + $0x28] sm:$0xf]
      %v4758 = vld [vmem:[%s4 + $0x2c] sm:$0xf]
      %v4759 = vld [vmem:[%s4 + $0x30] sm:$0xf]
      %v4760 = vld [vmem:[%s4 + $0x34] sm:$0xf]
      %v4761 = vld [vmem:[%s4 + $0x38] sm:$0xf]
      %v4762 = vld [vmem:[%s4 + $0x3c] sm:$0xf]
      %s4763 = scalar_lea.vmem %s4, 64
      %v4764 = vld [vmem:[%s4763] sm:$0xf]
      %v4765 = vld [vmem:[%s4763 + $0x4] sm:$0xf]
      %v4766 = vld [vmem:[%s4763 + $0x8] sm:$0xf]
      %v4767 = vld [vmem:[%s4763 + $0xc] sm:$0xf]
      %v4768 = vld [vmem:[%s4763 + $0x10] sm:$0xf]
      %v4769 = vld [vmem:[%s4763 + $0x14] sm:$0xf]
      %v4770 = vld [vmem:[%s4763 + $0x18] sm:$0xf]
      %v4771 = vld [vmem:[%s4763 + $0x1c] sm:$0xf]
      %v4772 = vld [vmem:[%s4763 + $0x20] sm:$0xf]
      %v4773 = vld [vmem:[%s4763 + $0x24] sm:$0xf]
      %v4774 = vld [vmem:[%s4763 + $0x28] sm:$0xf]
      %v4775 = vld [vmem:[%s4763 + $0x2c] sm:$0xf]
      %v4776 = vld [vmem:[%s4763 + $0x30] sm:$0xf]
      %v4777 = vld [vmem:[%s4763 + $0x34] sm:$0xf]
      %v4778 = vld [vmem:[%s4763 + $0x38] sm:$0xf]
      %v4779 = vld [vmem:[%s4763 + $0x3c] sm:$0xf]
      %v4796 = vunpack.c.l.b16 %v4764
      %v4797 = vunpack.c.l.b16 %v4765
      %v4798 = vunpack.c.l.b16 %v4766
      %v4799 = vunpack.c.l.b16 %v4767
      %v4800 = vunpack.c.l.b16 %v4768
      %v4801 = vunpack.c.l.b16 %v4769
      %v4802 = vunpack.c.l.b16 %v4770
      %v4803 = vunpack.c.l.b16 %v4771
      %v4804 = vunpack.c.l.b16 %v4772
      %v4805 = vunpack.c.l.b16 %v4773
      %v4806 = vunpack.c.l.b16 %v4774
      %v4807 = vunpack.c.l.b16 %v4775
      %v4808 = vunpack.c.l.b16 %v4776
      %v4809 = vunpack.c.l.b16 %v4777
      %v4810 = vunpack.c.l.b16 %v4778
      %v4811 = vunpack.c.l.b16 %v4779
      %v4812 = vpack.c.b16 %v4797, %v4796
      %v4813 = vpack.c.b16 %v4799, %v4798
      %v4814 = vpack.c.b16 %v4801, %v4800
      %v4815 = vpack.c.b16 %v4803, %v4802
      %v4816 = vpack.c.b16 %v4805, %v4804
      %v4817 = vpack.c.b16 %v4807, %v4806
      %v4818 = vpack.c.b16 %v4809, %v4808
      %v4819 = vpack.c.b16 %v4811, %v4810
      %4828 = vmatprep.subr.bf16.mxu0 0
      %4829 = vmatpush1.bf16.msra.mxu0 %v4812
      %4830 = vmatprep.subr.bf16.mxu0 0
      %4831 = vmatpush1.bf16.msra.mxu0 %v4813
      %4832 = vmatprep.subr.bf16.mxu0 0
      %4833 = vmatpush1.bf16.msra.mxu0 %v4814
      %4834 = vmatprep.subr.bf16.mxu0 0
      %4835 = vmatpush1.bf16.msra.mxu0 %v4815
      %4836 = vmatprep.subr.bf16.mxu0 0
      %4837 = vmatpush1.bf16.msra.mxu0 %v4816
      %4838 = vmatprep.subr.bf16.mxu0 0
      %4839 = vmatpush1.bf16.msra.mxu0 %v4817
      %4840 = vmatprep.subr.bf16.mxu0 0
      %4841 = vmatpush1.bf16.msra.mxu0 %v4818
      %4842 = vmatprep.subr.bf16.mxu0 0
      %4843 = vmatpush1.bf16.msra.mxu0 %v4819
      %4844 = vmatprep.subr.bf16.mxu0 0
      %4845 = vmatpush1.bf16.msra.mxu0 0
      %4846 = vmatprep.subr.bf16.mxu0 0
      %4847 = vmatpush1.bf16.msra.mxu0 0
      %4848 = vmatprep.subr.bf16.mxu0 0
      %4849 = vmatpush1.bf16.msra.mxu0 0
      %4850 = vmatprep.subr.bf16.mxu0 0
      %4851 = vmatpush1.bf16.msra.mxu0 0
      %4852 = vmatprep.subr.bf16.mxu0 0
      %4853 = vmatpush1.bf16.msra.mxu0 0
      %4854 = vmatprep.subr.bf16.mxu0 0
      %4855 = vmatpush1.bf16.msra.mxu0 0
      %4856 = vmatprep.subr.bf16.mxu0 0
      %4857 = vmatpush1.bf16.msra.mxu0 0
      %4858 = vmatprep.subr.bf16.mxu0 0
      %4859 = vmatpush1.bf16.msra.mxu0 0
      %4860 = vmatprep.mubr.bf16.mxu0 0
      %4861 = vmatmul.mubr.bf16.gmra.mrb[0].mxu0 %v4703
      %v4862 = vpop.f32.mrb[0].mxu0
      %v4863 = vadd.f32 0.0, %v4862
      %v4864 = vpop.f32.mrb[0].mxu0
      %v4865 = vpop.f32.mrb[0].mxu0
      %v4866 = vadd.f32 0.0, %v4865
      %v4867 = vpop.f32.mrb[0].mxu0
      %4868 = vmatprep.mubr.bf16.mxu0 0
      %4869 = vmatmul.mubr.bf16.gmra.mrb[0].mxu0 %v4704
      %v4870 = vpop.f32.mrb[0].mxu0
      %v4871 = vadd.f32 0.0, %v4870
      %v4872 = vpop.f32.mrb[0].mxu0
      %v4873 = vpop.f32.mrb[0].mxu0
      %v4874 = vadd.f32 0.0, %v4873
      %v4875 = vpop.f32.mrb[0].mxu0
      %4876 = vmatprep.mubr.bf16.mxu0 0
      %4877 = vmatmul.mubr.bf16.gmra.mrb[0].mxu0 %v4705
      %v4878 = vpop.f32.mrb[0].mxu0
      %v4879 = vadd.f32 0.0, %v4878
      %v4880 = vpop.f32.mrb[0].mxu0
      %v4881 = vpop.f32.mrb[0].mxu0
      %v4882 = vadd.f32 0.0, %v4881
      %v4883 = vpop.f32.mrb[0].mxu0
      %4884 = vmatprep.mubr.bf16.mxu0 0
      %4885 = vmatmul.mubr.bf16.gmra.mrb[0].mxu0 %v4706
      %v4886 = vpop.f32.mrb[0].mxu0
      %v4887 = vadd.f32 0.0, %v4886
      %v4888 = vpop.f32.mrb[0].mxu0
      %v4889 = vpop.f32.mrb[0].mxu0
      %v4890 = vadd.f32 0.0, %v4889
      %v4891 = vpop.f32.mrb[0].mxu0
      %4892 = vmatprep.mubr.bf16.mxu0 0
      %4893 = vmatmul.mubr.bf16.gmra.mrb[0].mxu0 %v4707
      %v4894 = vpop.f32.mrb[0].mxu0
      %v4895 = vadd.f32 0.0, %v4894
      %v4896 = vpop.f32.mrb[0].mxu0
      %v4897 = vpop.f32.mrb[0].mxu0
      %v4898 = vadd.f32 0.0, %v4897
      %v4899 = vpop.f32.mrb[0].mxu0
      %4900 = vmatprep.mubr.bf16.mxu0 0
      %4901 = vmatmul.mubr.bf16.gmra.mrb[0].mxu0 %v4708
      %v4902 = vpop.f32.mrb[0].mxu0
      %v4903 = vadd.f32 0.0, %v4902
      %v4904 = vpop.f32.mrb[0].mxu0
      %v4905 = vpop.f32.mrb[0].mxu0
      %v4906 = vadd.f32 0.0, %v4905
      %v4907 = vpop.f32.mrb[0].mxu0
      %4908 = vmatprep.mubr.bf16.mxu0 0
      %4909 = vmatmul.mubr.bf16.gmra.mrb[0].mxu0 %v4709
      %v4910 = vpop.f32.mrb[0].mxu0
      %v4911 = vadd.f32 0.0, %v4910
      %v4912 = vpop.f32.mrb[0].mxu0
      %v4913 = vpop.f32.mrb[0].mxu0
      %v4914 = vadd.f32 0.0, %v4913
      %v4915 = vpop.f32.mrb[0].mxu0
      %4916 = vmatprep.mubr.bf16.mxu0 0
      %4917 = vmatmul.mubr.bf16.gmra.mrb[0].mxu0 %v4710
      %v4918 = vpop.f32.mrb[0].mxu0
      %v4919 = vadd.f32 0.0, %v4918
      %v4920 = vpop.f32.mrb[0].mxu0
      %v4921 = vpop.f32.mrb[0].mxu0
      %v4922 = vadd.f32 0.0, %v4921
      %v4923 = vpop.f32.mrb[0].mxu0
      %4924 = vmatprep.mubr.bf16.mxu0 0
      %4925 = vmatmul.mubr.bf16.gmra.mrb[0].mxu0 %v4711
      %v4926 = vpop.f32.mrb[0].mxu0
      %v4927 = vadd.f32 0.0, %v4926
      %v4928 = vpop.f32.mrb[0].mxu0
      %v4929 = vpop.f32.mrb[0].mxu0
      %v4930 = vadd.f32 0.0, %v4929
      %v4931 = vpop.f32.mrb[0].mxu0
      %4932 = vmatprep.mubr.bf16.mxu0 0
      %4933 = vmatmul.mubr.bf16.gmra.mrb[0].mxu0 %v4712
      %v4934 = vpop.f32.mrb[0].mxu0
      %v4935 = vadd.f32 0.0, %v4934
      %v4936 = vpop.f32.mrb[0].mxu0
      %v4937 = vpop.f32.mrb[0].mxu0
      %v4938 = vadd.f32 0.0, %v4937
      %v4939 = vpop.f32.mrb[0].mxu0
      %4940 = vmatprep.mubr.bf16.mxu0 0
      %4941 = vmatmul.mubr.bf16.gmra.mrb[0].mxu0 %v4713
      %v4942 = vpop.f32.mrb[0].mxu0
      %v4943 = vadd.f32 0.0, %v4942
      %v4944 = vpop.f32.mrb[0].mxu0
      %v4945 = vpop.f32.mrb[0].mxu0
      %v4946 = vadd.f32 0.0, %v4945
      %v4947 = vpop.f32.mrb[0].mxu0
      %4948 = vmatprep.mubr.bf16.mxu0 0
      %4949 = vmatmul.mubr.bf16.gmra.mrb[0].mxu0 %v4714
      %v4950 = vpop.f32.mrb[0].mxu0
      %v4951 = vadd.f32 0.0, %v4950
      %v4952 = vpop.f32.mrb[0].mxu0
      %v4953 = vpop.f32.mrb[0].mxu0
      %v4954 = vadd.f32 0.0, %v4953
      %v4955 = vpop.f32.mrb[0].mxu0
      %4956 = vmatprep.mubr.bf16.mxu0 0
      %4957 = vmatmul.mubr.bf16.gmra.mrb[0].mxu0 %v4715
      %v4958 = vpop.f32.mrb[0].mxu0
      %v4959 = vadd.f32 0.0, %v4958
      %v4960 = vpop.f32.mrb[0].mxu0
      %v4961 = vpop.f32.mrb[0].mxu0
      %v4962 = vadd.f32 0.0, %v4961
      %v4963 = vpop.f32.mrb[0].mxu0
      %4964 = vmatprep.mubr.bf16.mxu0 0
      %4965 = vmatmul.mubr.bf16.gmra.mrb[0].mxu0 %v4716
      %v4966 = vpop.f32.mrb[0].mxu0
      %v4967 = vadd.f32 0.0, %v4966
      %v4968 = vpop.f32.mrb[0].mxu0
      %v4969 = vpop.f32.mrb[0].mxu0
      %v4970 = vadd.f32 0.0, %v4969
      %v4971 = vpop.f32.mrb[0].mxu0
      %4972 = vmatprep.mubr.bf16.mxu0 0
      %4973 = vmatmul.mubr.bf16.gmra.mrb[0].mxu0 %v4717
      %v4974 = vpop.f32.mrb[0].mxu0
      %v4975 = vadd.f32 0.0, %v4974
      %v4976 = vpop.f32.mrb[0].mxu0
      %v4977 = vpop.f32.mrb[0].mxu0
      %v4978 = vadd.f32 0.0, %v4977
      %v4979 = vpop.f32.mrb[0].mxu0
      %4980 = vmatprep.mubr.bf16.mxu0 0
      %4981 = vmatmul.mubr.bf16.gmra.mrb[0].mxu0 %v4718
      %v4982 = vpop.f32.mrb[0].mxu0
      %v4983 = vadd.f32 0.0, %v4982
      %v4984 = vpop.f32.mrb[0].mxu0
      %v4985 = vpop.f32.mrb[0].mxu0
      %v4986 = vadd.f32 0.0, %v4985
      %v4987 = vpop.f32.mrb[0].mxu0
      %4988 = vmatprep.mubr.bf16.mxu0 0
      %4989 = vmatmul.mubr.bf16.gmra.mrb[0].mxu0 %v4719
      %v4990 = vpop.f32.mrb[0].mxu0
      %v4991 = vadd.f32 0.0, %v4990
      %v4992 = vpop.f32.mrb[0].mxu0
      %v4993 = vpop.f32.mrb[0].mxu0
      %v4994 = vadd.f32 0.0, %v4993
      %v4995 = vpop.f32.mrb[0].mxu0
      %4996 = vmatprep.mubr.bf16.mxu0 0
      %4997 = vmatmul.mubr.bf16.gmra.mrb[0].mxu0 %v4720
      %v4998 = vpop.f32.mrb[0].mxu0
      %v4999 = vadd.f32 0.0, %v4998
      %v5000 = vpop.f32.mrb[0].mxu0
      %v5001 = vpop.f32.mrb[0].mxu0
      %v5002 = vadd.f32 0.0, %v5001
      %v5003 = vpop.f32.mrb[0].mxu0
      %5004 = vmatprep.mubr.bf16.mxu0 0
      %5005 = vmatmul.mubr.bf16.gmra.mrb[0].mxu0 %v4721
      %v5006 = vpop.f32.mrb[0].mxu0
      %v5007 = vadd.f32 0.0, %v5006
      %v5008 = vpop.f32.mrb[0].mxu0
      %v5009 = vpop.f32.mrb[0].mxu0
      %v5010 = vadd.f32 0.0, %v5009
      %v5011 = vpop.f32.mrb[0].mxu0
      %5012 = vmatprep.mubr.bf16.mxu0 0
      %5013 = vmatmul.mubr.bf16.gmra.mrb[0].mxu0 %v4722
      %v5014 = vpop.f32.mrb[0].mxu0
      %v5015 = vadd.f32 0.0, %v5014
      %v5016 = vpop.f32.mrb[0].mxu0
      %v5017 = vpop.f32.mrb[0].mxu0
      %v5018 = vadd.f32 0.0, %v5017
      %v5019 = vpop.f32.mrb[0].mxu0
      %5020 = vmatprep.mubr.bf16.mxu0 0
      %5021 = vmatmul.mubr.bf16.gmra.mrb[0].mxu0 %v4723
      %v5022 = vpop.f32.mrb[0].mxu0
      %v5023 = vadd.f32 0.0, %v5022
      %v5024 = vpop.f32.mrb[0].mxu0
      %v5025 = vpop.f32.mrb[0].mxu0
      %v5026 = vadd.f32 0.0, %v5025
      %v5027 = vpop.f32.mrb[0].mxu0
      %5028 = vmatprep.mubr.bf16.mxu0 0
      %5029 = vmatmul.mubr.bf16.gmra.mrb[0].mxu0 %v4724
      %v5030 = vpop.f32.mrb[0].mxu0
      %v5031 = vadd.f32 0.0, %v5030
      %v5032 = vpop.f32.mrb[0].mxu0
      %v5033 = vpop.f32.mrb[0].mxu0
      %v5034 = vadd.f32 0.0, %v5033
      %v5035 = vpop.f32.mrb[0].mxu0
      %5036 = vmatprep.mubr.bf16.mxu0 0
      %5037 = vmatmul.mubr.bf16.gmra.mrb[0].mxu0 %v4725
      %v5038 = vpop.f32.mrb[0].mxu0
      %v5039 = vadd.f32 0.0, %v5038
      %v5040 = vpop.f32.mrb[0].mxu0
      %v5041 = vpop.f32.mrb[0].mxu0
      %v5042 = vadd.f32 0.0, %v5041
      %v5043 = vpop.f32.mrb[0].mxu0
      %5044 = vmatprep.mubr.bf16.mxu0 0
      %5045 = vmatmul.mubr.bf16.gmra.mrb[0].mxu0 %v4726
      %v5046 = vpop.f32.mrb[0].mxu0
      %v5047 = vadd.f32 0.0, %v5046
      %v5048 = vpop.f32.mrb[0].mxu0
      %v5049 = vpop.f32.mrb[0].mxu0
      %v5050 = vadd.f32 0.0, %v5049
      %v5051 = vpop.f32.mrb[0].mxu0
      %5052 = vmatprep.mubr.bf16.mxu0 0
      %5053 = vmatmul.mubr.bf16.gmra.mrb[0].mxu0 %v4727
      %v5054 = vpop.f32.mrb[0].mxu0
      %v5055 = vadd.f32 0.0, %v5054
      %v5056 = vpop.f32.mrb[0].mxu0
      %v5057 = vpop.f32.mrb[0].mxu0
      %v5058 = vadd.f32 0.0, %v5057
      %v5059 = vpop.f32.mrb[0].mxu0
      %5060 = vmatprep.mubr.bf16.mxu0 0
      %5061 = vmatmul.mubr.bf16.gmra.mrb[0].mxu0 %v4728
      %v5062 = vpop.f32.mrb[0].mxu0
      %v5063 = vadd.f32 0.0, %v5062
      %v5064 = vpop.f32.mrb[0].mxu0
      %v5065 = vpop.f32.mrb[0].mxu0
      %v5066 = vadd.f32 0.0, %v5065
      %v5067 = vpop.f32.mrb[0].mxu0
      %5068 = vmatprep.mubr.bf16.mxu0 0
      %5069 = vmatmul.mubr.bf16.gmra.mrb[0].mxu0 %v4729
      %v5070 = vpop.f32.mrb[0].mxu0
      %v5071 = vadd.f32 0.0, %v5070
      %v5072 = vpop.f32.mrb[0].mxu0
      %v5073 = vpop.f32.mrb[0].mxu0
      %v5074 = vadd.f32 0.0, %v5073
      %v5075 = vpop.f32.mrb[0].mxu0
      %5076 = vmatprep.mubr.bf16.mxu0 0
      %5077 = vmatmul.mubr.bf16.gmra.mrb[0].mxu0 %v4730
      %v5078 = vpop.f32.mrb[0].mxu0
      %v5079 = vadd.f32 0.0, %v5078
      %v5080 = vpop.f32.mrb[0].mxu0
      %v5081 = vpop.f32.mrb[0].mxu0
      %v5082 = vadd.f32 0.0, %v5081
      %v5083 = vpop.f32.mrb[0].mxu0
      %5084 = vmatprep.mubr.bf16.mxu0 0
      %5085 = vmatmul.mubr.bf16.gmra.mrb[0].mxu0 %v4731
      %v5086 = vpop.f32.mrb[0].mxu0
      %v5087 = vadd.f32 0.0, %v5086
      %v5088 = vpop.f32.mrb[0].mxu0
      %v5089 = vpop.f32.mrb[0].mxu0
      %v5090 = vadd.f32 0.0, %v5089
      %v5091 = vpop.f32.mrb[0].mxu0
      %5092 = vmatprep.mubr.bf16.mxu0 0
      %5093 = vmatmul.mubr.bf16.gmra.mrb[0].mxu0 %v4732
      %v5094 = vpop.f32.mrb[0].mxu0
      %v5095 = vadd.f32 0.0, %v5094
      %v5096 = vpop.f32.mrb[0].mxu0
      %v5097 = vpop.f32.mrb[0].mxu0
      %v5098 = vadd.f32 0.0, %v5097
      %v5099 = vpop.f32.mrb[0].mxu0
      %5100 = vmatprep.mubr.bf16.mxu0 0
      %5101 = vmatmul.mubr.bf16.gmra.mrb[0].mxu0 %v4733
      %v5102 = vpop.f32.mrb[0].mxu0
      %v5103 = vadd.f32 0.0, %v5102
      %v5104 = vpop.f32.mrb[0].mxu0
      %v5105 = vpop.f32.mrb[0].mxu0
      %v5106 = vadd.f32 0.0, %v5105
      %v5107 = vpop.f32.mrb[0].mxu0
      %5108 = vmatprep.mubr.bf16.mxu0 0
      %5109 = vmatmul.mubr.bf16.gmra.mrb[0].mxu0 %v4734
      %v5110 = vpop.f32.mrb[0].mxu0
      %v5111 = vadd.f32 0.0, %v5110
      %v5112 = vpop.f32.mrb[0].mxu0
      %v5113 = vpop.f32.mrb[0].mxu0
      %v5114 = vadd.f32 0.0, %v5113
      %v5115 = vpop.f32.mrb[0].mxu0
      %5116 = vdwg.mxu0
      %v5133 = vunpack.c.l.b16 %v4747
      %v5134 = vunpack.c.l.b16 %v4748
      %v5135 = vunpack.c.l.b16 %v4749
      %v5136 = vunpack.c.l.b16 %v4750
      %v5137 = vunpack.c.l.b16 %v4751
      %v5138 = vunpack.c.l.b16 %v4752
      %v5139 = vunpack.c.l.b16 %v4753
      %v5140 = vunpack.c.l.b16 %v4754
      %v5141 = vunpack.c.l.b16 %v4755
      %v5142 = vunpack.c.l.b16 %v4756
      %v5143 = vunpack.c.l.b16 %v4757
      %v5144 = vunpack.c.l.b16 %v4758
      %v5145 = vunpack.c.l.b16 %v4759
      %v5146 = vunpack.c.l.b16 %v4760
      %v5147 = vunpack.c.l.b16 %v4761
      %v5148 = vunpack.c.l.b16 %v4762
      %v5149 = vpack.c.b16 %v5134, %v5133
      %v5150 = vpack.c.b16 %v5136, %v5135
      %v5151 = vpack.c.b16 %v5138, %v5137
      %v5152 = vpack.c.b16 %v5140, %v5139
      %v5153 = vpack.c.b16 %v5142, %v5141
      %v5154 = vpack.c.b16 %v5144, %v5143
      %v5155 = vpack.c.b16 %v5146, %v5145
      %v5156 = vpack.c.b16 %v5148, %v5147
      %5165 = vmatprep.subr.bf16.mxu0 0
      %5166 = vmatpush1.bf16.msra.mxu0 %v5149
      %5167 = vmatprep.subr.bf16.mxu0 0
      %5168 = vmatpush1.bf16.msra.mxu0 %v5150
      %5169 = vmatprep.subr.bf16.mxu0 0
      %5170 = vmatpush1.bf16.msra.mxu0 %v5151
      %5171 = vmatprep.subr.bf16.mxu0 0
      %5172 = vmatpush1.bf16.msra.mxu0 %v5152
      %5173 = vmatprep.subr.bf16.mxu0 0
      %5174 = vmatpush1.bf16.msra.mxu0 %v5153
      %5175 = vmatprep.subr.bf16.mxu0 0
      %5176 = vmatpush1.bf16.msra.mxu0 %v5154
      %5177 = vmatprep.subr.bf16.mxu0 0
      %5178 = vmatpush1.bf16.msra.mxu0 %v5155
      %5179 = vmatprep.subr.bf16.mxu0 0
      %5180 = vmatpush1.bf16.msra.mxu0 %v5156
      %5181 = vmatprep.subr.bf16.mxu0 0
      %5182 = vmatpush1.bf16.msra.mxu0 0
      %5183 = vmatprep.subr.bf16.mxu0 0
      %5184 = vmatpush1.bf16.msra.mxu0 0
      %5185 = vmatprep.subr.bf16.mxu0 0
      %5186 = vmatpush1.bf16.msra.mxu0 0
      %5187 = vmatprep.subr.bf16.mxu0 0
      %5188 = vmatpush1.bf16.msra.mxu0 0
      %5189 = vmatprep.subr.bf16.mxu0 0
      %5190 = vmatpush1.bf16.msra.mxu0 0
      %5191 = vmatprep.subr.bf16.mxu0 0
      %5192 = vmatpush1.bf16.msra.mxu0 0
      %5193 = vmatprep.subr.bf16.mxu0 0
      %5194 = vmatpush1.bf16.msra.mxu0 0
      %5195 = vmatprep.subr.bf16.mxu0 0
      %5196 = vmatpush1.bf16.msra.mxu0 0
      %5197 = vmatprep.mubr.bf16.mxu0 0
      %5198 = vmatmul.mubr.bf16.gmra.mrb[0].mxu0 %v4699
      %v5199 = vpop.f32.mrb[0].mxu0
      %v5200 = vadd.f32 %v4863, %v5199
      %v5201 = vpop.f32.mrb[0].mxu0
      %v5202 = vpop.f32.mrb[0].mxu0
      %v5203 = vadd.f32 %v4866, %v5202
      %v5204 = vpop.f32.mrb[0].mxu0
      %5205 = vmatprep.mubr.bf16.mxu0 0
      %5206 = vmatmul.mubr.bf16.gmra.mrb[0].mxu0 %v4700
      %v5207 = vpop.f32.mrb[0].mxu0
      %v5208 = vadd.f32 %v4871, %v5207
      %v5209 = vpop.f32.mrb[0].mxu0
      %v5210 = vpop.f32.mrb[0].mxu0
      %v5211 = vadd.f32 %v4874, %v5210
      %v5212 = vpop.f32.mrb[0].mxu0
      %5213 = vmatprep.mubr.bf16.mxu0 0
      %5214 = vmatmul.mubr.bf16.gmra.mrb[0].mxu0 %v4701
      %v5215 = vpop.f32.mrb[0].mxu0
      %v5216 = vadd.f32 %v4879, %v5215
      %v5217 = vpop.f32.mrb[0].mxu0
      %v5218 = vpop.f32.mrb[0].mxu0
      %v5219 = vadd.f32 %v4882, %v5218
      %v5220 = vpop.f32.mrb[0].mxu0
      %5221 = vmatprep.mubr.bf16.mxu0 0
      %5222 = vmatmul.mubr.bf16.gmra.mrb[0].mxu0 %v4702
      %v5223 = vpop.f32.mrb[0].mxu0
      %v5224 = vadd.f32 %v4887, %v5223
      %v5225 = vpop.f32.mrb[0].mxu0
      %v5226 = vpop.f32.mrb[0].mxu0
      %v5227 = vadd.f32 %v4890, %v5226
      %v5228 = vpop.f32.mrb[0].mxu0
      %5229 = vmatprep.mubr.bf16.mxu0 0
      %5230 = vmatmul.mubr.bf16.gmra.mrb[0].mxu0 %v4703
      %v5231 = vpop.f32.mrb[0].mxu0
      %v5232 = vadd.f32 %v4895, %v5231
      %v5233 = vpop.f32.mrb[0].mxu0
      %v5234 = vpop.f32.mrb[0].mxu0
      %v5235 = vadd.f32 %v4898, %v5234
      %v5236 = vpop.f32.mrb[0].mxu0
      %5237 = vmatprep.mubr.bf16.mxu0 0
      %5238 = vmatmul.mubr.bf16.gmra.mrb[0].mxu0 %v4704
      %v5239 = vpop.f32.mrb[0].mxu0
      %v5240 = vadd.f32 %v4903, %v5239
      %v5241 = vpop.f32.mrb[0].mxu0
      %v5242 = vpop.f32.mrb[0].mxu0
      %v5243 = vadd.f32 %v4906, %v5242
      %v5244 = vpop.f32.mrb[0].mxu0
      %5245 = vmatprep.mubr.bf16.mxu0 0
      %5246 = vmatmul.mubr.bf16.gmra.mrb[0].mxu0 %v4705
      %v5247 = vpop.f32.mrb[0].mxu0
      %v5248 = vadd.f32 %v4911, %v5247
      %v5249 = vpop.f32.mrb[0].mxu0
      %v5250 = vpop.f32.mrb[0].mxu0
      %v5251 = vadd.f32 %v4914, %v5250
      %v5252 = vpop.f32.mrb[0].mxu0
      %5253 = vmatprep.mubr.bf16.mxu0 0
      %5254 = vmatmul.mubr.bf16.gmra.mrb[0].mxu0 %v4706
      %v5255 = vpop.f32.mrb[0].mxu0
      %v5256 = vadd.f32 %v4919, %v5255
      %v5257 = vpop.f32.mrb[0].mxu0
      %v5258 = vpop.f32.mrb[0].mxu0
      %v5259 = vadd.f32 %v4922, %v5258
      %v5260 = vpop.f32.mrb[0].mxu0
      %5261 = vmatprep.mubr.bf16.mxu0 0
      %5262 = vmatmul.mubr.bf16.gmra.mrb[0].mxu0 %v4707
      %v5263 = vpop.f32.mrb[0].mxu0
      %v5264 = vadd.f32 %v4927, %v5263
      %v5265 = vpop.f32.mrb[0].mxu0
      %v5266 = vpop.f32.mrb[0].mxu0
      %v5267 = vadd.f32 %v4930, %v5266
      %v5268 = vpop.f32.mrb[0].mxu0
      %5269 = vmatprep.mubr.bf16.mxu0 0
      %5270 = vmatmul.mubr.bf16.gmra.mrb[0].mxu0 %v4708
      %v5271 = vpop.f32.mrb[0].mxu0
      %v5272 = vadd.f32 %v4935, %v5271
      %v5273 = vpop.f32.mrb[0].mxu0
      %v5274 = vpop.f32.mrb[0].mxu0
      %v5275 = vadd.f32 %v4938, %v5274
      %v5276 = vpop.f32.mrb[0].mxu0
      %5277 = vmatprep.mubr.bf16.mxu0 0
      %5278 = vmatmul.mubr.bf16.gmra.mrb[0].mxu0 %v4709
      %v5279 = vpop.f32.mrb[0].mxu0
      %v5280 = vadd.f32 %v4943, %v5279
      %v5281 = vpop.f32.mrb[0].mxu0
      %v5282 = vpop.f32.mrb[0].mxu0
      %v5283 = vadd.f32 %v4946, %v5282
      %v5284 = vpop.f32.mrb[0].mxu0
      %5285 = vmatprep.mubr.bf16.mxu0 0
      %5286 = vmatmul.mubr.bf16.gmra.mrb[0].mxu0 %v4710
      %v5287 = vpop.f32.mrb[0].mxu0
      %v5288 = vadd.f32 %v4951, %v5287
      %v5289 = vpop.f32.mrb[0].mxu0
      %v5290 = vpop.f32.mrb[0].mxu0
      %v5291 = vadd.f32 %v4954, %v5290
      %v5292 = vpop.f32.mrb[0].mxu0
      %5293 = vmatprep.mubr.bf16.mxu0 0
      %5294 = vmatmul.mubr.bf16.gmra.mrb[0].mxu0 %v4711
      %v5295 = vpop.f32.mrb[0].mxu0
      %v5296 = vadd.f32 %v4959, %v5295
      %v5297 = vpop.f32.mrb[0].mxu0
      %v5298 = vpop.f32.mrb[0].mxu0
      %v5299 = vadd.f32 %v4962, %v5298
      %v5300 = vpop.f32.mrb[0].mxu0
      %5301 = vmatprep.mubr.bf16.mxu0 0
      %5302 = vmatmul.mubr.bf16.gmra.mrb[0].mxu0 %v4712
      %v5303 = vpop.f32.mrb[0].mxu0
      %v5304 = vadd.f32 %v4967, %v5303
      %v5305 = vpop.f32.mrb[0].mxu0
      %v5306 = vpop.f32.mrb[0].mxu0
      %v5307 = vadd.f32 %v4970, %v5306
      %v5308 = vpop.f32.mrb[0].mxu0
      %5309 = vmatprep.mubr.bf16.mxu0 0
      %5310 = vmatmul.mubr.bf16.gmra.mrb[0].mxu0 %v4713
      %v5311 = vpop.f32.mrb[0].mxu0
      %v5312 = vadd.f32 %v4975, %v5311
      %v5313 = vpop.f32.mrb[0].mxu0
      %v5314 = vpop.f32.mrb[0].mxu0
      %v5315 = vadd.f32 %v4978, %v5314
      %v5316 = vpop.f32.mrb[0].mxu0
      %5317 = vmatprep.mubr.bf16.mxu0 0
      %5318 = vmatmul.mubr.bf16.gmra.mrb[0].mxu0 %v4714
      %v5319 = vpop.f32.mrb[0].mxu0
      %v5320 = vadd.f32 %v4983, %v5319
      %v5321 = vpop.f32.mrb[0].mxu0
      %v5322 = vpop.f32.mrb[0].mxu0
      %v5323 = vadd.f32 %v4986, %v5322
      %v5324 = vpop.f32.mrb[0].mxu0
      %5325 = vmatprep.mubr.bf16.mxu0 0
      %5326 = vmatmul.mubr.bf16.gmra.mrb[0].mxu0 %v4715
      %v5327 = vpop.f32.mrb[0].mxu0
      %v5328 = vadd.f32 %v4991, %v5327
      %v5329 = vpop.f32.mrb[0].mxu0
      %v5330 = vpop.f32.mrb[0].mxu0
      %v5331 = vadd.f32 %v4994, %v5330
      %v5332 = vpop.f32.mrb[0].mxu0
      %5333 = vmatprep.mubr.bf16.mxu0 0
      %5334 = vmatmul.mubr.bf16.gmra.mrb[0].mxu0 %v4716
      %v5335 = vpop.f32.mrb[0].mxu0
      %v5336 = vadd.f32 %v4999, %v5335
      %v5337 = vpop.f32.mrb[0].mxu0
      %v5338 = vpop.f32.mrb[0].mxu0
      %v5339 = vadd.f32 %v5002, %v5338
      %v5340 = vpop.f32.mrb[0].mxu0
      %5341 = vmatprep.mubr.bf16.mxu0 0
      %5342 = vmatmul.mubr.bf16.gmra.mrb[0].mxu0 %v4717
      %v5343 = vpop.f32.mrb[0].mxu0
      %v5344 = vadd.f32 %v5007, %v5343
      %v5345 = vpop.f32.mrb[0].mxu0
      %v5346 = vpop.f32.mrb[0].mxu0
      %v5347 = vadd.f32 %v5010, %v5346
      %v5348 = vpop.f32.mrb[0].mxu0
      %5349 = vmatprep.mubr.bf16.mxu0 0
      %5350 = vmatmul.mubr.bf16.gmra.mrb[0].mxu0 %v4718
      %v5351 = vpop.f32.mrb[0].mxu0
      %v5352 = vadd.f32 %v5015, %v5351
      %v5353 = vpop.f32.mrb[0].mxu0
      %v5354 = vpop.f32.mrb[0].mxu0
      %v5355 = vadd.f32 %v5018, %v5354
      %v5356 = vpop.f32.mrb[0].mxu0
      %5357 = vmatprep.mubr.bf16.mxu0 0
      %5358 = vmatmul.mubr.bf16.gmra.mrb[0].mxu0 %v4719
      %v5359 = vpop.f32.mrb[0].mxu0
      %v5360 = vadd.f32 %v5023, %v5359
      %v5361 = vpop.f32.mrb[0].mxu0
      %v5362 = vpop.f32.mrb[0].mxu0
      %v5363 = vadd.f32 %v5026, %v5362
      %v5364 = vpop.f32.mrb[0].mxu0
      %5365 = vmatprep.mubr.bf16.mxu0 0
      %5366 = vmatmul.mubr.bf16.gmra.mrb[0].mxu0 %v4720
      %v5367 = vpop.f32.mrb[0].mxu0
      %v5368 = vadd.f32 %v5031, %v5367
      %v5369 = vpop.f32.mrb[0].mxu0
      %v5370 = vpop.f32.mrb[0].mxu0
      %v5371 = vadd.f32 %v5034, %v5370
      %v5372 = vpop.f32.mrb[0].mxu0
      %5373 = vmatprep.mubr.bf16.mxu0 0
      %5374 = vmatmul.mubr.bf16.gmra.mrb[0].mxu0 %v4721
      %v5375 = vpop.f32.mrb[0].mxu0
      %v5376 = vadd.f32 %v5039, %v5375
      %v5377 = vpop.f32.mrb[0].mxu0
      %v5378 = vpop.f32.mrb[0].mxu0
      %v5379 = vadd.f32 %v5042, %v5378
      %v5380 = vpop.f32.mrb[0].mxu0
      %5381 = vmatprep.mubr.bf16.mxu0 0
      %5382 = vmatmul.mubr.bf16.gmra.mrb[0].mxu0 %v4722
      %v5383 = vpop.f32.mrb[0].mxu0
      %v5384 = vadd.f32 %v5047, %v5383
      %v5385 = vpop.f32.mrb[0].mxu0
      %v5386 = vpop.f32.mrb[0].mxu0
      %v5387 = vadd.f32 %v5050, %v5386
      %v5388 = vpop.f32.mrb[0].mxu0
      %5389 = vmatprep.mubr.bf16.mxu0 0
      %5390 = vmatmul.mubr.bf16.gmra.mrb[0].mxu0 %v4723
      %v5391 = vpop.f32.mrb[0].mxu0
      %v5392 = vadd.f32 %v5055, %v5391
      %v5393 = vpop.f32.mrb[0].mxu0
      %v5394 = vpop.f32.mrb[0].mxu0
      %v5395 = vadd.f32 %v5058, %v5394
      %v5396 = vpop.f32.mrb[0].mxu0
      %5397 = vmatprep.mubr.bf16.mxu0 0
      %5398 = vmatmul.mubr.bf16.gmra.mrb[0].mxu0 %v4724
      %v5399 = vpop.f32.mrb[0].mxu0
      %v5400 = vadd.f32 %v5063, %v5399
      %v5401 = vpop.f32.mrb[0].mxu0
      %v5402 = vpop.f32.mrb[0].mxu0
      %v5403 = vadd.f32 %v5066, %v5402
      %v5404 = vpop.f32.mrb[0].mxu0
      %5405 = vmatprep.mubr.bf16.mxu0 0
      %5406 = vmatmul.mubr.bf16.gmra.mrb[0].mxu0 %v4725
      %v5407 = vpop.f32.mrb[0].mxu0
      %v5408 = vadd.f32 %v5071, %v5407
      %v5409 = vpop.f32.mrb[0].mxu0
      %v5410 = vpop.f32.mrb[0].mxu0
      %v5411 = vadd.f32 %v5074, %v5410
      %v5412 = vpop.f32.mrb[0].mxu0
      %5413 = vmatprep.mubr.bf16.mxu0 0
      %5414 = vmatmul.mubr.bf16.gmra.mrb[0].mxu0 %v4726
      %v5415 = vpop.f32.mrb[0].mxu0
      %v5416 = vadd.f32 %v5079, %v5415
      %v5417 = vpop.f32.mrb[0].mxu0
      %v5418 = vpop.f32.mrb[0].mxu0
      %v5419 = vadd.f32 %v5082, %v5418
      %v5420 = vpop.f32.mrb[0].mxu0
      %5421 = vmatprep.mubr.bf16.mxu0 0
      %5422 = vmatmul.mubr.bf16.gmra.mrb[0].mxu0 %v4727
      %v5423 = vpop.f32.mrb[0].mxu0
      %v5424 = vadd.f32 %v5087, %v5423
      %v5425 = vpop.f32.mrb[0].mxu0
      %v5426 = vpop.f32.mrb[0].mxu0
      %v5427 = vadd.f32 %v5090, %v5426
      %v5428 = vpop.f32.mrb[0].mxu0
      %5429 = vmatprep.mubr.bf16.mxu0 0
      %5430 = vmatmul.mubr.bf16.gmra.mrb[0].mxu0 %v4728
      %v5431 = vpop.f32.mrb[0].mxu0
      %v5432 = vadd.f32 %v5095, %v5431
      %v5433 = vpop.f32.mrb[0].mxu0
      %v5434 = vpop.f32.mrb[0].mxu0
      %v5435 = vadd.f32 %v5098, %v5434
      %v5436 = vpop.f32.mrb[0].mxu0
      %5437 = vmatprep.mubr.bf16.mxu0 0
      %5438 = vmatmul.mubr.bf16.gmra.mrb[0].mxu0 %v4729
      %v5439 = vpop.f32.mrb[0].mxu0
      %v5440 = vadd.f32 %v5103, %v5439
      %v5441 = vpop.f32.mrb[0].mxu0
      %v5442 = vpop.f32.mrb[0].mxu0
      %v5443 = vadd.f32 %v5106, %v5442
      %v5444 = vpop.f32.mrb[0].mxu0
      %5445 = vmatprep.mubr.bf16.mxu0 0
      %5446 = vmatmul.mubr.bf16.gmra.mrb[0].mxu0 %v4730
      %v5447 = vpop.f32.mrb[0].mxu0
      %v5448 = vadd.f32 %v5111, %v5447
      %v5449 = vpop.f32.mrb[0].mxu0
      %v5450 = vpop.f32.mrb[0].mxu0
      %v5451 = vadd.f32 %v5114, %v5450
      %v5452 = vpop.f32.mrb[0].mxu0
      %5453 = vdwg.mxu0
      %s5454 = scalar_lea.vmem %s4, 128
      %v5455 = vld [vmem:[%s5454] sm:$0xf]
      %v5456 = vld [vmem:[%s5454 + $0x4] sm:$0xf]
      %v5457 = vld [vmem:[%s5454 + $0x8] sm:$0xf]
      %v5458 = vld [vmem:[%s5454 + $0xc] sm:$0xf]
      %v5459 = vld [vmem:[%s5454 + $0x10] sm:$0xf]
      %v5460 = vld [vmem:[%s5454 + $0x14] sm:$0xf]
      %v5461 = vld [vmem:[%s5454 + $0x18] sm:$0xf]
      %v5462 = vld [vmem:[%s5454 + $0x1c] sm:$0xf]
      %v5463 = vld [vmem:[%s5454 + $0x20] sm:$0xf]
      %v5464 = vld [vmem:[%s5454 + $0x24] sm:$0xf]
      %v5465 = vld [vmem:[%s5454 + $0x28] sm:$0xf]
      %v5466 = vld [vmem:[%s5454 + $0x2c] sm:$0xf]
      %v5467 = vld [vmem:[%s5454 + $0x30] sm:$0xf]
      %v5468 = vld [vmem:[%s5454 + $0x34] sm:$0xf]
      %v5469 = vld [vmem:[%s5454 + $0x38] sm:$0xf]
      %v5470 = vld [vmem:[%s5454 + $0x3c] sm:$0xf]
      %v5487 = vunpack.c.l.b16 %v5455
      %v5488 = vunpack.c.l.b16 %v5456
      %v5489 = vunpack.c.l.b16 %v5457
      %v5490 = vunpack.c.l.b16 %v5458
      %v5491 = vunpack.c.l.b16 %v5459
      %v5492 = vunpack.c.l.b16 %v5460
      %v5493 = vunpack.c.l.b16 %v5461
      %v5494 = vunpack.c.l.b16 %v5462
      %v5495 = vunpack.c.l.b16 %v5463
      %v5496 = vunpack.c.l.b16 %v5464
      %v5497 = vunpack.c.l.b16 %v5465
      %v5498 = vunpack.c.l.b16 %v5466
      %v5499 = vunpack.c.l.b16 %v5467
      %v5500 = vunpack.c.l.b16 %v5468
      %v5501 = vunpack.c.l.b16 %v5469
      %v5502 = vunpack.c.l.b16 %v5470
      %v5503 = vpack.c.b16 %v5488, %v5487
      %v5504 = vpack.c.b16 %v5490, %v5489
      %v5505 = vpack.c.b16 %v5492, %v5491
      %v5506 = vpack.c.b16 %v5494, %v5493
      %v5507 = vpack.c.b16 %v5496, %v5495
      %v5508 = vpack.c.b16 %v5498, %v5497
      %v5509 = vpack.c.b16 %v5500, %v5499
      %v5510 = vpack.c.b16 %v5502, %v5501
      %5519 = vmatprep.subr.bf16.mxu0 0
      %5520 = vmatpush1.bf16.msra.mxu0 %v5503
      %5521 = vmatprep.subr.bf16.mxu0 0
      %5522 = vmatpush1.bf16.msra.mxu0 %v5504
      %5523 = vmatprep.subr.bf16.mxu0 0
      %5524 = vmatpush1.bf16.msra.mxu0 %v5505
      %5525 = vmatprep.subr.bf16.mxu0 0
      %5526 = vmatpush1.bf16.msra.mxu0 %v5506
      %5527 = vmatprep.subr.bf16.mxu0 0
      %5528 = vmatpush1.bf16.msra.mxu0 %v5507
      %5529 = vmatprep.subr.bf16.mxu0 0
      %5530 = vmatpush1.bf16.msra.mxu0 %v5508
      %5531 = vmatprep.subr.bf16.mxu0 0
      %5532 = vmatpush1.bf16.msra.mxu0 %v5509
      %5533 = vmatprep.subr.bf16.mxu0 0
      %5534 = vmatpush1.bf16.msra.mxu0 %v5510
      %5535 = vmatprep.subr.bf16.mxu0 0
      %5536 = vmatpush1.bf16.msra.mxu0 0
      %5537 = vmatprep.subr.bf16.mxu0 0
      %5538 = vmatpush1.bf16.msra.mxu0 0
      %5539 = vmatprep.subr.bf16.mxu0 0
      %5540 = vmatpush1.bf16.msra.mxu0 0
      %5541 = vmatprep.subr.bf16.mxu0 0
      %5542 = vmatpush1.bf16.msra.mxu0 0
      %5543 = vmatprep.subr.bf16.mxu0 0
      %5544 = vmatpush1.bf16.msra.mxu0 0
      %5545 = vmatprep.subr.bf16.mxu0 0
      %5546 = vmatpush1.bf16.msra.mxu0 0
      %5547 = vmatprep.subr.bf16.mxu0 0
      %5548 = vmatpush1.bf16.msra.mxu0 0
      %5549 = vmatprep.subr.bf16.mxu0 0
      %5550 = vmatpush1.bf16.msra.mxu0 0
      %5551 = vmatprep.mubr.bf16.mxu0 0
      %5552 = vmatmul.mubr.bf16.gmra.mrb[0].mxu0 %v4707
      %v5553 = vpop.f32.mrb[0].mxu0
      %v5554 = vadd.f32 0.0, %v5553
      %v5555 = vpop.f32.mrb[0].mxu0
      %v5556 = vpop.f32.mrb[0].mxu0
      %v5557 = vadd.f32 0.0, %v5556
      %v5558 = vpop.f32.mrb[0].mxu0
      %5559 = vmatprep.mubr.bf16.mxu0 0
      %5560 = vmatmul.mubr.bf16.gmra.mrb[0].mxu0 %v4708
      %v5561 = vpop.f32.mrb[0].mxu0
      %v5562 = vadd.f32 0.0, %v5561
      %v5563 = vpop.f32.mrb[0].mxu0
      %v5564 = vpop.f32.mrb[0].mxu0
      %v5565 = vadd.f32 0.0, %v5564
      %v5566 = vpop.f32.mrb[0].mxu0
      %5567 = vmatprep.mubr.bf16.mxu0 0
      %5568 = vmatmul.mubr.bf16.gmra.mrb[0].mxu0 %v4709
      %v5569 = vpop.f32.mrb[0].mxu0
      %v5570 = vadd.f32 0.0, %v5569
      %v5571 = vpop.f32.mrb[0].mxu0
      %v5572 = vpop.f32.mrb[0].mxu0
      %v5573 = vadd.f32 0.0, %v5572
      %v5574 = vpop.f32.mrb[0].mxu0
      %5575 = vmatprep.mubr.bf16.mxu0 0
      %5576 = vmatmul.mubr.bf16.gmra.mrb[0].mxu0 %v4710
      %v5577 = vpop.f32.mrb[0].mxu0
      %v5578 = vadd.f32 0.0, %v5577
      %v5579 = vpop.f32.mrb[0].mxu0
      %v5580 = vpop.f32.mrb[0].mxu0
      %v5581 = vadd.f32 0.0, %v5580
      %v5582 = vpop.f32.mrb[0].mxu0
      %5583 = vmatprep.mubr.bf16.mxu0 0
      %5584 = vmatmul.mubr.bf16.gmra.mrb[0].mxu0 %v4711
      %v5585 = vpop.f32.mrb[0].mxu0
      %v5586 = vadd.f32 0.0, %v5585
      %v5587 = vpop.f32.mrb[0].mxu0
      %v5588 = vpop.f32.mrb[0].mxu0
      %v5589 = vadd.f32 0.0, %v5588
      %v5590 = vpop.f32.mrb[0].mxu0
      %5591 = vmatprep.mubr.bf16.mxu0 0
      %5592 = vmatmul.mubr.bf16.gmra.mrb[0].mxu0 %v4712
      %v5593 = vpop.f32.mrb[0].mxu0
      %v5594 = vadd.f32 0.0, %v5593
      %v5595 = vpop.f32.mrb[0].mxu0
      %v5596 = vpop.f32.mrb[0].mxu0
      %v5597 = vadd.f32 0.0, %v5596
      %v5598 = vpop.f32.mrb[0].mxu0
      %5599 = vmatprep.mubr.bf16.mxu0 0
      %5600 = vmatmul.mubr.bf16.gmra.mrb[0].mxu0 %v4713
      %v5601 = vpop.f32.mrb[0].mxu0
      %v5602 = vadd.f32 0.0, %v5601
      %v5603 = vpop.f32.mrb[0].mxu0
      %v5604 = vpop.f32.mrb[0].mxu0
      %v5605 = vadd.f32 0.0, %v5604
      %v5606 = vpop.f32.mrb[0].mxu0
      %5607 = vmatprep.mubr.bf16.mxu0 0
      %5608 = vmatmul.mubr.bf16.gmra.mrb[0].mxu0 %v4714
      %v5609 = vpop.f32.mrb[0].mxu0
      %v5610 = vadd.f32 0.0, %v5609
      %v5611 = vpop.f32.mrb[0].mxu0
      %v5612 = vpop.f32.mrb[0].mxu0
      %v5613 = vadd.f32 0.0, %v5612
      %v5614 = vpop.f32.mrb[0].mxu0
      %5615 = vmatprep.mubr.bf16.mxu0 0
      %5616 = vmatmul.mubr.bf16.gmra.mrb[0].mxu0 %v4715
      %v5617 = vpop.f32.mrb[0].mxu0
      %v5618 = vadd.f32 0.0, %v5617
      %v5619 = vpop.f32.mrb[0].mxu0
      %v5620 = vpop.f32.mrb[0].mxu0
      %v5621 = vadd.f32 0.0, %v5620
      %v5622 = vpop.f32.mrb[0].mxu0
      %5623 = vmatprep.mubr.bf16.mxu0 0
      %5624 = vmatmul.mubr.bf16.gmra.mrb[0].mxu0 %v4716
      %v5625 = vpop.f32.mrb[0].mxu0
      %v5626 = vadd.f32 0.0, %v5625
      %v5627 = vpop.f32.mrb[0].mxu0
      %v5628 = vpop.f32.mrb[0].mxu0
      %v5629 = vadd.f32 0.0, %v5628
      %v5630 = vpop.f32.mrb[0].mxu0
      %5631 = vmatprep.mubr.bf16.mxu0 0
      %5632 = vmatmul.mubr.bf16.gmra.mrb[0].mxu0 %v4717
      %v5633 = vpop.f32.mrb[0].mxu0
      %v5634 = vadd.f32 0.0, %v5633
      %v5635 = vpop.f32.mrb[0].mxu0
      %v5636 = vpop.f32.mrb[0].mxu0
      %v5637 = vadd.f32 0.0, %v5636
      %v5638 = vpop.f32.mrb[0].mxu0
      %5639 = vmatprep.mubr.bf16.mxu0 0
      %5640 = vmatmul.mubr.bf16.gmra.mrb[0].mxu0 %v4718
      %v5641 = vpop.f32.mrb[0].mxu0
      %v5642 = vadd.f32 0.0, %v5641
      %v5643 = vpop.f32.mrb[0].mxu0
      %v5644 = vpop.f32.mrb[0].mxu0
      %v5645 = vadd.f32 0.0, %v5644
      %v5646 = vpop.f32.mrb[0].mxu0
      %5647 = vmatprep.mubr.bf16.mxu0 0
      %5648 = vmatmul.mubr.bf16.gmra.mrb[0].mxu0 %v4719
      %v5649 = vpop.f32.mrb[0].mxu0
      %v5650 = vadd.f32 0.0, %v5649
      %v5651 = vpop.f32.mrb[0].mxu0
      %v5652 = vpop.f32.mrb[0].mxu0
      %v5653 = vadd.f32 0.0, %v5652
      %v5654 = vpop.f32.mrb[0].mxu0
      %5655 = vmatprep.mubr.bf16.mxu0 0
      %5656 = vmatmul.mubr.bf16.gmra.mrb[0].mxu0 %v4720
      %v5657 = vpop.f32.mrb[0].mxu0
      %v5658 = vadd.f32 0.0, %v5657
      %v5659 = vpop.f32.mrb[0].mxu0
      %v5660 = vpop.f32.mrb[0].mxu0
      %v5661 = vadd.f32 0.0, %v5660
      %v5662 = vpop.f32.mrb[0].mxu0
      %5663 = vmatprep.mubr.bf16.mxu0 0
      %5664 = vmatmul.mubr.bf16.gmra.mrb[0].mxu0 %v4721
      %v5665 = vpop.f32.mrb[0].mxu0
      %v5666 = vadd.f32 0.0, %v5665
      %v5667 = vpop.f32.mrb[0].mxu0
      %v5668 = vpop.f32.mrb[0].mxu0
      %v5669 = vadd.f32 0.0, %v5668
      %v5670 = vpop.f32.mrb[0].mxu0
      %5671 = vmatprep.mubr.bf16.mxu0 0
      %5672 = vmatmul.mubr.bf16.gmra.mrb[0].mxu0 %v4722
      %v5673 = vpop.f32.mrb[0].mxu0
      %v5674 = vadd.f32 0.0, %v5673
      %v5675 = vpop.f32.mrb[0].mxu0
      %v5676 = vpop.f32.mrb[0].mxu0
      %v5677 = vadd.f32 0.0, %v5676
      %v5678 = vpop.f32.mrb[0].mxu0
      %5679 = vmatprep.mubr.bf16.mxu0 0
      %5680 = vmatmul.mubr.bf16.gmra.mrb[0].mxu0 %v4723
      %v5681 = vpop.f32.mrb[0].mxu0
      %v5682 = vadd.f32 0.0, %v5681
      %v5683 = vpop.f32.mrb[0].mxu0
      %v5684 = vpop.f32.mrb[0].mxu0
      %v5685 = vadd.f32 0.0, %v5684
      %v5686 = vpop.f32.mrb[0].mxu0
      %5687 = vmatprep.mubr.bf16.mxu0 0
      %5688 = vmatmul.mubr.bf16.gmra.mrb[0].mxu0 %v4724
      %v5689 = vpop.f32.mrb[0].mxu0
      %v5690 = vadd.f32 0.0, %v5689
      %v5691 = vpop.f32.mrb[0].mxu0
      %v5692 = vpop.f32.mrb[0].mxu0
      %v5693 = vadd.f32 0.0, %v5692
      %v5694 = vpop.f32.mrb[0].mxu0
      %5695 = vmatprep.mubr.bf16.mxu0 0
      %5696 = vmatmul.mubr.bf16.gmra.mrb[0].mxu0 %v4725
      %v5697 = vpop.f32.mrb[0].mxu0
      %v5698 = vadd.f32 0.0, %v5697
      %v5699 = vpop.f32.mrb[0].mxu0
      %v5700 = vpop.f32.mrb[0].mxu0
      %v5701 = vadd.f32 0.0, %v5700
      %v5702 = vpop.f32.mrb[0].mxu0
      %5703 = vmatprep.mubr.bf16.mxu0 0
      %5704 = vmatmul.mubr.bf16.gmra.mrb[0].mxu0 %v4726
      %v5705 = vpop.f32.mrb[0].mxu0
      %v5706 = vadd.f32 0.0, %v5705
      %v5707 = vpop.f32.mrb[0].mxu0
      %v5708 = vpop.f32.mrb[0].mxu0
      %v5709 = vadd.f32 0.0, %v5708
      %v5710 = vpop.f32.mrb[0].mxu0
      %5711 = vmatprep.mubr.bf16.mxu0 0
      %5712 = vmatmul.mubr.bf16.gmra.mrb[0].mxu0 %v4727
      %v5713 = vpop.f32.mrb[0].mxu0
      %v5714 = vadd.f32 0.0, %v5713
      %v5715 = vpop.f32.mrb[0].mxu0
      %v5716 = vpop.f32.mrb[0].mxu0
      %v5717 = vadd.f32 0.0, %v5716
      %v5718 = vpop.f32.mrb[0].mxu0
      %5719 = vmatprep.mubr.bf16.mxu0 0
      %5720 = vmatmul.mubr.bf16.gmra.mrb[0].mxu0 %v4728
      %v5721 = vpop.f32.mrb[0].mxu0
      %v5722 = vadd.f32 0.0, %v5721
      %v5723 = vpop.f32.mrb[0].mxu0
      %v5724 = vpop.f32.mrb[0].mxu0
      %v5725 = vadd.f32 0.0, %v5724
      %v5726 = vpop.f32.mrb[0].mxu0
      %5727 = vmatprep.mubr.bf16.mxu0 0
      %5728 = vmatmul.mubr.bf16.gmra.mrb[0].mxu0 %v4729
      %v5729 = vpop.f32.mrb[0].mxu0
      %v5730 = vadd.f32 0.0, %v5729
      %v5731 = vpop.f32.mrb[0].mxu0
      %v5732 = vpop.f32.mrb[0].mxu0
      %v5733 = vadd.f32 0.0, %v5732
      %v5734 = vpop.f32.mrb[0].mxu0
      %5735 = vmatprep.mubr.bf16.mxu0 0
      %5736 = vmatmul.mubr.bf16.gmra.mrb[0].mxu0 %v4730
      %v5737 = vpop.f32.mrb[0].mxu0
      %v5738 = vadd.f32 0.0, %v5737
      %v5739 = vpop.f32.mrb[0].mxu0
      %v5740 = vpop.f32.mrb[0].mxu0
      %v5741 = vadd.f32 0.0, %v5740
      %v5742 = vpop.f32.mrb[0].mxu0
      %5743 = vmatprep.mubr.bf16.mxu0 0
      %5744 = vmatmul.mubr.bf16.gmra.mrb[0].mxu0 %v4731
      %v5745 = vpop.f32.mrb[0].mxu0
      %v5746 = vadd.f32 0.0, %v5745
      %v5747 = vpop.f32.mrb[0].mxu0
      %v5748 = vpop.f32.mrb[0].mxu0
      %v5749 = vadd.f32 0.0, %v5748
      %v5750 = vpop.f32.mrb[0].mxu0
      %5751 = vmatprep.mubr.bf16.mxu0 0
      %5752 = vmatmul.mubr.bf16.gmra.mrb[0].mxu0 %v4732
      %v5753 = vpop.f32.mrb[0].mxu0
      %v5754 = vadd.f32 0.0, %v5753
      %v5755 = vpop.f32.mrb[0].mxu0
      %v5756 = vpop.f32.mrb[0].mxu0
      %v5757 = vadd.f32 0.0, %v5756
      %v5758 = vpop.f32.mrb[0].mxu0
      %5759 = vmatprep.mubr.bf16.mxu0 0
      %5760 = vmatmul.mubr.bf16.gmra.mrb[0].mxu0 %v4733
      %v5761 = vpop.f32.mrb[0].mxu0
      %v5762 = vadd.f32 0.0, %v5761
      %v5763 = vpop.f32.mrb[0].mxu0
      %v5764 = vpop.f32.mrb[0].mxu0
      %v5765 = vadd.f32 0.0, %v5764
      %v5766 = vpop.f32.mrb[0].mxu0
      %5767 = vmatprep.mubr.bf16.mxu0 0
      %5768 = vmatmul.mubr.bf16.gmra.mrb[0].mxu0 %v4734
      %v5769 = vpop.f32.mrb[0].mxu0
      %v5770 = vadd.f32 0.0, %v5769
      %v5771 = vpop.f32.mrb[0].mxu0
      %v5772 = vpop.f32.mrb[0].mxu0
      %v5773 = vadd.f32 0.0, %v5772
      %v5774 = vpop.f32.mrb[0].mxu0
      %5775 = vmatprep.mubr.bf16.mxu0 0
      %5776 = vmatmul.mubr.bf16.gmra.mrb[0].mxu0 %v4735
      %v5777 = vpop.f32.mrb[0].mxu0
      %v5778 = vadd.f32 0.0, %v5777
      %v5779 = vpop.f32.mrb[0].mxu0
      %v5780 = vpop.f32.mrb[0].mxu0
      %v5781 = vadd.f32 0.0, %v5780
      %v5782 = vpop.f32.mrb[0].mxu0
      %5783 = vmatprep.mubr.bf16.mxu0 0
      %5784 = vmatmul.mubr.bf16.gmra.mrb[0].mxu0 %v4736
      %v5785 = vpop.f32.mrb[0].mxu0
      %v5786 = vadd.f32 0.0, %v5785
      %v5787 = vpop.f32.mrb[0].mxu0
      %v5788 = vpop.f32.mrb[0].mxu0
      %v5789 = vadd.f32 0.0, %v5788
      %v5790 = vpop.f32.mrb[0].mxu0
      %5791 = vmatprep.mubr.bf16.mxu0 0
      %5792 = vmatmul.mubr.bf16.gmra.mrb[0].mxu0 %v4737
      %v5793 = vpop.f32.mrb[0].mxu0
      %v5794 = vadd.f32 0.0, %v5793
      %v5795 = vpop.f32.mrb[0].mxu0
      %v5796 = vpop.f32.mrb[0].mxu0
      %v5797 = vadd.f32 0.0, %v5796
      %v5798 = vpop.f32.mrb[0].mxu0
      %5799 = vmatprep.mubr.bf16.mxu0 0
      %5800 = vmatmul.mubr.bf16.gmra.mrb[0].mxu0 %v4738
      %v5801 = vpop.f32.mrb[0].mxu0
      %v5802 = vadd.f32 0.0, %v5801
      %v5803 = vpop.f32.mrb[0].mxu0
      %v5804 = vpop.f32.mrb[0].mxu0
      %v5805 = vadd.f32 0.0, %v5804
      %v5806 = vpop.f32.mrb[0].mxu0
      %5807 = vdwg.mxu0
      %v5808 = vadd.f32 %v5200, %v5554
      %v5809 = vadd.f32 %v5203, %v5557
      %v5810 = vadd.f32 %v5208, %v5562
      %v5811 = vadd.f32 %v5211, %v5565
      %v5812 = vadd.f32 %v5216, %v5570
      %v5813 = vadd.f32 %v5219, %v5573
      %v5814 = vadd.f32 %v5224, %v5578
      %v5815 = vadd.f32 %v5227, %v5581
      %v5816 = vadd.f32 %v5232, %v5586
      %v5817 = vadd.f32 %v5235, %v5589
      %v5818 = vadd.f32 %v5240, %v5594
      %v5819 = vadd.f32 %v5243, %v5597
      %v5820 = vadd.f32 %v5248, %v5602
      %v5821 = vadd.f32 %v5251, %v5605
      %v5822 = vadd.f32 %v5256, %v5610
      %v5823 = vadd.f32 %v5259, %v5613
      %v5824 = vadd.f32 %v5264, %v5618
      %v5825 = vadd.f32 %v5267, %v5621
      %v5826 = vadd.f32 %v5272, %v5626
      %v5827 = vadd.f32 %v5275, %v5629
      %v5828 = vadd.f32 %v5280, %v5634
      %v5829 = vadd.f32 %v5283, %v5637
      %v5830 = vadd.f32 %v5288, %v5642
      %v5831 = vadd.f32 %v5291, %v5645
      %v5832 = vadd.f32 %v5296, %v5650
      %v5833 = vadd.f32 %v5299, %v5653
      %v5834 = vadd.f32 %v5304, %v5658
      %v5835 = vadd.f32 %v5307, %v5661
      %v5836 = vadd.f32 %v5312, %v5666
      %v5837 = vadd.f32 %v5315, %v5669
      %v5838 = vadd.f32 %v5320, %v5674
      %v5839 = vadd.f32 %v5323, %v5677
      %v5840 = vadd.f32 %v5328, %v5682
      %v5841 = vadd.f32 %v5331, %v5685
      %v5842 = vadd.f32 %v5336, %v5690
      %v5843 = vadd.f32 %v5339, %v5693
      %v5844 = vadd.f32 %v5344, %v5698
      %v5845 = vadd.f32 %v5347, %v5701
      %v5846 = vadd.f32 %v5352, %v5706
      %v5847 = vadd.f32 %v5355, %v5709
      %v5848 = vadd.f32 %v5360, %v5714
      %v5849 = vadd.f32 %v5363, %v5717
      %v5850 = vadd.f32 %v5368, %v5722
      %v5851 = vadd.f32 %v5371, %v5725
      %v5852 = vadd.f32 %v5376, %v5730
      %v5853 = vadd.f32 %v5379, %v5733
      %v5854 = vadd.f32 %v5384, %v5738
      %v5855 = vadd.f32 %v5387, %v5741
      %v5856 = vadd.f32 %v5392, %v5746
      %v5857 = vadd.f32 %v5395, %v5749
      %v5858 = vadd.f32 %v5400, %v5754
      %v5859 = vadd.f32 %v5403, %v5757
      %v5860 = vadd.f32 %v5408, %v5762
      %v5861 = vadd.f32 %v5411, %v5765
      %v5862 = vadd.f32 %v5416, %v5770
      %v5863 = vadd.f32 %v5419, %v5773
      %v5864 = vadd.f32 %v5424, %v5778
      %v5865 = vadd.f32 %v5427, %v5781
      %v5866 = vadd.f32 %v5432, %v5786
      %v5867 = vadd.f32 %v5435, %v5789
      %v5868 = vadd.f32 %v5440, %v5794
      %v5869 = vadd.f32 %v5443, %v5797
      %v5870 = vadd.f32 %v5448, %v5802
      %v5871 = vadd.f32 %v5451, %v5805
      %s5872 = scalar_lea.vmem %s4, 192
      %v5873 = vld [vmem:[%s5872] sm:$0xf]
      %v5874 = vld [vmem:[%s5872 + $0x4] sm:$0xf]
      %v5875 = vld [vmem:[%s5872 + $0x8] sm:$0xf]
      %v5876 = vld [vmem:[%s5872 + $0xc] sm:$0xf]
      %v5877 = vld [vmem:[%s5872 + $0x10] sm:$0xf]
      %v5878 = vld [vmem:[%s5872 + $0x14] sm:$0xf]
      %v5879 = vld [vmem:[%s5872 + $0x18] sm:$0xf]
      %v5880 = vld [vmem:[%s5872 + $0x1c] sm:$0xf]
      %v5881 = vld [vmem:[%s5872 + $0x20] sm:$0xf]
      %v5882 = vld [vmem:[%s5872 + $0x24] sm:$0xf]
      %v5883 = vld [vmem:[%s5872 + $0x28] sm:$0xf]
      %v5884 = vld [vmem:[%s5872 + $0x2c] sm:$0xf]
      %v5885 = vld [vmem:[%s5872 + $0x30] sm:$0xf]
      %v5886 = vld [vmem:[%s5872 + $0x34] sm:$0xf]
      %v5887 = vld [vmem:[%s5872 + $0x38] sm:$0xf]
      %v5888 = vld [vmem:[%s5872 + $0x3c] sm:$0xf]
      %v5905 = vunpack.c.l.b16 %v5873
      %v5906 = vunpack.c.l.b16 %v5874
      %v5907 = vunpack.c.l.b16 %v5875
      %v5908 = vunpack.c.l.b16 %v5876
      %v5909 = vunpack.c.l.b16 %v5877
      %v5910 = vunpack.c.l.b16 %v5878
      %v5911 = vunpack.c.l.b16 %v5879
      %v5912 = vunpack.c.l.b16 %v5880
      %v5913 = vunpack.c.l.b16 %v5881
      %v5914 = vunpack.c.l.b16 %v5882
      %v5915 = vunpack.c.l.b16 %v5883
      %v5916 = vunpack.c.l.b16 %v5884
      %v5917 = vunpack.c.l.b16 %v5885
      %v5918 = vunpack.c.l.b16 %v5886
      %v5919 = vunpack.c.l.b16 %v5887
      %v5920 = vunpack.c.l.b16 %v5888
      %v5921 = vpack.c.b16 %v5906, %v5905
      %v5922 = vpack.c.b16 %v5908, %v5907
      %v5923 = vpack.c.b16 %v5910, %v5909
      %v5924 = vpack.c.b16 %v5912, %v5911
      %v5925 = vpack.c.b16 %v5914, %v5913
      %v5926 = vpack.c.b16 %v5916, %v5915
      %v5927 = vpack.c.b16 %v5918, %v5917
      %v5928 = vpack.c.b16 %v5920, %v5919
      %5937 = vmatprep.subr.bf16.mxu0 0
      %5938 = vmatpush1.bf16.msra.mxu0 %v5921
      %5939 = vmatprep.subr.bf16.mxu0 0
      %5940 = vmatpush1.bf16.msra.mxu0 %v5922
      %5941 = vmatprep.subr.bf16.mxu0 0
      %5942 = vmatpush1.bf16.msra.mxu0 %v5923
      %5943 = vmatprep.subr.bf16.mxu0 0
      %5944 = vmatpush1.bf16.msra.mxu0 %v5924
      %5945 = vmatprep.subr.bf16.mxu0 0
      %5946 = vmatpush1.bf16.msra.mxu0 %v5925
      %5947 = vmatprep.subr.bf16.mxu0 0
      %5948 = vmatpush1.bf16.msra.mxu0 %v5926
      %5949 = vmatprep.subr.bf16.mxu0 0
      %5950 = vmatpush1.bf16.msra.mxu0 %v5927
      %5951 = vmatprep.subr.bf16.mxu0 0
      %5952 = vmatpush1.bf16.msra.mxu0 %v5928
      %5953 = vmatprep.subr.bf16.mxu0 0
      %5954 = vmatpush1.bf16.msra.mxu0 0
      %5955 = vmatprep.subr.bf16.mxu0 0
      %5956 = vmatpush1.bf16.msra.mxu0 0
      %5957 = vmatprep.subr.bf16.mxu0 0
      %5958 = vmatpush1.bf16.msra.mxu0 0
      %5959 = vmatprep.subr.bf16.mxu0 0
      %5960 = vmatpush1.bf16.msra.mxu0 0
      %5961 = vmatprep.subr.bf16.mxu0 0
      %5962 = vmatpush1.bf16.msra.mxu0 0
      %5963 = vmatprep.subr.bf16.mxu0 0
      %5964 = vmatpush1.bf16.msra.mxu0 0
      %5965 = vmatprep.subr.bf16.mxu0 0
      %5966 = vmatpush1.bf16.msra.mxu0 0
      %5967 = vmatprep.subr.bf16.mxu0 0
      %5968 = vmatpush1.bf16.msra.mxu0 0
      %5969 = vmatprep.mubr.bf16.mxu0 0
      %5970 = vmatmul.mubr.bf16.gmra.mrb[0].mxu0 %v4711
      %v5971 = vpop.f32.mrb[0].mxu0
      %v5972 = vadd.f32 0.0, %v5971
      %v5973 = vpop.f32.mrb[0].mxu0
      %v5974 = vpop.f32.mrb[0].mxu0
      %v5975 = vadd.f32 0.0, %v5974
      %v5976 = vpop.f32.mrb[0].mxu0
      %5977 = vmatprep.mubr.bf16.mxu0 0
      %5978 = vmatmul.mubr.bf16.gmra.mrb[0].mxu0 %v4712
      %v5979 = vpop.f32.mrb[0].mxu0
      %v5980 = vadd.f32 0.0, %v5979
      %v5981 = vpop.f32.mrb[0].mxu0
      %v5982 = vpop.f32.mrb[0].mxu0
      %v5983 = vadd.f32 0.0, %v5982
      %v5984 = vpop.f32.mrb[0].mxu0
      %5985 = vmatprep.mubr.bf16.mxu0 0
      %5986 = vmatmul.mubr.bf16.gmra.mrb[0].mxu0 %v4713
      %v5987 = vpop.f32.mrb[0].mxu0
      %v5988 = vadd.f32 0.0, %v5987
      %v5989 = vpop.f32.mrb[0].mxu0
      %v5990 = vpop.f32.mrb[0].mxu0
      %v5991 = vadd.f32 0.0, %v5990
      %v5992 = vpop.f32.mrb[0].mxu0
      %5993 = vmatprep.mubr.bf16.mxu0 0
      %5994 = vmatmul.mubr.bf16.gmra.mrb[0].mxu0 %v4714
      %v5995 = vpop.f32.mrb[0].mxu0
      %v5996 = vadd.f32 0.0, %v5995
      %v5997 = vpop.f32.mrb[0].mxu0
      %v5998 = vpop.f32.mrb[0].mxu0
      %v5999 = vadd.f32 0.0, %v5998
      %v6000 = vpop.f32.mrb[0].mxu0
      %6001 = vmatprep.mubr.bf16.mxu0 0
      %6002 = vmatmul.mubr.bf16.gmra.mrb[0].mxu0 %v4715
      %v6003 = vpop.f32.mrb[0].mxu0
      %v6004 = vadd.f32 0.0, %v6003
      %v6005 = vpop.f32.mrb[0].mxu0
      %v6006 = vpop.f32.mrb[0].mxu0
      %v6007 = vadd.f32 0.0, %v6006
      %v6008 = vpop.f32.mrb[0].mxu0
      %6009 = vmatprep.mubr.bf16.mxu0 0
      %6010 = vmatmul.mubr.bf16.gmra.mrb[0].mxu0 %v4716
      %v6011 = vpop.f32.mrb[0].mxu0
      %v6012 = vadd.f32 0.0, %v6011
      %v6013 = vpop.f32.mrb[0].mxu0
      %v6014 = vpop.f32.mrb[0].mxu0
      %v6015 = vadd.f32 0.0, %v6014
      %v6016 = vpop.f32.mrb[0].mxu0
      %6017 = vmatprep.mubr.bf16.mxu0 0
      %6018 = vmatmul.mubr.bf16.gmra.mrb[0].mxu0 %v4717
      %v6019 = vpop.f32.mrb[0].mxu0
      %v6020 = vadd.f32 0.0, %v6019
      %v6021 = vpop.f32.mrb[0].mxu0
      %v6022 = vpop.f32.mrb[0].mxu0
      %v6023 = vadd.f32 0.0, %v6022
      %v6024 = vpop.f32.mrb[0].mxu0
      %6025 = vmatprep.mubr.bf16.mxu0 0
      %6026 = vmatmul.mubr.bf16.gmra.mrb[0].mxu0 %v4718
      %v6027 = vpop.f32.mrb[0].mxu0
      %v6028 = vadd.f32 0.0, %v6027
      %v6029 = vpop.f32.mrb[0].mxu0
      %v6030 = vpop.f32.mrb[0].mxu0
      %v6031 = vadd.f32 0.0, %v6030
      %v6032 = vpop.f32.mrb[0].mxu0
      %6033 = vmatprep.mubr.bf16.mxu0 0
      %6034 = vmatmul.mubr.bf16.gmra.mrb[0].mxu0 %v4719
      %v6035 = vpop.f32.mrb[0].mxu0
      %v6036 = vadd.f32 0.0, %v6035
      %v6037 = vpop.f32.mrb[0].mxu0
      %v6038 = vpop.f32.mrb[0].mxu0
      %v6039 = vadd.f32 0.0, %v6038
      %v6040 = vpop.f32.mrb[0].mxu0
      %6041 = vmatprep.mubr.bf16.mxu0 0
      %6042 = vmatmul.mubr.bf16.gmra.mrb[0].mxu0 %v4720
      %v6043 = vpop.f32.mrb[0].mxu0
      %v6044 = vadd.f32 0.0, %v6043
      %v6045 = vpop.f32.mrb[0].mxu0
      %v6046 = vpop.f32.mrb[0].mxu0
      %v6047 = vadd.f32 0.0, %v6046
      %v6048 = vpop.f32.mrb[0].mxu0
      %6049 = vmatprep.mubr.bf16.mxu0 0
      %6050 = vmatmul.mubr.bf16.gmra.mrb[0].mxu0 %v4721
      %v6051 = vpop.f32.mrb[0].mxu0
      %v6052 = vadd.f32 0.0, %v6051
      %v6053 = vpop.f32.mrb[0].mxu0
      %v6054 = vpop.f32.mrb[0].mxu0
      %v6055 = vadd.f32 0.0, %v6054
      %v6056 = vpop.f32.mrb[0].mxu0
      %6057 = vmatprep.mubr.bf16.mxu0 0
      %6058 = vmatmul.mubr.bf16.gmra.mrb[0].mxu0 %v4722
      %v6059 = vpop.f32.mrb[0].mxu0
      %v6060 = vadd.f32 0.0, %v6059
      %v6061 = vpop.f32.mrb[0].mxu0
      %v6062 = vpop.f32.mrb[0].mxu0
      %v6063 = vadd.f32 0.0, %v6062
      %v6064 = vpop.f32.mrb[0].mxu0
      %6065 = vmatprep.mubr.bf16.mxu0 0
      %6066 = vmatmul.mubr.bf16.gmra.mrb[0].mxu0 %v4723
      %v6067 = vpop.f32.mrb[0].mxu0
      %v6068 = vadd.f32 0.0, %v6067
      %v6069 = vpop.f32.mrb[0].mxu0
      %v6070 = vpop.f32.mrb[0].mxu0
      %v6071 = vadd.f32 0.0, %v6070
      %v6072 = vpop.f32.mrb[0].mxu0
      %6073 = vmatprep.mubr.bf16.mxu0 0
      %6074 = vmatmul.mubr.bf16.gmra.mrb[0].mxu0 %v4724
      %v6075 = vpop.f32.mrb[0].mxu0
      %v6076 = vadd.f32 0.0, %v6075
      %v6077 = vpop.f32.mrb[0].mxu0
      %v6078 = vpop.f32.mrb[0].mxu0
      %v6079 = vadd.f32 0.0, %v6078
      %v6080 = vpop.f32.mrb[0].mxu0
      %6081 = vmatprep.mubr.bf16.mxu0 0
      %6082 = vmatmul.mubr.bf16.gmra.mrb[0].mxu0 %v4725
      %v6083 = vpop.f32.mrb[0].mxu0
      %v6084 = vadd.f32 0.0, %v6083
      %v6085 = vpop.f32.mrb[0].mxu0
      %v6086 = vpop.f32.mrb[0].mxu0
      %v6087 = vadd.f32 0.0, %v6086
      %v6088 = vpop.f32.mrb[0].mxu0
      %6089 = vmatprep.mubr.bf16.mxu0 0
      %6090 = vmatmul.mubr.bf16.gmra.mrb[0].mxu0 %v4726
      %v6091 = vpop.f32.mrb[0].mxu0
      %v6092 = vadd.f32 0.0, %v6091
      %v6093 = vpop.f32.mrb[0].mxu0
      %v6094 = vpop.f32.mrb[0].mxu0
      %v6095 = vadd.f32 0.0, %v6094
      %v6096 = vpop.f32.mrb[0].mxu0
      %6097 = vmatprep.mubr.bf16.mxu0 0
      %6098 = vmatmul.mubr.bf16.gmra.mrb[0].mxu0 %v4727
      %v6099 = vpop.f32.mrb[0].mxu0
      %v6100 = vadd.f32 0.0, %v6099
      %v6101 = vpop.f32.mrb[0].mxu0
      %v6102 = vpop.f32.mrb[0].mxu0
      %v6103 = vadd.f32 0.0, %v6102
      %v6104 = vpop.f32.mrb[0].mxu0
      %6105 = vmatprep.mubr.bf16.mxu0 0
      %6106 = vmatmul.mubr.bf16.gmra.mrb[0].mxu0 %v4728
      %v6107 = vpop.f32.mrb[0].mxu0
      %v6108 = vadd.f32 0.0, %v6107
      %v6109 = vpop.f32.mrb[0].mxu0
      %v6110 = vpop.f32.mrb[0].mxu0
      %v6111 = vadd.f32 0.0, %v6110
      %v6112 = vpop.f32.mrb[0].mxu0
      %6113 = vmatprep.mubr.bf16.mxu0 0
      %6114 = vmatmul.mubr.bf16.gmra.mrb[0].mxu0 %v4729
      %v6115 = vpop.f32.mrb[0].mxu0
      %v6116 = vadd.f32 0.0, %v6115
      %v6117 = vpop.f32.mrb[0].mxu0
      %v6118 = vpop.f32.mrb[0].mxu0
      %v6119 = vadd.f32 0.0, %v6118
      %v6120 = vpop.f32.mrb[0].mxu0
      %6121 = vmatprep.mubr.bf16.mxu0 0
      %6122 = vmatmul.mubr.bf16.gmra.mrb[0].mxu0 %v4730
      %v6123 = vpop.f32.mrb[0].mxu0
      %v6124 = vadd.f32 0.0, %v6123
      %v6125 = vpop.f32.mrb[0].mxu0
      %v6126 = vpop.f32.mrb[0].mxu0
      %v6127 = vadd.f32 0.0, %v6126
      %v6128 = vpop.f32.mrb[0].mxu0
      %6129 = vmatprep.mubr.bf16.mxu0 0
      %6130 = vmatmul.mubr.bf16.gmra.mrb[0].mxu0 %v4731
      %v6131 = vpop.f32.mrb[0].mxu0
      %v6132 = vadd.f32 0.0, %v6131
      %v6133 = vpop.f32.mrb[0].mxu0
      %v6134 = vpop.f32.mrb[0].mxu0
      %v6135 = vadd.f32 0.0, %v6134
      %v6136 = vpop.f32.mrb[0].mxu0
      %6137 = vmatprep.mubr.bf16.mxu0 0
      %6138 = vmatmul.mubr.bf16.gmra.mrb[0].mxu0 %v4732
      %v6139 = vpop.f32.mrb[0].mxu0
      %v6140 = vadd.f32 0.0, %v6139
      %v6141 = vpop.f32.mrb[0].mxu0
      %v6142 = vpop.f32.mrb[0].mxu0
      %v6143 = vadd.f32 0.0, %v6142
      %v6144 = vpop.f32.mrb[0].mxu0
      %6145 = vmatprep.mubr.bf16.mxu0 0
      %6146 = vmatmul.mubr.bf16.gmra.mrb[0].mxu0 %v4733
      %v6147 = vpop.f32.mrb[0].mxu0
      %v6148 = vadd.f32 0.0, %v6147
      %v6149 = vpop.f32.mrb[0].mxu0
      %v6150 = vpop.f32.mrb[0].mxu0
      %v6151 = vadd.f32 0.0, %v6150
      %v6152 = vpop.f32.mrb[0].mxu0
      %6153 = vmatprep.mubr.bf16.mxu0 0
      %6154 = vmatmul.mubr.bf16.gmra.mrb[0].mxu0 %v4734
      %v6155 = vpop.f32.mrb[0].mxu0
      %v6156 = vadd.f32 0.0, %v6155
      %v6157 = vpop.f32.mrb[0].mxu0
      %v6158 = vpop.f32.mrb[0].mxu0
      %v6159 = vadd.f32 0.0, %v6158
      %v6160 = vpop.f32.mrb[0].mxu0
      %6161 = vmatprep.mubr.bf16.mxu0 0
      %6162 = vmatmul.mubr.bf16.gmra.mrb[0].mxu0 %v4735
      %v6163 = vpop.f32.mrb[0].mxu0
      %v6164 = vadd.f32 0.0, %v6163
      %v6165 = vpop.f32.mrb[0].mxu0
      %v6166 = vpop.f32.mrb[0].mxu0
      %v6167 = vadd.f32 0.0, %v6166
      %v6168 = vpop.f32.mrb[0].mxu0
      %6169 = vmatprep.mubr.bf16.mxu0 0
      %6170 = vmatmul.mubr.bf16.gmra.mrb[0].mxu0 %v4736
      %v6171 = vpop.f32.mrb[0].mxu0
      %v6172 = vadd.f32 0.0, %v6171
      %v6173 = vpop.f32.mrb[0].mxu0
      %v6174 = vpop.f32.mrb[0].mxu0
      %v6175 = vadd.f32 0.0, %v6174
      %v6176 = vpop.f32.mrb[0].mxu0
      %6177 = vmatprep.mubr.bf16.mxu0 0
      %6178 = vmatmul.mubr.bf16.gmra.mrb[0].mxu0 %v4737
      %v6179 = vpop.f32.mrb[0].mxu0
      %v6180 = vadd.f32 0.0, %v6179
      %v6181 = vpop.f32.mrb[0].mxu0
      %v6182 = vpop.f32.mrb[0].mxu0
      %v6183 = vadd.f32 0.0, %v6182
      %v6184 = vpop.f32.mrb[0].mxu0
      %6185 = vmatprep.mubr.bf16.mxu0 0
      %6186 = vmatmul.mubr.bf16.gmra.mrb[0].mxu0 %v4738
      %v6187 = vpop.f32.mrb[0].mxu0
      %v6188 = vadd.f32 0.0, %v6187
      %v6189 = vpop.f32.mrb[0].mxu0
      %v6190 = vpop.f32.mrb[0].mxu0
      %v6191 = vadd.f32 0.0, %v6190
      %v6192 = vpop.f32.mrb[0].mxu0
      %6193 = vmatprep.mubr.bf16.mxu0 0
      %6194 = vmatmul.mubr.bf16.gmra.mrb[0].mxu0 %v4739
      %v6195 = vpop.f32.mrb[0].mxu0
      %v6196 = vadd.f32 0.0, %v6195
      %v6197 = vpop.f32.mrb[0].mxu0
      %v6198 = vpop.f32.mrb[0].mxu0
      %v6199 = vadd.f32 0.0, %v6198
      %v6200 = vpop.f32.mrb[0].mxu0
      %6201 = vmatprep.mubr.bf16.mxu0 0
      %6202 = vmatmul.mubr.bf16.gmra.mrb[0].mxu0 %v4740
      %v6203 = vpop.f32.mrb[0].mxu0
      %v6204 = vadd.f32 0.0, %v6203
      %v6205 = vpop.f32.mrb[0].mxu0
      %v6206 = vpop.f32.mrb[0].mxu0
      %v6207 = vadd.f32 0.0, %v6206
      %v6208 = vpop.f32.mrb[0].mxu0
      %6209 = vmatprep.mubr.bf16.mxu0 0
      %6210 = vmatmul.mubr.bf16.gmra.mrb[0].mxu0 %v4741
      %v6211 = vpop.f32.mrb[0].mxu0
      %v6212 = vadd.f32 0.0, %v6211
      %v6213 = vpop.f32.mrb[0].mxu0
      %v6214 = vpop.f32.mrb[0].mxu0
      %v6215 = vadd.f32 0.0, %v6214
      %v6216 = vpop.f32.mrb[0].mxu0
      %6217 = vmatprep.mubr.bf16.mxu0 0
      %6218 = vmatmul.mubr.bf16.gmra.mrb[0].mxu0 %v4742
      %v6219 = vpop.f32.mrb[0].mxu0
      %v6220 = vadd.f32 0.0, %v6219
      %v6221 = vpop.f32.mrb[0].mxu0
      %v6222 = vpop.f32.mrb[0].mxu0
      %v6223 = vadd.f32 0.0, %v6222
      %v6224 = vpop.f32.mrb[0].mxu0
      %6225 = vdwg.mxu0
      %v6226 = vadd.f32 %v5808, %v5972
      %v6227 = vadd.f32 %v5809, %v5975
      %v6228 = vadd.f32 %v5810, %v5980
      %v6229 = vadd.f32 %v5811, %v5983
      %v6230 = vadd.f32 %v5812, %v5988
      %v6231 = vadd.f32 %v5813, %v5991
      %v6232 = vadd.f32 %v5814, %v5996
      %v6233 = vadd.f32 %v5815, %v5999
      %v6234 = vadd.f32 %v5816, %v6004
      %v6235 = vadd.f32 %v5817, %v6007
      %v6236 = vadd.f32 %v5818, %v6012
      %v6237 = vadd.f32 %v5819, %v6015
      %v6238 = vadd.f32 %v5820, %v6020
      %v6239 = vadd.f32 %v5821, %v6023
      %v6240 = vadd.f32 %v5822, %v6028
      %v6241 = vadd.f32 %v5823, %v6031
      %v6242 = vadd.f32 %v5824, %v6036
      %v6243 = vadd.f32 %v5825, %v6039
      %v6244 = vadd.f32 %v5826, %v6044
      %v6245 = vadd.f32 %v5827, %v6047
      %v6246 = vadd.f32 %v5828, %v6052
      %v6247 = vadd.f32 %v5829, %v6055
      %v6248 = vadd.f32 %v5830, %v6060
      %v6249 = vadd.f32 %v5831, %v6063
      %v6250 = vadd.f32 %v5832, %v6068
      %v6251 = vadd.f32 %v5833, %v6071
      %v6252 = vadd.f32 %v5834, %v6076
      %v6253 = vadd.f32 %v5835, %v6079
      %v6254 = vadd.f32 %v5836, %v6084
      %v6255 = vadd.f32 %v5837, %v6087
      %v6256 = vadd.f32 %v5838, %v6092
      %v6257 = vadd.f32 %v5839, %v6095
      %v6258 = vadd.f32 %v5840, %v6100
      %v6259 = vadd.f32 %v5841, %v6103
      %v6260 = vadd.f32 %v5842, %v6108
      %v6261 = vadd.f32 %v5843, %v6111
      %v6262 = vadd.f32 %v5844, %v6116
      %v6263 = vadd.f32 %v5845, %v6119
      %v6264 = vadd.f32 %v5846, %v6124
      %v6265 = vadd.f32 %v5847, %v6127
      %v6266 = vadd.f32 %v5848, %v6132
      %v6267 = vadd.f32 %v5849, %v6135
      %v6268 = vadd.f32 %v5850, %v6140
      %v6269 = vadd.f32 %v5851, %v6143
      %v6270 = vadd.f32 %v5852, %v6148
      %v6271 = vadd.f32 %v5853, %v6151
      %v6272 = vadd.f32 %v5854, %v6156
      %v6273 = vadd.f32 %v5855, %v6159
      %v6274 = vadd.f32 %v5856, %v6164
      %v6275 = vadd.f32 %v5857, %v6167
      %v6276 = vadd.f32 %v5858, %v6172
      %v6277 = vadd.f32 %v5859, %v6175
      %v6278 = vadd.f32 %v5860, %v6180
      %v6279 = vadd.f32 %v5861, %v6183
      %v6280 = vadd.f32 %v5862, %v6188
      %v6281 = vadd.f32 %v5863, %v6191
      %v6282 = vadd.f32 %v5864, %v6196
      %v6283 = vadd.f32 %v5865, %v6199
      %v6284 = vadd.f32 %v5866, %v6204
      %v6285 = vadd.f32 %v5867, %v6207
      %v6286 = vadd.f32 %v5868, %v6212
      %v6287 = vadd.f32 %v5869, %v6215
      %v6288 = vadd.f32 %v5870, %v6220
      %v6289 = vadd.f32 %v5871, %v6223
      %s6290 = scalar_lea.vmem %s4, 256
      %v6291 = vld [vmem:[%s6290] sm:$0xf]
      %v6292 = vld [vmem:[%s6290 + $0x4] sm:$0xf]
      %v6293 = vld [vmem:[%s6290 + $0x8] sm:$0xf]
      %v6294 = vld [vmem:[%s6290 + $0xc] sm:$0xf]
      %v6295 = vld [vmem:[%s6290 + $0x10] sm:$0xf]
      %v6296 = vld [vmem:[%s6290 + $0x14] sm:$0xf]
      %v6297 = vld [vmem:[%s6290 + $0x18] sm:$0xf]
      %v6298 = vld [vmem:[%s6290 + $0x1c] sm:$0xf]
      %v6299 = vld [vmem:[%s6290 + $0x20] sm:$0xf]
      %v6300 = vld [vmem:[%s6290 + $0x24] sm:$0xf]
      %v6301 = vld [vmem:[%s6290 + $0x28] sm:$0xf]
      %v6302 = vld [vmem:[%s6290 + $0x2c] sm:$0xf]
      %v6303 = vld [vmem:[%s6290 + $0x30] sm:$0xf]
      %v6304 = vld [vmem:[%s6290 + $0x34] sm:$0xf]
      %v6305 = vld [vmem:[%s6290 + $0x38] sm:$0xf]
      %v6306 = vld [vmem:[%s6290 + $0x3c] sm:$0xf]
      %v6323 = vunpack.c.l.b16 %v6291
      %v6324 = vunpack.c.l.b16 %v6292
      %v6325 = vunpack.c.l.b16 %v6293
      %v6326 = vunpack.c.l.b16 %v6294
      %v6327 = vunpack.c.l.b16 %v6295
      %v6328 = vunpack.c.l.b16 %v6296
      %v6329 = vunpack.c.l.b16 %v6297
      %v6330 = vunpack.c.l.b16 %v6298
      %v6331 = vunpack.c.l.b16 %v6299
      %v6332 = vunpack.c.l.b16 %v6300
      %v6333 = vunpack.c.l.b16 %v6301
      %v6334 = vunpack.c.l.b16 %v6302
      %v6335 = vunpack.c.l.b16 %v6303
      %v6336 = vunpack.c.l.b16 %v6304
      %v6337 = vunpack.c.l.b16 %v6305
      %v6338 = vunpack.c.l.b16 %v6306
      %v6339 = vpack.c.b16 %v6324, %v6323
      %v6340 = vpack.c.b16 %v6326, %v6325
      %v6341 = vpack.c.b16 %v6328, %v6327
      %v6342 = vpack.c.b16 %v6330, %v6329
      %v6343 = vpack.c.b16 %v6332, %v6331
      %v6344 = vpack.c.b16 %v6334, %v6333
      %v6345 = vpack.c.b16 %v6336, %v6335
      %v6346 = vpack.c.b16 %v6338, %v6337
      %6355 = vmatprep.subr.bf16.mxu0 0
      %6356 = vmatpush1.bf16.msra.mxu0 %v6339
      %6357 = vmatprep.subr.bf16.mxu0 0
      %6358 = vmatpush1.bf16.msra.mxu0 %v6340
      %6359 = vmatprep.subr.bf16.mxu0 0
      %6360 = vmatpush1.bf16.msra.mxu0 %v6341
      %6361 = vmatprep.subr.bf16.mxu0 0
      %6362 = vmatpush1.bf16.msra.mxu0 %v6342
      %6363 = vmatprep.subr.bf16.mxu0 0
      %6364 = vmatpush1.bf16.msra.mxu0 %v6343
      %6365 = vmatprep.subr.bf16.mxu0 0
      %6366 = vmatpush1.bf16.msra.mxu0 %v6344
      %6367 = vmatprep.subr.bf16.mxu0 0
      %6368 = vmatpush1.bf16.msra.mxu0 %v6345
      %6369 = vmatprep.subr.bf16.mxu0 0
      %6370 = vmatpush1.bf16.msra.mxu0 %v6346
      %6371 = vmatprep.subr.bf16.mxu0 0
      %6372 = vmatpush1.bf16.msra.mxu0 0
      %6373 = vmatprep.subr.bf16.mxu0 0
      %6374 = vmatpush1.bf16.msra.mxu0 0
      %6375 = vmatprep.subr.bf16.mxu0 0
      %6376 = vmatpush1.bf16.msra.mxu0 0
      %6377 = vmatprep.subr.bf16.mxu0 0
      %6378 = vmatpush1.bf16.msra.mxu0 0
      %6379 = vmatprep.subr.bf16.mxu0 0
      %6380 = vmatpush1.bf16.msra.mxu0 0
      %6381 = vmatprep.subr.bf16.mxu0 0
      %6382 = vmatpush1.bf16.msra.mxu0 0
      %6383 = vmatprep.subr.bf16.mxu0 0
      %6384 = vmatpush1.bf16.msra.mxu0 0
      %6385 = vmatprep.subr.bf16.mxu0 0
      %6386 = vmatpush1.bf16.msra.mxu0 0
      %6387 = vmatprep.mubr.bf16.mxu0 0
      %6388 = vmatmul.mubr.bf16.gmra.mrb[0].mxu0 %v4715
      %v6389 = vpop.f32.mrb[0].mxu0
      %v6390 = vadd.f32 0.0, %v6389
      %v6391 = vpop.f32.mrb[0].mxu0
      %v6392 = vpop.f32.mrb[0].mxu0
      %v6393 = vadd.f32 0.0, %v6392
      %v6394 = vpop.f32.mrb[0].mxu0
      %6395 = vmatprep.mubr.bf16.mxu0 0
      %6396 = vmatmul.mubr.bf16.gmra.mrb[0].mxu0 %v4716
      %v6397 = vpop.f32.mrb[0].mxu0
      %v6398 = vadd.f32 0.0, %v6397
      %v6399 = vpop.f32.mrb[0].mxu0
      %v6400 = vpop.f32.mrb[0].mxu0
      %v6401 = vadd.f32 0.0, %v6400
      %v6402 = vpop.f32.mrb[0].mxu0
      %6403 = vmatprep.mubr.bf16.mxu0 0
      %6404 = vmatmul.mubr.bf16.gmra.mrb[0].mxu0 %v4717
      %v6405 = vpop.f32.mrb[0].mxu0
      %v6406 = vadd.f32 0.0, %v6405
      %v6407 = vpop.f32.mrb[0].mxu0
      %v6408 = vpop.f32.mrb[0].mxu0
      %v6409 = vadd.f32 0.0, %v6408
      %v6410 = vpop.f32.mrb[0].mxu0
      %6411 = vmatprep.mubr.bf16.mxu0 0
      %6412 = vmatmul.mubr.bf16.gmra.mrb[0].mxu0 %v4718
      %v6413 = vpop.f32.mrb[0].mxu0
      %v6414 = vadd.f32 0.0, %v6413
      %v6415 = vpop.f32.mrb[0].mxu0
      %v6416 = vpop.f32.mrb[0].mxu0
      %v6417 = vadd.f32 0.0, %v6416
      %v6418 = vpop.f32.mrb[0].mxu0
      %6419 = vmatprep.mubr.bf16.mxu0 0
      %6420 = vmatmul.mubr.bf16.gmra.mrb[0].mxu0 %v4719
      %v6421 = vpop.f32.mrb[0].mxu0
      %v6422 = vadd.f32 0.0, %v6421
      %v6423 = vpop.f32.mrb[0].mxu0
      %v6424 = vpop.f32.mrb[0].mxu0
      %v6425 = vadd.f32 0.0, %v6424
      %v6426 = vpop.f32.mrb[0].mxu0
      %6427 = vmatprep.mubr.bf16.mxu0 0
      %6428 = vmatmul.mubr.bf16.gmra.mrb[0].mxu0 %v4720
      %v6429 = vpop.f32.mrb[0].mxu0
      %v6430 = vadd.f32 0.0, %v6429
      %v6431 = vpop.f32.mrb[0].mxu0
      %v6432 = vpop.f32.mrb[0].mxu0
      %v6433 = vadd.f32 0.0, %v6432
      %v6434 = vpop.f32.mrb[0].mxu0
      %6435 = vmatprep.mubr.bf16.mxu0 0
      %6436 = vmatmul.mubr.bf16.gmra.mrb[0].mxu0 %v4721
      %v6437 = vpop.f32.mrb[0].mxu0
      %v6438 = vadd.f32 0.0, %v6437
      %v6439 = vpop.f32.mrb[0].mxu0
      %v6440 = vpop.f32.mrb[0].mxu0
      %v6441 = vadd.f32 0.0, %v6440
      %v6442 = vpop.f32.mrb[0].mxu0
      %6443 = vmatprep.mubr.bf16.mxu0 0
      %6444 = vmatmul.mubr.bf16.gmra.mrb[0].mxu0 %v4722
      %v6445 = vpop.f32.mrb[0].mxu0
      %v6446 = vadd.f32 0.0, %v6445
      %v6447 = vpop.f32.mrb[0].mxu0
      %v6448 = vpop.f32.mrb[0].mxu0
      %v6449 = vadd.f32 0.0, %v6448
      %v6450 = vpop.f32.mrb[0].mxu0
      %6451 = vmatprep.mubr.bf16.mxu0 0
      %6452 = vmatmul.mubr.bf16.gmra.mrb[0].mxu0 %v4723
      %v6453 = vpop.f32.mrb[0].mxu0
      %v6454 = vadd.f32 0.0, %v6453
      %v6455 = vpop.f32.mrb[0].mxu0
      %v6456 = vpop.f32.mrb[0].mxu0
      %v6457 = vadd.f32 0.0, %v6456
      %v6458 = vpop.f32.mrb[0].mxu0
      %6459 = vmatprep.mubr.bf16.mxu0 0
      %6460 = vmatmul.mubr.bf16.gmra.mrb[0].mxu0 %v4724
      %v6461 = vpop.f32.mrb[0].mxu0
      %v6462 = vadd.f32 0.0, %v6461
      %v6463 = vpop.f32.mrb[0].mxu0
      %v6464 = vpop.f32.mrb[0].mxu0
      %v6465 = vadd.f32 0.0, %v6464
      %v6466 = vpop.f32.mrb[0].mxu0
      %6467 = vmatprep.mubr.bf16.mxu0 0
      %6468 = vmatmul.mubr.bf16.gmra.mrb[0].mxu0 %v4725
      %v6469 = vpop.f32.mrb[0].mxu0
      %v6470 = vadd.f32 0.0, %v6469
      %v6471 = vpop.f32.mrb[0].mxu0
      %v6472 = vpop.f32.mrb[0].mxu0
      %v6473 = vadd.f32 0.0, %v6472
      %v6474 = vpop.f32.mrb[0].mxu0
      %6475 = vmatprep.mubr.bf16.mxu0 0
      %6476 = vmatmul.mubr.bf16.gmra.mrb[0].mxu0 %v4726
      %v6477 = vpop.f32.mrb[0].mxu0
      %v6478 = vadd.f32 0.0, %v6477
      %v6479 = vpop.f32.mrb[0].mxu0
      %v6480 = vpop.f32.mrb[0].mxu0
      %v6481 = vadd.f32 0.0, %v6480
      %v6482 = vpop.f32.mrb[0].mxu0
      %6483 = vmatprep.mubr.bf16.mxu0 0
      %6484 = vmatmul.mubr.bf16.gmra.mrb[0].mxu0 %v4727
      %v6485 = vpop.f32.mrb[0].mxu0
      %v6486 = vadd.f32 0.0, %v6485
      %v6487 = vpop.f32.mrb[0].mxu0
      %v6488 = vpop.f32.mrb[0].mxu0
      %v6489 = vadd.f32 0.0, %v6488
      %v6490 = vpop.f32.mrb[0].mxu0
      %6491 = vmatprep.mubr.bf16.mxu0 0
      %6492 = vmatmul.mubr.bf16.gmra.mrb[0].mxu0 %v4728
      %v6493 = vpop.f32.mrb[0].mxu0
      %v6494 = vadd.f32 0.0, %v6493
      %v6495 = vpop.f32.mrb[0].mxu0
      %v6496 = vpop.f32.mrb[0].mxu0
      %v6497 = vadd.f32 0.0, %v6496
      %v6498 = vpop.f32.mrb[0].mxu0
      %6499 = vmatprep.mubr.bf16.mxu0 0
      %6500 = vmatmul.mubr.bf16.gmra.mrb[0].mxu0 %v4729
      %v6501 = vpop.f32.mrb[0].mxu0
      %v6502 = vadd.f32 0.0, %v6501
      %v6503 = vpop.f32.mrb[0].mxu0
      %v6504 = vpop.f32.mrb[0].mxu0
      %v6505 = vadd.f32 0.0, %v6504
      %v6506 = vpop.f32.mrb[0].mxu0
      %6507 = vmatprep.mubr.bf16.mxu0 0
      %6508 = vmatmul.mubr.bf16.gmra.mrb[0].mxu0 %v4730
      %v6509 = vpop.f32.mrb[0].mxu0
      %v6510 = vadd.f32 0.0, %v6509
      %v6511 = vpop.f32.mrb[0].mxu0
      %v6512 = vpop.f32.mrb[0].mxu0
      %v6513 = vadd.f32 0.0, %v6512
      %v6514 = vpop.f32.mrb[0].mxu0
      %6515 = vmatprep.mubr.bf16.mxu0 0
      %6516 = vmatmul.mubr.bf16.gmra.mrb[0].mxu0 %v4731
      %v6517 = vpop.f32.mrb[0].mxu0
      %v6518 = vadd.f32 0.0, %v6517
      %v6519 = vpop.f32.mrb[0].mxu0
      %v6520 = vpop.f32.mrb[0].mxu0
      %v6521 = vadd.f32 0.0, %v6520
      %v6522 = vpop.f32.mrb[0].mxu0
      %6523 = vmatprep.mubr.bf16.mxu0 0
      %6524 = vmatmul.mubr.bf16.gmra.mrb[0].mxu0 %v4732
      %v6525 = vpop.f32.mrb[0].mxu0
      %v6526 = vadd.f32 0.0, %v6525
      %v6527 = vpop.f32.mrb[0].mxu0
      %v6528 = vpop.f32.mrb[0].mxu0
      %v6529 = vadd.f32 0.0, %v6528
      %v6530 = vpop.f32.mrb[0].mxu0
      %6531 = vmatprep.mubr.bf16.mxu0 0
      %6532 = vmatmul.mubr.bf16.gmra.mrb[0].mxu0 %v4733
      %v6533 = vpop.f32.mrb[0].mxu0
      %v6534 = vadd.f32 0.0, %v6533
      %v6535 = vpop.f32.mrb[0].mxu0
      %v6536 = vpop.f32.mrb[0].mxu0
      %v6537 = vadd.f32 0.0, %v6536
      %v6538 = vpop.f32.mrb[0].mxu0
      %6539 = vmatprep.mubr.bf16.mxu0 0
      %6540 = vmatmul.mubr.bf16.gmra.mrb[0].mxu0 %v4734
      %v6541 = vpop.f32.mrb[0].mxu0
      %v6542 = vadd.f32 0.0, %v6541
      %v6543 = vpop.f32.mrb[0].mxu0
      %v6544 = vpop.f32.mrb[0].mxu0
      %v6545 = vadd.f32 0.0, %v6544
      %v6546 = vpop.f32.mrb[0].mxu0
      %6547 = vmatprep.mubr.bf16.mxu0 0
      %6548 = vmatmul.mubr.bf16.gmra.mrb[0].mxu0 %v4735
      %v6549 = vpop.f32.mrb[0].mxu0
      %v6550 = vadd.f32 0.0, %v6549
      %v6551 = vpop.f32.mrb[0].mxu0
      %v6552 = vpop.f32.mrb[0].mxu0
      %v6553 = vadd.f32 0.0, %v6552
      %v6554 = vpop.f32.mrb[0].mxu0
      %6555 = vmatprep.mubr.bf16.mxu0 0
      %6556 = vmatmul.mubr.bf16.gmra.mrb[0].mxu0 %v4736
      %v6557 = vpop.f32.mrb[0].mxu0
      %v6558 = vadd.f32 0.0, %v6557
      %v6559 = vpop.f32.mrb[0].mxu0
      %v6560 = vpop.f32.mrb[0].mxu0
      %v6561 = vadd.f32 0.0, %v6560
      %v6562 = vpop.f32.mrb[0].mxu0
      %6563 = vmatprep.mubr.bf16.mxu0 0
      %6564 = vmatmul.mubr.bf16.gmra.mrb[0].mxu0 %v4737
      %v6565 = vpop.f32.mrb[0].mxu0
      %v6566 = vadd.f32 0.0, %v6565
      %v6567 = vpop.f32.mrb[0].mxu0
      %v6568 = vpop.f32.mrb[0].mxu0
      %v6569 = vadd.f32 0.0, %v6568
      %v6570 = vpop.f32.mrb[0].mxu0
      %6571 = vmatprep.mubr.bf16.mxu0 0
      %6572 = vmatmul.mubr.bf16.gmra.mrb[0].mxu0 %v4738
      %v6573 = vpop.f32.mrb[0].mxu0
      %v6574 = vadd.f32 0.0, %v6573
      %v6575 = vpop.f32.mrb[0].mxu0
      %v6576 = vpop.f32.mrb[0].mxu0
      %v6577 = vadd.f32 0.0, %v6576
      %v6578 = vpop.f32.mrb[0].mxu0
      %6579 = vmatprep.mubr.bf16.mxu0 0
      %6580 = vmatmul.mubr.bf16.gmra.mrb[0].mxu0 %v4739
      %v6581 = vpop.f32.mrb[0].mxu0
      %v6582 = vadd.f32 0.0, %v6581
      %v6583 = vpop.f32.mrb[0].mxu0
      %v6584 = vpop.f32.mrb[0].mxu0
      %v6585 = vadd.f32 0.0, %v6584
      %v6586 = vpop.f32.mrb[0].mxu0
      %6587 = vmatprep.mubr.bf16.mxu0 0
      %6588 = vmatmul.mubr.bf16.gmra.mrb[0].mxu0 %v4740
      %v6589 = vpop.f32.mrb[0].mxu0
      %v6590 = vadd.f32 0.0, %v6589
      %v6591 = vpop.f32.mrb[0].mxu0
      %v6592 = vpop.f32.mrb[0].mxu0
      %v6593 = vadd.f32 0.0, %v6592
      %v6594 = vpop.f32.mrb[0].mxu0
      %6595 = vmatprep.mubr.bf16.mxu0 0
      %6596 = vmatmul.mubr.bf16.gmra.mrb[0].mxu0 %v4741
      %v6597 = vpop.f32.mrb[0].mxu0
      %v6598 = vadd.f32 0.0, %v6597
      %v6599 = vpop.f32.mrb[0].mxu0
      %v6600 = vpop.f32.mrb[0].mxu0
      %v6601 = vadd.f32 0.0, %v6600
      %v6602 = vpop.f32.mrb[0].mxu0
      %6603 = vmatprep.mubr.bf16.mxu0 0
      %6604 = vmatmul.mubr.bf16.gmra.mrb[0].mxu0 %v4742
      %v6605 = vpop.f32.mrb[0].mxu0
      %v6606 = vadd.f32 0.0, %v6605
      %v6607 = vpop.f32.mrb[0].mxu0
      %v6608 = vpop.f32.mrb[0].mxu0
      %v6609 = vadd.f32 0.0, %v6608
      %v6610 = vpop.f32.mrb[0].mxu0
      %6611 = vmatprep.mubr.bf16.mxu0 0
      %6612 = vmatmul.mubr.bf16.gmra.mrb[0].mxu0 %v4743
      %v6613 = vpop.f32.mrb[0].mxu0
      %v6614 = vadd.f32 0.0, %v6613
      %v6615 = vpop.f32.mrb[0].mxu0
      %v6616 = vpop.f32.mrb[0].mxu0
      %v6617 = vadd.f32 0.0, %v6616
      %v6618 = vpop.f32.mrb[0].mxu0
      %6619 = vmatprep.mubr.bf16.mxu0 0
      %6620 = vmatmul.mubr.bf16.gmra.mrb[0].mxu0 %v4744
      %v6621 = vpop.f32.mrb[0].mxu0
      %v6622 = vadd.f32 0.0, %v6621
      %v6623 = vpop.f32.mrb[0].mxu0
      %v6624 = vpop.f32.mrb[0].mxu0
      %v6625 = vadd.f32 0.0, %v6624
      %v6626 = vpop.f32.mrb[0].mxu0
      %6627 = vmatprep.mubr.bf16.mxu0 0
      %6628 = vmatmul.mubr.bf16.gmra.mrb[0].mxu0 %v4745
      %v6629 = vpop.f32.mrb[0].mxu0
      %v6630 = vadd.f32 0.0, %v6629
      %v6631 = vpop.f32.mrb[0].mxu0
      %v6632 = vpop.f32.mrb[0].mxu0
      %v6633 = vadd.f32 0.0, %v6632
      %v6634 = vpop.f32.mrb[0].mxu0
      %6635 = vmatprep.mubr.bf16.mxu0 0
      %6636 = vmatmul.mubr.bf16.gmra.mrb[0].mxu0 %v4746
      %v6637 = vpop.f32.mrb[0].mxu0
      %v6638 = vadd.f32 0.0, %v6637
      %v6639 = vpop.f32.mrb[0].mxu0
      %v6640 = vpop.f32.mrb[0].mxu0
      %v6641 = vadd.f32 0.0, %v6640
      %v6642 = vpop.f32.mrb[0].mxu0
      %6643 = vdwg.mxu0
      %v6644 = vadd.f32 %v6226, %v6390
      %v6645 = vadd.f32 %v6227, %v6393
      %v6646 = vadd.f32 %v6228, %v6398
      %v6647 = vadd.f32 %v6229, %v6401
      %v6648 = vadd.f32 %v6230, %v6406
      %v6649 = vadd.f32 %v6231, %v6409
      %v6650 = vadd.f32 %v6232, %v6414
      %v6651 = vadd.f32 %v6233, %v6417
      %v6652 = vadd.f32 %v6234, %v6422
      %v6653 = vadd.f32 %v6235, %v6425
      %v6654 = vadd.f32 %v6236, %v6430
      %v6655 = vadd.f32 %v6237, %v6433
      %v6656 = vadd.f32 %v6238, %v6438
      %v6657 = vadd.f32 %v6239, %v6441
      %v6658 = vadd.f32 %v6240, %v6446
      %v6659 = vadd.f32 %v6241, %v6449
      %v6660 = vadd.f32 %v6242, %v6454
      %v6661 = vadd.f32 %v6243, %v6457
      %v6662 = vadd.f32 %v6244, %v6462
      %v6663 = vadd.f32 %v6245, %v6465
      %v6664 = vadd.f32 %v6246, %v6470
      %v6665 = vadd.f32 %v6247, %v6473
      %v6666 = vadd.f32 %v6248, %v6478
      %v6667 = vadd.f32 %v6249, %v6481
      %v6668 = vadd.f32 %v6250, %v6486
      %v6669 = vadd.f32 %v6251, %v6489
      %v6670 = vadd.f32 %v6252, %v6494
      %v6671 = vadd.f32 %v6253, %v6497
      %v6672 = vadd.f32 %v6254, %v6502
      %v6673 = vadd.f32 %v6255, %v6505
      %v6674 = vadd.f32 %v6256, %v6510
      %v6675 = vadd.f32 %v6257, %v6513
      %v6676 = vadd.f32 %v6258, %v6518
      %v6677 = vadd.f32 %v6259, %v6521
      %v6678 = vadd.f32 %v6260, %v6526
      %v6679 = vadd.f32 %v6261, %v6529
      %v6680 = vadd.f32 %v6262, %v6534
      %v6681 = vadd.f32 %v6263, %v6537
      %v6682 = vadd.f32 %v6264, %v6542
      %v6683 = vadd.f32 %v6265, %v6545
      %v6684 = vadd.f32 %v6266, %v6550
      %v6685 = vadd.f32 %v6267, %v6553
      %v6686 = vadd.f32 %v6268, %v6558
      %v6687 = vadd.f32 %v6269, %v6561
      %v6688 = vadd.f32 %v6270, %v6566
      %v6689 = vadd.f32 %v6271, %v6569
      %v6690 = vadd.f32 %v6272, %v6574
      %v6691 = vadd.f32 %v6273, %v6577
      %v6692 = vadd.f32 %v6274, %v6582
      %v6693 = vadd.f32 %v6275, %v6585
      %v6694 = vadd.f32 %v6276, %v6590
      %v6695 = vadd.f32 %v6277, %v6593
      %v6696 = vadd.f32 %v6278, %v6598
      %v6697 = vadd.f32 %v6279, %v6601
      %v6698 = vadd.f32 %v6280, %v6606
      %v6699 = vadd.f32 %v6281, %v6609
      %v6700 = vadd.f32 %v6282, %v6614
      %v6701 = vadd.f32 %v6283, %v6617
      %v6702 = vadd.f32 %v6284, %v6622
      %v6703 = vadd.f32 %v6285, %v6625
      %v6704 = vadd.f32 %v6286, %v6630
      %v6705 = vadd.f32 %v6287, %v6633
      %v6706 = vadd.f32 %v6288, %v6638
      %v6707 = vadd.f32 %v6289, %v6641
      %v6708 = vld [vmem:[%s5] sm:$0x1]
      %v6710 = vlaneseq
      %v6711 = vshrl.u32 %v6710, 7
      %v6712 = vsub.s32 0, %v6711
      %v6713 = vrot.slane %v6708, %v6712
      %v6715 = vadd.f32 %v6644, %v6713
      %v6716 = vadd.f32 %v6645, %v6713
      %v6717 = vadd.f32 %v6646, %v6713
      %v6718 = vadd.f32 %v6647, %v6713
      %v6719 = vadd.f32 %v6648, %v6713
      %v6720 = vadd.f32 %v6649, %v6713
      %v6721 = vadd.f32 %v6650, %v6713
      %v6722 = vadd.f32 %v6651, %v6713
      %v6723 = vadd.f32 %v6652, %v6713
      %v6724 = vadd.f32 %v6653, %v6713
      %v6725 = vadd.f32 %v6654, %v6713
      %v6726 = vadd.f32 %v6655, %v6713
      %v6727 = vadd.f32 %v6656, %v6713
      %v6728 = vadd.f32 %v6657, %v6713
      %v6729 = vadd.f32 %v6658, %v6713
      %v6730 = vadd.f32 %v6659, %v6713
      %v6731 = vadd.f32 %v6660, %v6713
      %v6732 = vadd.f32 %v6661, %v6713
      %v6733 = vadd.f32 %v6662, %v6713
      %v6734 = vadd.f32 %v6663, %v6713
      %v6735 = vadd.f32 %v6664, %v6713
      %v6736 = vadd.f32 %v6665, %v6713
      %v6737 = vadd.f32 %v6666, %v6713
      %v6738 = vadd.f32 %v6667, %v6713
      %v6739 = vadd.f32 %v6668, %v6713
      %v6740 = vadd.f32 %v6669, %v6713
      %v6741 = vadd.f32 %v6670, %v6713
      %v6742 = vadd.f32 %v6671, %v6713
      %v6743 = vadd.f32 %v6672, %v6713
      %v6744 = vadd.f32 %v6673, %v6713
      %v6745 = vadd.f32 %v6674, %v6713
      %v6746 = vadd.f32 %v6675, %v6713
      %v6747 = vadd.f32 %v6676, %v6713
      %v6748 = vadd.f32 %v6677, %v6713
      %v6749 = vadd.f32 %v6678, %v6713
      %v6750 = vadd.f32 %v6679, %v6713
      %v6751 = vadd.f32 %v6680, %v6713
      %v6752 = vadd.f32 %v6681, %v6713
      %v6753 = vadd.f32 %v6682, %v6713
      %v6754 = vadd.f32 %v6683, %v6713
      %v6755 = vadd.f32 %v6684, %v6713
      %v6756 = vadd.f32 %v6685, %v6713
      %v6757 = vadd.f32 %v6686, %v6713
      %v6758 = vadd.f32 %v6687, %v6713
      %v6759 = vadd.f32 %v6688, %v6713
      %v6760 = vadd.f32 %v6689, %v6713
      %v6761 = vadd.f32 %v6690, %v6713
      %v6762 = vadd.f32 %v6691, %v6713
      %v6763 = vadd.f32 %v6692, %v6713
      %v6764 = vadd.f32 %v6693, %v6713
      %v6765 = vadd.f32 %v6694, %v6713
      %v6766 = vadd.f32 %v6695, %v6713
      %v6767 = vadd.f32 %v6696, %v6713
      %v6768 = vadd.f32 %v6697, %v6713
      %v6769 = vadd.f32 %v6698, %v6713
      %v6770 = vadd.f32 %v6699, %v6713
      %v6771 = vadd.f32 %v6700, %v6713
      %v6772 = vadd.f32 %v6701, %v6713
      %v6773 = vadd.f32 %v6702, %v6713
      %v6774 = vadd.f32 %v6703, %v6713
      %v6775 = vadd.f32 %v6704, %v6713
      %v6776 = vadd.f32 %v6705, %v6713
      %v6777 = vadd.f32 %v6706, %v6713
      %v6778 = vadd.f32 %v6707, %v6713
      %v6779 = vmax.f32 %v6715, 0.0
      %v6780 = vmax.f32 %v6716, 0.0
      %v6781 = vmax.f32 %v6717, 0.0
      %v6782 = vmax.f32 %v6718, 0.0
      %v6783 = vmax.f32 %v6719, 0.0
      %v6784 = vmax.f32 %v6720, 0.0
      %v6785 = vmax.f32 %v6721, 0.0
      %v6786 = vmax.f32 %v6722, 0.0
      %v6787 = vmax.f32 %v6723, 0.0
      %v6788 = vmax.f32 %v6724, 0.0
      %v6789 = vmax.f32 %v6725, 0.0
      %v6790 = vmax.f32 %v6726, 0.0
      %v6791 = vmax.f32 %v6727, 0.0
      %v6792 = vmax.f32 %v6728, 0.0
      %v6793 = vmax.f32 %v6729, 0.0
      %v6794 = vmax.f32 %v6730, 0.0
      %v6795 = vmax.f32 %v6731, 0.0
      %v6796 = vmax.f32 %v6732, 0.0
      %v6797 = vmax.f32 %v6733, 0.0
      %v6798 = vmax.f32 %v6734, 0.0
      %v6799 = vmax.f32 %v6735, 0.0
      %v6800 = vmax.f32 %v6736, 0.0
      %v6801 = vmax.f32 %v6737, 0.0
      %v6802 = vmax.f32 %v6738, 0.0
      %v6803 = vmax.f32 %v6739, 0.0
      %v6804 = vmax.f32 %v6740, 0.0
      %v6805 = vmax.f32 %v6741, 0.0
      %v6806 = vmax.f32 %v6742, 0.0
      %v6807 = vmax.f32 %v6743, 0.0
      %v6808 = vmax.f32 %v6744, 0.0
      %v6809 = vmax.f32 %v6745, 0.0
      %v6810 = vmax.f32 %v6746, 0.0
      %v6811 = vmax.f32 %v6747, 0.0
      %v6812 = vmax.f32 %v6748, 0.0
      %v6813 = vmax.f32 %v6749, 0.0
      %v6814 = vmax.f32 %v6750, 0.0
      %v6815 = vmax.f32 %v6751, 0.0
      %v6816 = vmax.f32 %v6752, 0.0
      %v6817 = vmax.f32 %v6753, 0.0
      %v6818 = vmax.f32 %v6754, 0.0
      %v6819 = vmax.f32 %v6755, 0.0
      %v6820 = vmax.f32 %v6756, 0.0
      %v6821 = vmax.f32 %v6757, 0.0
      %v6822 = vmax.f32 %v6758, 0.0
      %v6823 = vmax.f32 %v6759, 0.0
      %v6824 = vmax.f32 %v6760, 0.0
      %v6825 = vmax.f32 %v6761, 0.0
      %v6826 = vmax.f32 %v6762, 0.0
      %v6827 = vmax.f32 %v6763, 0.0
      %v6828 = vmax.f32 %v6764, 0.0
      %v6829 = vmax.f32 %v6765, 0.0
      %v6830 = vmax.f32 %v6766, 0.0
      %v6831 = vmax.f32 %v6767, 0.0
      %v6832 = vmax.f32 %v6768, 0.0
      %v6833 = vmax.f32 %v6769, 0.0
      %v6834 = vmax.f32 %v6770, 0.0
      %v6835 = vmax.f32 %v6771, 0.0
      %v6836 = vmax.f32 %v6772, 0.0
      %v6837 = vmax.f32 %v6773, 0.0
      %v6838 = vmax.f32 %v6774, 0.0
      %v6839 = vmax.f32 %v6775, 0.0
      %v6840 = vmax.f32 %v6776, 0.0
      %v6841 = vmax.f32 %v6777, 0.0
      %v6842 = vmax.f32 %v6778, 0.0
      %v6843 = vmax.f32 %v6779, %v6787
      %v6844 = vmax.f32 %v6780, %v6788
      %v6845 = vmax.f32 %v6781, %v6789
      %v6846 = vmax.f32 %v6782, %v6790
      %v6847 = vmax.f32 %v6783, %v6791
      %v6848 = vmax.f32 %v6784, %v6792
      %v6849 = vmax.f32 %v6785, %v6793
      %v6850 = vmax.f32 %v6786, %v6794
      %v6851 = vmax.f32 %v6795, %v6803
      %v6852 = vmax.f32 %v6796, %v6804
      %v6853 = vmax.f32 %v6797, %v6805
      %v6854 = vmax.f32 %v6798, %v6806
      %v6855 = vmax.f32 %v6799, %v6807
      %v6856 = vmax.f32 %v6800, %v6808
      %v6857 = vmax.f32 %v6801, %v6809
      %v6858 = vmax.f32 %v6802, %v6810
      %v6859 = vmax.f32 %v6811, %v6819
      %v6860 = vmax.f32 %v6812, %v6820
      %v6861 = vmax.f32 %v6813, %v6821
      %v6862 = vmax.f32 %v6814, %v6822
      %v6863 = vmax.f32 %v6815, %v6823
      %v6864 = vmax.f32 %v6816, %v6824
      %v6865 = vmax.f32 %v6817, %v6825
      %v6866 = vmax.f32 %v6818, %v6826
      %v6867 = vmax.f32 %v6827, %v6835
      %v6868 = vmax.f32 %v6828, %v6836
      %v6869 = vmax.f32 %v6829, %v6837
      %v6870 = vmax.f32 %v6830, %v6838
      %v6871 = vmax.f32 %v6831, %v6839
      %v6872 = vmax.f32 %v6832, %v6840
      %v6873 = vmax.f32 %v6833, %v6841
      %v6874 = vmax.f32 %v6834, %v6842
      %6875 = vrot.lane.b32.xlu0 %v6843, 112
      %v6876 = vpop.permute.xlu0 %6875
      %6877 = vrot.lane.b32.xlu0 %v6844, 112
      %v6878 = vpop.permute.xlu0 %6877
      %6879 = vrot.lane.b32.xlu0 %v6845, 112
      %v6880 = vpop.permute.xlu0 %6879
      %6881 = vrot.lane.b32.xlu0 %v6846, 112
      %v6882 = vpop.permute.xlu0 %6881
      %6883 = vrot.lane.b32.xlu0 %v6847, 112
      %v6884 = vpop.permute.xlu0 %6883
      %6885 = vrot.lane.b32.xlu0 %v6848, 112
      %v6886 = vpop.permute.xlu0 %6885
      %6887 = vrot.lane.b32.xlu0 %v6849, 112
      %v6888 = vpop.permute.xlu0 %6887
      %6889 = vrot.lane.b32.xlu0 %v6850, 112
      %v6890 = vpop.permute.xlu0 %6889
      %6891 = vrot.lane.b32.xlu0 %v6851, 112
      %v6892 = vpop.permute.xlu0 %6891
      %6893 = vrot.lane.b32.xlu0 %v6852, 112
      %v6894 = vpop.permute.xlu0 %6893
      %6895 = vrot.lane.b32.xlu0 %v6853, 112
      %v6896 = vpop.permute.xlu0 %6895
      %6897 = vrot.lane.b32.xlu0 %v6854, 112
      %v6898 = vpop.permute.xlu0 %6897
      %6899 = vrot.lane.b32.xlu0 %v6855, 112
      %v6900 = vpop.permute.xlu0 %6899
      %6901 = vrot.lane.b32.xlu0 %v6856, 112
      %v6902 = vpop.permute.xlu0 %6901
      %6903 = vrot.lane.b32.xlu0 %v6857, 112
      %v6904 = vpop.permute.xlu0 %6903
      %6905 = vrot.lane.b32.xlu0 %v6858, 112
      %v6906 = vpop.permute.xlu0 %6905
      %6907 = vrot.lane.b32.xlu0 %v6859, 112
      %v6908 = vpop.permute.xlu0 %6907
      %6909 = vrot.lane.b32.xlu0 %v6860, 112
      %v6910 = vpop.permute.xlu0 %6909
      %6911 = vrot.lane.b32.xlu0 %v6861, 112
      %v6912 = vpop.permute.xlu0 %6911
      %6913 = vrot.lane.b32.xlu0 %v6862, 112
      %v6914 = vpop.permute.xlu0 %6913
      %6915 = vrot.lane.b32.xlu0 %v6863, 112
      %v6916 = vpop.permute.xlu0 %6915
      %6917 = vrot.lane.b32.xlu0 %v6864, 112
      %v6918 = vpop.permute.xlu0 %6917
      %6919 = vrot.lane.b32.xlu0 %v6865, 112
      %v6920 = vpop.permute.xlu0 %6919
      %6921 = vrot.lane.b32.xlu0 %v6866, 112
      %v6922 = vpop.permute.xlu0 %6921
      %6923 = vrot.lane.b32.xlu0 %v6867, 112
      %v6924 = vpop.permute.xlu0 %6923
      %6925 = vrot.lane.b32.xlu0 %v6868, 112
      %v6926 = vpop.permute.xlu0 %6925
      %6927 = vrot.lane.b32.xlu0 %v6869, 112
      %v6928 = vpop.permute.xlu0 %6927
      %6929 = vrot.lane.b32.xlu0 %v6870, 112
      %v6930 = vpop.permute.xlu0 %6929
      %6931 = vrot.lane.b32.xlu0 %v6871, 112
      %v6932 = vpop.permute.xlu0 %6931
      %6933 = vrot.lane.b32.xlu0 %v6872, 112
      %v6934 = vpop.permute.xlu0 %6933
      %6935 = vrot.lane.b32.xlu0 %v6873, 112
      %v6936 = vpop.permute.xlu0 %6935
      %6937 = vrot.lane.b32.xlu0 %v6874, 112
      %v6938 = vpop.permute.xlu0 %6937
      %v6939 = vmax.f32 %v6843, %v6876
      %v6940 = vmax.f32 %v6844, %v6878
      %v6941 = vmax.f32 %v6845, %v6880
      %v6942 = vmax.f32 %v6846, %v6882
      %v6943 = vmax.f32 %v6847, %v6884
      %v6944 = vmax.f32 %v6848, %v6886
      %v6945 = vmax.f32 %v6849, %v6888
      %v6946 = vmax.f32 %v6850, %v6890
      %v6947 = vmax.f32 %v6851, %v6892
      %v6948 = vmax.f32 %v6852, %v6894
      %v6949 = vmax.f32 %v6853, %v6896
      %v6950 = vmax.f32 %v6854, %v6898
      %v6951 = vmax.f32 %v6855, %v6900
      %v6952 = vmax.f32 %v6856, %v6902
      %v6953 = vmax.f32 %v6857, %v6904
      %v6954 = vmax.f32 %v6858, %v6906
      %v6955 = vmax.f32 %v6859, %v6908
      %v6956 = vmax.f32 %v6860, %v6910
      %v6957 = vmax.f32 %v6861, %v6912
      %v6958 = vmax.f32 %v6862, %v6914
      %v6959 = vmax.f32 %v6863, %v6916
      %v6960 = vmax.f32 %v6864, %v6918
      %v6961 = vmax.f32 %v6865, %v6920
      %v6962 = vmax.f32 %v6866, %v6922
      %v6963 = vmax.f32 %v6867, %v6924
      %v6964 = vmax.f32 %v6868, %v6926
      %v6965 = vmax.f32 %v6869, %v6928
      %v6966 = vmax.f32 %v6870, %v6930
      %v6967 = vmax.f32 %v6871, %v6932
      %v6968 = vmax.f32 %v6872, %v6934
      %v6969 = vmax.f32 %v6873, %v6936
      %v6970 = vmax.f32 %v6874, %v6938
      %v6971 = vpack.c.bf16 %v6940, %v6939
      %v6972 = vpack.c.bf16 %v6948, %v6947
      %v6973 = vpack.c.bf16 %v6956, %v6955
      %v6974 = vpack.c.bf16 %v6964, %v6963
      %v6975 = vpack.c.bf16 %v6942, %v6941
      %v6976 = vpack.c.bf16 %v6950, %v6949
      %v6977 = vpack.c.bf16 %v6958, %v6957
      %v6978 = vpack.c.bf16 %v6966, %v6965
      %v6979 = vpack.c.bf16 %v6944, %v6943
      %v6980 = vpack.c.bf16 %v6952, %v6951
      %v6981 = vpack.c.bf16 %v6960, %v6959
      %v6982 = vpack.c.bf16 %v6968, %v6967
      %v6983 = vpack.c.bf16 %v6946, %v6945
      %v6984 = vpack.c.bf16 %v6954, %v6953
      %v6985 = vpack.c.bf16 %v6962, %v6961
      %v6986 = vpack.c.bf16 %v6970, %v6969
      %v6987 = vld [vmem:[%s6] sm:$0xf]
      %v6988 = vld [vmem:[%s6 + $0x4] sm:$0xf]
      %v6989 = vld [vmem:[%s6 + $0x8] sm:$0xf]
      %v6990 = vld [vmem:[%s6 + $0xc] sm:$0xf]
      %v6991 = vld [vmem:[%s6 + $0x10] sm:$0xf]
      %v6992 = vld [vmem:[%s6 + $0x14] sm:$0xf]
      %v6993 = vld [vmem:[%s6 + $0x18] sm:$0xf]
      %v6994 = vld [vmem:[%s6 + $0x1c] sm:$0xf]
      %v6995 = vld [vmem:[%s6 + $0x20] sm:$0xf]
      %v6996 = vld [vmem:[%s6 + $0x24] sm:$0xf]
      %v6997 = vld [vmem:[%s6 + $0x28] sm:$0xf]
      %v6998 = vld [vmem:[%s6 + $0x2c] sm:$0xf]
      %v6999 = vld [vmem:[%s6 + $0x30] sm:$0xf]
      %v7000 = vld [vmem:[%s6 + $0x34] sm:$0xf]
      %v7001 = vld [vmem:[%s6 + $0x38] sm:$0xf]
      %v7002 = vld [vmem:[%s6 + $0x3c] sm:$0xf]
      %v7003 = vld [vmem:[%s6 + $0x40] sm:$0xf]
      %v7004 = vld [vmem:[%s6 + $0x44] sm:$0xf]
      %v7005 = vld [vmem:[%s6 + $0x48] sm:$0xf]
      %v7006 = vld [vmem:[%s6 + $0x4c] sm:$0xf]
      %v7007 = vld [vmem:[%s6 + $0x50] sm:$0xf]
      %v7008 = vld [vmem:[%s6 + $0x54] sm:$0xf]
      %v7009 = vld [vmem:[%s6 + $0x58] sm:$0xf]
      %v7010 = vld [vmem:[%s6 + $0x5c] sm:$0xf]
      %v7011 = vld [vmem:[%s6 + $0x60] sm:$0xf]
      %v7012 = vld [vmem:[%s6 + $0x64] sm:$0xf]
      %v7013 = vld [vmem:[%s6 + $0x68] sm:$0xf]
      %v7014 = vld [vmem:[%s6 + $0x6c] sm:$0xf]
      %v7015 = vld [vmem:[%s6 + $0x70] sm:$0xf]
      %v7016 = vld [vmem:[%s6 + $0x74] sm:$0xf]
      %v7017 = vld [vmem:[%s6 + $0x78] sm:$0xf]
      %v7018 = vld [vmem:[%s6 + $0x7c] sm:$0xf]
      %v7019 = vld [vmem:[%s6 + $0x80] sm:$0xf]
      %v7020 = vld [vmem:[%s6 + $0x84] sm:$0xf]
      %v7021 = vld [vmem:[%s6 + $0x88] sm:$0xf]
      %v7022 = vld [vmem:[%s6 + $0x8c] sm:$0xf]
      %v7023 = vld [vmem:[%s6 + $0x90] sm:$0xf]
      %v7024 = vld [vmem:[%s6 + $0x94] sm:$0xf]
      %v7025 = vld [vmem:[%s6 + $0x98] sm:$0xf]
      %v7026 = vld [vmem:[%s6 + $0x9c] sm:$0xf]
      %v7027 = vld [vmem:[%s6 + $0xa0] sm:$0xf]
      %v7028 = vld [vmem:[%s6 + $0xa4] sm:$0xf]
      %v7029 = vld [vmem:[%s6 + $0xa8] sm:$0xf]
      %v7030 = vld [vmem:[%s6 + $0xac] sm:$0xf]
      %v7031 = vld [vmem:[%s6 + $0xb0] sm:$0xf]
      %v7032 = vld [vmem:[%s6 + $0xb4] sm:$0xf]
      %v7033 = vld [vmem:[%s6 + $0xb8] sm:$0xf]
      %v7034 = vld [vmem:[%s6 + $0xbc] sm:$0xf]
      %v7035 = vld [vmem:[%s6 + $0xc0] sm:$0xf]
      %v7036 = vld [vmem:[%s6 + $0xc4] sm:$0xf]
      %v7037 = vld [vmem:[%s6 + $0xc8] sm:$0xf]
      %v7038 = vld [vmem:[%s6 + $0xcc] sm:$0xf]
      %v7039 = vld [vmem:[%s6 + $0xd0] sm:$0xf]
      %v7040 = vld [vmem:[%s6 + $0xd4] sm:$0xf]
      %v7041 = vld [vmem:[%s6 + $0xd8] sm:$0xf]
      %v7042 = vld [vmem:[%s6 + $0xdc] sm:$0xf]
      %v7043 = vld [vmem:[%s6 + $0xe0] sm:$0xf]
      %v7044 = vld [vmem:[%s6 + $0xe4] sm:$0xf]
      %v7045 = vld [vmem:[%s6 + $0xe8] sm:$0xf]
      %v7046 = vld [vmem:[%s6 + $0xec] sm:$0xf]
      %v7047 = vld [vmem:[%s6 + $0xf0] sm:$0xf]
      %v7048 = vld [vmem:[%s6 + $0xf4] sm:$0xf]
      %v7049 = vld [vmem:[%s6 + $0xf8] sm:$0xf]
      %v7050 = vld [vmem:[%s6 + $0xfc] sm:$0xf]
      %v7051 = vld [vmem:[%s7] sm:$0x1]
      %v7053 = vlaneseq
      %v7054 = vshrl.u32 %v7053, 7
      %v7055 = vsub.s32 0, %v7054
      %v7056 = vrot.slane %v7051, %v7055
      %v7122 = vunpack.c.l.b16 %v6987
      %v7123 = vunpack.c.l.b16 %v6988
      %v7124 = vunpack.c.l.b16 %v6989
      %v7125 = vunpack.c.l.b16 %v6990
      %v7126 = vunpack.c.l.b16 %v6991
      %v7127 = vunpack.c.l.b16 %v6992
      %v7128 = vunpack.c.l.b16 %v6993
      %v7129 = vunpack.c.l.b16 %v6994
      %v7130 = vunpack.c.l.b16 %v6995
      %v7131 = vunpack.c.l.b16 %v6996
      %v7132 = vunpack.c.l.b16 %v6997
      %v7133 = vunpack.c.l.b16 %v6998
      %v7134 = vunpack.c.l.b16 %v6999
      %v7135 = vunpack.c.l.b16 %v7000
      %v7136 = vunpack.c.l.b16 %v7001
      %v7137 = vunpack.c.l.b16 %v7002
      %v7138 = vunpack.c.l.b16 %v7003
      %v7139 = vunpack.c.l.b16 %v7004
      %v7140 = vunpack.c.l.b16 %v7005
      %v7141 = vunpack.c.l.b16 %v7006
      %v7142 = vunpack.c.l.b16 %v7007
      %v7143 = vunpack.c.l.b16 %v7008
      %v7144 = vunpack.c.l.b16 %v7009
      %v7145 = vunpack.c.l.b16 %v7010
      %v7146 = vunpack.c.l.b16 %v7011
      %v7147 = vunpack.c.l.b16 %v7012
      %v7148 = vunpack.c.l.b16 %v7013
      %v7149 = vunpack.c.l.b16 %v7014
      %v7150 = vunpack.c.l.b16 %v7015
      %v7151 = vunpack.c.l.b16 %v7016
      %v7152 = vunpack.c.l.b16 %v7017
      %v7153 = vunpack.c.l.b16 %v7018
      %v7154 = vunpack.c.l.b16 %v7019
      %v7155 = vunpack.c.l.b16 %v7020
      %v7156 = vunpack.c.l.b16 %v7021
      %v7157 = vunpack.c.l.b16 %v7022
      %v7158 = vunpack.c.l.b16 %v7023
      %v7159 = vunpack.c.l.b16 %v7024
      %v7160 = vunpack.c.l.b16 %v7025
      %v7161 = vunpack.c.l.b16 %v7026
      %v7162 = vunpack.c.l.b16 %v7027
      %v7163 = vunpack.c.l.b16 %v7028
      %v7164 = vunpack.c.l.b16 %v7029
      %v7165 = vunpack.c.l.b16 %v7030
      %v7166 = vunpack.c.l.b16 %v7031
      %v7167 = vunpack.c.l.b16 %v7032
      %v7168 = vunpack.c.l.b16 %v7033
      %v7169 = vunpack.c.l.b16 %v7034
      %v7170 = vunpack.c.l.b16 %v7035
      %v7171 = vunpack.c.l.b16 %v7036
      %v7172 = vunpack.c.l.b16 %v7037
      %v7173 = vunpack.c.l.b16 %v7038
      %v7174 = vunpack.c.l.b16 %v7039
      %v7175 = vunpack.c.l.b16 %v7040
      %v7176 = vunpack.c.l.b16 %v7041
      %v7177 = vunpack.c.l.b16 %v7042
      %v7178 = vunpack.c.l.b16 %v7043
      %v7179 = vunpack.c.l.b16 %v7044
      %v7180 = vunpack.c.l.b16 %v7045
      %v7181 = vunpack.c.l.b16 %v7046
      %v7182 = vunpack.c.l.b16 %v7047
      %v7183 = vunpack.c.l.b16 %v7048
      %v7184 = vunpack.c.l.b16 %v7049
      %v7185 = vunpack.c.l.b16 %v7050
      %v7186 = vpack.c.b16 %v7123, %v7122
      %v7187 = vpack.c.b16 %v7125, %v7124
      %v7188 = vpack.c.b16 %v7127, %v7126
      %v7189 = vpack.c.b16 %v7129, %v7128
      %v7190 = vpack.c.b16 %v7131, %v7130
      %v7191 = vpack.c.b16 %v7133, %v7132
      %v7192 = vpack.c.b16 %v7135, %v7134
      %v7193 = vpack.c.b16 %v7137, %v7136
      %v7194 = vpack.c.b16 %v7139, %v7138
      %v7195 = vpack.c.b16 %v7141, %v7140
      %v7196 = vpack.c.b16 %v7143, %v7142
      %v7197 = vpack.c.b16 %v7145, %v7144
      %v7198 = vpack.c.b16 %v7147, %v7146
      %v7199 = vpack.c.b16 %v7149, %v7148
      %v7200 = vpack.c.b16 %v7151, %v7150
      %v7201 = vpack.c.b16 %v7153, %v7152
      %v7202 = vpack.c.b16 %v7155, %v7154
      %v7203 = vpack.c.b16 %v7157, %v7156
      %v7204 = vpack.c.b16 %v7159, %v7158
      %v7205 = vpack.c.b16 %v7161, %v7160
      %v7206 = vpack.c.b16 %v7163, %v7162
      %v7207 = vpack.c.b16 %v7165, %v7164
      %v7208 = vpack.c.b16 %v7167, %v7166
      %v7209 = vpack.c.b16 %v7169, %v7168
      %v7210 = vpack.c.b16 %v7171, %v7170
      %v7211 = vpack.c.b16 %v7173, %v7172
      %v7212 = vpack.c.b16 %v7175, %v7174
      %v7213 = vpack.c.b16 %v7177, %v7176
      %v7214 = vpack.c.b16 %v7179, %v7178
      %v7215 = vpack.c.b16 %v7181, %v7180
      %v7216 = vpack.c.b16 %v7183, %v7182
      %v7217 = vpack.c.b16 %v7185, %v7184
      %7250 = vmatprep.subr.bf16.mxu0 0
      %7251 = vmatpush1.bf16.msra.mxu0 %v7186
      %7252 = vmatprep.subr.bf16.mxu0 0
      %7253 = vmatpush1.bf16.msra.mxu0 %v7187
      %7254 = vmatprep.subr.bf16.mxu0 0
      %7255 = vmatpush1.bf16.msra.mxu0 %v7188
      %7256 = vmatprep.subr.bf16.mxu0 0
      %7257 = vmatpush1.bf16.msra.mxu0 %v7189
      %7258 = vmatprep.subr.bf16.mxu0 0
      %7259 = vmatpush1.bf16.msra.mxu0 %v7190
      %7260 = vmatprep.subr.bf16.mxu0 0
      %7261 = vmatpush1.bf16.msra.mxu0 %v7191
      %7262 = vmatprep.subr.bf16.mxu0 0
      %7263 = vmatpush1.bf16.msra.mxu0 %v7192
      %7264 = vmatprep.subr.bf16.mxu0 0
      %7265 = vmatpush1.bf16.msra.mxu0 %v7193
      %7266 = vmatprep.subr.bf16.mxu0 0
      %7267 = vmatpush1.bf16.msra.mxu0 %v7194
      %7268 = vmatprep.subr.bf16.mxu0 0
      %7269 = vmatpush1.bf16.msra.mxu0 %v7195
      %7270 = vmatprep.subr.bf16.mxu0 0
      %7271 = vmatpush1.bf16.msra.mxu0 %v7196
      %7272 = vmatprep.subr.bf16.mxu0 0
      %7273 = vmatpush1.bf16.msra.mxu0 %v7197
      %7274 = vmatprep.subr.bf16.mxu0 0
      %7275 = vmatpush1.bf16.msra.mxu0 %v7198
      %7276 = vmatprep.subr.bf16.mxu0 0
      %7277 = vmatpush1.bf16.msra.mxu0 %v7199
      %7278 = vmatprep.subr.bf16.mxu0 0
      %7279 = vmatpush1.bf16.msra.mxu0 %v7200
      %7280 = vmatprep.subr.bf16.mxu0 0
      %7281 = vmatpush1.bf16.msra.mxu0 %v7201
      %7282 = vmatprep.mubr.bf16.mxu0 %v6972
      %7283 = vmatmul.mubr.bf16.gmra.mrb[0].mxu0 %v6971
      %v7284 = vpop.f32.mrb[0].mxu0
      %v7285 = vadd.f32 %v7056, %v7284
      %v7286 = vpop.f32.mrb[0].mxu0
      %v7287 = vpop.f32.mrb[0].mxu0
      %v7288 = vadd.f32 %v7056, %v7287
      %v7289 = vpop.f32.mrb[0].mxu0
      %7290 = vmatprep.mubr.bf16.mxu0 %v6976
      %7291 = vmatmul.mubr.bf16.gmra.mrb[0].mxu0 %v6975
      %v7292 = vpop.f32.mrb[0].mxu0
      %v7293 = vadd.f32 %v7056, %v7292
      %v7294 = vpop.f32.mrb[0].mxu0
      %v7295 = vpop.f32.mrb[0].mxu0
      %v7296 = vadd.f32 %v7056, %v7295
      %v7297 = vpop.f32.mrb[0].mxu0
      %7298 = vmatprep.mubr.bf16.mxu0 %v6980
      %7299 = vmatmul.mubr.bf16.gmra.mrb[0].mxu0 %v6979
      %v7300 = vpop.f32.mrb[0].mxu0
      %v7301 = vadd.f32 %v7056, %v7300
      %v7302 = vpop.f32.mrb[0].mxu0
      %v7303 = vpop.f32.mrb[0].mxu0
      %v7304 = vadd.f32 %v7056, %v7303
      %v7305 = vpop.f32.mrb[0].mxu0
      %7306 = vmatprep.mubr.bf16.mxu0 %v6984
      %7307 = vmatmul.mubr.bf16.gmra.mrb[0].mxu0 %v6983
      %v7308 = vpop.f32.mrb[0].mxu0
      %v7309 = vadd.f32 %v7056, %v7308
      %v7310 = vpop.f32.mrb[0].mxu0
      %v7311 = vpop.f32.mrb[0].mxu0
      %v7312 = vadd.f32 %v7056, %v7311
      %v7313 = vpop.f32.mrb[0].mxu0
      %7314 = vdwg.mxu0
      %7315 = vmatprep.subr.bf16.mxu0 0
      %7316 = vmatpush1.bf16.msra.mxu0 %v7202
      %7317 = vmatprep.subr.bf16.mxu0 0
      %7318 = vmatpush1.bf16.msra.mxu0 %v7203
      %7319 = vmatprep.subr.bf16.mxu0 0
      %7320 = vmatpush1.bf16.msra.mxu0 %v7204
      %7321 = vmatprep.subr.bf16.mxu0 0
      %7322 = vmatpush1.bf16.msra.mxu0 %v7205
      %7323 = vmatprep.subr.bf16.mxu0 0
      %7324 = vmatpush1.bf16.msra.mxu0 %v7206
      %7325 = vmatprep.subr.bf16.mxu0 0
      %7326 = vmatpush1.bf16.msra.mxu0 %v7207
      %7327 = vmatprep.subr.bf16.mxu0 0
      %7328 = vmatpush1.bf16.msra.mxu0 %v7208
      %7329 = vmatprep.subr.bf16.mxu0 0
      %7330 = vmatpush1.bf16.msra.mxu0 %v7209
      %7331 = vmatprep.subr.bf16.mxu0 0
      %7332 = vmatpush1.bf16.msra.mxu0 %v7210
      %7333 = vmatprep.subr.bf16.mxu0 0
      %7334 = vmatpush1.bf16.msra.mxu0 %v7211
      %7335 = vmatprep.subr.bf16.mxu0 0
      %7336 = vmatpush1.bf16.msra.mxu0 %v7212
      %7337 = vmatprep.subr.bf16.mxu0 0
      %7338 = vmatpush1.bf16.msra.mxu0 %v7213
      %7339 = vmatprep.subr.bf16.mxu0 0
      %7340 = vmatpush1.bf16.msra.mxu0 %v7214
      %7341 = vmatprep.subr.bf16.mxu0 0
      %7342 = vmatpush1.bf16.msra.mxu0 %v7215
      %7343 = vmatprep.subr.bf16.mxu0 0
      %7344 = vmatpush1.bf16.msra.mxu0 %v7216
      %7345 = vmatprep.subr.bf16.mxu0 0
      %7346 = vmatpush1.bf16.msra.mxu0 %v7217
      %7347 = vmatprep.mubr.bf16.mxu0 %v6974
      %7348 = vmatmul.mubr.bf16.gmra.mrb[0].mxu0 %v6973
      %v7349 = vpop.f32.mrb[0].mxu0
      %v7350 = vadd.f32 %v7285, %v7349
      %v7351 = vpop.f32.mrb[0].mxu0
      %v7352 = vpop.f32.mrb[0].mxu0
      %v7353 = vadd.f32 %v7288, %v7352
      %v7354 = vpop.f32.mrb[0].mxu0
      %7355 = vmatprep.mubr.bf16.mxu0 %v6978
      %7356 = vmatmul.mubr.bf16.gmra.mrb[0].mxu0 %v6977
      %v7357 = vpop.f32.mrb[0].mxu0
      %v7358 = vadd.f32 %v7293, %v7357
      %v7359 = vpop.f32.mrb[0].mxu0
      %v7360 = vpop.f32.mrb[0].mxu0
      %v7361 = vadd.f32 %v7296, %v7360
      %v7362 = vpop.f32.mrb[0].mxu0
      %7363 = vmatprep.mubr.bf16.mxu0 %v6982
      %7364 = vmatmul.mubr.bf16.gmra.mrb[0].mxu0 %v6981
      %v7365 = vpop.f32.mrb[0].mxu0
      %v7366 = vadd.f32 %v7301, %v7365
      %v7367 = vpop.f32.mrb[0].mxu0
      %v7368 = vpop.f32.mrb[0].mxu0
      %v7369 = vadd.f32 %v7304, %v7368
      %v7370 = vpop.f32.mrb[0].mxu0
      %7371 = vmatprep.mubr.bf16.mxu0 %v6986
      %7372 = vmatmul.mubr.bf16.gmra.mrb[0].mxu0 %v6985
      %v7373 = vpop.f32.mrb[0].mxu0
      %v7374 = vadd.f32 %v7309, %v7373
      %v7375 = vpop.f32.mrb[0].mxu0
      %v7376 = vpop.f32.mrb[0].mxu0
      %v7377 = vadd.f32 %v7312, %v7376
      %v7378 = vpop.f32.mrb[0].mxu0
      %7379 = vdwg.mxu0
      %v7380 = vmax.f32 %v7350, 0.0
      %v7381 = vmax.f32 %v7353, 0.0
      %v7382 = vmax.f32 %v7358, 0.0
      %v7383 = vmax.f32 %v7361, 0.0
      %v7384 = vmax.f32 %v7366, 0.0
      %v7385 = vmax.f32 %v7369, 0.0
      %v7386 = vmax.f32 %v7374, 0.0
      %v7387 = vmax.f32 %v7377, 0.0
      %v7388 = vpack.c.bf16 %v7381, %v7380
      %v7389 = vpack.c.bf16 %v7383, %v7382
      %v7390 = vpack.c.bf16 %v7385, %v7384
      %v7391 = vpack.c.bf16 %v7387, %v7386
      %v7392 = vld [vmem:[%s8] sm:$0xf]
      %v7393 = vld [vmem:[%s8 + $0x4] sm:$0xf]
      %v7394 = vld [vmem:[%s8 + $0x8] sm:$0xf]
      %v7395 = vld [vmem:[%s8 + $0xc] sm:$0xf]
      %v7396 = vld [vmem:[%s8 + $0x10] sm:$0xf]
      %v7397 = vld [vmem:[%s8 + $0x14] sm:$0xf]
      %v7398 = vld [vmem:[%s8 + $0x18] sm:$0xf]
      %v7399 = vld [vmem:[%s8 + $0x1c] sm:$0xf]
      %v7400 = vld [vmem:[%s8 + $0x20] sm:$0xf]
      %v7401 = vld [vmem:[%s8 + $0x24] sm:$0xf]
      %v7402 = vld [vmem:[%s8 + $0x28] sm:$0xf]
      %v7403 = vld [vmem:[%s8 + $0x2c] sm:$0xf]
      %v7404 = vld [vmem:[%s8 + $0x30] sm:$0xf]
      %v7405 = vld [vmem:[%s8 + $0x34] sm:$0xf]
      %v7406 = vld [vmem:[%s8 + $0x38] sm:$0xf]
      %v7407 = vld [vmem:[%s8 + $0x3c] sm:$0xf]
      %v7408 = vld [vmem:[%s9] sm:$0x1]
      %v7410 = vlaneseq
      %v7411 = vshrl.u32 %v7410, 7
      %v7412 = vsub.s32 0, %v7411
      %v7413 = vrot.slane %v7408, %v7412
      %v7431 = vunpack.c.l.b16 %v7392
      %v7432 = vunpack.c.l.b16 %v7393
      %v7433 = vunpack.c.l.b16 %v7394
      %v7434 = vunpack.c.l.b16 %v7395
      %v7435 = vunpack.c.l.b16 %v7396
      %v7436 = vunpack.c.l.b16 %v7397
      %v7437 = vunpack.c.l.b16 %v7398
      %v7438 = vunpack.c.l.b16 %v7399
      %v7439 = vunpack.c.l.b16 %v7400
      %v7440 = vunpack.c.l.b16 %v7401
      %v7441 = vunpack.c.l.b16 %v7402
      %v7442 = vunpack.c.l.b16 %v7403
      %v7443 = vunpack.c.l.b16 %v7404
      %v7444 = vunpack.c.l.b16 %v7405
      %v7445 = vunpack.c.l.b16 %v7406
      %v7446 = vunpack.c.l.b16 %v7407
      %v7447 = vpack.c.b16 %v7432, %v7431
      %v7448 = vpack.c.b16 %v7434, %v7433
      %v7449 = vpack.c.b16 %v7436, %v7435
      %v7450 = vpack.c.b16 %v7438, %v7437
      %v7451 = vpack.c.b16 %v7440, %v7439
      %v7452 = vpack.c.b16 %v7442, %v7441
      %v7453 = vpack.c.b16 %v7444, %v7443
      %v7454 = vpack.c.b16 %v7446, %v7445
      %7463 = vmatprep.subr.bf16.mxu0 0
      %7464 = vmatpush1.bf16.msra.mxu0 %v7447
      %7465 = vmatprep.subr.bf16.mxu0 0
      %7466 = vmatpush1.bf16.msra.mxu0 %v7448
      %7467 = vmatprep.subr.bf16.mxu0 0
      %7468 = vmatpush1.bf16.msra.mxu0 %v7449
      %7469 = vmatprep.subr.bf16.mxu0 0
      %7470 = vmatpush1.bf16.msra.mxu0 %v7450
      %7471 = vmatprep.subr.bf16.mxu0 0
      %7472 = vmatpush1.bf16.msra.mxu0 %v7451
      %7473 = vmatprep.subr.bf16.mxu0 0
      %7474 = vmatpush1.bf16.msra.mxu0 %v7452
      %7475 = vmatprep.subr.bf16.mxu0 0
      %7476 = vmatpush1.bf16.msra.mxu0 %v7453
      %7477 = vmatprep.subr.bf16.mxu0 0
      %7478 = vmatpush1.bf16.msra.mxu0 %v7454
      %7479 = vmatprep.subr.bf16.mxu0 0
      %7480 = vmatpush1.bf16.msra.mxu0 0
      %7481 = vmatprep.subr.bf16.mxu0 0
      %7482 = vmatpush1.bf16.msra.mxu0 0
      %7483 = vmatprep.subr.bf16.mxu0 0
      %7484 = vmatpush1.bf16.msra.mxu0 0
      %7485 = vmatprep.subr.bf16.mxu0 0
      %7486 = vmatpush1.bf16.msra.mxu0 0
      %7487 = vmatprep.subr.bf16.mxu0 0
      %7488 = vmatpush1.bf16.msra.mxu0 0
      %7489 = vmatprep.subr.bf16.mxu0 0
      %7490 = vmatpush1.bf16.msra.mxu0 0
      %7491 = vmatprep.subr.bf16.mxu0 0
      %7492 = vmatpush1.bf16.msra.mxu0 0
      %7493 = vmatprep.subr.bf16.mxu0 0
      %7494 = vmatpush1.bf16.msra.mxu0 0
      %7495 = vmatprep.mubr.bf16.mxu0 0
      %7496 = vmatmul.mubr.bf16.gmra.mrb[0].mxu0 %v7388
      %v7497 = vpop.f32.mrb[0].mxu0
      %v7498 = vadd.f32 %v7413, %v7497
      %v7499 = vpop.f32.mrb[0].mxu0
      %v7500 = vpop.f32.mrb[0].mxu0
      %v7501 = vadd.f32 %v7413, %v7500
      %v7502 = vpop.f32.mrb[0].mxu0
      %7503 = vmatprep.mubr.bf16.mxu0 0
      %7504 = vmatmul.mubr.bf16.gmra.mrb[0].mxu0 %v7389
      %v7505 = vpop.f32.mrb[0].mxu0
      %v7506 = vadd.f32 %v7413, %v7505
      %v7507 = vpop.f32.mrb[0].mxu0
      %v7508 = vpop.f32.mrb[0].mxu0
      %v7509 = vadd.f32 %v7413, %v7508
      %v7510 = vpop.f32.mrb[0].mxu0
      %7511 = vmatprep.mubr.bf16.mxu0 0
      %7512 = vmatmul.mubr.bf16.gmra.mrb[0].mxu0 %v7390
      %v7513 = vpop.f32.mrb[0].mxu0
      %v7514 = vadd.f32 %v7413, %v7513
      %v7515 = vpop.f32.mrb[0].mxu0
      %v7516 = vpop.f32.mrb[0].mxu0
      %v7517 = vadd.f32 %v7413, %v7516
      %v7518 = vpop.f32.mrb[0].mxu0
      %7519 = vmatprep.mubr.bf16.mxu0 0
      %7520 = vmatmul.mubr.bf16.gmra.mrb[0].mxu0 %v7391
      %v7521 = vpop.f32.mrb[0].mxu0
      %v7522 = vadd.f32 %v7413, %v7521
      %v7523 = vpop.f32.mrb[0].mxu0
      %v7524 = vpop.f32.mrb[0].mxu0
      %v7525 = vadd.f32 %v7413, %v7524
      %v7526 = vpop.f32.mrb[0].mxu0
      %7527 = vdwg.mxu0
      %v7528 = vmax.f32 %v7498, 0.0
      %v7529 = vmax.f32 %v7501, 0.0
      %v7530 = vmax.f32 %v7506, 0.0
      %v7531 = vmax.f32 %v7509, 0.0
      %v7532 = vmax.f32 %v7514, 0.0
      %v7533 = vmax.f32 %v7517, 0.0
      %v7534 = vmax.f32 %v7522, 0.0
      %v7535 = vmax.f32 %v7525, 0.0
      %7536 = vst [vmem:[%s359] sm:$0xff] %v7528
      %7537 = vst [vmem:[%s359 + $0x8] sm:$0xff] %v7529
      %7538 = vst [vmem:[%s359 + $0x10] sm:$0xff] %v7530
      %7539 = vst [vmem:[%s359 + $0x18] sm:$0xff] %v7531
      %7540 = vst [vmem:[%s359 + $0x20] sm:$0xff] %v7532
      %7541 = vst [vmem:[%s359 + $0x28] sm:$0xff] %v7533
      %7542 = vst [vmem:[%s359 + $0x30] sm:$0xff] %v7534
      %7543 = vst [vmem:[%s359 + $0x38] sm:$0xff] %v7535
      %s7544 = smul.u32 8, %s21
      %p7545 = scmp.lt.s32.totalorder %s7544, 15
      %s7546 = scalar_select %p7545, %s7544, 15
      %s7547 = smul.addr %s7546, 8
      %s7548 = scalar_lea.vmem %s10, %s7547
      // Predicated region
      $region61: #{mnist_net_forward.1} parent=59 // pred_check
        %p7549 = pneg %p254
      $region62: #{mnist_net_forward.1} parent=59 // pred_check_branch
        %7551 = sbr.rel (%p7549) target = $region64
      $region63: #{mnist_net_forward.1} parent=59 // pred_region
        %s7552 = smul.u32 8, %s21
      $region64: #{mnist_net_forward.1} parent=59 // pred_fallthru
        _
    $region60: #{mnist_net_forward.1} parent=5 // pred_fallthru
      _
    %p7553 = scmp.le.s32.totalorder 2, %s16
    // Predicated region
    $region65: #{mnist_net_forward.1} parent=5 // pred_check
      %p7554 = pneg %p7553
    $region66: #{mnist_net_forward.1} parent=5 // pred_check_branch
      %7556 = sbr.rel (%p7554) target = $region68
    $region67: #{mnist_net_forward.1} parent=5 // pred_region
      %s7557 = ssub.s32 %s16, 2
      // Predicated region
      $region69: #{mnist_net_forward.1} parent=67 // pred_check
        %p7558 = pneg %p260
      $region70: #{mnist_net_forward.1} parent=67 // pred_check_branch
        %7560 = sbr.rel (%p7558) target = $region72
      $region71: #{mnist_net_forward.1} parent=67 // pred_region
        %s7561 = smul.u32 8, %s22
        %p7562 = scmp.lt.s32.totalorder %s7561, 15
        %s7563 = scalar_select %p7562, %s7561, 15
        %s7564 = smul.addr %s7563, 8
        %s7565 = scalar_lea.vmem %s10, %s7564
      $region72: #{mnist_net_forward.1} parent=67 // pred_fallthru
        _
    $region68: #{mnist_net_forward.1} parent=5 // pred_fallthru
      _
  $region6: #{mnist_net_forward.1} parent=0 // loop_footer
    %s20 = sadd.s32 1, %s16
  $region7: #{mnist_net_forward.1} parent=0 // loop_footer_branch
    %15 = sbr.rel target = $region3
  $region8: #{mnist_net_forward.1} parent=0 // loop_exit
    _

</llo_original>
